<compile_context>
chip_gen: v5e
topology: v5e:2x2
jax: 0.10.0
libtpu: 0.0.40
codegen_flags: <defaults>
</compile_context>

<pallas_src>
import functools

import jax
import jax.numpy as jnp
from jax import lax
from jax.experimental import pallas as pl
from jax.experimental.pallas import tpu as pltpu


# ----------------------------------------------------------------------------
# Pallas kernel: feature projector (3x3 conv as one wide-K matmul) + energy
# head + L2-norm + folded multi-head Hopfield retrieval + energy fusion MLP.
# ----------------------------------------------------------------------------
def hopfield_pebal_kernel(
    rows_hbm,                                   # (total_rows, 128) bf16, HBM
    w1_ref, b1_ref,                             # fused 3x3 conv (1152,128), BN folded
    w2_ref, b2_ref,                             # conv1x1 (BN scale folded)
    w3_ref, b3_ref,                             # conv1x1 -> feature_dim
    we1_ref, be1_ref, we2_ref,                  # energy head (BN scale folded)
    simw_ref, simb_ref, memret_ref,             # folded Hopfield weights
    wf1a_ref, wf1b_ref, bf1_ref, wf2_ref,       # fusion MLP parameter rows
    scal_ref,                                   # SMEM scalars: [be2, bf2]
    feat_out_ref, ener_out_ref,                 # outputs: features, [comb|mem_e]
    buf_ref, sem_ref,                           # (2, slab, C) VMEM + DMA sems
    *, tile_n, halo_off, wp, num_heads, mem_size, memory_initialized, bf16_exp):
  f32 = jnp.float32
  bf16 = jnp.bfloat16
  slab = buf_ref.shape[1]
  C = buf_ref.shape[2]
  i = pl.program_id(0)
  slot = i % 2

  # ---- double-buffered halo-slab DMA (prime at i==0, prefetch i+1, wait i).
  @pl.when(i == 0)
  def _prime():
    pltpu.make_async_copy(rows_hbm.at[pl.ds(0, slab)], buf_ref.at[0],
                          sem_ref.at[0]).start()

  @pl.when(i + 1 < pl.num_programs(0))
  def _prefetch():
    nstart = pl.multiple_of((i + 1) * tile_n, tile_n)
    pltpu.make_async_copy(rows_hbm.at[pl.ds(nstart, slab)],
                          buf_ref.at[1 - slot], sem_ref.at[1 - slot]).start()

  start = pl.multiple_of(i * tile_n, tile_n)
  pltpu.make_async_copy(rows_hbm.at[pl.ds(start, slab)], buf_ref.at[slot],
                        sem_ref.at[slot]).wait()

  # ---- conv3x3: nine shifted windows lane-concatenated -> one K=9*128 matmul,
  #      then 1x1 (+folded BN+ReLU), then 1x1 -> feature_dim.
  windows = [buf_ref[slot, pl.ds(halo_off + dy * wp + dx, tile_n), :]
             for dy in (-1, 0, 1) for dx in (-1, 0, 1)]
  lhs = jnp.concatenate(windows, axis=-1)                       # (tile, 9C) bf16
  h1 = jnp.maximum(jnp.dot(lhs, w1_ref[...], preferred_element_type=f32)
                   + b1_ref[...], 0.0).astype(bf16)
  h2 = jnp.maximum(jnp.dot(h1, w2_ref[...], preferred_element_type=f32)
                   + b2_ref[...], 0.0).astype(bf16)
  proj = jnp.dot(h2, w3_ref[...], preferred_element_type=f32) + b3_ref[...]

  # ---- F.normalize(p=2, dim=1, eps=1e-12): single rsqrt (EUP).
  sumsq = jnp.sum(proj * proj, axis=-1, keepdims=True)
  fnorm = proj * lax.rsqrt(jnp.maximum(sumsq, 1e-24))
  feat_out_ref[...] = fnorm

  # ---- energy head on the un-shifted backbone rows (center tap of lhs).
  center = lhs[:, 4 * C:5 * C]
  e = jnp.maximum(jnp.dot(center, we1_ref[...], preferred_element_type=f32)
                  + be1_ref[...], 0.0)
  base_e = jnp.sum(e * we2_ref[...], axis=-1, keepdims=True) + scal_ref[0]

  # ---- multi-head Hopfield retrieval against the memory bank.
  #      Head Linear + beta folded into simw/simb; per-head retrievals collapse
  #      into one matmul with 1/num_heads folded into memret (exact rewrites).
  #      NOTE: fnorm is cast to bf16 before the similarity matmul (beta already
  #      folded into simw) -- logits carry ~bf16-level error scaled by beta.
  if memory_initialized:
    fn_bf = fnorm.astype(bf16)
    sim = (jnp.dot(fn_bf, simw_ref[...], preferred_element_type=f32)
           + simb_ref[...])                                     # (tile, H*M)
    attn_sum = jnp.zeros((tile_n, mem_size), f32)
    for h in range(num_heads):
      s = sim[:, h * mem_size:(h + 1) * mem_size]
      z = s - jnp.max(s, axis=-1, keepdims=True)
      if bf16_exp:
        pexp = jnp.exp(z.astype(bf16)).astype(f32)   # bf16 EUP (v6e/v7x)
      else:
        pexp = jnp.exp(z)                            # f32 exp (v5e)
      inv = 1.0 / jnp.sum(pexp, axis=-1, keepdims=True)   # exact reciprocal
      attn_sum = attn_sum + pexp * inv
    retrieved = jnp.dot(attn_sum.astype(bf16), memret_ref[...],
                        preferred_element_type=f32)             # (tile, D)
    mem_e = 1.0 - jnp.sum(fnorm * retrieved, axis=-1, keepdims=True)
  else:
    mem_e = jnp.zeros((tile_n, 1), f32)

  # ---- energy fusion MLP: Linear(2,8) + ReLU + Linear(8,1), vectorized.
  hid = jnp.maximum(base_e * wf1a_ref[...] + mem_e * wf1b_ref[...]
                    + bf1_ref[...], 0.0)                        # (tile, 8)
  comb = jnp.sum(hid * wf2_ref[...], axis=-1, keepdims=True) + scal_ref[1]
  ener_out_ref[...] = jnp.concatenate([comb, mem_e], axis=-1)   # (tile, 2)


# ----------------------------------------------------------------------------
# Glue: stand-in backbone and the pallas_call wrapper.
# ----------------------------------------------------------------------------
def standin_deepwv3plus(x, p):
  # Features are emitted NHWC bf16 directly so the kernel prologue is a single
  # pad+reshape (no transpose / extra f32 HBM passes).
  dn = ('NCHW', 'OIHW', 'NCHW')
  dn_nhwc = ('NCHW', 'OIHW', 'NHWC')
  x1 = jax.nn.relu(lax.conv_general_dilated(x, p['w_mod1'], (1, 1), 'SAME',
                                            dimension_numbers=dn)
                   + p['b_mod1'][None, :, None, None])
  pooled = lax.reduce_window(x1, -jnp.inf, lax.max,
                             (1, 1, 2, 2), (1, 1, 2, 2), 'VALID')
  feats_nhwc = jax.nn.relu(
      lax.conv_general_dilated(pooled, p['w_mod2'], (1, 1), 'SAME',
                               dimension_numbers=dn_nhwc)
      + p['b_mod2'][None, None, None, :]).astype(jnp.bfloat16)
  logits = (lax.conv_general_dilated(x, p['w_logits'], (1, 1), 'SAME',
                                     dimension_numbers=dn)
            + p['b_logits'][None, :, None, None])
  return logits, feats_nhwc


def hopfield_pebal_forward(x, p, memory_initialized=True, tile_n=None,
                           bf16_softmax_exp=True):
  duplicated = x.shape[0] == 1
  if duplicated:
    x = jnp.tile(x, (2, 1, 1, 1))
  logits, feats_nhwc = standin_deepwv3plus(x, p)
  if duplicated:
    logits, feats_nhwc = logits[:1], feats_nhwc[:1]

  B, Hf, Wf, C = feats_nhwc.shape                        # C == 128
  Hp, Wp = Hf + 2, Wf + 2                                # per-image zero pad
  Mtot = B * Hp * Wp                                     # padded pixel rows

  fd = p['w3'].shape[1]
  H = int(p['num_heads'])
  mem = p['memory_bank']
  Msz = mem.shape[0]
  HM = H * Msz

  # ---- width-scaled tiling: halo cost is ~2*G rows (G ~ Wp) per tile, so the
  #      tile grows with Wp; capped by a VMEM estimate that fits v7x (64 MiB).
  G = ((Wp + 1 + 15) // 16) * 16                         # halo guard >= Wp+1
  mrows = ((Mtot + 127) // 128) * 128
  if tile_n is None:
    tile_n = 6 * Wp                                      # halo amplification <~1.4x
  tile_n = max(128, ((int(tile_n) + 127) // 128) * 128)
  tile_n = min(tile_n, mrows)

  def vmem_bytes(tn):
    slab_ = tn + 2 * G
    b = 2 * slab_ * C * 2                                # double-buffered slabs
    b += tn * 9 * C * 2                                  # fused conv LHS (bf16)
    b += 2 * tn * C * 4                                  # conv intermediates
    b += 3 * tn * fd * 4                                 # proj / fnorm / retrieved
    b += tn * HM * 4 + tn * Msz * 4                      # sim logits + attn accum
    b += 2 * tn * (fd + 2) * 4                           # double-buffered outputs
    b += (9 * C * C + 2 * C * C + C * fd + fd * HM + Msz * fd) * 2 + HM * 4
    return b

  VMEM_BUDGET = 36 * 1024 * 1024
  while tile_n > 128 and vmem_bytes(tile_n) > VMEM_BUDGET:
    tile_n = max(128, (tile_n // 2 // 128) * 128)

  n_tiles = -(-Mtot // tile_n)
  Rtot = n_tiles * tile_n
  slab = tile_n + 2 * G
  total = Rtot + 2 * G

  # Single bf16 HBM stream of padded pixel-major feature rows
  # (== torch .view(B,C,-1).transpose(1,2) ordering with a zero ring per image).
  rows = jnp.pad(feats_nhwc, ((0, 0), (1, 1), (1, 1), (0, 0))).reshape(Mtot, C)
  rows = jnp.pad(rows, ((G, total - G - Mtot), (0, 0)))

  f32, bf = jnp.float32, jnp.bfloat16
  beta = jnp.exp(p['log_beta'])
  memT = mem.T
  # sim_h = fnorm @ (beta * W_h @ mem^T) + beta * (b_h @ mem^T)   (exact fold)
  simw = (jnp.concatenate([p['wh'][h] @ memT for h in range(H)], axis=1)
          * beta).astype(bf)
  simb = (jnp.concatenate([p['bh'][h] @ memT for h in range(H)], axis=1)
          * beta).astype(f32)
  memret = (mem / H).astype(bf)                          # mean over heads folded
  # BatchNorm scales folded into the matmul weights (exact, then bf16 cast).
  w1cat = (p['w1'].reshape(9 * C, C) * p['s1']).astype(bf)     # (1152, 128)
  w2f = (p['w2'] * p['s2']).astype(bf)
  we1f = (p['we1'] * p['se1']).astype(bf)

  weight_args = [
      w1cat, p['b1'].astype(f32),
      w2f, p['b2'].astype(f32),
      p['w3'].astype(bf), p['b3'].astype(f32),
      we1f, p['be1'].astype(f32), p['we2'].astype(f32),
      simw, simb, memret,
      p['wf1'][:, 0][None, :].astype(f32), p['wf1'][:, 1][None, :].astype(f32),
      p['bf1'][None, :].astype(f32), p['wf2'].astype(f32),
  ]
  scal = jnp.concatenate([p['be2'], p['bf2']]).astype(f32)

  def full_spec(arr):
    nd = arr.ndim
    return pl.BlockSpec(arr.shape, lambda i, _nd=nd: (0,) * _nd)

  in_specs = ([pl.BlockSpec(memory_space=pl.ANY)]        # rows (manual DMA)
              + [full_spec(w) for w in weight_args]
              + [pl.BlockSpec(memory_space=pltpu.MemorySpace.SMEM)])
  out_specs = (pl.BlockSpec((tile_n, fd), lambda i: (i, 0)),
               pl.BlockSpec((tile_n, 2), lambda i: (i, 0)))
  out_shape = (jax.ShapeDtypeStruct((Rtot, fd), jnp.float32),
               jax.ShapeDtypeStruct((Rtot, 2), jnp.float32))
  scratch_shapes = [pltpu.VMEM((2, slab, C), jnp.bfloat16),
                    pltpu.SemaphoreType.DMA((2,))]

  kernel = functools.partial(
      hopfield_pebal_kernel, tile_n=tile_n, halo_off=G, wp=Wp,
      num_heads=H, mem_size=Msz, memory_initialized=memory_initialized,
      bf16_exp=bf16_softmax_exp)

  vmem_limit = int(min(48 * 1024 * 1024,
                       max(32 * 1024 * 1024, 1.5 * vmem_bytes(tile_n))))

  feats_out, ener = pl.pallas_call(
      kernel,
      grid=(n_tiles,),
      in_specs=in_specs,
      out_specs=out_specs,
      out_shape=out_shape,
      scratch_shapes=scratch_shapes,
      compiler_params=pltpu.CompilerParams(
          # "arbitrary": the cross-iteration DMA prefetch is primed at i == 0,
          # so the whole grid must run sequentially on one core.  v5e/v6e have
          # a single TensorCore anyway.
          # TODO(synk): for v7x megacore, split work with an explicit
          # core-parallel leading axis and prime each core's first tile.
          dimension_semantics=("arbitrary",),
          vmem_limit_bytes=vmem_limit),
  )(rows, *weight_args, scal)

  def unpad(a):  # drop tile tail + per-image pad ring, restore pixel order
    return a[:Mtot].reshape(B, Hp, Wp, -1)[:, 1:-1, 1:-1, :]

  feats_out = unpad(feats_out).reshape(B * Hf * Wf, fd)
  ener = unpad(ener)
  comb = ener[..., 0].reshape(B, Hf * Wf)
  mem_e = ener[..., 1].reshape(B, Hf * Wf)
  return {"logits": logits, "energy": comb, "features": feats_out,
          "memory_energies": mem_e}


# ----------------------------------------------------------------------------
# Deterministic parameter init (synthetic weights; shapes from the module).
# ----------------------------------------------------------------------------
def init_params(key, num_classes=19, memory_size=128, feature_dim=256,
                num_heads=4, hopfield_beta=2.0):
  ks = iter(jax.random.split(key, 32))

  def nrm(shape, scale=0.05):
    return scale * jax.random.normal(next(ks), shape, jnp.float32)

  eps = 1e-5

  def bn_fold(conv_bias, c):
    # fresh BatchNorm (inference): gamma=1, beta=0, mean=0, var=1
    scale = jnp.full((1, c), 1.0 / jnp.sqrt(1.0 + eps), jnp.float32)
    return scale, scale * conv_bias[None, :]

  p = {}
  # stand-in backbone
  p['w_mod1'] = nrm((64, 3, 3, 3));   p['b_mod1'] = nrm((64,))
  p['w_mod2'] = nrm((128, 64, 3, 3)); p['b_mod2'] = nrm((128,))
  p['w_logits'] = nrm((num_classes, 3, 3, 3)); p['b_logits'] = nrm((num_classes,))
  # feature projector (3x3 conv stored tap-major: (tap, cin, cout))
  p['w1'] = nrm((9, 128, 128)); cb1 = nrm((128,)); p['s1'], p['b1'] = bn_fold(cb1, 128)
  p['w2'] = nrm((128, 128));    cb2 = nrm((128,)); p['s2'], p['b2'] = bn_fold(cb2, 128)
  p['w3'] = nrm((128, feature_dim)); p['b3'] = nrm((feature_dim,))[None, :]
  # energy head
  p['we1'] = nrm((128, 128)); cbe = nrm((128,)); p['se1'], p['be1'] = bn_fold(cbe, 128)
  p['we2'] = nrm((1, 128)); p['be2'] = nrm((1,))
  # attention heads (pre-transposed to (in, out)), one Linear per head
  p['wh'] = nrm((num_heads, feature_dim, feature_dim))
  p['bh'] = nrm((num_heads, 1, feature_dim))
  # energy fusion: Linear(2,8) + ReLU + Linear(8,1)
  p['wf1'] = nrm((8, 2)); p['bf1'] = nrm((8,))
  p['wf2'] = nrm((1, 8)); p['bf2'] = nrm((1,))
  p['log_beta'] = jnp.log(jnp.asarray(hopfield_beta, jnp.float32))
  # memory bank: unit-norm rows (as update_memory would store normalized feats)
  mb = nrm((memory_size, feature_dim), 1.0)
  p['memory_bank'] = mb / jnp.linalg.norm(mb, axis=1, keepdims=True)
  p['num_heads'] = num_heads
  return p


if __name__ == "__main__":
  key = jax.random.PRNGKey(0)
  k_x, k_p = jax.random.split(key)
  x = jax.random.normal(k_x, (2, 3, 16, 16), jnp.float32)     # NCHW input
  params = init_params(k_p)

  # A fresh module has memory_initialized=False (memory energies = 0); run with
  # the memory path enabled to exercise the Hopfield-retrieval kernel.
  # tile_n=128 so this tiny test exercises a multi-tile grid (default is
  # width-scaled and VMEM-capped).
  out = hopfield_pebal_forward(x, params, memory_initialized=True, tile_n=128)
  out = jax.block_until_ready(out)

  assert out["logits"].shape == (2, 19, 16, 16)
  assert out["energy"].shape == (2, 64)
  assert out["features"].shape == (2 * 8 * 8, 256)
  assert out["memory_energies"].shape == (2, 64)
  assert all(bool(jnp.all(jnp.isfinite(v))) for v in out.values())
  print("KERNEL_OK")
</pallas_src>

<mosaic_0001>
module attributes {stable_mosaic.version = 11 : i64} {
  func.func @hopfield_pebal_kernel(%arg0: i32, %arg1: memref<288x128xbf16, #tpu.memory_space<any>>, %arg2: memref<1152x128xbf16, #tpu.memory_space<vmem>>, %arg3: memref<1x128xf32, #tpu.memory_space<vmem>>, %arg4: memref<128x128xbf16, #tpu.memory_space<vmem>>, %arg5: memref<1x128xf32, #tpu.memory_space<vmem>>, %arg6: memref<128x256xbf16, #tpu.memory_space<vmem>>, %arg7: memref<1x256xf32, #tpu.memory_space<vmem>>, %arg8: memref<128x128xbf16, #tpu.memory_space<vmem>>, %arg9: memref<1x128xf32, #tpu.memory_space<vmem>>, %arg10: memref<1x128xf32, #tpu.memory_space<vmem>>, %arg11: memref<256x512xbf16, #tpu.memory_space<vmem>>, %arg12: memref<1x512xf32, #tpu.memory_space<vmem>>, %arg13: memref<128x256xbf16, #tpu.memory_space<vmem>>, %arg14: memref<1x8xf32, #tpu.memory_space<vmem>>, %arg15: memref<1x8xf32, #tpu.memory_space<vmem>>, %arg16: memref<1x8xf32, #tpu.memory_space<vmem>>, %arg17: memref<1x8xf32, #tpu.memory_space<vmem>>, %arg18: memref<2xf32, #tpu.memory_space<smem>>, %arg19: memref<128x256xf32, #tpu.memory_space<vmem>>, %arg20: memref<128x2xf32, #tpu.memory_space<vmem>>, %arg21: memref<2x160x128xbf16, #tpu.memory_space<vmem>>, %arg22: memref<2x!tpu.dma_semaphore, #tpu.memory_space<semaphore_mem>>) attributes {dimension_semantics = [#tpu.dimension_semantics<arbitrary>], iteration_bounds = array<i64: 2>, scalar_prefetch = 0 : i64, scratch_operands = 2 : i64, tpu.core_type = #tpu.core_type<tc>, window_params = [{}, {pipeline_mode = #tpu.pipeline_mode<synchronous>, transform_indices = @transform_1, window_bounds = array<i64: 1152, 128>}, {pipeline_mode = #tpu.pipeline_mode<synchronous>, transform_indices = @transform_2, window_bounds = array<i64: 1, 128>}, {pipeline_mode = #tpu.pipeline_mode<synchronous>, transform_indices = @transform_3, window_bounds = array<i64: 128, 128>}, {pipeline_mode = #tpu.pipeline_mode<synchronous>, transform_indices = @transform_4, window_bounds = array<i64: 1, 128>}, {pipeline_mode = #tpu.pipeline_mode<synchronous>, transform_indices = @transform_5, window_bounds = array<i64: 128, 256>}, {pipeline_mode = #tpu.pipeline_mode<synchronous>, transform_indices = @transform_6, window_bounds = array<i64: 1, 256>}, {pipeline_mode = #tpu.pipeline_mode<synchronous>, transform_indices = @transform_7, window_bounds = array<i64: 128, 128>}, {pipeline_mode = #tpu.pipeline_mode<synchronous>, transform_indices = @transform_8, window_bounds = array<i64: 1, 128>}, {pipeline_mode = #tpu.pipeline_mode<synchronous>, transform_indices = @transform_9, window_bounds = array<i64: 1, 128>}, {pipeline_mode = #tpu.pipeline_mode<synchronous>, transform_indices = @transform_10, window_bounds = array<i64: 256, 512>}, {pipeline_mode = #tpu.pipeline_mode<synchronous>, transform_indices = @transform_11, window_bounds = array<i64: 1, 512>}, {pipeline_mode = #tpu.pipeline_mode<synchronous>, transform_indices = @transform_12, window_bounds = array<i64: 128, 256>}, {pipeline_mode = #tpu.pipeline_mode<synchronous>, transform_indices = @transform_13, window_bounds = array<i64: 1, 8>}, {pipeline_mode = #tpu.pipeline_mode<synchronous>, transform_indices = @transform_14, window_bounds = array<i64: 1, 8>}, {pipeline_mode = #tpu.pipeline_mode<synchronous>, transform_indices = @transform_15, window_bounds = array<i64: 1, 8>}, {pipeline_mode = #tpu.pipeline_mode<synchronous>, transform_indices = @transform_16, window_bounds = array<i64: 1, 8>}, {transform_indices = @transform_17, window_bounds = array<i64: 2>}, {transform_indices = @transform_18, window_bounds = array<i64: 128, 256>}, {transform_indices = @transform_19, window_bounds = array<i64: 128, 2>}]} {
    %c2_i32 = arith.constant 2 : i32
    %c0_i32 = arith.constant 0 : i32
    %0 = arith.cmpi eq, %c2_i32, %c0_i32 : i32
    %c1_i32 = arith.constant 1 : i32
    %1 = arith.select %0, %c1_i32, %c2_i32 : i32
    %2 = arith.remsi %arg0, %1 : i32
    %c0_i32_0 = arith.constant 0 : i32
    %3 = arith.cmpi ne, %2, %c0_i32_0 : i32
    %c0_i32_1 = arith.constant 0 : i32
    %4 = arith.cmpi slt, %2, %c0_i32_1 : i32
    %c0_i32_2 = arith.constant 0 : i32
    %5 = arith.cmpi slt, %1, %c0_i32_2 : i32
    %6 = arith.xori %4, %5 : i1
    %7 = arith.andi %6, %3 : i1
    %8 = arith.addi %2, %1 : i32
    %9 = arith.select %7, %8, %2 : i32
    %c0_i32_3 = arith.constant 0 : i32
    %10 = arith.cmpi eq, %arg0, %c0_i32_3 : i32
    %11 = arith.extui %10 : i1 to i32
    %c0_i32_4 = arith.constant 0 : i32
    %12 = arith.cmpi ne, %11, %c0_i32_4 : i32
    scf.if %12 {
      %c0_i32_84 = arith.constant 0 : i32
      %c0_i32_85 = arith.constant 0 : i32
      %c0_i32_86 = arith.constant 0 : i32
      %c0_i32_87 = arith.constant 0 : i32
      %197 = tpu.memref_slice %arg1[%c0_i32_86, %c0_i32_87] : memref<288x128xbf16, #tpu.memory_space<any>> -> memref<160x128xbf16, #tpu.memory_space<any>>
      %c0_i32_88 = arith.constant 0 : i32
      %c0_i32_89 = arith.constant 0 : i32
      %198 = tpu.memref_slice %arg21[%c0_i32_84, %c0_i32_88, %c0_i32_89] : memref<2x160x128xbf16, #tpu.memory_space<vmem>> -> memref<1x160x128xbf16, #tpu.memory_space<vmem>>
      %199 = tpu.memref_squeeze %198 : memref<1x160x128xbf16, #tpu.memory_space<vmem>> -> memref<160x128xbf16, #tpu.memory_space<vmem>>
      %200 = tpu.memref_slice %arg22[%c0_i32_85] : memref<2x!tpu.dma_semaphore, #tpu.memory_space<semaphore_mem>> -> memref<1x!tpu.dma_semaphore, #tpu.memory_space<semaphore_mem>>
      %201 = tpu.memref_squeeze %200 : memref<1x!tpu.dma_semaphore, #tpu.memory_space<semaphore_mem>> -> memref<!tpu.dma_semaphore, #tpu.memory_space<semaphore_mem>>
      tpu.enqueue_dma source(%197 : memref<160x128xbf16, #tpu.memory_space<any>>) target(%199 : memref<160x128xbf16, #tpu.memory_space<vmem>>) target_semaphore(%201 : memref<!tpu.dma_semaphore, #tpu.memory_space<semaphore_mem>>)
    } else {
    }
    %c1_i32_5 = arith.constant 1 : i32
    %13 = arith.addi %arg0, %c1_i32_5 : i32
    %c2_i32_6 = arith.constant 2 : i32
    %14 = arith.cmpi slt, %13, %c2_i32_6 : i32
    %15 = arith.extui %14 : i1 to i32
    %c0_i32_7 = arith.constant 0 : i32
    %16 = arith.cmpi ne, %15, %c0_i32_7 : i32
    scf.if %16 {
      %c1_i32_84 = arith.constant 1 : i32
      %197 = arith.addi %arg0, %c1_i32_84 : i32
      %c128_i32_85 = arith.constant 128 : i32
      %198 = arith.muli %197, %c128_i32_85 : i32
      %199 = tpu.assume_multiple %198, 128 : i32
      %c1_i32_86 = arith.constant 1 : i32
      %200 = arith.subi %c1_i32_86, %9 : i32
      %c1_i32_87 = arith.constant 1 : i32
      %201 = arith.subi %c1_i32_87, %9 : i32
      %c0_i32_88 = arith.constant 0 : i32
      %202 = tpu.memref_slice %arg1[%199, %c0_i32_88] : memref<288x128xbf16, #tpu.memory_space<any>> -> memref<160x128xbf16, #tpu.memory_space<any>>
      %c0_i32_89 = arith.constant 0 : i32
      %c0_i32_90 = arith.constant 0 : i32
      %203 = tpu.memref_slice %arg21[%200, %c0_i32_89, %c0_i32_90] : memref<2x160x128xbf16, #tpu.memory_space<vmem>> -> memref<1x160x128xbf16, #tpu.memory_space<vmem>>
      %204 = tpu.memref_squeeze %203 : memref<1x160x128xbf16, #tpu.memory_space<vmem>> -> memref<160x128xbf16, #tpu.memory_space<vmem>>
      %205 = tpu.memref_slice %arg22[%201] : memref<2x!tpu.dma_semaphore, #tpu.memory_space<semaphore_mem>> -> memref<1x!tpu.dma_semaphore, #tpu.memory_space<semaphore_mem>>
      %206 = tpu.memref_squeeze %205 : memref<1x!tpu.dma_semaphore, #tpu.memory_space<semaphore_mem>> -> memref<!tpu.dma_semaphore, #tpu.memory_space<semaphore_mem>>
      tpu.enqueue_dma source(%202 : memref<160x128xbf16, #tpu.memory_space<any>>) target(%204 : memref<160x128xbf16, #tpu.memory_space<vmem>>) target_semaphore(%206 : memref<!tpu.dma_semaphore, #tpu.memory_space<semaphore_mem>>)
    } else {
    }
    %c128_i32 = arith.constant 128 : i32
    %17 = arith.muli %arg0, %c128_i32 : i32
    %18 = tpu.assume_multiple %17, 128 : i32
    %c0_i32_8 = arith.constant 0 : i32
    %19 = tpu.memref_slice %arg1[%18, %c0_i32_8] : memref<288x128xbf16, #tpu.memory_space<any>> -> memref<160x128xbf16, #tpu.memory_space<any>>
    %c0_i32_9 = arith.constant 0 : i32
    %c0_i32_10 = arith.constant 0 : i32
    %20 = tpu.memref_slice %arg21[%9, %c0_i32_9, %c0_i32_10] : memref<2x160x128xbf16, #tpu.memory_space<vmem>> -> memref<1x160x128xbf16, #tpu.memory_space<vmem>>
    %21 = tpu.memref_squeeze %20 : memref<1x160x128xbf16, #tpu.memory_space<vmem>> -> memref<160x128xbf16, #tpu.memory_space<vmem>>
    %22 = tpu.memref_slice %arg22[%9] : memref<2x!tpu.dma_semaphore, #tpu.memory_space<semaphore_mem>> -> memref<1x!tpu.dma_semaphore, #tpu.memory_space<semaphore_mem>>
    %23 = tpu.memref_squeeze %22 : memref<1x!tpu.dma_semaphore, #tpu.memory_space<semaphore_mem>> -> memref<!tpu.dma_semaphore, #tpu.memory_space<semaphore_mem>>
    tpu.wait_dma2 semaphore(%23 : memref<!tpu.dma_semaphore, #tpu.memory_space<semaphore_mem>>) src(%19 : memref<160x128xbf16, #tpu.memory_space<any>>) dst(%21 : memref<160x128xbf16, #tpu.memory_space<vmem>>)
    %24 = arith.index_cast %9 : i32 to index
    %c5 = arith.constant 5 : index
    %c0 = arith.constant 0 : index
    %25 = vector.load %arg21[%24, %c5, %c0] : memref<2x160x128xbf16, #tpu.memory_space<vmem>>, vector<1x128x128xbf16>
    %26 = vector.shape_cast %25 : vector<1x128x128xbf16> to vector<128x128xbf16>
    %27 = arith.index_cast %9 : i32 to index
    %c6 = arith.constant 6 : index
    %c0_11 = arith.constant 0 : index
    %28 = vector.load %arg21[%27, %c6, %c0_11] : memref<2x160x128xbf16, #tpu.memory_space<vmem>>, vector<1x128x128xbf16>
    %29 = vector.shape_cast %28 : vector<1x128x128xbf16> to vector<128x128xbf16>
    %30 = arith.index_cast %9 : i32 to index
    %c7 = arith.constant 7 : index
    %c0_12 = arith.constant 0 : index
    %31 = vector.load %arg21[%30, %c7, %c0_12] : memref<2x160x128xbf16, #tpu.memory_space<vmem>>, vector<1x128x128xbf16>
    %32 = vector.shape_cast %31 : vector<1x128x128xbf16> to vector<128x128xbf16>
    %33 = arith.index_cast %9 : i32 to index
    %c15 = arith.constant 15 : index
    %c0_13 = arith.constant 0 : index
    %34 = vector.load %arg21[%33, %c15, %c0_13] : memref<2x160x128xbf16, #tpu.memory_space<vmem>>, vector<1x128x128xbf16>
    %35 = vector.shape_cast %34 : vector<1x128x128xbf16> to vector<128x128xbf16>
    %36 = arith.index_cast %9 : i32 to index
    %c16 = arith.constant 16 : index
    %c0_14 = arith.constant 0 : index
    %37 = vector.load %arg21[%36, %c16, %c0_14] : memref<2x160x128xbf16, #tpu.memory_space<vmem>>, vector<1x128x128xbf16>
    %38 = vector.shape_cast %37 : vector<1x128x128xbf16> to vector<128x128xbf16>
    %39 = arith.index_cast %9 : i32 to index
    %c17 = arith.constant 17 : index
    %c0_15 = arith.constant 0 : index
    %40 = vector.load %arg21[%39, %c17, %c0_15] : memref<2x160x128xbf16, #tpu.memory_space<vmem>>, vector<1x128x128xbf16>
    %41 = vector.shape_cast %40 : vector<1x128x128xbf16> to vector<128x128xbf16>
    %42 = arith.index_cast %9 : i32 to index
    %c25 = arith.constant 25 : index
    %c0_16 = arith.constant 0 : index
    %43 = vector.load %arg21[%42, %c25, %c0_16] : memref<2x160x128xbf16, #tpu.memory_space<vmem>>, vector<1x128x128xbf16>
    %44 = vector.shape_cast %43 : vector<1x128x128xbf16> to vector<128x128xbf16>
    %45 = arith.index_cast %9 : i32 to index
    %c26 = arith.constant 26 : index
    %c0_17 = arith.constant 0 : index
    %46 = vector.load %arg21[%45, %c26, %c0_17] : memref<2x160x128xbf16, #tpu.memory_space<vmem>>, vector<1x128x128xbf16>
    %47 = vector.shape_cast %46 : vector<1x128x128xbf16> to vector<128x128xbf16>
    %48 = arith.index_cast %9 : i32 to index
    %c27 = arith.constant 27 : index
    %c0_18 = arith.constant 0 : index
    %49 = vector.load %arg21[%48, %c27, %c0_18] : memref<2x160x128xbf16, #tpu.memory_space<vmem>>, vector<1x128x128xbf16>
    %50 = vector.shape_cast %49 : vector<1x128x128xbf16> to vector<128x128xbf16>
    %51 = tpu.concatenate %26, %29, %32, %35, %38, %41, %44, %47, %50 in 1 : vector<128x128xbf16>, vector<128x128xbf16>, vector<128x128xbf16>, vector<128x128xbf16>, vector<128x128xbf16>, vector<128x128xbf16>, vector<128x128xbf16>, vector<128x128xbf16>, vector<128x128xbf16> -> vector<128x1152xbf16>
    %c0_19 = arith.constant 0 : index
    %c0_20 = arith.constant 0 : index
    %52 = vector.load %arg2[%c0_19, %c0_20] : memref<1152x128xbf16, #tpu.memory_space<vmem>>, vector<1152x128xbf16>
    %cst = arith.constant dense<0.000000e+00> : vector<128x128xf32>
    %53 = tpu.matmul %51, %52, %cst {dimension_numbers = #tpu.dot_dimension_numbers<[1], [0], [0], [1], [0, 0, 1, 1], [], []>} : vector<128x1152xbf16>, vector<1152x128xbf16>, vector<128x128xf32> -> vector<128x128xf32>
    %c0_21 = arith.constant 0 : index
    %c0_22 = arith.constant 0 : index
    %54 = vector.load %arg3[%c0_21, %c0_22] : memref<1x128xf32, #tpu.memory_space<vmem>>, vector<1x128xf32>
    %55 = vector.broadcast %54 : vector<1x128xf32> to vector<128x128xf32>
    %56 = arith.addf %53, %55 : vector<128x128xf32>
    %cst_23 = arith.constant 0.000000e+00 : f32
    %57 = vector.broadcast %cst_23 : f32 to vector<128x128xf32>
    %58 = arith.maximumf %56, %57 : vector<128x128xf32>
    %59 = arith.truncf %58 : vector<128x128xf32> to vector<128x128xbf16>
    %c0_24 = arith.constant 0 : index
    %c0_25 = arith.constant 0 : index
    %60 = vector.load %arg4[%c0_24, %c0_25] : memref<128x128xbf16, #tpu.memory_space<vmem>>, vector<128x128xbf16>
    %cst_26 = arith.constant dense<0.000000e+00> : vector<128x128xf32>
    %61 = tpu.matmul %59, %60, %cst_26 {dimension_numbers = #tpu.dot_dimension_numbers<[1], [0], [0], [1], [0, 0, 1, 1], [], []>} : vector<128x128xbf16>, vector<128x128xbf16>, vector<128x128xf32> -> vector<128x128xf32>
    %c0_27 = arith.constant 0 : index
    %c0_28 = arith.constant 0 : index
    %62 = vector.load %arg5[%c0_27, %c0_28] : memref<1x128xf32, #tpu.memory_space<vmem>>, vector<1x128xf32>
    %63 = vector.broadcast %62 : vector<1x128xf32> to vector<128x128xf32>
    %64 = arith.addf %61, %63 : vector<128x128xf32>
    %cst_29 = arith.constant 0.000000e+00 : f32
    %65 = vector.broadcast %cst_29 : f32 to vector<128x128xf32>
    %66 = arith.maximumf %64, %65 : vector<128x128xf32>
    %67 = arith.truncf %66 : vector<128x128xf32> to vector<128x128xbf16>
    %c0_30 = arith.constant 0 : index
    %c0_31 = arith.constant 0 : index
    %68 = vector.load %arg6[%c0_30, %c0_31] : memref<128x256xbf16, #tpu.memory_space<vmem>>, vector<128x256xbf16>
    %cst_32 = arith.constant dense<0.000000e+00> : vector<128x256xf32>
    %69 = tpu.matmul %67, %68, %cst_32 {dimension_numbers = #tpu.dot_dimension_numbers<[1], [0], [0], [1], [0, 0, 1, 1], [], []>} : vector<128x128xbf16>, vector<128x256xbf16>, vector<128x256xf32> -> vector<128x256xf32>
    %c0_33 = arith.constant 0 : index
    %c0_34 = arith.constant 0 : index
    %70 = vector.load %arg7[%c0_33, %c0_34] : memref<1x256xf32, #tpu.memory_space<vmem>>, vector<1x256xf32>
    %71 = vector.broadcast %70 : vector<1x256xf32> to vector<128x256xf32>
    %72 = arith.addf %69, %71 : vector<128x256xf32>
    %73 = arith.mulf %72, %72 : vector<128x256xf32>
    %cst_35 = arith.constant dense<0.000000e+00> : vector<128xf32>
    %74 = vector.multi_reduction <add>, %73, %cst_35 [1] : vector<128x256xf32> to vector<128xf32>
    %75 = vector.shape_cast %74 : vector<128xf32> to vector<128x1xf32>
    %cst_36 = arith.constant 1.000000e-24 : f32
    %76 = vector.broadcast %cst_36 : f32 to vector<128x1xf32>
    %77 = arith.maximumf %75, %76 : vector<128x1xf32>
    %78 = math.rsqrt %77 : vector<128x1xf32>
    %79 = vector.broadcast %78 : vector<128x1xf32> to vector<128x256xf32>
    %80 = arith.mulf %72, %79 : vector<128x256xf32>
    %c0_37 = arith.constant 0 : index
    %c0_38 = arith.constant 0 : index
    %81 = vector.load %arg19[%c0_37, %c0_38] : memref<128x256xf32, #tpu.memory_space<vmem>>, vector<128x256xf32>
    tpu.vector_store %arg19[%c0_37, %c0_38], %80 {strides = array<i32>} : memref<128x256xf32, #tpu.memory_space<vmem>>, vector<128x256xf32>,
    %82 = vector.extract_strided_slice %51 {offsets = [0, 512], sizes = [128, 128], strides = [1, 1]} : vector<128x1152xbf16> to vector<128x128xbf16>
    %c0_39 = arith.constant 0 : index
    %c0_40 = arith.constant 0 : index
    %83 = vector.load %arg8[%c0_39, %c0_40] : memref<128x128xbf16, #tpu.memory_space<vmem>>, vector<128x128xbf16>
    %cst_41 = arith.constant dense<0.000000e+00> : vector<128x128xf32>
    %84 = tpu.matmul %82, %83, %cst_41 {dimension_numbers = #tpu.dot_dimension_numbers<[1], [0], [0], [1], [0, 0, 1, 1], [], []>} : vector<128x128xbf16>, vector<128x128xbf16>, vector<128x128xf32> -> vector<128x128xf32>
    %c0_42 = arith.constant 0 : index
    %c0_43 = arith.constant 0 : index
    %85 = vector.load %arg9[%c0_42, %c0_43] : memref<1x128xf32, #tpu.memory_space<vmem>>, vector<1x128xf32>
    %86 = vector.broadcast %85 : vector<1x128xf32> to vector<128x128xf32>
    %87 = arith.addf %84, %86 : vector<128x128xf32>
    %cst_44 = arith.constant 0.000000e+00 : f32
    %88 = vector.broadcast %cst_44 : f32 to vector<128x128xf32>
    %89 = arith.maximumf %87, %88 : vector<128x128xf32>
    %c0_45 = arith.constant 0 : index
    %c0_46 = arith.constant 0 : index
    %90 = vector.load %arg10[%c0_45, %c0_46] : memref<1x128xf32, #tpu.memory_space<vmem>>, vector<1x128xf32>
    %91 = vector.broadcast %90 : vector<1x128xf32> to vector<128x128xf32>
    %92 = arith.mulf %89, %91 : vector<128x128xf32>
    %cst_47 = arith.constant dense<0.000000e+00> : vector<128xf32>
    %93 = vector.multi_reduction <add>, %92, %cst_47 [1] : vector<128x128xf32> to vector<128xf32>
    %94 = vector.shape_cast %93 : vector<128xf32> to vector<128x1xf32>
    %c0_48 = arith.constant 0 : index
    %95 = memref.load %arg18[%c0_48] : memref<2xf32, #tpu.memory_space<smem>>
    %96 = vector.broadcast %95 : f32 to vector<128x1xf32>
    %97 = arith.addf %94, %96 : vector<128x1xf32>
    %98 = arith.truncf %80 : vector<128x256xf32> to vector<128x256xbf16>
    %c0_49 = arith.constant 0 : index
    %c0_50 = arith.constant 0 : index
    %99 = vector.load %arg11[%c0_49, %c0_50] : memref<256x512xbf16, #tpu.memory_space<vmem>>, vector<256x512xbf16>
    %cst_51 = arith.constant dense<0.000000e+00> : vector<128x512xf32>
    %100 = tpu.matmul %98, %99, %cst_51 {dimension_numbers = #tpu.dot_dimension_numbers<[1], [0], [0], [1], [0, 0, 1, 1], [], []>} : vector<128x256xbf16>, vector<256x512xbf16>, vector<128x512xf32> -> vector<128x512xf32>
    %c0_52 = arith.constant 0 : index
    %c0_53 = arith.constant 0 : index
    %101 = vector.load %arg12[%c0_52, %c0_53] : memref<1x512xf32, #tpu.memory_space<vmem>>, vector<1x512xf32>
    %102 = vector.broadcast %101 : vector<1x512xf32> to vector<128x512xf32>
    %103 = arith.addf %100, %102 : vector<128x512xf32>
    %cst_54 = arith.constant 0.000000e+00 : f32
    %104 = vector.broadcast %cst_54 : f32 to vector<128x128xf32>
    %105 = vector.extract_strided_slice %103 {offsets = [0, 0], sizes = [128, 128], strides = [1, 1]} : vector<128x512xf32> to vector<128x128xf32>
    %cst_55 = arith.constant dense<0xFF800000> : vector<128xf32>
    %106 = vector.multi_reduction <maximumf>, %105, %cst_55 [1] : vector<128x128xf32> to vector<128xf32>
    %107 = vector.shape_cast %106 : vector<128xf32> to vector<128x1xf32>
    %108 = vector.broadcast %107 : vector<128x1xf32> to vector<128x128xf32>
    %109 = arith.subf %105, %108 : vector<128x128xf32>
    %110 = arith.truncf %109 : vector<128x128xf32> to vector<128x128xbf16>
    %111 = math.exp %110 : vector<128x128xbf16>
    %112 = arith.extf %111 : vector<128x128xbf16> to vector<128x128xf32>
    %cst_56 = arith.constant dense<0.000000e+00> : vector<128xf32>
    %113 = vector.multi_reduction <add>, %112, %cst_56 [1] : vector<128x128xf32> to vector<128xf32>
    %114 = vector.shape_cast %113 : vector<128xf32> to vector<128x1xf32>
    %cst_57 = arith.constant 1.000000e+00 : f32
    %115 = vector.broadcast %cst_57 : f32 to vector<128x1xf32>
    %116 = arith.divf %115, %114 : vector<128x1xf32>
    %117 = vector.broadcast %116 : vector<128x1xf32> to vector<128x128xf32>
    %118 = arith.mulf %112, %117 : vector<128x128xf32>
    %119 = arith.addf %104, %118 : vector<128x128xf32>
    %120 = vector.extract_strided_slice %103 {offsets = [0, 128], sizes = [128, 128], strides = [1, 1]} : vector<128x512xf32> to vector<128x128xf32>
    %cst_58 = arith.constant dense<0xFF800000> : vector<128xf32>
    %121 = vector.multi_reduction <maximumf>, %120, %cst_58 [1] : vector<128x128xf32> to vector<128xf32>
    %122 = vector.shape_cast %121 : vector<128xf32> to vector<128x1xf32>
    %123 = vector.broadcast %122 : vector<128x1xf32> to vector<128x128xf32>
    %124 = arith.subf %120, %123 : vector<128x128xf32>
    %125 = arith.truncf %124 : vector<128x128xf32> to vector<128x128xbf16>
    %126 = math.exp %125 : vector<128x128xbf16>
    %127 = arith.extf %126 : vector<128x128xbf16> to vector<128x128xf32>
    %cst_59 = arith.constant dense<0.000000e+00> : vector<128xf32>
    %128 = vector.multi_reduction <add>, %127, %cst_59 [1] : vector<128x128xf32> to vector<128xf32>
    %129 = vector.shape_cast %128 : vector<128xf32> to vector<128x1xf32>
    %cst_60 = arith.constant 1.000000e+00 : f32
    %130 = vector.broadcast %cst_60 : f32 to vector<128x1xf32>
    %131 = arith.divf %130, %129 : vector<128x1xf32>
    %132 = vector.broadcast %131 : vector<128x1xf32> to vector<128x128xf32>
    %133 = arith.mulf %127, %132 : vector<128x128xf32>
    %134 = arith.addf %119, %133 : vector<128x128xf32>
    %135 = vector.extract_strided_slice %103 {offsets = [0, 256], sizes = [128, 128], strides = [1, 1]} : vector<128x512xf32> to vector<128x128xf32>
    %cst_61 = arith.constant dense<0xFF800000> : vector<128xf32>
    %136 = vector.multi_reduction <maximumf>, %135, %cst_61 [1] : vector<128x128xf32> to vector<128xf32>
    %137 = vector.shape_cast %136 : vector<128xf32> to vector<128x1xf32>
    %138 = vector.broadcast %137 : vector<128x1xf32> to vector<128x128xf32>
    %139 = arith.subf %135, %138 : vector<128x128xf32>
    %140 = arith.truncf %139 : vector<128x128xf32> to vector<128x128xbf16>
    %141 = math.exp %140 : vector<128x128xbf16>
    %142 = arith.extf %141 : vector<128x128xbf16> to vector<128x128xf32>
    %cst_62 = arith.constant dense<0.000000e+00> : vector<128xf32>
    %143 = vector.multi_reduction <add>, %142, %cst_62 [1] : vector<128x128xf32> to vector<128xf32>
    %144 = vector.shape_cast %143 : vector<128xf32> to vector<128x1xf32>
    %cst_63 = arith.constant 1.000000e+00 : f32
    %145 = vector.broadcast %cst_63 : f32 to vector<128x1xf32>
    %146 = arith.divf %145, %144 : vector<128x1xf32>
    %147 = vector.broadcast %146 : vector<128x1xf32> to vector<128x128xf32>
    %148 = arith.mulf %142, %147 : vector<128x128xf32>
    %149 = arith.addf %134, %148 : vector<128x128xf32>
    %150 = vector.extract_strided_slice %103 {offsets = [0, 384], sizes = [128, 128], strides = [1, 1]} : vector<128x512xf32> to vector<128x128xf32>
    %cst_64 = arith.constant dense<0xFF800000> : vector<128xf32>
    %151 = vector.multi_reduction <maximumf>, %150, %cst_64 [1] : vector<128x128xf32> to vector<128xf32>
    %152 = vector.shape_cast %151 : vector<128xf32> to vector<128x1xf32>
    %153 = vector.broadcast %152 : vector<128x1xf32> to vector<128x128xf32>
    %154 = arith.subf %150, %153 : vector<128x128xf32>
    %155 = arith.truncf %154 : vector<128x128xf32> to vector<128x128xbf16>
    %156 = math.exp %155 : vector<128x128xbf16>
    %157 = arith.extf %156 : vector<128x128xbf16> to vector<128x128xf32>
    %cst_65 = arith.constant dense<0.000000e+00> : vector<128xf32>
    %158 = vector.multi_reduction <add>, %157, %cst_65 [1] : vector<128x128xf32> to vector<128xf32>
    %159 = vector.shape_cast %158 : vector<128xf32> to vector<128x1xf32>
    %cst_66 = arith.constant 1.000000e+00 : f32
    %160 = vector.broadcast %cst_66 : f32 to vector<128x1xf32>
    %161 = arith.divf %160, %159 : vector<128x1xf32>
    %162 = vector.broadcast %161 : vector<128x1xf32> to vector<128x128xf32>
    %163 = arith.mulf %157, %162 : vector<128x128xf32>
    %164 = arith.addf %149, %163 : vector<128x128xf32>
    %165 = arith.truncf %164 : vector<128x128xf32> to vector<128x128xbf16>
    %c0_67 = arith.constant 0 : index
    %c0_68 = arith.constant 0 : index
    %166 = vector.load %arg13[%c0_67, %c0_68] : memref<128x256xbf16, #tpu.memory_space<vmem>>, vector<128x256xbf16>
    %cst_69 = arith.constant dense<0.000000e+00> : vector<128x256xf32>
    %167 = tpu.matmul %165, %166, %cst_69 {dimension_numbers = #tpu.dot_dimension_numbers<[1], [0], [0], [1], [0, 0, 1, 1], [], []>} : vector<128x128xbf16>, vector<128x256xbf16>, vector<128x256xf32> -> vector<128x256xf32>
    %168 = arith.mulf %80, %167 : vector<128x256xf32>
    %cst_70 = arith.constant dense<0.000000e+00> : vector<128xf32>
    %169 = vector.multi_reduction <add>, %168, %cst_70 [1] : vector<128x256xf32> to vector<128xf32>
    %170 = vector.shape_cast %169 : vector<128xf32> to vector<128x1xf32>
    %cst_71 = arith.constant 1.000000e+00 : f32
    %171 = vector.broadcast %cst_71 : f32 to vector<128x1xf32>
    %172 = arith.subf %171, %170 : vector<128x1xf32>
    %c0_72 = arith.constant 0 : index
    %c0_73 = arith.constant 0 : index
    %173 = vector.load %arg14[%c0_72, %c0_73] : memref<1x8xf32, #tpu.memory_space<vmem>>, vector<1x8xf32>
    %174 = vector.broadcast %97 : vector<128x1xf32> to vector<128x8xf32>
    %175 = vector.broadcast %173 : vector<1x8xf32> to vector<128x8xf32>
    %176 = arith.mulf %174, %175 : vector<128x8xf32>
    %c0_74 = arith.constant 0 : index
    %c0_75 = arith.constant 0 : index
    %177 = vector.load %arg15[%c0_74, %c0_75] : memref<1x8xf32, #tpu.memory_space<vmem>>, vector<1x8xf32>
    %178 = vector.broadcast %172 : vector<128x1xf32> to vector<128x8xf32>
    %179 = vector.broadcast %177 : vector<1x8xf32> to vector<128x8xf32>
    %180 = arith.mulf %178, %179 : vector<128x8xf32>
    %181 = arith.addf %176, %180 : vector<128x8xf32>
    %c0_76 = arith.constant 0 : index
    %c0_77 = arith.constant 0 : index
    %182 = vector.load %arg16[%c0_76, %c0_77] : memref<1x8xf32, #tpu.memory_space<vmem>>, vector<1x8xf32>
    %183 = vector.broadcast %182 : vector<1x8xf32> to vector<128x8xf32>
    %184 = arith.addf %181, %183 : vector<128x8xf32>
    %cst_78 = arith.constant 0.000000e+00 : f32
    %185 = vector.broadcast %cst_78 : f32 to vector<128x8xf32>
    %186 = arith.maximumf %184, %185 : vector<128x8xf32>
    %c0_79 = arith.constant 0 : index
    %c0_80 = arith.constant 0 : index
    %187 = vector.load %arg17[%c0_79, %c0_80] : memref<1x8xf32, #tpu.memory_space<vmem>>, vector<1x8xf32>
    %188 = vector.broadcast %187 : vector<1x8xf32> to vector<128x8xf32>
    %189 = arith.mulf %186, %188 : vector<128x8xf32>
    %cst_81 = arith.constant dense<0.000000e+00> : vector<128xf32>
    %190 = vector.multi_reduction <add>, %189, %cst_81 [1] : vector<128x8xf32> to vector<128xf32>
    %191 = vector.shape_cast %190 : vector<128xf32> to vector<128x1xf32>
    %c1 = arith.constant 1 : index
    %192 = memref.load %arg18[%c1] : memref<2xf32, #tpu.memory_space<smem>>
    %193 = vector.broadcast %192 : f32 to vector<128x1xf32>
    %194 = arith.addf %191, %193 : vector<128x1xf32>
    %195 = tpu.concatenate %194, %172 in 1 : vector<128x1xf32>, vector<128x1xf32> -> vector<128x2xf32>
    %c0_82 = arith.constant 0 : index
    %c0_83 = arith.constant 0 : index
    %196 = vector.load %arg20[%c0_82, %c0_83] : memref<128x2xf32, #tpu.memory_space<vmem>>, vector<128x2xf32>
    tpu.vector_store %arg20[%c0_82, %c0_83], %195 {strides = array<i32>} : memref<128x2xf32, #tpu.memory_space<vmem>>, vector<128x2xf32>,
    return
  }
  func.func @transform_1(%arg0: i32) -> (i32, i32) {
    %c0_i32 = arith.constant 0 : i32
    %c0_i32_0 = arith.constant 0 : i32
    %c0_i32_1 = arith.constant 0 : i32
    return %c0_i32, %c0_i32_0 : i32, i32
  }
  func.func @transform_2(%arg0: i32) -> (i32, i32) {
    %c0_i32 = arith.constant 0 : i32
    %c0_i32_0 = arith.constant 0 : i32
    %c0_i32_1 = arith.constant 0 : i32
    return %c0_i32, %c0_i32_0 : i32, i32
  }
  func.func @transform_3(%arg0: i32) -> (i32, i32) {
    %c0_i32 = arith.constant 0 : i32
    %c0_i32_0 = arith.constant 0 : i32
    %c0_i32_1 = arith.constant 0 : i32
    return %c0_i32, %c0_i32_0 : i32, i32
  }
  func.func @transform_4(%arg0: i32) -> (i32, i32) {
    %c0_i32 = arith.constant 0 : i32
    %c0_i32_0 = arith.constant 0 : i32
    %c0_i32_1 = arith.constant 0 : i32
    return %c0_i32, %c0_i32_0 : i32, i32
  }
  func.func @transform_5(%arg0: i32) -> (i32, i32) {
    %c0_i32 = arith.constant 0 : i32
    %c0_i32_0 = arith.constant 0 : i32
    %c0_i32_1 = arith.constant 0 : i32
    return %c0_i32, %c0_i32_0 : i32, i32
  }
  func.func @transform_6(%arg0: i32) -> (i32, i32) {
    %c0_i32 = arith.constant 0 : i32
    %c0_i32_0 = arith.constant 0 : i32
    %c0_i32_1 = arith.constant 0 : i32
    return %c0_i32, %c0_i32_0 : i32, i32
  }
  func.func @transform_7(%arg0: i32) -> (i32, i32) {
    %c0_i32 = arith.constant 0 : i32
    %c0_i32_0 = arith.constant 0 : i32
    %c0_i32_1 = arith.constant 0 : i32
    return %c0_i32, %c0_i32_0 : i32, i32
  }
  func.func @transform_8(%arg0: i32) -> (i32, i32) {
    %c0_i32 = arith.constant 0 : i32
    %c0_i32_0 = arith.constant 0 : i32
    %c0_i32_1 = arith.constant 0 : i32
    return %c0_i32, %c0_i32_0 : i32, i32
  }
  func.func @transform_9(%arg0: i32) -> (i32, i32) {
    %c0_i32 = arith.constant 0 : i32
    %c0_i32_0 = arith.constant 0 : i32
    %c0_i32_1 = arith.constant 0 : i32
    return %c0_i32, %c0_i32_0 : i32, i32
  }
  func.func @transform_10(%arg0: i32) -> (i32, i32) {
    %c0_i32 = arith.constant 0 : i32
    %c0_i32_0 = arith.constant 0 : i32
    %c0_i32_1 = arith.constant 0 : i32
    return %c0_i32, %c0_i32_0 : i32, i32
  }
  func.func @transform_11(%arg0: i32) -> (i32, i32) {
    %c0_i32 = arith.constant 0 : i32
    %c0_i32_0 = arith.constant 0 : i32
    %c0_i32_1 = arith.constant 0 : i32
    return %c0_i32, %c0_i32_0 : i32, i32
  }
  func.func @transform_12(%arg0: i32) -> (i32, i32) {
    %c0_i32 = arith.constant 0 : i32
    %c0_i32_0 = arith.constant 0 : i32
    %c0_i32_1 = arith.constant 0 : i32
    return %c0_i32, %c0_i32_0 : i32, i32
  }
  func.func @transform_13(%arg0: i32) -> (i32, i32) {
    %c0_i32 = arith.constant 0 : i32
    %c0_i32_0 = arith.constant 0 : i32
    %c0_i32_1 = arith.constant 0 : i32
    return %c0_i32, %c0_i32_0 : i32, i32
  }
  func.func @transform_14(%arg0: i32) -> (i32, i32) {
    %c0_i32 = arith.constant 0 : i32
    %c0_i32_0 = arith.constant 0 : i32
    %c0_i32_1 = arith.constant 0 : i32
    return %c0_i32, %c0_i32_0 : i32, i32
  }
  func.func @transform_15(%arg0: i32) -> (i32, i32) {
    %c0_i32 = arith.constant 0 : i32
    %c0_i32_0 = arith.constant 0 : i32
    %c0_i32_1 = arith.constant 0 : i32
    return %c0_i32, %c0_i32_0 : i32, i32
  }
  func.func @transform_16(%arg0: i32) -> (i32, i32) {
    %c0_i32 = arith.constant 0 : i32
    %c0_i32_0 = arith.constant 0 : i32
    %c0_i32_1 = arith.constant 0 : i32
    return %c0_i32, %c0_i32_0 : i32, i32
  }
  func.func @transform_17(%arg0: i32) -> i32 {
    %c0_i32 = arith.constant 0 : i32
    %c0_i32_0 = arith.constant 0 : i32
    return %c0_i32 : i32
  }
  func.func @transform_18(%arg0: i32) -> (i32, i32) {
    %c0_i32 = arith.constant 0 : i32
    %c0_i32_0 = arith.constant 0 : i32
    return %arg0, %c0_i32 : i32, i32
  }
  func.func @transform_19(%arg0: i32) -> (i32, i32) {
    %c0_i32 = arith.constant 0 : i32
    %c0_i32_0 = arith.constant 0 : i32
    return %arg0, %c0_i32 : i32, i32
  }
}

</mosaic_0001>

<llo_original>
// kernel: tpu_custom_call.1
$region0: #{tpu_custom_call.1}
  #allocation0 [shape = 'u32[]', space=smem, size = 0x4, offset = 0x4, fixed_abs, tag = 'smem constant byte address 0x4 - core index']
  #allocation1 [shape = 'u32[72,128]{1,0:T(1,128)}', space=vmem, size = 0x9000, scoped, tag = 'internal scratch']
  #allocation2 [shape = 'bf16[2,160,128]{2,1,0:T(8,128)(2,1)}', space=vmem, size = 0x14000, scoped, tag = 'scratch operand']
  #allocation3 [shape = 's32[2]{0}', space=sflag, size = 0x8, scoped, tag = 'scratch operand']
  #allocation21 [shape = 's32[]', space=sflag, size = 0x4, offset = 0, fixed_abs, tag = 'sflag constant byte address 0x0 - dummy sync flag']
  #allocation22 [shape = 's32[]', space=sflag, size = 0x4, offset = 0, fixed_abs, tag = 'sflag constant byte address 0x0 - dummy sync flag']
  #allocation23 [shape = 'u32[]', space=smem, size = 0x4, offset = 0x44, fixed_abs, tag = 'smem constant byte address 0x44 - assertion arg 0']
  #allocation24 [shape = 'u32[]', space=smem, size = 0x4, offset = 0x48, fixed_abs, tag = 'smem constant byte address 0x48 - assertion arg 1']
  #allocation25 [shape = 's32[]', space=sflag, size = 0x4, offset = 0, fixed_abs, tag = 'sflag constant byte address 0x0 - dummy sync flag']
  #allocation26 [shape = 's32[]', space=sflag, size = 0x4, offset = 0, fixed_abs, tag = 'sflag constant byte address 0x0 - dummy sync flag']
  %s0 = inlined_call_operand.hbm [shape: bf16[288,128], index: 0, kind: input, shape index: {}]
  %s1 = inlined_call_operand.hbm [shape: bf16[1152,128], index: 1, kind: input, shape index: {}]
  %s2 = inlined_call_operand.vmem [shape: f32[1,128], index: 2, kind: input, shape index: {}]
  %s3 = inlined_call_operand.hbm [shape: bf16[128,128], index: 3, kind: input, shape index: {}]
  %s4 = inlined_call_operand.hbm [shape: f32[1,128], index: 4, kind: input, shape index: {}]
  %s5 = inlined_call_operand.hbm [shape: bf16[128,256], index: 5, kind: input, shape index: {}]
  %s6 = inlined_call_operand.vmem [shape: f32[1,256], index: 6, kind: input, shape index: {}]
  %s7 = inlined_call_operand.hbm [shape: bf16[128,128], index: 7, kind: input, shape index: {}]
  %s8 = inlined_call_operand.hbm [shape: f32[1,128], index: 8, kind: input, shape index: {}]
  %s9 = inlined_call_operand.vmem [shape: f32[1,128], index: 9, kind: input, shape index: {}]
  %s10 = inlined_call_operand.hbm [shape: bf16[256,512], index: 10, kind: input, shape index: {}]
  %s11 = inlined_call_operand.vmem [shape: f32[1,512], index: 11, kind: input, shape index: {}]
  %s12 = inlined_call_operand.hbm [shape: bf16[128,256], index: 12, kind: input, shape index: {}]
  %s13 = inlined_call_operand.vmem [shape: f32[1,8], index: 13, kind: input, shape index: {}]
  %s14 = inlined_call_operand.vmem [shape: f32[1,8], index: 14, kind: input, shape index: {}]
  %s15 = inlined_call_operand.vmem [shape: f32[1,8], index: 15, kind: input, shape index: {}]
  %s16 = inlined_call_operand.vmem [shape: f32[1,8], index: 16, kind: input, shape index: {}]
  %s17 = inlined_call_operand.vmem [shape: f32[2], index: 17, kind: input, shape index: {}]
  %s18 = inlined_call_operand.hbm [shape: f32[256,256], index: 18, kind: output, shape index: {0}]
  %s19 = inlined_call_operand.vmem [shape: f32[256,2], index: 19, kind: output, shape index: {1}]
  %20 = xla_tuple %s18, %s19
  %s21 = sld [smem:[#allocation0]]
  $region161: #{tpu_custom_call.1} parent=0
    _
  %s23 = ssub.s32 1, %s21
  %s24 = scalar_select 0, %s23, %s21
  $region1: #{tpu_custom_call.1} parent=0
    #allocation4 [shape = 'u8[294912]{0}', space=vmem, size = 0x48000, scoped, tag = 'input window, operand 1, single buffered']
    #allocation5 [shape = 's32[2]{0}', space=sflag, size = 0x8, scoped, tag = 'scoped memory for tpu_custom_call.1']
    #allocation6 [shape = 's32[2]{0}', space=sflag, size = 0x8, scoped, tag = 'scoped memory for tpu_custom_call.1']
    #allocation7 [shape = 's32[2]{0}', space=sflag, size = 0x8, scoped, tag = 'scoped memory for tpu_custom_call.1']
    #allocation8 [shape = 'u8[32768]{0}', space=vmem, size = 0x8000, scoped, tag = 'input window, operand 3, single buffered']
    #allocation9 [shape = 's32[1]{0}', space=sflag, size = 0x4, scoped, tag = 'scoped memory for tpu_custom_call.1']
    #allocation10 [shape = 'u8[512]{0}', space=vmem, size = 0x400, scoped, tag = 'input window, operand 4, single buffered']
    #allocation11 [shape = 'u8[65536]{0}', space=vmem, size = 0x10000, scoped, tag = 'input window, operand 5, single buffered']
    #allocation12 [shape = 's32[1]{0}', space=sflag, size = 0x4, scoped, tag = 'scoped memory for tpu_custom_call.1']
    #allocation13 [shape = 'u8[32768]{0}', space=vmem, size = 0x8000, scoped, tag = 'input window, operand 7, single buffered']
    #allocation14 [shape = 'u8[512]{0}', space=vmem, size = 0x400, scoped, tag = 'input window, operand 8, single buffered']
    #allocation15 [shape = 's32[1]{0}', space=sflag, size = 0x4, scoped, tag = 'scoped memory for tpu_custom_call.1']
    #allocation16 [shape = 'u8[262144]{0}', space=vmem, size = 0x40000, scoped, tag = 'input window, operand 10, single buffered']
    #allocation17 [shape = 'u8[65536]{0}', space=vmem, size = 0x10000, scoped, tag = 'input window, operand 12, single buffered']
    #allocation18 [shape = 's32[1]{0}', space=sflag, size = 0x4, scoped, tag = 'scoped memory for tpu_custom_call.1']
    #allocation19 [shape = 'u8[512]{0}', space=smem, size = 0x200, scoped, tag = 'input window, operand 17, single buffered']
    #allocation20 [shape = 'u8[262144]{0}', space=vmem, size = 0x40000, scoped, tag = 'output window, operand 0']
    %25 = vsyncpa [#allocation5], 0
    %26 = vsyncpa [#allocation9], 0
    %27 = vsyncpa [#allocation12], 0
    %28 = vsyncpa [#allocation15], 0
    %29 = vsyncpa [#allocation18], 0
    %30 = vsyncpa [#allocation7], 0
    %31 = vsyncpa [#allocation6], 0
    %s32 = scalar_lea.sflag [#allocation6], 1
    %33 = vsyncpa %s32, 0
    loop: start=0, step=1, limit=4
    $region2: #{tpu_custom_call.1} parent=1 // loop_pre_header
      _
    $region3: #{tpu_custom_call.1} parent=1 // loop_header
      %s35 = sphi 0, %s39
      %p36 = scmp.ge.s32.totalorder %s35, 4
      %s43 = sphi 0, %s43
      %s45 = sphi 0, %s43
      %s46 = sphi 0, %s45
      %s60 = sphi 0, %s46
      %s64 = sphi 0, %s64
      %s66 = sphi 0, %s64
      %s67 = sphi 0, %s66
      %s81 = sphi 0, %s67
      %s85 = sphi 0, %s85
      %s87 = sphi 0, %s85
      %s88 = sphi 0, %s87
      %s102 = sphi 0, %s88
      %s106 = sphi 0, %s106
      %s108 = sphi 0, %s106
      %s109 = sphi 0, %s108
      %s123 = sphi 0, %s109
      %s127 = sphi 0, %s127
      %s129 = sphi 0, %s127
      %s130 = sphi 0, %s129
      %s144 = sphi 0, %s130
      %s148 = sphi 0, %s148
      %s150 = sphi 0, %s148
      %s151 = sphi 0, %s150
      %s165 = sphi 0, %s151
      %s169 = sphi 0, %s169
      %s171 = sphi 0, %s169
      %s172 = sphi 0, %s171
      %s186 = sphi 0, %s172
      %s190 = sphi 0, %s190
      %s192 = sphi 0, %s190
      %s193 = sphi 0, %s192
      %s207 = sphi 0, %s193
      %s211 = sphi 0, %s211
      %s213 = sphi 0, %s211
      %s214 = sphi 0, %s213
      %s228 = sphi 0, %s214
      %s232 = sphi 0, %s232
      %s234 = sphi 0, %s232
      %s235 = sphi 0, %s234
      %s249 = sphi 0, %s235
      %s253 = sphi 0, %s253
      %s255 = sphi 0, %s253
      %s256 = sphi 0, %s255
      %s270 = sphi 0, %s256
      %s274 = sphi 0, %s274
      %s276 = sphi 0, %s274
      %s277 = sphi 0, %s276
      %s291 = sphi 0, %s277
      %s295 = sphi 0, %s295
      %s297 = sphi 0, %s295
      %s298 = sphi 0, %s297
      %s312 = sphi 0, %s298
      %s316 = sphi 0, %s316
      %s318 = sphi 0, %s316
      %s319 = sphi 0, %s318
      %s333 = sphi 0, %s319
      %s337 = sphi 0, %s337
      %s339 = sphi 0, %s337
      %s340 = sphi 0, %s339
      %s354 = sphi 0, %s340
      %s358 = sphi 0, %s358
      %s360 = sphi 0, %s358
      %s361 = sphi 0, %s360
      %s375 = sphi 0, %s361
      %s379 = sphi 0, %s379
      %s381 = sphi 0, %s379
      %s382 = sphi 0, %s381
      %s396 = sphi 0, %s382
      %s402 = sphi 0, %s404
      %s405 = sphi 0, %s402
      %s406 = sphi 0, %s405
      %s422 = sphi 0, %s406
      %s428 = sphi 0, %s430
      %s431 = sphi 0, %s428
      %s432 = sphi 0, %s431
      %s448 = sphi 0, %s432
    $region4: #{tpu_custom_call.1} parent=1 // loop_header_branch
      %38 = sbr.rel (%p36) target = $region8
    $region5: #{tpu_custom_call.1} parent=1 // loop_body
      %s40 = ssub.s32 %s35, 1
      %s41 = ssub.s32 %s35, 2
      %s42 = sadd.s32 %s35, 1
      %s44 = sadd.s32 %s43, 1
      %p47 = scmp.eq.s32.totalorder %s35, 1
      %p48 = scmp.ne.s32.totalorder %s43, %s45
      %p49 = scmp.eq.s32.totalorder %s35, 0
      %p50 = por %p48, %p49
      %p51 = scmp.ne.s32.totalorder %s43, %s45
      %p52 = scmp.eq.s32.totalorder %s40, 1
      %p53 = por %p51, %p52
      %p54 = scmp.ne.s32.totalorder %s45, %s46
      %p55 = scmp.eq.s32.totalorder %s40, 0
      %p56 = por %p54, %p55
      %p57 = scmp.ne.s32.totalorder %s45, %s46
      %p58 = scmp.eq.s32.totalorder %s41, 1
      %p59 = por %p57, %p58
      %p61 = scmp.ne.s32.totalorder %s46, %s60
      %p62 = scmp.eq.s32.totalorder %s41, 0
      %p63 = por %p61, %p62
      %s65 = sadd.s32 %s64, 1
      %p68 = scmp.eq.s32.totalorder %s35, 1
      %p69 = scmp.ne.s32.totalorder %s64, %s66
      %p70 = scmp.eq.s32.totalorder %s35, 0
      %p71 = por %p69, %p70
      %p72 = scmp.ne.s32.totalorder %s64, %s66
      %p73 = scmp.eq.s32.totalorder %s40, 1
      %p74 = por %p72, %p73
      %p75 = scmp.ne.s32.totalorder %s66, %s67
      %p76 = scmp.eq.s32.totalorder %s40, 0
      %p77 = por %p75, %p76
      %p78 = scmp.ne.s32.totalorder %s66, %s67
      %p79 = scmp.eq.s32.totalorder %s41, 1
      %p80 = por %p78, %p79
      %p82 = scmp.ne.s32.totalorder %s67, %s81
      %p83 = scmp.eq.s32.totalorder %s41, 0
      %p84 = por %p82, %p83
      %s86 = sadd.s32 %s85, 1
      %p89 = scmp.eq.s32.totalorder %s35, 1
      %p90 = scmp.ne.s32.totalorder %s85, %s87
      %p91 = scmp.eq.s32.totalorder %s35, 0
      %p92 = por %p90, %p91
      %p93 = scmp.ne.s32.totalorder %s85, %s87
      %p94 = scmp.eq.s32.totalorder %s40, 1
      %p95 = por %p93, %p94
      %p96 = scmp.ne.s32.totalorder %s87, %s88
      %p97 = scmp.eq.s32.totalorder %s40, 0
      %p98 = por %p96, %p97
      %p99 = scmp.ne.s32.totalorder %s87, %s88
      %p100 = scmp.eq.s32.totalorder %s41, 1
      %p101 = por %p99, %p100
      %p103 = scmp.ne.s32.totalorder %s88, %s102
      %p104 = scmp.eq.s32.totalorder %s41, 0
      %p105 = por %p103, %p104
      %s107 = sadd.s32 %s106, 1
      %p110 = scmp.eq.s32.totalorder %s35, 1
      %p111 = scmp.ne.s32.totalorder %s106, %s108
      %p112 = scmp.eq.s32.totalorder %s35, 0
      %p113 = por %p111, %p112
      %p114 = scmp.ne.s32.totalorder %s106, %s108
      %p115 = scmp.eq.s32.totalorder %s40, 1
      %p116 = por %p114, %p115
      %p117 = scmp.ne.s32.totalorder %s108, %s109
      %p118 = scmp.eq.s32.totalorder %s40, 0
      %p119 = por %p117, %p118
      %p120 = scmp.ne.s32.totalorder %s108, %s109
      %p121 = scmp.eq.s32.totalorder %s41, 1
      %p122 = por %p120, %p121
      %p124 = scmp.ne.s32.totalorder %s109, %s123
      %p125 = scmp.eq.s32.totalorder %s41, 0
      %p126 = por %p124, %p125
      %s128 = sadd.s32 %s127, 1
      %p131 = scmp.eq.s32.totalorder %s35, 1
      %p132 = scmp.ne.s32.totalorder %s127, %s129
      %p133 = scmp.eq.s32.totalorder %s35, 0
      %p134 = por %p132, %p133
      %p135 = scmp.ne.s32.totalorder %s127, %s129
      %p136 = scmp.eq.s32.totalorder %s40, 1
      %p137 = por %p135, %p136
      %p138 = scmp.ne.s32.totalorder %s129, %s130
      %p139 = scmp.eq.s32.totalorder %s40, 0
      %p140 = por %p138, %p139
      %p141 = scmp.ne.s32.totalorder %s129, %s130
      %p142 = scmp.eq.s32.totalorder %s41, 1
      %p143 = por %p141, %p142
      %p145 = scmp.ne.s32.totalorder %s130, %s144
      %p146 = scmp.eq.s32.totalorder %s41, 0
      %p147 = por %p145, %p146
      %s149 = sadd.s32 %s148, 1
      %p152 = scmp.eq.s32.totalorder %s35, 1
      %p153 = scmp.ne.s32.totalorder %s148, %s150
      %p154 = scmp.eq.s32.totalorder %s35, 0
      %p155 = por %p153, %p154
      %p156 = scmp.ne.s32.totalorder %s148, %s150
      %p157 = scmp.eq.s32.totalorder %s40, 1
      %p158 = por %p156, %p157
      %p159 = scmp.ne.s32.totalorder %s150, %s151
      %p160 = scmp.eq.s32.totalorder %s40, 0
      %p161 = por %p159, %p160
      %p162 = scmp.ne.s32.totalorder %s150, %s151
      %p163 = scmp.eq.s32.totalorder %s41, 1
      %p164 = por %p162, %p163
      %p166 = scmp.ne.s32.totalorder %s151, %s165
      %p167 = scmp.eq.s32.totalorder %s41, 0
      %p168 = por %p166, %p167
      %s170 = sadd.s32 %s169, 1
      %p173 = scmp.eq.s32.totalorder %s35, 1
      %p174 = scmp.ne.s32.totalorder %s169, %s171
      %p175 = scmp.eq.s32.totalorder %s35, 0
      %p176 = por %p174, %p175
      %p177 = scmp.ne.s32.totalorder %s169, %s171
      %p178 = scmp.eq.s32.totalorder %s40, 1
      %p179 = por %p177, %p178
      %p180 = scmp.ne.s32.totalorder %s171, %s172
      %p181 = scmp.eq.s32.totalorder %s40, 0
      %p182 = por %p180, %p181
      %p183 = scmp.ne.s32.totalorder %s171, %s172
      %p184 = scmp.eq.s32.totalorder %s41, 1
      %p185 = por %p183, %p184
      %p187 = scmp.ne.s32.totalorder %s172, %s186
      %p188 = scmp.eq.s32.totalorder %s41, 0
      %p189 = por %p187, %p188
      %s191 = sadd.s32 %s190, 1
      %p194 = scmp.eq.s32.totalorder %s35, 1
      %p195 = scmp.ne.s32.totalorder %s190, %s192
      %p196 = scmp.eq.s32.totalorder %s35, 0
      %p197 = por %p195, %p196
      %p198 = scmp.ne.s32.totalorder %s190, %s192
      %p199 = scmp.eq.s32.totalorder %s40, 1
      %p200 = por %p198, %p199
      %p201 = scmp.ne.s32.totalorder %s192, %s193
      %p202 = scmp.eq.s32.totalorder %s40, 0
      %p203 = por %p201, %p202
      %p204 = scmp.ne.s32.totalorder %s192, %s193
      %p205 = scmp.eq.s32.totalorder %s41, 1
      %p206 = por %p204, %p205
      %p208 = scmp.ne.s32.totalorder %s193, %s207
      %p209 = scmp.eq.s32.totalorder %s41, 0
      %p210 = por %p208, %p209
      %s212 = sadd.s32 %s211, 1
      %p215 = scmp.eq.s32.totalorder %s35, 1
      %p216 = scmp.ne.s32.totalorder %s211, %s213
      %p217 = scmp.eq.s32.totalorder %s35, 0
      %p218 = por %p216, %p217
      %p219 = scmp.ne.s32.totalorder %s211, %s213
      %p220 = scmp.eq.s32.totalorder %s40, 1
      %p221 = por %p219, %p220
      %p222 = scmp.ne.s32.totalorder %s213, %s214
      %p223 = scmp.eq.s32.totalorder %s40, 0
      %p224 = por %p222, %p223
      %p225 = scmp.ne.s32.totalorder %s213, %s214
      %p226 = scmp.eq.s32.totalorder %s41, 1
      %p227 = por %p225, %p226
      %p229 = scmp.ne.s32.totalorder %s214, %s228
      %p230 = scmp.eq.s32.totalorder %s41, 0
      %p231 = por %p229, %p230
      %s233 = sadd.s32 %s232, 1
      %p236 = scmp.eq.s32.totalorder %s35, 1
      %p237 = scmp.ne.s32.totalorder %s232, %s234
      %p238 = scmp.eq.s32.totalorder %s35, 0
      %p239 = por %p237, %p238
      %p240 = scmp.ne.s32.totalorder %s232, %s234
      %p241 = scmp.eq.s32.totalorder %s40, 1
      %p242 = por %p240, %p241
      %p243 = scmp.ne.s32.totalorder %s234, %s235
      %p244 = scmp.eq.s32.totalorder %s40, 0
      %p245 = por %p243, %p244
      %p246 = scmp.ne.s32.totalorder %s234, %s235
      %p247 = scmp.eq.s32.totalorder %s41, 1
      %p248 = por %p246, %p247
      %p250 = scmp.ne.s32.totalorder %s235, %s249
      %p251 = scmp.eq.s32.totalorder %s41, 0
      %p252 = por %p250, %p251
      %s254 = sadd.s32 %s253, 1
      %p257 = scmp.eq.s32.totalorder %s35, 1
      %p258 = scmp.ne.s32.totalorder %s253, %s255
      %p259 = scmp.eq.s32.totalorder %s35, 0
      %p260 = por %p258, %p259
      %p261 = scmp.ne.s32.totalorder %s253, %s255
      %p262 = scmp.eq.s32.totalorder %s40, 1
      %p263 = por %p261, %p262
      %p264 = scmp.ne.s32.totalorder %s255, %s256
      %p265 = scmp.eq.s32.totalorder %s40, 0
      %p266 = por %p264, %p265
      %p267 = scmp.ne.s32.totalorder %s255, %s256
      %p268 = scmp.eq.s32.totalorder %s41, 1
      %p269 = por %p267, %p268
      %p271 = scmp.ne.s32.totalorder %s256, %s270
      %p272 = scmp.eq.s32.totalorder %s41, 0
      %p273 = por %p271, %p272
      %s275 = sadd.s32 %s274, 1
      %p278 = scmp.eq.s32.totalorder %s35, 1
      %p279 = scmp.ne.s32.totalorder %s274, %s276
      %p280 = scmp.eq.s32.totalorder %s35, 0
      %p281 = por %p279, %p280
      %p282 = scmp.ne.s32.totalorder %s274, %s276
      %p283 = scmp.eq.s32.totalorder %s40, 1
      %p284 = por %p282, %p283
      %p285 = scmp.ne.s32.totalorder %s276, %s277
      %p286 = scmp.eq.s32.totalorder %s40, 0
      %p287 = por %p285, %p286
      %p288 = scmp.ne.s32.totalorder %s276, %s277
      %p289 = scmp.eq.s32.totalorder %s41, 1
      %p290 = por %p288, %p289
      %p292 = scmp.ne.s32.totalorder %s277, %s291
      %p293 = scmp.eq.s32.totalorder %s41, 0
      %p294 = por %p292, %p293
      %s296 = sadd.s32 %s295, 1
      %p299 = scmp.eq.s32.totalorder %s35, 1
      %p300 = scmp.ne.s32.totalorder %s295, %s297
      %p301 = scmp.eq.s32.totalorder %s35, 0
      %p302 = por %p300, %p301
      %p303 = scmp.ne.s32.totalorder %s295, %s297
      %p304 = scmp.eq.s32.totalorder %s40, 1
      %p305 = por %p303, %p304
      %p306 = scmp.ne.s32.totalorder %s297, %s298
      %p307 = scmp.eq.s32.totalorder %s40, 0
      %p308 = por %p306, %p307
      %p309 = scmp.ne.s32.totalorder %s297, %s298
      %p310 = scmp.eq.s32.totalorder %s41, 1
      %p311 = por %p309, %p310
      %p313 = scmp.ne.s32.totalorder %s298, %s312
      %p314 = scmp.eq.s32.totalorder %s41, 0
      %p315 = por %p313, %p314
      %s317 = sadd.s32 %s316, 1
      %p320 = scmp.eq.s32.totalorder %s35, 1
      %p321 = scmp.ne.s32.totalorder %s316, %s318
      %p322 = scmp.eq.s32.totalorder %s35, 0
      %p323 = por %p321, %p322
      %p324 = scmp.ne.s32.totalorder %s316, %s318
      %p325 = scmp.eq.s32.totalorder %s40, 1
      %p326 = por %p324, %p325
      %p327 = scmp.ne.s32.totalorder %s318, %s319
      %p328 = scmp.eq.s32.totalorder %s40, 0
      %p329 = por %p327, %p328
      %p330 = scmp.ne.s32.totalorder %s318, %s319
      %p331 = scmp.eq.s32.totalorder %s41, 1
      %p332 = por %p330, %p331
      %p334 = scmp.ne.s32.totalorder %s319, %s333
      %p335 = scmp.eq.s32.totalorder %s41, 0
      %p336 = por %p334, %p335
      %s338 = sadd.s32 %s337, 1
      %p341 = scmp.eq.s32.totalorder %s35, 1
      %p342 = scmp.ne.s32.totalorder %s337, %s339
      %p343 = scmp.eq.s32.totalorder %s35, 0
      %p344 = por %p342, %p343
      %p345 = scmp.ne.s32.totalorder %s337, %s339
      %p346 = scmp.eq.s32.totalorder %s40, 1
      %p347 = por %p345, %p346
      %p348 = scmp.ne.s32.totalorder %s339, %s340
      %p349 = scmp.eq.s32.totalorder %s40, 0
      %p350 = por %p348, %p349
      %p351 = scmp.ne.s32.totalorder %s339, %s340
      %p352 = scmp.eq.s32.totalorder %s41, 1
      %p353 = por %p351, %p352
      %p355 = scmp.ne.s32.totalorder %s340, %s354
      %p356 = scmp.eq.s32.totalorder %s41, 0
      %p357 = por %p355, %p356
      %s359 = sadd.s32 %s358, 1
      %p362 = scmp.eq.s32.totalorder %s35, 1
      %p363 = scmp.ne.s32.totalorder %s358, %s360
      %p364 = scmp.eq.s32.totalorder %s35, 0
      %p365 = por %p363, %p364
      %p366 = scmp.ne.s32.totalorder %s358, %s360
      %p367 = scmp.eq.s32.totalorder %s40, 1
      %p368 = por %p366, %p367
      %p369 = scmp.ne.s32.totalorder %s360, %s361
      %p370 = scmp.eq.s32.totalorder %s40, 0
      %p371 = por %p369, %p370
      %p372 = scmp.ne.s32.totalorder %s360, %s361
      %p373 = scmp.eq.s32.totalorder %s41, 1
      %p374 = por %p372, %p373
      %p376 = scmp.ne.s32.totalorder %s361, %s375
      %p377 = scmp.eq.s32.totalorder %s41, 0
      %p378 = por %p376, %p377
      %s380 = sadd.s32 %s379, 1
      %p383 = scmp.eq.s32.totalorder %s35, 1
      %p384 = scmp.ne.s32.totalorder %s379, %s381
      %p385 = scmp.eq.s32.totalorder %s35, 0
      %p386 = por %p384, %p385
      %p387 = scmp.ne.s32.totalorder %s379, %s381
      %p388 = scmp.eq.s32.totalorder %s40, 1
      %p389 = por %p387, %p388
      %p390 = scmp.ne.s32.totalorder %s381, %s382
      %p391 = scmp.eq.s32.totalorder %s40, 0
      %p392 = por %p390, %p391
      %p393 = scmp.ne.s32.totalorder %s381, %s382
      %p394 = scmp.eq.s32.totalorder %s41, 1
      %p395 = por %p393, %p394
      %p397 = scmp.ne.s32.totalorder %s382, %s396
      %p398 = scmp.eq.s32.totalorder %s41, 0
      %p399 = por %p397, %p398
      %s400 = ssub.s32 %s35, %s42
      %p401 = scmp.eq.s32.totalorder %s400, 0
      %s403 = sadd.s32 %s402, 1
      %s404 = scalar_select %p401, %s402, %s403
      %p407 = pneg %p401
      %p408 = scmp.eq.s32.totalorder %s35, 1
      %p409 = por %p407, %p408
      %p410 = scmp.ne.s32.totalorder %s402, %s405
      %p411 = scmp.eq.s32.totalorder %s35, 0
      %p412 = por %p410, %p411
      %p413 = scmp.ne.s32.totalorder %s402, %s405
      %p414 = scmp.eq.s32.totalorder %s40, 1
      %p415 = por %p413, %p414
      %p416 = scmp.ne.s32.totalorder %s405, %s406
      %p417 = scmp.eq.s32.totalorder %s40, 0
      %p418 = por %p416, %p417
      %p419 = scmp.ne.s32.totalorder %s405, %s406
      %p420 = scmp.eq.s32.totalorder %s41, 1
      %p421 = por %p419, %p420
      %p423 = scmp.ne.s32.totalorder %s406, %s422
      %p424 = scmp.eq.s32.totalorder %s41, 0
      %p425 = por %p423, %p424
      %s426 = ssub.s32 %s35, %s42
      %p427 = scmp.eq.s32.totalorder %s426, 0
      %s429 = sadd.s32 %s428, 1
      %s430 = scalar_select %p427, %s428, %s429
      %p433 = pneg %p427
      %p434 = scmp.eq.s32.totalorder %s35, 1
      %p435 = por %p433, %p434
      %p436 = scmp.ne.s32.totalorder %s428, %s431
      %p437 = scmp.eq.s32.totalorder %s35, 0
      %p438 = por %p436, %p437
      %p439 = scmp.ne.s32.totalorder %s428, %s431
      %p440 = scmp.eq.s32.totalorder %s40, 1
      %p441 = por %p439, %p440
      %p442 = scmp.ne.s32.totalorder %s431, %s432
      %p443 = scmp.eq.s32.totalorder %s40, 0
      %p444 = por %p442, %p443
      %p445 = scmp.ne.s32.totalorder %s431, %s432
      %p446 = scmp.eq.s32.totalorder %s41, 1
      %p447 = por %p445, %p446
      %p449 = scmp.ne.s32.totalorder %s432, %s448
      %p450 = scmp.eq.s32.totalorder %s41, 0
      %p451 = por %p449, %p450
      %p452 = scmp.le.s32.totalorder 1, %s35
      %p453 = scmp.lt.s32.totalorder %s35, 3
      %p454 = pnand %p452, %p453
      %p455 = pneg %p454
      // Predicated region
      $region9: #{tpu_custom_call.1} parent=5 // pred_check
        _
      $region10: #{tpu_custom_call.1} parent=5 // pred_check_branch
        %457 = sbr.rel (%p454) target = $region12
      $region11: #{tpu_custom_call.1} parent=5 // pred_region
        %s458 = ssub.s32 %s35, 1
        // Predicated region
        $region13: #{tpu_custom_call.1} parent=11 // pred_check
          %p459 = pneg %p56
        $region14: #{tpu_custom_call.1} parent=11 // pred_check_branch
          %461 = sbr.rel (%p459) target = $region16
        $region15: #{tpu_custom_call.1} parent=11 // pred_region
          %463 = vsyncadd [#allocation5], 0
          %s464 = sshll.u32 %s1, 4
          %s465 = int_to_ptr.hbm [resolvable:$true] %s464
          %s466 = sshll.u32 [#allocation4], 4
          %s467 = int_to_ptr.vmem [resolvable:$true] %s466
          %472 = dma.hbm_to_vmem [thread:$0]  %s465, 9216, %s467, [#allocation5], 64, 64, 4
        $region16: #{tpu_custom_call.1} parent=11 // pred_fallthru
          _
        // Predicated region
        $region17: #{tpu_custom_call.1} parent=11 // pred_check
          %p473 = pneg %p77
        $region18: #{tpu_custom_call.1} parent=11 // pred_check_branch
          %475 = sbr.rel (%p473) target = $region20
        $region19: #{tpu_custom_call.1} parent=11 // pred_region
          _
        $region20: #{tpu_custom_call.1} parent=11 // pred_fallthru
          _
        // Predicated region
        $region21: #{tpu_custom_call.1} parent=11 // pred_check
          %p476 = pneg %p98
        $region22: #{tpu_custom_call.1} parent=11 // pred_check_branch
          %478 = sbr.rel (%p476) target = $region24
        $region23: #{tpu_custom_call.1} parent=11 // pred_region
          %480 = vsyncadd [#allocation9], 0
          %s481 = sshll.u32 %s3, 4
          %s482 = int_to_ptr.hbm [resolvable:$true] %s481
          %s483 = sshll.u32 [#allocation8], 4
          %s484 = int_to_ptr.vmem [resolvable:$true] %s483
          %489 = dma.hbm_to_vmem [thread:$0]  %s482, 1024, %s484, [#allocation9], 64, 64, 4
        $region24: #{tpu_custom_call.1} parent=11 // pred_fallthru
          _
        // Predicated region
        $region25: #{tpu_custom_call.1} parent=11 // pred_check
          %p490 = pneg %p119
        $region26: #{tpu_custom_call.1} parent=11 // pred_check_branch
          %492 = sbr.rel (%p490) target = $region28
        $region27: #{tpu_custom_call.1} parent=11 // pred_region
          %494 = vsyncadd [#allocation9], 0
          %s496 = sshll.u32 %s4, 4
          %s497 = int_to_ptr.hbm [resolvable:$true] %s496
          %s498 = sshll.u32 [#allocation10], 4
          %s499 = int_to_ptr.vmem [resolvable:$true] %s498
          %501 = dma.hbm_to_vmem [thread:$0]  %s497, 16, %s499, [#allocation9]
        $region28: #{tpu_custom_call.1} parent=11 // pred_fallthru
          _
        // Predicated region
        $region29: #{tpu_custom_call.1} parent=11 // pred_check
          %p502 = pneg %p140
        $region30: #{tpu_custom_call.1} parent=11 // pred_check_branch
          %504 = sbr.rel (%p502) target = $region32
        $region31: #{tpu_custom_call.1} parent=11 // pred_region
          %506 = vsyncadd [#allocation12], 0
          %s507 = sshll.u32 %s5, 4
          %s508 = int_to_ptr.hbm [resolvable:$true] %s507
          %s509 = sshll.u32 [#allocation11], 4
          %s510 = int_to_ptr.vmem [resolvable:$true] %s509
          %515 = dma.hbm_to_vmem [thread:$0]  %s508, 2048, %s510, [#allocation12], 128, 128, 8
        $region32: #{tpu_custom_call.1} parent=11 // pred_fallthru
          _
        // Predicated region
        $region33: #{tpu_custom_call.1} parent=11 // pred_check
          %p516 = pneg %p161
        $region34: #{tpu_custom_call.1} parent=11 // pred_check_branch
          %518 = sbr.rel (%p516) target = $region36
        $region35: #{tpu_custom_call.1} parent=11 // pred_region
          _
        $region36: #{tpu_custom_call.1} parent=11 // pred_fallthru
          _
        // Predicated region
        $region37: #{tpu_custom_call.1} parent=11 // pred_check
          %p519 = pneg %p182
        $region38: #{tpu_custom_call.1} parent=11 // pred_check_branch
          %521 = sbr.rel (%p519) target = $region40
        $region39: #{tpu_custom_call.1} parent=11 // pred_region
          %523 = vsyncadd [#allocation12], 0
          %s524 = sshll.u32 %s7, 4
          %s525 = int_to_ptr.hbm [resolvable:$true] %s524
          %s526 = sshll.u32 [#allocation13], 4
          %s527 = int_to_ptr.vmem [resolvable:$true] %s526
          %532 = dma.hbm_to_vmem [thread:$0]  %s525, 1024, %s527, [#allocation12], 64, 64, 4
        $region40: #{tpu_custom_call.1} parent=11 // pred_fallthru
          _
        // Predicated region
        $region41: #{tpu_custom_call.1} parent=11 // pred_check
          %p533 = pneg %p203
        $region42: #{tpu_custom_call.1} parent=11 // pred_check_branch
          %535 = sbr.rel (%p533) target = $region44
        $region43: #{tpu_custom_call.1} parent=11 // pred_region
          %537 = vsyncadd [#allocation15], 0
          %s539 = sshll.u32 %s8, 4
          %s540 = int_to_ptr.hbm [resolvable:$true] %s539
          %s541 = sshll.u32 [#allocation14], 4
          %s542 = int_to_ptr.vmem [resolvable:$true] %s541
          %544 = dma.hbm_to_vmem [thread:$0]  %s540, 16, %s542, [#allocation15]
        $region44: #{tpu_custom_call.1} parent=11 // pred_fallthru
          _
        // Predicated region
        $region45: #{tpu_custom_call.1} parent=11 // pred_check
          %p545 = pneg %p224
        $region46: #{tpu_custom_call.1} parent=11 // pred_check_branch
          %547 = sbr.rel (%p545) target = $region48
        $region47: #{tpu_custom_call.1} parent=11 // pred_region
          _
        $region48: #{tpu_custom_call.1} parent=11 // pred_fallthru
          _
        // Predicated region
        $region49: #{tpu_custom_call.1} parent=11 // pred_check
          %p548 = pneg %p245
        $region50: #{tpu_custom_call.1} parent=11 // pred_check_branch
          %550 = sbr.rel (%p548) target = $region52
        $region51: #{tpu_custom_call.1} parent=11 // pred_region
          %552 = vsyncadd [#allocation15], 0
          %s553 = sshll.u32 %s10, 4
          %s554 = int_to_ptr.hbm [resolvable:$true] %s553
          %s555 = sshll.u32 [#allocation16], 4
          %s556 = int_to_ptr.vmem [resolvable:$true] %s555
          %561 = dma.hbm_to_vmem [thread:$0]  %s554, 8192, %s556, [#allocation15], 256, 256, 16
        $region52: #{tpu_custom_call.1} parent=11 // pred_fallthru
          _
        // Predicated region
        $region53: #{tpu_custom_call.1} parent=11 // pred_check
          %p562 = pneg %p266
        $region54: #{tpu_custom_call.1} parent=11 // pred_check_branch
          %564 = sbr.rel (%p562) target = $region56
        $region55: #{tpu_custom_call.1} parent=11 // pred_region
          _
        $region56: #{tpu_custom_call.1} parent=11 // pred_fallthru
          _
        // Predicated region
        $region57: #{tpu_custom_call.1} parent=11 // pred_check
          %p565 = pneg %p287
        $region58: #{tpu_custom_call.1} parent=11 // pred_check_branch
          %567 = sbr.rel (%p565) target = $region60
        $region59: #{tpu_custom_call.1} parent=11 // pred_region
          %569 = vsyncadd [#allocation18], 0
          %s570 = sshll.u32 %s12, 4
          %s571 = int_to_ptr.hbm [resolvable:$true] %s570
          %s572 = sshll.u32 [#allocation17], 4
          %s573 = int_to_ptr.vmem [resolvable:$true] %s572
          %578 = dma.hbm_to_vmem [thread:$0]  %s571, 2048, %s573, [#allocation18], 128, 128, 8
        $region60: #{tpu_custom_call.1} parent=11 // pred_fallthru
          _
        // Predicated region
        $region61: #{tpu_custom_call.1} parent=11 // pred_check
          %p579 = pneg %p308
        $region62: #{tpu_custom_call.1} parent=11 // pred_check_branch
          %581 = sbr.rel (%p579) target = $region64
        $region63: #{tpu_custom_call.1} parent=11 // pred_region
          _
        $region64: #{tpu_custom_call.1} parent=11 // pred_fallthru
          _
        // Predicated region
        $region65: #{tpu_custom_call.1} parent=11 // pred_check
          %p582 = pneg %p329
        $region66: #{tpu_custom_call.1} parent=11 // pred_check_branch
          %584 = sbr.rel (%p582) target = $region68
        $region67: #{tpu_custom_call.1} parent=11 // pred_region
          _
        $region68: #{tpu_custom_call.1} parent=11 // pred_fallthru
          _
        // Predicated region
        $region69: #{tpu_custom_call.1} parent=11 // pred_check
          %p585 = pneg %p350
        $region70: #{tpu_custom_call.1} parent=11 // pred_check_branch
          %587 = sbr.rel (%p585) target = $region72
        $region71: #{tpu_custom_call.1} parent=11 // pred_region
          _
        $region72: #{tpu_custom_call.1} parent=11 // pred_fallthru
          _
        // Predicated region
        $region73: #{tpu_custom_call.1} parent=11 // pred_check
          %p588 = pneg %p371
        $region74: #{tpu_custom_call.1} parent=11 // pred_check_branch
          %590 = sbr.rel (%p588) target = $region76
        $region75: #{tpu_custom_call.1} parent=11 // pred_region
          _
        $region76: #{tpu_custom_call.1} parent=11 // pred_fallthru
          _
        // Predicated region
        $region77: #{tpu_custom_call.1} parent=11 // pred_check
          %p591 = pneg %p392
        $region78: #{tpu_custom_call.1} parent=11 // pred_check_branch
          %593 = sbr.rel (%p591) target = $region80
        $region79: #{tpu_custom_call.1} parent=11 // pred_region
          %595 = vsyncadd [#allocation7], 0
          %s597 = sshll.u32 %s17, 4
          %s598 = int_to_ptr.vmem [resolvable:$true] %s597
          %600 = dma.vmem_to_smem %s598, 16, [#allocation19], [#allocation7]
        $region80: #{tpu_custom_call.1} parent=11 // pred_fallthru
          _
      $region12: #{tpu_custom_call.1} parent=5 // pred_fallthru
        _
      %p601 = scmp.lt.s32.totalorder %s35, 2
      // Predicated region
      $region81: #{tpu_custom_call.1} parent=5 // pred_check
        %p602 = pneg %p601
      $region82: #{tpu_custom_call.1} parent=5 // pred_check_branch
        %604 = sbr.rel (%p602) target = $region84
      $region83: #{tpu_custom_call.1} parent=5 // pred_region
        _
      $region84: #{tpu_custom_call.1} parent=5 // pred_fallthru
        _
      %p605 = scmp.le.s32.totalorder 1, %s35
      %p606 = scmp.lt.s32.totalorder %s35, 3
      %p607 = pnand %p605, %p606
      %p608 = pneg %p607
      // Predicated region
      $region85: #{tpu_custom_call.1} parent=5 // pred_check
        _
      $region86: #{tpu_custom_call.1} parent=5 // pred_check_branch
        %610 = sbr.rel (%p607) target = $region88
      $region87: #{tpu_custom_call.1} parent=5 // pred_region
        %s611 = ssub.s32 %s35, 1
        // Predicated region
        $region89: #{tpu_custom_call.1} parent=87 // pred_check
          %p612 = pneg %p56
        $region90: #{tpu_custom_call.1} parent=87 // pred_check_branch
          %614 = sbr.rel (%p612) target = $region92
        $region91: #{tpu_custom_call.1} parent=87 // pred_region
          %616 = dma.done [#allocation5], 9216
        $region92: #{tpu_custom_call.1} parent=87 // pred_fallthru
          _
        // Predicated region
        $region93: #{tpu_custom_call.1} parent=87 // pred_check
          %p617 = pneg %p98
        $region94: #{tpu_custom_call.1} parent=87 // pred_check_branch
          %619 = sbr.rel (%p617) target = $region96
        $region95: #{tpu_custom_call.1} parent=87 // pred_region
          %621 = dma.done [#allocation9], 1024
        $region96: #{tpu_custom_call.1} parent=87 // pred_fallthru
          _
        // Predicated region
        $region97: #{tpu_custom_call.1} parent=87 // pred_check
          %p622 = pneg %p119
        $region98: #{tpu_custom_call.1} parent=87 // pred_check_branch
          %624 = sbr.rel (%p622) target = $region100
        $region99: #{tpu_custom_call.1} parent=87 // pred_region
          %626 = dma.done [#allocation9], 16
        $region100: #{tpu_custom_call.1} parent=87 // pred_fallthru
          _
        // Predicated region
        $region101: #{tpu_custom_call.1} parent=87 // pred_check
          %p627 = pneg %p140
        $region102: #{tpu_custom_call.1} parent=87 // pred_check_branch
          %629 = sbr.rel (%p627) target = $region104
        $region103: #{tpu_custom_call.1} parent=87 // pred_region
          %631 = dma.done [#allocation12], 2048
        $region104: #{tpu_custom_call.1} parent=87 // pred_fallthru
          _
        // Predicated region
        $region105: #{tpu_custom_call.1} parent=87 // pred_check
          %p632 = pneg %p182
        $region106: #{tpu_custom_call.1} parent=87 // pred_check_branch
          %634 = sbr.rel (%p632) target = $region108
        $region107: #{tpu_custom_call.1} parent=87 // pred_region
          %636 = dma.done [#allocation12], 1024
        $region108: #{tpu_custom_call.1} parent=87 // pred_fallthru
          _
        // Predicated region
        $region109: #{tpu_custom_call.1} parent=87 // pred_check
          %p637 = pneg %p203
        $region110: #{tpu_custom_call.1} parent=87 // pred_check_branch
          %639 = sbr.rel (%p637) target = $region112
        $region111: #{tpu_custom_call.1} parent=87 // pred_region
          %641 = dma.done [#allocation15], 16
        $region112: #{tpu_custom_call.1} parent=87 // pred_fallthru
          _
        // Predicated region
        $region113: #{tpu_custom_call.1} parent=87 // pred_check
          %p642 = pneg %p245
        $region114: #{tpu_custom_call.1} parent=87 // pred_check_branch
          %644 = sbr.rel (%p642) target = $region116
        $region115: #{tpu_custom_call.1} parent=87 // pred_region
          %646 = dma.done [#allocation15], 8192
        $region116: #{tpu_custom_call.1} parent=87 // pred_fallthru
          _
        // Predicated region
        $region117: #{tpu_custom_call.1} parent=87 // pred_check
          %p647 = pneg %p287
        $region118: #{tpu_custom_call.1} parent=87 // pred_check_branch
          %649 = sbr.rel (%p647) target = $region120
        $region119: #{tpu_custom_call.1} parent=87 // pred_region
          %651 = dma.done [#allocation18], 2048
        $region120: #{tpu_custom_call.1} parent=87 // pred_fallthru
          _
        // Predicated region
        $region121: #{tpu_custom_call.1} parent=87 // pred_check
          %p652 = pneg %p392
        $region122: #{tpu_custom_call.1} parent=87 // pred_check_branch
          %654 = sbr.rel (%p652) target = $region124
        $region123: #{tpu_custom_call.1} parent=87 // pred_region
          %656 = dma.done [#allocation7], 16
        $region124: #{tpu_custom_call.1} parent=87 // pred_fallthru
          _
        %657 = sfence
        %p658 = pneg %p56
        %p659 = pneg %p53
        %p660 = pneg %p77
        %p661 = pneg %p74
        %p662 = pneg %p98
        %p663 = pneg %p95
        %p664 = pneg %p119
        %p665 = pneg %p116
        %p666 = pneg %p140
        %p667 = pneg %p137
        %p668 = pneg %p161
        %p669 = pneg %p158
        %p670 = pneg %p182
        %p671 = pneg %p179
        %p672 = pneg %p203
        %p673 = pneg %p200
        %p674 = pneg %p224
        %p675 = pneg %p221
        %p676 = pneg %p245
        %p677 = pneg %p242
        %p678 = pneg %p266
        %p679 = pneg %p263
        %p680 = pneg %p287
        %p681 = pneg %p284
        %p682 = pneg %p308
        %p683 = pneg %p305
        %p684 = pneg %p329
        %p685 = pneg %p326
        %p686 = pneg %p350
        %p687 = pneg %p347
        %p688 = pneg %p371
        %p689 = pneg %p368
        %p690 = pneg %p392
        %p691 = pneg %p389
        %p692 = pneg %p418
        %p693 = pneg %p415
        %s694 = sand.u32 %s405, 1
        %s695 = scalar_lea.sflag [#allocation6], %s694
        %s696 = sand.u32 %s405, 1
        %s697 = smul.addr %s696, 256
        %s698 = scalar_lea.vmem [#allocation20], %s697
        %p699 = pneg %p444
        %p700 = pneg %p441
        %s701 = smul.u32 16, %s40
        %p702 = scmp.lt.s32.totalorder %s701, 31
        %s703 = scalar_select %p702, %s701, 31
        %s704 = smul.addr %s703, 8
        %s705 = scalar_lea.vmem %s19, %s704
        %s706 = smul.u32 16, %s40
        %s707 = smul.u32 16, %s40
        %p708 = scmp.lt.s32.totalorder %s707, 31
        %s709 = scalar_select %p708, %s707, 31
        %s710 = smul.addr %s709, 8
        %s711 = scalar_lea.vmem %s19, %s710
        %s712 = smul.u32 16, %s40
        %p713 = scmp.lt.s32.totalorder %s40, 0
        %s714 = ssub.s32 0, %s40
        %s715 = scalar_select %p713, %s714, %s40
        %s716 = sand.u32 %s715, 1
        %s717 = ssub.s32 0, %s716
        %s718 = scalar_select %p713, %s717, %s716
        %p719 = scmp.ne.s32.totalorder %s718, 0
        %p720 = scmp.lt.s32.totalorder %s718, 0
        %p721 = pnand %p720, %p719
        %p722 = pneg %p721
        %s723 = sadd.s32 %s718, 2
        %s724 = scalar_select %p722, %s723, %s718
        %p725 = scmp.eq.s32.totalorder %s40, 0
        // Predicated region
        $region125: #{tpu_custom_call.1} parent=87 // pred_check
          %p726 = pneg %p725
        $region126: #{tpu_custom_call.1} parent=87 // pred_check_branch
          %728 = sbr.rel (%p726) target = $region128
        $region127: #{tpu_custom_call.1} parent=87 // pred_region
          // Predicated region
          $region129: #{tpu_custom_call.1} parent=127 // pred_check
            _
          $region130: #{tpu_custom_call.1} parent=127 // pred_check_branch
            %730 = sbr.rel target = $region132
          $region131: #{tpu_custom_call.1} parent=127 // pred_region
            %731 = sst [smem:[#allocation23]] [#allocation22]
            %732 = sst [smem:[#allocation24]] [#allocation21]
          $region132: #{tpu_custom_call.1} parent=127 // pred_fallthru
            _
          %734 = shalt.err (0)
          %s736 = sshll.u32 %s0, 4
          %s737 = int_to_ptr.hbm [resolvable:$true] %s736
          %s738 = sshll.u32 [#allocation2], 4
          %s739 = int_to_ptr.vmem [resolvable:$true] %s738
          %741 = dma.hbm_to_vmem [thread:$0]  %s737, 1280, %s739, [#allocation3]
        $region128: #{tpu_custom_call.1} parent=87 // pred_fallthru
          _
        %s742 = sadd.s32 %s40, 1
        %p743 = scmp.lt.s32.totalorder %s742, 2
        // Predicated region
        $region133: #{tpu_custom_call.1} parent=87 // pred_check
          %p744 = pneg %p743
        $region134: #{tpu_custom_call.1} parent=87 // pred_check_branch
          %746 = sbr.rel (%p744) target = $region136
        $region135: #{tpu_custom_call.1} parent=87 // pred_region
          %s747 = smul.u32 %s742, 128
          %s748 = ssub.s32 1, %s724
          %s749 = sshra.s32 %s747, 3
          %s750 = sand.u32 %s747, 7
          %s751 = smul.addr %s749, 4
          %s752 = scalar_lea.hbm %s0, %s751
          %s753 = smul.u32 %s748, 20
          %s754 = smul.addr %s753, 4
          %s755 = scalar_lea.vmem [#allocation2], %s754
          %s756 = scalar_lea.sflag [#allocation3], %s748
          // Predicated region
          $region137: #{tpu_custom_call.1} parent=135 // pred_check
            _
          $region138: #{tpu_custom_call.1} parent=135 // pred_check_branch
            %758 = sbr.rel target = $region140
          $region139: #{tpu_custom_call.1} parent=135 // pred_region
            %759 = sst [smem:[#allocation23]] [#allocation26]
            %760 = sst [smem:[#allocation24]] [#allocation25]
          $region140: #{tpu_custom_call.1} parent=135 // pred_fallthru
            _
          %762 = shalt.err (0)
          %s764 = sshll.u32 %s752, 4
          %s765 = int_to_ptr.hbm [resolvable:$true] %s764
          %s766 = sshll.u32 %s755, 4
          %s767 = int_to_ptr.vmem [resolvable:$true] %s766
          %769 = dma.hbm_to_vmem [thread:$0]  %s765, 1280, %s767, %s756
        $region136: #{tpu_custom_call.1} parent=87 // pred_fallthru
          _
        %s770 = smul.u32 %s40, 128
        %s771 = smul.u32 %s724, 20
        %s772 = smul.addr %s771, 4
        %s773 = scalar_lea.vmem [#allocation2], %s772
        %s774 = scalar_lea.sflag [#allocation3], %s724
        %s775 = smul.u32 4, 20
        %s776 = smul.u32 %s775, 1
        %s777 = sshll.u32 %s776, 4
        %778 = dma.done %s774, %s777
        %v779 = vld [vmem:[%s773] sm:$0xc]
        %v780 = vld [vmem:[%s773 + $0x4] sm:$0xf]
        %v781 = vld [vmem:[%s773 + $0x8] sm:$0xf]
        %v782 = vld [vmem:[%s773 + $0xc] sm:$0xf]
        %v783 = vld [vmem:[%s773 + $0x10] sm:$0xf]
        %v784 = vld [vmem:[%s773 + $0x14] sm:$0xf]
        %v785 = vld [vmem:[%s773 + $0x18] sm:$0xf]
        %v786 = vld [vmem:[%s773 + $0x1c] sm:$0xf]
        %v787 = vld [vmem:[%s773 + $0x20] sm:$0xf]
        %v788 = vld [vmem:[%s773 + $0x24] sm:$0xf]
        %v789 = vld [vmem:[%s773 + $0x28] sm:$0xf]
        %v790 = vld [vmem:[%s773 + $0x2c] sm:$0xf]
        %v791 = vld [vmem:[%s773 + $0x30] sm:$0xf]
        %v792 = vld [vmem:[%s773 + $0x34] sm:$0xf]
        %v793 = vld [vmem:[%s773 + $0x38] sm:$0xf]
        %v794 = vld [vmem:[%s773 + $0x3c] sm:$0xf]
        %v795 = vld [vmem:[%s773 + $0x40] sm:$0x7]
        %v796 = vld [vmem:[%s773] sm:$0x8]
        %v797 = vld [vmem:[%s773 + $0x40] sm:$0xf]
        %v798 = vld [vmem:[%s773 + $0x4] sm:$0x8]
        %v799 = vld [vmem:[%s773 + $0x44] sm:$0xf]
        %v800 = vld [vmem:[%s773 + $0x48] sm:$0x1]
        %v801 = vld [vmem:[%s773 + $0x48] sm:$0xf]
        %v802 = vld [vmem:[%s773 + $0x4c] sm:$0x1]
        %v803 = vld [vmem:[%s773 + $0xc] sm:$0xe]
        %v804 = vld [vmem:[%s773 + $0x4c] sm:$0x3]
        %v822 = vunpack.c.l.b16 %v779
        %v823 = vunpack.c.l.b16 %v780
        %v824 = vunpack.c.l.b16 %v781
        %v825 = vunpack.c.l.b16 %v782
        %v826 = vunpack.c.l.b16 %v783
        %v827 = vunpack.c.l.b16 %v784
        %v828 = vunpack.c.l.b16 %v785
        %v829 = vunpack.c.l.b16 %v786
        %v830 = vunpack.c.l.b16 %v787
        %v831 = vunpack.c.l.b16 %v788
        %v832 = vunpack.c.l.b16 %v789
        %v833 = vunpack.c.l.b16 %v790
        %v834 = vunpack.c.l.b16 %v791
        %v835 = vunpack.c.l.b16 %v792
        %v836 = vunpack.c.l.b16 %v793
        %v837 = vunpack.c.l.b16 %v794
        %v838 = vunpack.c.l.b16 %v795
        %v839 = vpack.c.b16 %v823, %v822
        %v840 = vpack.c.b16 %v825, %v824
        %v841 = vpack.c.b16 %v827, %v826
        %v842 = vpack.c.b16 %v829, %v828
        %v843 = vpack.c.b16 %v831, %v830
        %v844 = vpack.c.b16 %v833, %v832
        %v845 = vpack.c.b16 %v835, %v834
        %v846 = vpack.c.b16 %v837, %v836
        %v847 = vpack.c.b16 %v838, %v838
        %v849 = vunpack.c.l.b16 %v796
        %v850 = vpack.c.b16 %v823, %v849
        %vm851 = vsmask.f32 7424
        %v853 = vshrl.u32 %v850, 16
        %v855 = vshll.u32 %v850, 16
        %v857 = vrot.slane %v855, 1
        %v858 = vor.u32 %v853, %v857
        %v860 = vshll.u32 %v840, 16
        %v862 = vrot.slane %v860, 1
        %v863 = vsel %vm851, %v858, %v862
        %v864 = vshrl.u32 %v840, 16
        %v866 = vor.u32 %v864, %v862
        %v868 = vshll.u32 %v841, 16
        %v870 = vrot.slane %v868, 1
        %v871 = vsel %vm851, %v866, %v870
        %v872 = vshrl.u32 %v841, 16
        %v874 = vor.u32 %v872, %v870
        %v876 = vshll.u32 %v842, 16
        %v878 = vrot.slane %v876, 1
        %v879 = vsel %vm851, %v874, %v878
        %v880 = vshrl.u32 %v842, 16
        %v882 = vor.u32 %v880, %v878
        %v884 = vshll.u32 %v843, 16
        %v886 = vrot.slane %v884, 1
        %v887 = vsel %vm851, %v882, %v886
        %v888 = vshrl.u32 %v843, 16
        %v890 = vor.u32 %v888, %v886
        %v892 = vshll.u32 %v844, 16
        %v894 = vrot.slane %v892, 1
        %v895 = vsel %vm851, %v890, %v894
        %v896 = vshrl.u32 %v844, 16
        %v898 = vor.u32 %v896, %v894
        %v900 = vshll.u32 %v845, 16
        %v902 = vrot.slane %v900, 1
        %v903 = vsel %vm851, %v898, %v902
        %v904 = vshrl.u32 %v845, 16
        %v906 = vor.u32 %v904, %v902
        %v908 = vshll.u32 %v846, 16
        %v910 = vrot.slane %v908, 1
        %v911 = vsel %vm851, %v906, %v910
        %v912 = vshrl.u32 %v846, 16
        %v914 = vor.u32 %v912, %v910
        %v916 = vshll.u32 %v847, 16
        %v918 = vrot.slane %v916, 1
        %v919 = vsel %vm851, %v914, %v918
        %v920 = vshrl.u32 %v847, 16
        %v922 = vor.u32 %v920, %v918
        %v924 = vunpack.c.l.b16 %v797
        %v925 = vpack.c.b16 %v924, %v924
        %vm926 = vcmask 1046528
        %v927 = vrot.slane %v850, 1
        %v928 = vrot.slane %v840, 1
        %v929 = vsel %vm926, %v927, %v928
        %v930 = vrot.slane %v841, 1
        %v931 = vsel %vm926, %v928, %v930
        %v932 = vrot.slane %v842, 1
        %v933 = vsel %vm926, %v930, %v932
        %v934 = vrot.slane %v843, 1
        %v935 = vsel %vm926, %v932, %v934
        %v936 = vrot.slane %v844, 1
        %v937 = vsel %vm926, %v934, %v936
        %v938 = vrot.slane %v845, 1
        %v939 = vsel %vm926, %v936, %v938
        %v940 = vrot.slane %v846, 1
        %v941 = vsel %vm926, %v938, %v940
        %v942 = vrot.slane %v925, 1
        %v943 = vsel %vm926, %v940, %v942
        %v946 = vunpack.c.l.b16 %v798
        %v947 = vunpack.c.l.b16 %v799
        %v948 = vpack.c.b16 %v824, %v946
        %v949 = vpack.c.b16 %v826, %v825
        %v950 = vpack.c.b16 %v828, %v827
        %v951 = vpack.c.b16 %v830, %v829
        %v952 = vpack.c.b16 %v832, %v831
        %v953 = vpack.c.b16 %v834, %v833
        %v954 = vpack.c.b16 %v836, %v835
        %v955 = vpack.c.b16 %v924, %v837
        %v956 = vpack.c.b16 %v947, %v947
        %v957 = vrot.slane %v948, 1
        %v958 = vrot.slane %v949, 1
        %v959 = vsel %vm926, %v957, %v958
        %v960 = vrot.slane %v950, 1
        %v961 = vsel %vm926, %v958, %v960
        %v962 = vrot.slane %v951, 1
        %v963 = vsel %vm926, %v960, %v962
        %v964 = vrot.slane %v952, 1
        %v965 = vsel %vm926, %v962, %v964
        %v966 = vrot.slane %v953, 1
        %v967 = vsel %vm926, %v964, %v966
        %v968 = vrot.slane %v954, 1
        %v969 = vsel %vm926, %v966, %v968
        %v970 = vrot.slane %v955, 1
        %v971 = vsel %vm926, %v968, %v970
        %v972 = vrot.slane %v956, 1
        %v973 = vsel %vm926, %v970, %v972
        %v974 = vpack.c.b16 %v947, %v924
        %vm975 = vsmask.f32 2304
        %v976 = vrot.slane %v864, 5
        %v977 = vrot.slane %v860, 6
        %v978 = vor.u32 %v976, %v977
        %v979 = vrot.slane %v872, 5
        %v980 = vrot.slane %v868, 6
        %v981 = vor.u32 %v979, %v980
        %v982 = vsel %vm975, %v978, %v981
        %v983 = vrot.slane %v880, 5
        %v984 = vrot.slane %v876, 6
        %v985 = vor.u32 %v983, %v984
        %v986 = vsel %vm975, %v981, %v985
        %v987 = vrot.slane %v888, 5
        %v988 = vrot.slane %v884, 6
        %v989 = vor.u32 %v987, %v988
        %v990 = vsel %vm975, %v985, %v989
        %v991 = vrot.slane %v896, 5
        %v992 = vrot.slane %v892, 6
        %v993 = vor.u32 %v991, %v992
        %v994 = vsel %vm975, %v989, %v993
        %v995 = vrot.slane %v904, 5
        %v996 = vrot.slane %v900, 6
        %v997 = vor.u32 %v995, %v996
        %v998 = vsel %vm975, %v993, %v997
        %v999 = vrot.slane %v912, 5
        %v1000 = vrot.slane %v908, 6
        %v1001 = vor.u32 %v999, %v1000
        %v1002 = vsel %vm975, %v997, %v1001
        %v1004 = vshrl.u32 %v974, 16
        %v1006 = vrot.slane %v1004, 5
        %v1007 = vshll.u32 %v974, 16
        %v1009 = vrot.slane %v1007, 6
        %v1010 = vor.u32 %v1006, %v1009
        %v1011 = vsel %vm975, %v1001, %v1010
        %v1013 = vunpack.c.l.b16 %v800
        %v1014 = vpack.c.b16 %v1013, %v1013
        %vm1015 = vcmask 1041408
        %v1016 = vrot.slane %v840, 6
        %v1017 = vrot.slane %v841, 6
        %v1018 = vsel %vm1015, %v1016, %v1017
        %v1019 = vrot.slane %v842, 6
        %v1020 = vsel %vm1015, %v1017, %v1019
        %v1021 = vrot.slane %v843, 6
        %v1022 = vsel %vm1015, %v1019, %v1021
        %v1023 = vrot.slane %v844, 6
        %v1024 = vsel %vm1015, %v1021, %v1023
        %v1025 = vrot.slane %v845, 6
        %v1026 = vsel %vm1015, %v1023, %v1025
        %v1027 = vrot.slane %v846, 6
        %v1028 = vsel %vm1015, %v1025, %v1027
        %v1029 = vrot.slane %v974, 6
        %v1030 = vsel %vm1015, %v1027, %v1029
        %v1031 = vrot.slane %v1014, 6
        %v1032 = vsel %vm1015, %v1029, %v1031
        %v1035 = vunpack.c.l.b16 %v801
        %v1036 = vunpack.c.l.b16 %v802
        %v1037 = vpack.c.b16 %v1035, %v947
        %v1038 = vpack.c.b16 %v1036, %v1036
        %v1039 = vrot.slane %v949, 6
        %v1040 = vrot.slane %v950, 6
        %v1041 = vsel %vm1015, %v1039, %v1040
        %v1042 = vrot.slane %v951, 6
        %v1043 = vsel %vm1015, %v1040, %v1042
        %v1044 = vrot.slane %v952, 6
        %v1045 = vsel %vm1015, %v1042, %v1044
        %v1046 = vrot.slane %v953, 6
        %v1047 = vsel %vm1015, %v1044, %v1046
        %v1048 = vrot.slane %v954, 6
        %v1049 = vsel %vm1015, %v1046, %v1048
        %v1050 = vrot.slane %v955, 6
        %v1051 = vsel %vm1015, %v1048, %v1050
        %v1052 = vrot.slane %v1037, 6
        %v1053 = vsel %vm1015, %v1050, %v1052
        %v1054 = vrot.slane %v1038, 6
        %v1055 = vsel %vm1015, %v1052, %v1054
        %v1057 = vunpack.c.l.b16 %v803
        %v1058 = vpack.c.b16 %v826, %v1057
        %vm1059 = vsmask.f32 1280
        %v1061 = vshrl.u32 %v1058, 16
        %v1063 = vrot.slane %v1061, 6
        %v1064 = vshll.u32 %v1058, 16
        %v1066 = vrot.slane %v1064, 7
        %v1067 = vor.u32 %v1063, %v1066
        %v1069 = vshrl.u32 %v950, 16
        %v1071 = vrot.slane %v1069, 6
        %v1072 = vshll.u32 %v950, 16
        %v1074 = vrot.slane %v1072, 7
        %v1075 = vor.u32 %v1071, %v1074
        %v1076 = vsel %vm1059, %v1067, %v1075
        %v1078 = vshrl.u32 %v951, 16
        %v1080 = vrot.slane %v1078, 6
        %v1081 = vshll.u32 %v951, 16
        %v1083 = vrot.slane %v1081, 7
        %v1084 = vor.u32 %v1080, %v1083
        %v1085 = vsel %vm1059, %v1075, %v1084
        %v1087 = vshrl.u32 %v952, 16
        %v1089 = vrot.slane %v1087, 6
        %v1090 = vshll.u32 %v952, 16
        %v1092 = vrot.slane %v1090, 7
        %v1093 = vor.u32 %v1089, %v1092
        %v1094 = vsel %vm1059, %v1084, %v1093
        %v1096 = vshrl.u32 %v953, 16
        %v1098 = vrot.slane %v1096, 6
        %v1099 = vshll.u32 %v953, 16
        %v1101 = vrot.slane %v1099, 7
        %v1102 = vor.u32 %v1098, %v1101
        %v1103 = vsel %vm1059, %v1093, %v1102
        %v1105 = vshrl.u32 %v954, 16
        %v1107 = vrot.slane %v1105, 6
        %v1108 = vshll.u32 %v954, 16
        %v1110 = vrot.slane %v1108, 7
        %v1111 = vor.u32 %v1107, %v1110
        %v1112 = vsel %vm1059, %v1102, %v1111
        %v1114 = vshrl.u32 %v955, 16
        %v1116 = vrot.slane %v1114, 6
        %v1117 = vshll.u32 %v955, 16
        %v1119 = vrot.slane %v1117, 7
        %v1120 = vor.u32 %v1116, %v1119
        %v1121 = vsel %vm1059, %v1111, %v1120
        %v1123 = vshrl.u32 %v1037, 16
        %v1125 = vrot.slane %v1123, 6
        %v1126 = vshll.u32 %v1037, 16
        %v1128 = vrot.slane %v1126, 7
        %v1129 = vor.u32 %v1125, %v1128
        %v1130 = vsel %vm1059, %v1120, %v1129
        %v1132 = vshrl.u32 %v1038, 16
        %v1134 = vrot.slane %v1132, 6
        %v1135 = vshll.u32 %v1038, 16
        %v1137 = vrot.slane %v1135, 7
        %v1138 = vor.u32 %v1134, %v1137
        %v1139 = vsel %vm1059, %v1129, %v1138
        %v1141 = vunpack.c.l.b16 %v804
        %v1142 = vpack.c.b16 %v1141, %v1141
        %vm1143 = vcmask 1040384
        %v1144 = vrot.slane %v1058, 7
        %v1145 = vrot.slane %v950, 7
        %v1146 = vsel %vm1143, %v1144, %v1145
        %v1147 = vrot.slane %v951, 7
        %v1148 = vsel %vm1143, %v1145, %v1147
        %v1149 = vrot.slane %v952, 7
        %v1150 = vsel %vm1143, %v1147, %v1149
        %v1151 = vrot.slane %v953, 7
        %v1152 = vsel %vm1143, %v1149, %v1151
        %v1153 = vrot.slane %v954, 7
        %v1154 = vsel %vm1143, %v1151, %v1153
        %v1155 = vrot.slane %v955, 7
        %v1156 = vsel %vm1143, %v1153, %v1155
        %v1157 = vrot.slane %v1037, 7
        %v1158 = vsel %vm1143, %v1155, %v1157
        %v1159 = vrot.slane %v1142, 7
        %v1160 = vsel %vm1143, %v1157, %v1159
        %v1161 = vld [vmem:[#allocation4] sm:$0xf]
        %v1162 = vld [vmem:[#allocation4 + $0x4] sm:$0xf]
        %v1163 = vld [vmem:[#allocation4 + $0x8] sm:$0xf]
        %v1164 = vld [vmem:[#allocation4 + $0xc] sm:$0xf]
        %v1165 = vld [vmem:[#allocation4 + $0x10] sm:$0xf]
        %v1166 = vld [vmem:[#allocation4 + $0x14] sm:$0xf]
        %v1167 = vld [vmem:[#allocation4 + $0x18] sm:$0xf]
        %v1168 = vld [vmem:[#allocation4 + $0x1c] sm:$0xf]
        %v1169 = vld [vmem:[#allocation4 + $0x20] sm:$0xf]
        %v1170 = vld [vmem:[#allocation4 + $0x24] sm:$0xf]
        %v1171 = vld [vmem:[#allocation4 + $0x28] sm:$0xf]
        %v1172 = vld [vmem:[#allocation4 + $0x2c] sm:$0xf]
        %v1173 = vld [vmem:[#allocation4 + $0x30] sm:$0xf]
        %v1174 = vld [vmem:[#allocation4 + $0x34] sm:$0xf]
        %v1175 = vld [vmem:[#allocation4 + $0x38] sm:$0xf]
        %v1176 = vld [vmem:[#allocation4 + $0x3c] sm:$0xf]
        %v1177 = vld [vmem:[#allocation4 + $0x40] sm:$0xf]
        %v1178 = vld [vmem:[#allocation4 + $0x44] sm:$0xf]
        %v1179 = vld [vmem:[#allocation4 + $0x48] sm:$0xf]
        %v1180 = vld [vmem:[#allocation4 + $0x4c] sm:$0xf]
        %v1181 = vld [vmem:[#allocation4 + $0x50] sm:$0xf]
        %v1182 = vld [vmem:[#allocation4 + $0x54] sm:$0xf]
        %v1183 = vld [vmem:[#allocation4 + $0x58] sm:$0xf]
        %v1184 = vld [vmem:[#allocation4 + $0x5c] sm:$0xf]
        %v1185 = vld [vmem:[#allocation4 + $0x60] sm:$0xf]
        %v1186 = vld [vmem:[#allocation4 + $0x64] sm:$0xf]
        %v1187 = vld [vmem:[#allocation4 + $0x68] sm:$0xf]
        %v1188 = vld [vmem:[#allocation4 + $0x6c] sm:$0xf]
        %v1189 = vld [vmem:[#allocation4 + $0x70] sm:$0xf]
        %v1190 = vld [vmem:[#allocation4 + $0x74] sm:$0xf]
        %v1191 = vld [vmem:[#allocation4 + $0x78] sm:$0xf]
        %v1192 = vld [vmem:[#allocation4 + $0x7c] sm:$0xf]
        %v1193 = vld [vmem:[#allocation4 + $0x80] sm:$0xf]
        %v1194 = vld [vmem:[#allocation4 + $0x84] sm:$0xf]
        %v1195 = vld [vmem:[#allocation4 + $0x88] sm:$0xf]
        %v1196 = vld [vmem:[#allocation4 + $0x8c] sm:$0xf]
        %v1197 = vld [vmem:[#allocation4 + $0x90] sm:$0xf]
        %v1198 = vld [vmem:[#allocation4 + $0x94] sm:$0xf]
        %v1199 = vld [vmem:[#allocation4 + $0x98] sm:$0xf]
        %v1200 = vld [vmem:[#allocation4 + $0x9c] sm:$0xf]
        %v1201 = vld [vmem:[#allocation4 + $0xa0] sm:$0xf]
        %v1202 = vld [vmem:[#allocation4 + $0xa4] sm:$0xf]
        %v1203 = vld [vmem:[#allocation4 + $0xa8] sm:$0xf]
        %v1204 = vld [vmem:[#allocation4 + $0xac] sm:$0xf]
        %v1205 = vld [vmem:[#allocation4 + $0xb0] sm:$0xf]
        %v1206 = vld [vmem:[#allocation4 + $0xb4] sm:$0xf]
        %v1207 = vld [vmem:[#allocation4 + $0xb8] sm:$0xf]
        %v1208 = vld [vmem:[#allocation4 + $0xbc] sm:$0xf]
        %v1209 = vld [vmem:[#allocation4 + $0xc0] sm:$0xf]
        %v1210 = vld [vmem:[#allocation4 + $0xc4] sm:$0xf]
        %v1211 = vld [vmem:[#allocation4 + $0xc8] sm:$0xf]
        %v1212 = vld [vmem:[#allocation4 + $0xcc] sm:$0xf]
        %v1213 = vld [vmem:[#allocation4 + $0xd0] sm:$0xf]
        %v1214 = vld [vmem:[#allocation4 + $0xd4] sm:$0xf]
        %v1215 = vld [vmem:[#allocation4 + $0xd8] sm:$0xf]
        %v1216 = vld [vmem:[#allocation4 + $0xdc] sm:$0xf]
        %v1217 = vld [vmem:[#allocation4 + $0xe0] sm:$0xf]
        %v1218 = vld [vmem:[#allocation4 + $0xe4] sm:$0xf]
        %v1219 = vld [vmem:[#allocation4 + $0xe8] sm:$0xf]
        %v1220 = vld [vmem:[#allocation4 + $0xec] sm:$0xf]
        %v1221 = vld [vmem:[#allocation4 + $0xf0] sm:$0xf]
        %v1222 = vld [vmem:[#allocation4 + $0xf4] sm:$0xf]
        %v1223 = vld [vmem:[#allocation4 + $0xf8] sm:$0xf]
        %v1224 = vld [vmem:[#allocation4 + $0xfc] sm:$0xf]
        %v1225 = vld [vmem:[#allocation4 + $0x100] sm:$0xf]
        %v1226 = vld [vmem:[#allocation4 + $0x104] sm:$0xf]
        %v1227 = vld [vmem:[#allocation4 + $0x108] sm:$0xf]
        %v1228 = vld [vmem:[#allocation4 + $0x10c] sm:$0xf]
        %v1229 = vld [vmem:[#allocation4 + $0x110] sm:$0xf]
        %v1230 = vld [vmem:[#allocation4 + $0x114] sm:$0xf]
        %v1231 = vld [vmem:[#allocation4 + $0x118] sm:$0xf]
        %v1232 = vld [vmem:[#allocation4 + $0x11c] sm:$0xf]
        %v1233 = vld [vmem:[#allocation4 + $0x120] sm:$0xf]
        %v1234 = vld [vmem:[#allocation4 + $0x124] sm:$0xf]
        %v1235 = vld [vmem:[#allocation4 + $0x128] sm:$0xf]
        %v1236 = vld [vmem:[#allocation4 + $0x12c] sm:$0xf]
        %v1237 = vld [vmem:[#allocation4 + $0x130] sm:$0xf]
        %v1238 = vld [vmem:[#allocation4 + $0x134] sm:$0xf]
        %v1239 = vld [vmem:[#allocation4 + $0x138] sm:$0xf]
        %v1240 = vld [vmem:[#allocation4 + $0x13c] sm:$0xf]
        %v1241 = vld [vmem:[#allocation4 + $0x140] sm:$0xf]
        %v1242 = vld [vmem:[#allocation4 + $0x144] sm:$0xf]
        %v1243 = vld [vmem:[#allocation4 + $0x148] sm:$0xf]
        %v1244 = vld [vmem:[#allocation4 + $0x14c] sm:$0xf]
        %v1245 = vld [vmem:[#allocation4 + $0x150] sm:$0xf]
        %v1246 = vld [vmem:[#allocation4 + $0x154] sm:$0xf]
        %v1247 = vld [vmem:[#allocation4 + $0x158] sm:$0xf]
        %v1248 = vld [vmem:[#allocation4 + $0x15c] sm:$0xf]
        %v1249 = vld [vmem:[#allocation4 + $0x160] sm:$0xf]
        %v1250 = vld [vmem:[#allocation4 + $0x164] sm:$0xf]
        %v1251 = vld [vmem:[#allocation4 + $0x168] sm:$0xf]
        %v1252 = vld [vmem:[#allocation4 + $0x16c] sm:$0xf]
        %v1253 = vld [vmem:[#allocation4 + $0x170] sm:$0xf]
        %v1254 = vld [vmem:[#allocation4 + $0x174] sm:$0xf]
        %v1255 = vld [vmem:[#allocation4 + $0x178] sm:$0xf]
        %v1256 = vld [vmem:[#allocation4 + $0x17c] sm:$0xf]
        %v1257 = vld [vmem:[#allocation4 + $0x180] sm:$0xf]
        %v1258 = vld [vmem:[#allocation4 + $0x184] sm:$0xf]
        %v1259 = vld [vmem:[#allocation4 + $0x188] sm:$0xf]
        %v1260 = vld [vmem:[#allocation4 + $0x18c] sm:$0xf]
        %v1261 = vld [vmem:[#allocation4 + $0x190] sm:$0xf]
        %v1262 = vld [vmem:[#allocation4 + $0x194] sm:$0xf]
        %v1263 = vld [vmem:[#allocation4 + $0x198] sm:$0xf]
        %v1264 = vld [vmem:[#allocation4 + $0x19c] sm:$0xf]
        %v1265 = vld [vmem:[#allocation4 + $0x1a0] sm:$0xf]
        %v1266 = vld [vmem:[#allocation4 + $0x1a4] sm:$0xf]
        %v1267 = vld [vmem:[#allocation4 + $0x1a8] sm:$0xf]
        %v1268 = vld [vmem:[#allocation4 + $0x1ac] sm:$0xf]
        %v1269 = vld [vmem:[#allocation4 + $0x1b0] sm:$0xf]
        %v1270 = vld [vmem:[#allocation4 + $0x1b4] sm:$0xf]
        %v1271 = vld [vmem:[#allocation4 + $0x1b8] sm:$0xf]
        %v1272 = vld [vmem:[#allocation4 + $0x1bc] sm:$0xf]
        %v1273 = vld [vmem:[#allocation4 + $0x1c0] sm:$0xf]
        %v1274 = vld [vmem:[#allocation4 + $0x1c4] sm:$0xf]
        %v1275 = vld [vmem:[#allocation4 + $0x1c8] sm:$0xf]
        %v1276 = vld [vmem:[#allocation4 + $0x1cc] sm:$0xf]
        %v1277 = vld [vmem:[#allocation4 + $0x1d0] sm:$0xf]
        %v1278 = vld [vmem:[#allocation4 + $0x1d4] sm:$0xf]
        %v1279 = vld [vmem:[#allocation4 + $0x1d8] sm:$0xf]
        %v1280 = vld [vmem:[#allocation4 + $0x1dc] sm:$0xf]
        %v1281 = vld [vmem:[#allocation4 + $0x1e0] sm:$0xf]
        %v1282 = vld [vmem:[#allocation4 + $0x1e4] sm:$0xf]
        %v1283 = vld [vmem:[#allocation4 + $0x1e8] sm:$0xf]
        %v1284 = vld [vmem:[#allocation4 + $0x1ec] sm:$0xf]
        %v1285 = vld [vmem:[#allocation4 + $0x1f0] sm:$0xf]
        %v1286 = vld [vmem:[#allocation4 + $0x1f4] sm:$0xf]
        %v1287 = vld [vmem:[#allocation4 + $0x1f8] sm:$0xf]
        %v1288 = vld [vmem:[#allocation4 + $0x1fc] sm:$0xf]
        %v1289 = vld [vmem:[#allocation4 + $0x200] sm:$0xf]
        %v1290 = vld [vmem:[#allocation4 + $0x204] sm:$0xf]
        %v1291 = vld [vmem:[#allocation4 + $0x208] sm:$0xf]
        %v1292 = vld [vmem:[#allocation4 + $0x20c] sm:$0xf]
        %v1293 = vld [vmem:[#allocation4 + $0x210] sm:$0xf]
        %v1294 = vld [vmem:[#allocation4 + $0x214] sm:$0xf]
        %v1295 = vld [vmem:[#allocation4 + $0x218] sm:$0xf]
        %v1296 = vld [vmem:[#allocation4 + $0x21c] sm:$0xf]
        %v1297 = vld [vmem:[#allocation4 + $0x220] sm:$0xf]
        %v1298 = vld [vmem:[#allocation4 + $0x224] sm:$0xf]
        %v1299 = vld [vmem:[#allocation4 + $0x228] sm:$0xf]
        %v1300 = vld [vmem:[#allocation4 + $0x22c] sm:$0xf]
        %v1301 = vld [vmem:[#allocation4 + $0x230] sm:$0xf]
        %v1302 = vld [vmem:[#allocation4 + $0x234] sm:$0xf]
        %v1303 = vld [vmem:[#allocation4 + $0x238] sm:$0xf]
        %v1304 = vld [vmem:[#allocation4 + $0x23c] sm:$0xf]
        %v1305 = vld [vmem:[%s2] sm:$0x1]
        %v1307 = vperm.slane %v1305, 0
        %vm1309 = vsmask.f32 5376
        %v1311 = vshrl.u32 %v839, 16
        %v1313 = vrot.slane %v1311, 2
        %v1314 = vshll.u32 %v839, 16
        %v1316 = vrot.slane %v1314, 3
        %v1317 = vor.u32 %v1313, %v1316
        %v1318 = vrot.slane %v864, 2
        %v1319 = vrot.slane %v860, 3
        %v1320 = vor.u32 %v1318, %v1319
        %v1321 = vsel %vm1309, %v1317, %v1320
        %v1323 = vshrl.u32 %v863, 16
        %v1325 = vrot.slane %v1323, 2
        %v1326 = vshll.u32 %v863, 16
        %v1328 = vrot.slane %v1326, 3
        %v1329 = vor.u32 %v1325, %v1328
        %v1331 = vshrl.u32 %v871, 16
        %v1333 = vrot.slane %v1331, 2
        %v1334 = vshll.u32 %v871, 16
        %v1336 = vrot.slane %v1334, 3
        %v1337 = vor.u32 %v1333, %v1336
        %v1338 = vsel %vm1309, %v1329, %v1337
        %v1340 = vshrl.u32 %v929, 16
        %v1342 = vrot.slane %v1340, 2
        %v1343 = vshll.u32 %v929, 16
        %v1345 = vrot.slane %v1343, 3
        %v1346 = vor.u32 %v1342, %v1345
        %v1348 = vshrl.u32 %v931, 16
        %v1350 = vrot.slane %v1348, 2
        %v1351 = vshll.u32 %v931, 16
        %v1353 = vrot.slane %v1351, 3
        %v1354 = vor.u32 %v1350, %v1353
        %v1355 = vsel %vm1309, %v1346, %v1354
        %v1357 = vshrl.u32 %v959, 16
        %v1359 = vrot.slane %v1357, 2
        %v1360 = vshll.u32 %v959, 16
        %v1362 = vrot.slane %v1360, 3
        %v1363 = vor.u32 %v1359, %v1362
        %v1365 = vshrl.u32 %v961, 16
        %v1367 = vrot.slane %v1365, 2
        %v1368 = vshll.u32 %v961, 16
        %v1370 = vrot.slane %v1368, 3
        %v1371 = vor.u32 %v1367, %v1370
        %v1372 = vsel %vm1309, %v1363, %v1371
        %v1374 = vshrl.u32 %v978, 16
        %v1376 = vrot.slane %v1374, 2
        %v1377 = vshll.u32 %v978, 16
        %v1379 = vrot.slane %v1377, 3
        %v1380 = vor.u32 %v1376, %v1379
        %v1382 = vshrl.u32 %v982, 16
        %v1384 = vrot.slane %v1382, 2
        %v1385 = vshll.u32 %v982, 16
        %v1387 = vrot.slane %v1385, 3
        %v1388 = vor.u32 %v1384, %v1387
        %v1389 = vsel %vm1309, %v1380, %v1388
        %v1391 = vshrl.u32 %v1016, 16
        %v1393 = vrot.slane %v1391, 2
        %v1394 = vshll.u32 %v1016, 16
        %v1396 = vrot.slane %v1394, 3
        %v1397 = vor.u32 %v1393, %v1396
        %v1399 = vshrl.u32 %v1018, 16
        %v1401 = vrot.slane %v1399, 2
        %v1402 = vshll.u32 %v1018, 16
        %v1404 = vrot.slane %v1402, 3
        %v1405 = vor.u32 %v1401, %v1404
        %v1406 = vsel %vm1309, %v1397, %v1405
        %v1408 = vshrl.u32 %v1039, 16
        %v1410 = vrot.slane %v1408, 2
        %v1411 = vshll.u32 %v1039, 16
        %v1413 = vrot.slane %v1411, 3
        %v1414 = vor.u32 %v1410, %v1413
        %v1416 = vshrl.u32 %v1041, 16
        %v1418 = vrot.slane %v1416, 2
        %v1419 = vshll.u32 %v1041, 16
        %v1421 = vrot.slane %v1419, 3
        %v1422 = vor.u32 %v1418, %v1421
        %v1423 = vsel %vm1309, %v1414, %v1422
        %v1425 = vshrl.u32 %v1067, 16
        %v1427 = vrot.slane %v1425, 2
        %v1428 = vshll.u32 %v1067, 16
        %v1430 = vrot.slane %v1428, 3
        %v1431 = vor.u32 %v1427, %v1430
        %v1433 = vshrl.u32 %v1076, 16
        %v1435 = vrot.slane %v1433, 2
        %v1436 = vshll.u32 %v1076, 16
        %v1438 = vrot.slane %v1436, 3
        %v1439 = vor.u32 %v1435, %v1438
        %v1440 = vsel %vm1309, %v1431, %v1439
        %v1442 = vshrl.u32 %v1144, 16
        %v1444 = vrot.slane %v1442, 2
        %v1445 = vshll.u32 %v1144, 16
        %v1447 = vrot.slane %v1445, 3
        %v1448 = vor.u32 %v1444, %v1447
        %v1450 = vshrl.u32 %v1146, 16
        %v1452 = vrot.slane %v1450, 2
        %v1453 = vshll.u32 %v1146, 16
        %v1455 = vrot.slane %v1453, 3
        %v1456 = vor.u32 %v1452, %v1455
        %v1457 = vsel %vm1309, %v1448, %v1456
        %v1458 = vrot.slane %v872, 2
        %v1459 = vrot.slane %v868, 3
        %v1460 = vor.u32 %v1458, %v1459
        %v1461 = vsel %vm1309, %v1320, %v1460
        %v1463 = vshrl.u32 %v879, 16
        %v1465 = vrot.slane %v1463, 2
        %v1466 = vshll.u32 %v879, 16
        %v1468 = vrot.slane %v1466, 3
        %v1469 = vor.u32 %v1465, %v1468
        %v1470 = vsel %vm1309, %v1337, %v1469
        %v1472 = vshrl.u32 %v933, 16
        %v1474 = vrot.slane %v1472, 2
        %v1475 = vshll.u32 %v933, 16
        %v1477 = vrot.slane %v1475, 3
        %v1478 = vor.u32 %v1474, %v1477
        %v1479 = vsel %vm1309, %v1354, %v1478
        %v1481 = vshrl.u32 %v963, 16
        %v1483 = vrot.slane %v1481, 2
        %v1484 = vshll.u32 %v963, 16
        %v1486 = vrot.slane %v1484, 3
        %v1487 = vor.u32 %v1483, %v1486
        %v1488 = vsel %vm1309, %v1371, %v1487
        %v1490 = vshrl.u32 %v986, 16
        %v1492 = vrot.slane %v1490, 2
        %v1493 = vshll.u32 %v986, 16
        %v1495 = vrot.slane %v1493, 3
        %v1496 = vor.u32 %v1492, %v1495
        %v1497 = vsel %vm1309, %v1388, %v1496
        %v1499 = vshrl.u32 %v1020, 16
        %v1501 = vrot.slane %v1499, 2
        %v1502 = vshll.u32 %v1020, 16
        %v1504 = vrot.slane %v1502, 3
        %v1505 = vor.u32 %v1501, %v1504
        %v1506 = vsel %vm1309, %v1405, %v1505
        %v1508 = vshrl.u32 %v1043, 16
        %v1510 = vrot.slane %v1508, 2
        %v1511 = vshll.u32 %v1043, 16
        %v1513 = vrot.slane %v1511, 3
        %v1514 = vor.u32 %v1510, %v1513
        %v1515 = vsel %vm1309, %v1422, %v1514
        %v1517 = vshrl.u32 %v1085, 16
        %v1519 = vrot.slane %v1517, 2
        %v1520 = vshll.u32 %v1085, 16
        %v1522 = vrot.slane %v1520, 3
        %v1523 = vor.u32 %v1519, %v1522
        %v1524 = vsel %vm1309, %v1439, %v1523
        %v1526 = vshrl.u32 %v1148, 16
        %v1528 = vrot.slane %v1526, 2
        %v1529 = vshll.u32 %v1148, 16
        %v1531 = vrot.slane %v1529, 3
        %v1532 = vor.u32 %v1528, %v1531
        %v1533 = vsel %vm1309, %v1456, %v1532
        %v1534 = vrot.slane %v880, 2
        %v1535 = vrot.slane %v876, 3
        %v1536 = vor.u32 %v1534, %v1535
        %v1537 = vsel %vm1309, %v1460, %v1536
        %v1539 = vshrl.u32 %v887, 16
        %v1541 = vrot.slane %v1539, 2
        %v1542 = vshll.u32 %v887, 16
        %v1544 = vrot.slane %v1542, 3
        %v1545 = vor.u32 %v1541, %v1544
        %v1546 = vsel %vm1309, %v1469, %v1545
        %v1548 = vshrl.u32 %v935, 16
        %v1550 = vrot.slane %v1548, 2
        %v1551 = vshll.u32 %v935, 16
        %v1553 = vrot.slane %v1551, 3
        %v1554 = vor.u32 %v1550, %v1553
        %v1555 = vsel %vm1309, %v1478, %v1554
        %v1557 = vshrl.u32 %v965, 16
        %v1559 = vrot.slane %v1557, 2
        %v1560 = vshll.u32 %v965, 16
        %v1562 = vrot.slane %v1560, 3
        %v1563 = vor.u32 %v1559, %v1562
        %v1564 = vsel %vm1309, %v1487, %v1563
        %v1566 = vshrl.u32 %v990, 16
        %v1568 = vrot.slane %v1566, 2
        %v1569 = vshll.u32 %v990, 16
        %v1571 = vrot.slane %v1569, 3
        %v1572 = vor.u32 %v1568, %v1571
        %v1573 = vsel %vm1309, %v1496, %v1572
        %v1575 = vshrl.u32 %v1022, 16
        %v1577 = vrot.slane %v1575, 2
        %v1578 = vshll.u32 %v1022, 16
        %v1580 = vrot.slane %v1578, 3
        %v1581 = vor.u32 %v1577, %v1580
        %v1582 = vsel %vm1309, %v1505, %v1581
        %v1584 = vshrl.u32 %v1045, 16
        %v1586 = vrot.slane %v1584, 2
        %v1587 = vshll.u32 %v1045, 16
        %v1589 = vrot.slane %v1587, 3
        %v1590 = vor.u32 %v1586, %v1589
        %v1591 = vsel %vm1309, %v1514, %v1590
        %v1593 = vshrl.u32 %v1094, 16
        %v1595 = vrot.slane %v1593, 2
        %v1596 = vshll.u32 %v1094, 16
        %v1598 = vrot.slane %v1596, 3
        %v1599 = vor.u32 %v1595, %v1598
        %v1600 = vsel %vm1309, %v1523, %v1599
        %v1602 = vshrl.u32 %v1150, 16
        %v1604 = vrot.slane %v1602, 2
        %v1605 = vshll.u32 %v1150, 16
        %v1607 = vrot.slane %v1605, 3
        %v1608 = vor.u32 %v1604, %v1607
        %v1609 = vsel %vm1309, %v1532, %v1608
        %v1610 = vrot.slane %v888, 2
        %v1611 = vrot.slane %v884, 3
        %v1612 = vor.u32 %v1610, %v1611
        %v1613 = vsel %vm1309, %v1536, %v1612
        %v1615 = vshrl.u32 %v895, 16
        %v1617 = vrot.slane %v1615, 2
        %v1618 = vshll.u32 %v895, 16
        %v1620 = vrot.slane %v1618, 3
        %v1621 = vor.u32 %v1617, %v1620
        %v1622 = vsel %vm1309, %v1545, %v1621
        %v1624 = vshrl.u32 %v937, 16
        %v1626 = vrot.slane %v1624, 2
        %v1627 = vshll.u32 %v937, 16
        %v1629 = vrot.slane %v1627, 3
        %v1630 = vor.u32 %v1626, %v1629
        %v1631 = vsel %vm1309, %v1554, %v1630
        %v1633 = vshrl.u32 %v967, 16
        %v1635 = vrot.slane %v1633, 2
        %v1636 = vshll.u32 %v967, 16
        %v1638 = vrot.slane %v1636, 3
        %v1639 = vor.u32 %v1635, %v1638
        %v1640 = vsel %vm1309, %v1563, %v1639
        %v1642 = vshrl.u32 %v994, 16
        %v1644 = vrot.slane %v1642, 2
        %v1645 = vshll.u32 %v994, 16
        %v1647 = vrot.slane %v1645, 3
        %v1648 = vor.u32 %v1644, %v1647
        %v1649 = vsel %vm1309, %v1572, %v1648
        %v1651 = vshrl.u32 %v1024, 16
        %v1653 = vrot.slane %v1651, 2
        %v1654 = vshll.u32 %v1024, 16
        %v1656 = vrot.slane %v1654, 3
        %v1657 = vor.u32 %v1653, %v1656
        %v1658 = vsel %vm1309, %v1581, %v1657
        %v1660 = vshrl.u32 %v1047, 16
        %v1662 = vrot.slane %v1660, 2
        %v1663 = vshll.u32 %v1047, 16
        %v1665 = vrot.slane %v1663, 3
        %v1666 = vor.u32 %v1662, %v1665
        %v1667 = vsel %vm1309, %v1590, %v1666
        %v1669 = vshrl.u32 %v1103, 16
        %v1671 = vrot.slane %v1669, 2
        %v1672 = vshll.u32 %v1103, 16
        %v1674 = vrot.slane %v1672, 3
        %v1675 = vor.u32 %v1671, %v1674
        %v1676 = vsel %vm1309, %v1599, %v1675
        %v1678 = vshrl.u32 %v1152, 16
        %v1680 = vrot.slane %v1678, 2
        %v1681 = vshll.u32 %v1152, 16
        %v1683 = vrot.slane %v1681, 3
        %v1684 = vor.u32 %v1680, %v1683
        %v1685 = vsel %vm1309, %v1608, %v1684
        %v1686 = vrot.slane %v896, 2
        %v1687 = vrot.slane %v892, 3
        %v1688 = vor.u32 %v1686, %v1687
        %v1689 = vsel %vm1309, %v1612, %v1688
        %v1691 = vshrl.u32 %v903, 16
        %v1693 = vrot.slane %v1691, 2
        %v1694 = vshll.u32 %v903, 16
        %v1696 = vrot.slane %v1694, 3
        %v1697 = vor.u32 %v1693, %v1696
        %v1698 = vsel %vm1309, %v1621, %v1697
        %v1700 = vshrl.u32 %v939, 16
        %v1702 = vrot.slane %v1700, 2
        %v1703 = vshll.u32 %v939, 16
        %v1705 = vrot.slane %v1703, 3
        %v1706 = vor.u32 %v1702, %v1705
        %v1707 = vsel %vm1309, %v1630, %v1706
        %v1709 = vshrl.u32 %v969, 16
        %v1711 = vrot.slane %v1709, 2
        %v1712 = vshll.u32 %v969, 16
        %v1714 = vrot.slane %v1712, 3
        %v1715 = vor.u32 %v1711, %v1714
        %v1716 = vsel %vm1309, %v1639, %v1715
        %v1718 = vshrl.u32 %v998, 16
        %v1720 = vrot.slane %v1718, 2
        %v1721 = vshll.u32 %v998, 16
        %v1723 = vrot.slane %v1721, 3
        %v1724 = vor.u32 %v1720, %v1723
        %v1725 = vsel %vm1309, %v1648, %v1724
        %v1727 = vshrl.u32 %v1026, 16
        %v1729 = vrot.slane %v1727, 2
        %v1730 = vshll.u32 %v1026, 16
        %v1732 = vrot.slane %v1730, 3
        %v1733 = vor.u32 %v1729, %v1732
        %v1734 = vsel %vm1309, %v1657, %v1733
        %v1736 = vshrl.u32 %v1049, 16
        %v1738 = vrot.slane %v1736, 2
        %v1739 = vshll.u32 %v1049, 16
        %v1741 = vrot.slane %v1739, 3
        %v1742 = vor.u32 %v1738, %v1741
        %v1743 = vsel %vm1309, %v1666, %v1742
        %v1745 = vshrl.u32 %v1112, 16
        %v1747 = vrot.slane %v1745, 2
        %v1748 = vshll.u32 %v1112, 16
        %v1750 = vrot.slane %v1748, 3
        %v1751 = vor.u32 %v1747, %v1750
        %v1752 = vsel %vm1309, %v1675, %v1751
        %v1754 = vshrl.u32 %v1154, 16
        %v1756 = vrot.slane %v1754, 2
        %v1757 = vshll.u32 %v1154, 16
        %v1759 = vrot.slane %v1757, 3
        %v1760 = vor.u32 %v1756, %v1759
        %v1761 = vsel %vm1309, %v1684, %v1760
        %v1762 = vrot.slane %v904, 2
        %v1763 = vrot.slane %v900, 3
        %v1764 = vor.u32 %v1762, %v1763
        %v1765 = vsel %vm1309, %v1688, %v1764
        %v1767 = vshrl.u32 %v911, 16
        %v1769 = vrot.slane %v1767, 2
        %v1770 = vshll.u32 %v911, 16
        %v1772 = vrot.slane %v1770, 3
        %v1773 = vor.u32 %v1769, %v1772
        %v1774 = vsel %vm1309, %v1697, %v1773
        %v1776 = vshrl.u32 %v941, 16
        %v1778 = vrot.slane %v1776, 2
        %v1779 = vshll.u32 %v941, 16
        %v1781 = vrot.slane %v1779, 3
        %v1782 = vor.u32 %v1778, %v1781
        %v1783 = vsel %vm1309, %v1706, %v1782
        %v1785 = vshrl.u32 %v971, 16
        %v1787 = vrot.slane %v1785, 2
        %v1788 = vshll.u32 %v971, 16
        %v1790 = vrot.slane %v1788, 3
        %v1791 = vor.u32 %v1787, %v1790
        %v1792 = vsel %vm1309, %v1715, %v1791
        %v1794 = vshrl.u32 %v1002, 16
        %v1796 = vrot.slane %v1794, 2
        %v1797 = vshll.u32 %v1002, 16
        %v1799 = vrot.slane %v1797, 3
        %v1800 = vor.u32 %v1796, %v1799
        %v1801 = vsel %vm1309, %v1724, %v1800
        %v1803 = vshrl.u32 %v1028, 16
        %v1805 = vrot.slane %v1803, 2
        %v1806 = vshll.u32 %v1028, 16
        %v1808 = vrot.slane %v1806, 3
        %v1809 = vor.u32 %v1805, %v1808
        %v1810 = vsel %vm1309, %v1733, %v1809
        %v1812 = vshrl.u32 %v1051, 16
        %v1814 = vrot.slane %v1812, 2
        %v1815 = vshll.u32 %v1051, 16
        %v1817 = vrot.slane %v1815, 3
        %v1818 = vor.u32 %v1814, %v1817
        %v1819 = vsel %vm1309, %v1742, %v1818
        %v1821 = vshrl.u32 %v1121, 16
        %v1823 = vrot.slane %v1821, 2
        %v1824 = vshll.u32 %v1121, 16
        %v1826 = vrot.slane %v1824, 3
        %v1827 = vor.u32 %v1823, %v1826
        %v1828 = vsel %vm1309, %v1751, %v1827
        %v1830 = vshrl.u32 %v1156, 16
        %v1832 = vrot.slane %v1830, 2
        %v1833 = vshll.u32 %v1156, 16
        %v1835 = vrot.slane %v1833, 3
        %v1836 = vor.u32 %v1832, %v1835
        %v1837 = vsel %vm1309, %v1760, %v1836
        %v1838 = vrot.slane %v912, 2
        %v1839 = vrot.slane %v908, 3
        %v1840 = vor.u32 %v1838, %v1839
        %v1841 = vsel %vm1309, %v1764, %v1840
        %v1843 = vshrl.u32 %v919, 16
        %v1845 = vrot.slane %v1843, 2
        %v1846 = vshll.u32 %v919, 16
        %v1848 = vrot.slane %v1846, 3
        %v1849 = vor.u32 %v1845, %v1848
        %v1850 = vsel %vm1309, %v1773, %v1849
        %v1852 = vshrl.u32 %v943, 16
        %v1854 = vrot.slane %v1852, 2
        %v1855 = vshll.u32 %v943, 16
        %v1857 = vrot.slane %v1855, 3
        %v1858 = vor.u32 %v1854, %v1857
        %v1859 = vsel %vm1309, %v1782, %v1858
        %v1861 = vshrl.u32 %v973, 16
        %v1863 = vrot.slane %v1861, 2
        %v1864 = vshll.u32 %v973, 16
        %v1866 = vrot.slane %v1864, 3
        %v1867 = vor.u32 %v1863, %v1866
        %v1868 = vsel %vm1309, %v1791, %v1867
        %v1870 = vshrl.u32 %v1011, 16
        %v1872 = vrot.slane %v1870, 2
        %v1873 = vshll.u32 %v1011, 16
        %v1875 = vrot.slane %v1873, 3
        %v1876 = vor.u32 %v1872, %v1875
        %v1877 = vsel %vm1309, %v1800, %v1876
        %v1879 = vshrl.u32 %v1030, 16
        %v1881 = vrot.slane %v1879, 2
        %v1882 = vshll.u32 %v1030, 16
        %v1884 = vrot.slane %v1882, 3
        %v1885 = vor.u32 %v1881, %v1884
        %v1886 = vsel %vm1309, %v1809, %v1885
        %v1888 = vshrl.u32 %v1053, 16
        %v1890 = vrot.slane %v1888, 2
        %v1891 = vshll.u32 %v1053, 16
        %v1893 = vrot.slane %v1891, 3
        %v1894 = vor.u32 %v1890, %v1893
        %v1895 = vsel %vm1309, %v1818, %v1894
        %v1897 = vshrl.u32 %v1130, 16
        %v1899 = vrot.slane %v1897, 2
        %v1900 = vshll.u32 %v1130, 16
        %v1902 = vrot.slane %v1900, 3
        %v1903 = vor.u32 %v1899, %v1902
        %v1904 = vsel %vm1309, %v1827, %v1903
        %v1906 = vshrl.u32 %v1158, 16
        %v1908 = vrot.slane %v1906, 2
        %v1909 = vshll.u32 %v1158, 16
        %v1911 = vrot.slane %v1909, 3
        %v1912 = vor.u32 %v1908, %v1911
        %v1913 = vsel %vm1309, %v1836, %v1912
        %v1914 = vrot.slane %v920, 2
        %v1915 = vrot.slane %v916, 3
        %v1916 = vor.u32 %v1914, %v1915
        %v1917 = vsel %vm1309, %v1840, %v1916
        %v1919 = vshrl.u32 %v922, 16
        %v1921 = vrot.slane %v1919, 2
        %v1922 = vshll.u32 %v922, 16
        %v1924 = vrot.slane %v1922, 3
        %v1925 = vor.u32 %v1921, %v1924
        %v1926 = vsel %vm1309, %v1849, %v1925
        %v1928 = vshrl.u32 %v942, 16
        %v1930 = vrot.slane %v1928, 2
        %v1931 = vshll.u32 %v942, 16
        %v1933 = vrot.slane %v1931, 3
        %v1934 = vor.u32 %v1930, %v1933
        %v1935 = vsel %vm1309, %v1858, %v1934
        %v1937 = vshrl.u32 %v972, 16
        %v1939 = vrot.slane %v1937, 2
        %v1940 = vshll.u32 %v972, 16
        %v1942 = vrot.slane %v1940, 3
        %v1943 = vor.u32 %v1939, %v1942
        %v1944 = vsel %vm1309, %v1867, %v1943
        %v1946 = vshrl.u32 %v1010, 16
        %v1948 = vrot.slane %v1946, 2
        %v1949 = vshll.u32 %v1010, 16
        %v1951 = vrot.slane %v1949, 3
        %v1952 = vor.u32 %v1948, %v1951
        %v1953 = vsel %vm1309, %v1876, %v1952
        %v1955 = vshrl.u32 %v1032, 16
        %v1957 = vrot.slane %v1955, 2
        %v1958 = vshll.u32 %v1032, 16
        %v1960 = vrot.slane %v1958, 3
        %v1961 = vor.u32 %v1957, %v1960
        %v1962 = vsel %vm1309, %v1885, %v1961
        %v1964 = vshrl.u32 %v1055, 16
        %v1966 = vrot.slane %v1964, 2
        %v1967 = vshll.u32 %v1055, 16
        %v1969 = vrot.slane %v1967, 3
        %v1970 = vor.u32 %v1966, %v1969
        %v1971 = vsel %vm1309, %v1894, %v1970
        %v1973 = vshrl.u32 %v1139, 16
        %v1975 = vrot.slane %v1973, 2
        %v1976 = vshll.u32 %v1139, 16
        %v1978 = vrot.slane %v1976, 3
        %v1979 = vor.u32 %v1975, %v1978
        %v1980 = vsel %vm1309, %v1903, %v1979
        %v1982 = vshrl.u32 %v1160, 16
        %v1984 = vrot.slane %v1982, 2
        %v1985 = vshll.u32 %v1160, 16
        %v1987 = vrot.slane %v1985, 3
        %v1988 = vor.u32 %v1984, %v1987
        %v1989 = vsel %vm1309, %v1912, %v1988
        %v2206 = vunpack.c.l.b16 %v1161
        %v2207 = vunpack.c.l.b16 %v1162
        %v2208 = vunpack.c.l.b16 %v1163
        %v2209 = vunpack.c.l.b16 %v1164
        %v2210 = vunpack.c.l.b16 %v1165
        %v2211 = vunpack.c.l.b16 %v1166
        %v2212 = vunpack.c.l.b16 %v1167
        %v2213 = vunpack.c.l.b16 %v1168
        %v2214 = vunpack.c.l.b16 %v1169
        %v2215 = vunpack.c.l.b16 %v1170
        %v2216 = vunpack.c.l.b16 %v1171
        %v2217 = vunpack.c.l.b16 %v1172
        %v2218 = vunpack.c.l.b16 %v1173
        %v2219 = vunpack.c.l.b16 %v1174
        %v2220 = vunpack.c.l.b16 %v1175
        %v2221 = vunpack.c.l.b16 %v1176
        %v2222 = vunpack.c.l.b16 %v1177
        %v2223 = vunpack.c.l.b16 %v1178
        %v2224 = vunpack.c.l.b16 %v1179
        %v2225 = vunpack.c.l.b16 %v1180
        %v2226 = vunpack.c.l.b16 %v1181
        %v2227 = vunpack.c.l.b16 %v1182
        %v2228 = vunpack.c.l.b16 %v1183
        %v2229 = vunpack.c.l.b16 %v1184
        %v2230 = vunpack.c.l.b16 %v1185
        %v2231 = vunpack.c.l.b16 %v1186
        %v2232 = vunpack.c.l.b16 %v1187
        %v2233 = vunpack.c.l.b16 %v1188
        %v2234 = vunpack.c.l.b16 %v1189
        %v2235 = vunpack.c.l.b16 %v1190
        %v2236 = vunpack.c.l.b16 %v1191
        %v2237 = vunpack.c.l.b16 %v1192
        %v2238 = vunpack.c.l.b16 %v1193
        %v2239 = vunpack.c.l.b16 %v1194
        %v2240 = vunpack.c.l.b16 %v1195
        %v2241 = vunpack.c.l.b16 %v1196
        %v2242 = vunpack.c.l.b16 %v1197
        %v2243 = vunpack.c.l.b16 %v1198
        %v2244 = vunpack.c.l.b16 %v1199
        %v2245 = vunpack.c.l.b16 %v1200
        %v2246 = vunpack.c.l.b16 %v1201
        %v2247 = vunpack.c.l.b16 %v1202
        %v2248 = vunpack.c.l.b16 %v1203
        %v2249 = vunpack.c.l.b16 %v1204
        %v2250 = vunpack.c.l.b16 %v1205
        %v2251 = vunpack.c.l.b16 %v1206
        %v2252 = vunpack.c.l.b16 %v1207
        %v2253 = vunpack.c.l.b16 %v1208
        %v2254 = vunpack.c.l.b16 %v1209
        %v2255 = vunpack.c.l.b16 %v1210
        %v2256 = vunpack.c.l.b16 %v1211
        %v2257 = vunpack.c.l.b16 %v1212
        %v2258 = vunpack.c.l.b16 %v1213
        %v2259 = vunpack.c.l.b16 %v1214
        %v2260 = vunpack.c.l.b16 %v1215
        %v2261 = vunpack.c.l.b16 %v1216
        %v2262 = vunpack.c.l.b16 %v1217
        %v2263 = vunpack.c.l.b16 %v1218
        %v2264 = vunpack.c.l.b16 %v1219
        %v2265 = vunpack.c.l.b16 %v1220
        %v2266 = vunpack.c.l.b16 %v1221
        %v2267 = vunpack.c.l.b16 %v1222
        %v2268 = vunpack.c.l.b16 %v1223
        %v2269 = vunpack.c.l.b16 %v1224
        %v2270 = vunpack.c.l.b16 %v1225
        %v2271 = vunpack.c.l.b16 %v1226
        %v2272 = vunpack.c.l.b16 %v1227
        %v2273 = vunpack.c.l.b16 %v1228
        %v2274 = vunpack.c.l.b16 %v1229
        %v2275 = vunpack.c.l.b16 %v1230
        %v2276 = vunpack.c.l.b16 %v1231
        %v2277 = vunpack.c.l.b16 %v1232
        %v2278 = vunpack.c.l.b16 %v1233
        %v2279 = vunpack.c.l.b16 %v1234
        %v2280 = vunpack.c.l.b16 %v1235
        %v2281 = vunpack.c.l.b16 %v1236
        %v2282 = vunpack.c.l.b16 %v1237
        %v2283 = vunpack.c.l.b16 %v1238
        %v2284 = vunpack.c.l.b16 %v1239
        %v2285 = vunpack.c.l.b16 %v1240
        %v2286 = vunpack.c.l.b16 %v1241
        %v2287 = vunpack.c.l.b16 %v1242
        %v2288 = vunpack.c.l.b16 %v1243
        %v2289 = vunpack.c.l.b16 %v1244
        %v2290 = vunpack.c.l.b16 %v1245
        %v2291 = vunpack.c.l.b16 %v1246
        %v2292 = vunpack.c.l.b16 %v1247
        %v2293 = vunpack.c.l.b16 %v1248
        %v2294 = vunpack.c.l.b16 %v1249
        %v2295 = vunpack.c.l.b16 %v1250
        %v2296 = vunpack.c.l.b16 %v1251
        %v2297 = vunpack.c.l.b16 %v1252
        %v2298 = vunpack.c.l.b16 %v1253
        %v2299 = vunpack.c.l.b16 %v1254
        %v2300 = vunpack.c.l.b16 %v1255
        %v2301 = vunpack.c.l.b16 %v1256
        %v2302 = vunpack.c.l.b16 %v1257
        %v2303 = vunpack.c.l.b16 %v1258
        %v2304 = vunpack.c.l.b16 %v1259
        %v2305 = vunpack.c.l.b16 %v1260
        %v2306 = vunpack.c.l.b16 %v1261
        %v2307 = vunpack.c.l.b16 %v1262
        %v2308 = vunpack.c.l.b16 %v1263
        %v2309 = vunpack.c.l.b16 %v1264
        %v2310 = vunpack.c.l.b16 %v1265
        %v2311 = vunpack.c.l.b16 %v1266
        %v2312 = vunpack.c.l.b16 %v1267
        %v2313 = vunpack.c.l.b16 %v1268
        %v2314 = vunpack.c.l.b16 %v1269
        %v2315 = vunpack.c.l.b16 %v1270
        %v2316 = vunpack.c.l.b16 %v1271
        %v2317 = vunpack.c.l.b16 %v1272
        %v2318 = vunpack.c.l.b16 %v1273
        %v2319 = vunpack.c.l.b16 %v1274
        %v2320 = vunpack.c.l.b16 %v1275
        %v2321 = vunpack.c.l.b16 %v1276
        %v2322 = vunpack.c.l.b16 %v1277
        %v2323 = vunpack.c.l.b16 %v1278
        %v2324 = vunpack.c.l.b16 %v1279
        %v2325 = vunpack.c.l.b16 %v1280
        %v2326 = vunpack.c.l.b16 %v1281
        %v2327 = vunpack.c.l.b16 %v1282
        %v2328 = vunpack.c.l.b16 %v1283
        %v2329 = vunpack.c.l.b16 %v1284
        %v2330 = vunpack.c.l.b16 %v1285
        %v2331 = vunpack.c.l.b16 %v1286
        %v2332 = vunpack.c.l.b16 %v1287
        %v2333 = vunpack.c.l.b16 %v1288
        %v2334 = vunpack.c.l.b16 %v1289
        %v2335 = vunpack.c.l.b16 %v1290
        %v2336 = vunpack.c.l.b16 %v1291
        %v2337 = vunpack.c.l.b16 %v1292
        %v2338 = vunpack.c.l.b16 %v1293
        %v2339 = vunpack.c.l.b16 %v1294
        %v2340 = vunpack.c.l.b16 %v1295
        %v2341 = vunpack.c.l.b16 %v1296
        %v2342 = vunpack.c.l.b16 %v1297
        %v2343 = vunpack.c.l.b16 %v1298
        %v2344 = vunpack.c.l.b16 %v1299
        %v2345 = vunpack.c.l.b16 %v1300
        %v2346 = vunpack.c.l.b16 %v1301
        %v2347 = vunpack.c.l.b16 %v1302
        %v2348 = vunpack.c.l.b16 %v1303
        %v2349 = vunpack.c.l.b16 %v1304
        %v2350 = vpack.c.b16 %v2207, %v2206
        %v2351 = vpack.c.b16 %v2209, %v2208
        %v2352 = vpack.c.b16 %v2211, %v2210
        %v2353 = vpack.c.b16 %v2213, %v2212
        %v2354 = vpack.c.b16 %v2215, %v2214
        %v2355 = vpack.c.b16 %v2217, %v2216
        %v2356 = vpack.c.b16 %v2219, %v2218
        %v2357 = vpack.c.b16 %v2221, %v2220
        %v2358 = vpack.c.b16 %v2223, %v2222
        %v2359 = vpack.c.b16 %v2225, %v2224
        %v2360 = vpack.c.b16 %v2227, %v2226
        %v2361 = vpack.c.b16 %v2229, %v2228
        %v2362 = vpack.c.b16 %v2231, %v2230
        %v2363 = vpack.c.b16 %v2233, %v2232
        %v2364 = vpack.c.b16 %v2235, %v2234
        %v2365 = vpack.c.b16 %v2237, %v2236
        %v2366 = vpack.c.b16 %v2239, %v2238
        %v2367 = vpack.c.b16 %v2241, %v2240
        %v2368 = vpack.c.b16 %v2243, %v2242
        %v2369 = vpack.c.b16 %v2245, %v2244
        %v2370 = vpack.c.b16 %v2247, %v2246
        %v2371 = vpack.c.b16 %v2249, %v2248
        %v2372 = vpack.c.b16 %v2251, %v2250
        %v2373 = vpack.c.b16 %v2253, %v2252
        %v2374 = vpack.c.b16 %v2255, %v2254
        %v2375 = vpack.c.b16 %v2257, %v2256
        %v2376 = vpack.c.b16 %v2259, %v2258
        %v2377 = vpack.c.b16 %v2261, %v2260
        %v2378 = vpack.c.b16 %v2263, %v2262
        %v2379 = vpack.c.b16 %v2265, %v2264
        %v2380 = vpack.c.b16 %v2267, %v2266
        %v2381 = vpack.c.b16 %v2269, %v2268
        %v2382 = vpack.c.b16 %v2271, %v2270
        %v2383 = vpack.c.b16 %v2273, %v2272
        %v2384 = vpack.c.b16 %v2275, %v2274
        %v2385 = vpack.c.b16 %v2277, %v2276
        %v2386 = vpack.c.b16 %v2279, %v2278
        %v2387 = vpack.c.b16 %v2281, %v2280
        %v2388 = vpack.c.b16 %v2283, %v2282
        %v2389 = vpack.c.b16 %v2285, %v2284
        %v2390 = vpack.c.b16 %v2287, %v2286
        %v2391 = vpack.c.b16 %v2289, %v2288
        %v2392 = vpack.c.b16 %v2291, %v2290
        %v2393 = vpack.c.b16 %v2293, %v2292
        %v2394 = vpack.c.b16 %v2295, %v2294
        %v2395 = vpack.c.b16 %v2297, %v2296
        %v2396 = vpack.c.b16 %v2299, %v2298
        %v2397 = vpack.c.b16 %v2301, %v2300
        %v2398 = vpack.c.b16 %v2303, %v2302
        %v2399 = vpack.c.b16 %v2305, %v2304
        %v2400 = vpack.c.b16 %v2307, %v2306
        %v2401 = vpack.c.b16 %v2309, %v2308
        %v2402 = vpack.c.b16 %v2311, %v2310
        %v2403 = vpack.c.b16 %v2313, %v2312
        %v2404 = vpack.c.b16 %v2315, %v2314
        %v2405 = vpack.c.b16 %v2317, %v2316
        %v2406 = vpack.c.b16 %v2319, %v2318
        %v2407 = vpack.c.b16 %v2321, %v2320
        %v2408 = vpack.c.b16 %v2323, %v2322
        %v2409 = vpack.c.b16 %v2325, %v2324
        %v2410 = vpack.c.b16 %v2327, %v2326
        %v2411 = vpack.c.b16 %v2329, %v2328
        %v2412 = vpack.c.b16 %v2331, %v2330
        %v2413 = vpack.c.b16 %v2333, %v2332
        %v2414 = vpack.c.b16 %v2335, %v2334
        %v2415 = vpack.c.b16 %v2337, %v2336
        %v2416 = vpack.c.b16 %v2339, %v2338
        %v2417 = vpack.c.b16 %v2341, %v2340
        %v2418 = vpack.c.b16 %v2343, %v2342
        %v2419 = vpack.c.b16 %v2345, %v2344
        %v2420 = vpack.c.b16 %v2347, %v2346
        %v2421 = vpack.c.b16 %v2349, %v2348
        %2494 = vmatpush.bf16.msra.mxu0 %v2357
        %2495 = vmatpush.bf16.msra.mxu0 %v2356
        %2496 = vmatpush.bf16.msra.mxu0 %v2355
        %2497 = vmatpush.bf16.msra.mxu0 %v2354
        %2498 = vmatpush.bf16.msra.mxu0 %v2353
        %2499 = vmatpush.bf16.msra.mxu0 %v2352
        %2500 = vmatpush.bf16.msra.mxu0 %v2351
        %2501 = vmatpush.bf16.msra.mxu0 %v2350
        %2502 = vmatmul.bf16.gmra.mxu0 %v1321
        %v2503 = vpop.f32.mrf.mxu0
        %v2504 = vadd.f32 %v1307, %v2503
        %v2505 = vpop.f32.mrf.mxu0
        %v2506 = vadd.f32 %v1307, %v2505
        %2507 = vmatmul.bf16.gmra.mxu0 %v1461
        %v2508 = vpop.f32.mrf.mxu0
        %v2509 = vadd.f32 %v1307, %v2508
        %v2510 = vpop.f32.mrf.mxu0
        %v2511 = vadd.f32 %v1307, %v2510
        %2512 = vmatmul.bf16.gmra.mxu0 %v1537
        %v2513 = vpop.f32.mrf.mxu0
        %v2514 = vadd.f32 %v1307, %v2513
        %v2515 = vpop.f32.mrf.mxu0
        %v2516 = vadd.f32 %v1307, %v2515
        %2517 = vmatmul.bf16.gmra.mxu0 %v1613
        %v2518 = vpop.f32.mrf.mxu0
        %v2519 = vadd.f32 %v1307, %v2518
        %v2520 = vpop.f32.mrf.mxu0
        %v2521 = vadd.f32 %v1307, %v2520
        %2522 = vmatmul.bf16.gmra.mxu0 %v1689
        %v2523 = vpop.f32.mrf.mxu0
        %v2524 = vadd.f32 %v1307, %v2523
        %v2525 = vpop.f32.mrf.mxu0
        %v2526 = vadd.f32 %v1307, %v2525
        %2527 = vmatmul.bf16.gmra.mxu0 %v1765
        %v2528 = vpop.f32.mrf.mxu0
        %v2529 = vadd.f32 %v1307, %v2528
        %v2530 = vpop.f32.mrf.mxu0
        %v2531 = vadd.f32 %v1307, %v2530
        %2532 = vmatmul.bf16.gmra.mxu0 %v1841
        %v2533 = vpop.f32.mrf.mxu0
        %v2534 = vadd.f32 %v1307, %v2533
        %v2535 = vpop.f32.mrf.mxu0
        %v2536 = vadd.f32 %v1307, %v2535
        %2537 = vmatmul.bf16.gmra.mxu0 %v1917
        %v2538 = vpop.f32.mrf.mxu0
        %v2539 = vadd.f32 %v1307, %v2538
        %v2540 = vpop.f32.mrf.mxu0
        %v2541 = vadd.f32 %v1307, %v2540
        %2542 = vdwg.mxu0
        %2543 = vmatpush.bf16.msra.mxu0 %v2365
        %2544 = vmatpush.bf16.msra.mxu0 %v2364
        %2545 = vmatpush.bf16.msra.mxu0 %v2363
        %2546 = vmatpush.bf16.msra.mxu0 %v2362
        %2547 = vmatpush.bf16.msra.mxu0 %v2361
        %2548 = vmatpush.bf16.msra.mxu0 %v2360
        %2549 = vmatpush.bf16.msra.mxu0 %v2359
        %2550 = vmatpush.bf16.msra.mxu0 %v2358
        %2551 = vmatmul.bf16.gmra.mxu0 %v1338
        %v2552 = vpop.f32.mrf.mxu0
        %v2553 = vadd.f32 %v2504, %v2552
        %v2554 = vpop.f32.mrf.mxu0
        %v2555 = vadd.f32 %v2506, %v2554
        %2556 = vmatmul.bf16.gmra.mxu0 %v1470
        %v2557 = vpop.f32.mrf.mxu0
        %v2558 = vadd.f32 %v2509, %v2557
        %v2559 = vpop.f32.mrf.mxu0
        %v2560 = vadd.f32 %v2511, %v2559
        %2561 = vmatmul.bf16.gmra.mxu0 %v1546
        %v2562 = vpop.f32.mrf.mxu0
        %v2563 = vadd.f32 %v2514, %v2562
        %v2564 = vpop.f32.mrf.mxu0
        %v2565 = vadd.f32 %v2516, %v2564
        %2566 = vmatmul.bf16.gmra.mxu0 %v1622
        %v2567 = vpop.f32.mrf.mxu0
        %v2568 = vadd.f32 %v2519, %v2567
        %v2569 = vpop.f32.mrf.mxu0
        %v2570 = vadd.f32 %v2521, %v2569
        %2571 = vmatmul.bf16.gmra.mxu0 %v1698
        %v2572 = vpop.f32.mrf.mxu0
        %v2573 = vadd.f32 %v2524, %v2572
        %v2574 = vpop.f32.mrf.mxu0
        %v2575 = vadd.f32 %v2526, %v2574
        %2576 = vmatmul.bf16.gmra.mxu0 %v1774
        %v2577 = vpop.f32.mrf.mxu0
        %v2578 = vadd.f32 %v2529, %v2577
        %v2579 = vpop.f32.mrf.mxu0
        %v2580 = vadd.f32 %v2531, %v2579
        %2581 = vmatmul.bf16.gmra.mxu0 %v1850
        %v2582 = vpop.f32.mrf.mxu0
        %v2583 = vadd.f32 %v2534, %v2582
        %v2584 = vpop.f32.mrf.mxu0
        %v2585 = vadd.f32 %v2536, %v2584
        %2586 = vmatmul.bf16.gmra.mxu0 %v1926
        %v2587 = vpop.f32.mrf.mxu0
        %v2588 = vadd.f32 %v2539, %v2587
        %v2589 = vpop.f32.mrf.mxu0
        %v2590 = vadd.f32 %v2541, %v2589
        %2591 = vdwg.mxu0
        %2592 = vmatpush.bf16.msra.mxu0 %v2373
        %2593 = vmatpush.bf16.msra.mxu0 %v2372
        %2594 = vmatpush.bf16.msra.mxu0 %v2371
        %2595 = vmatpush.bf16.msra.mxu0 %v2370
        %2596 = vmatpush.bf16.msra.mxu0 %v2369
        %2597 = vmatpush.bf16.msra.mxu0 %v2368
        %2598 = vmatpush.bf16.msra.mxu0 %v2367
        %2599 = vmatpush.bf16.msra.mxu0 %v2366
        %2600 = vmatmul.bf16.gmra.mxu0 %v1355
        %v2601 = vpop.f32.mrf.mxu0
        %v2602 = vadd.f32 %v2553, %v2601
        %v2603 = vpop.f32.mrf.mxu0
        %v2604 = vadd.f32 %v2555, %v2603
        %2605 = vmatmul.bf16.gmra.mxu0 %v1479
        %v2606 = vpop.f32.mrf.mxu0
        %v2607 = vadd.f32 %v2558, %v2606
        %v2608 = vpop.f32.mrf.mxu0
        %v2609 = vadd.f32 %v2560, %v2608
        %2610 = vmatmul.bf16.gmra.mxu0 %v1555
        %v2611 = vpop.f32.mrf.mxu0
        %v2612 = vadd.f32 %v2563, %v2611
        %v2613 = vpop.f32.mrf.mxu0
        %v2614 = vadd.f32 %v2565, %v2613
        %2615 = vmatmul.bf16.gmra.mxu0 %v1631
        %v2616 = vpop.f32.mrf.mxu0
        %v2617 = vadd.f32 %v2568, %v2616
        %v2618 = vpop.f32.mrf.mxu0
        %v2619 = vadd.f32 %v2570, %v2618
        %2620 = vmatmul.bf16.gmra.mxu0 %v1707
        %v2621 = vpop.f32.mrf.mxu0
        %v2622 = vadd.f32 %v2573, %v2621
        %v2623 = vpop.f32.mrf.mxu0
        %v2624 = vadd.f32 %v2575, %v2623
        %2625 = vmatmul.bf16.gmra.mxu0 %v1783
        %v2626 = vpop.f32.mrf.mxu0
        %v2627 = vadd.f32 %v2578, %v2626
        %v2628 = vpop.f32.mrf.mxu0
        %v2629 = vadd.f32 %v2580, %v2628
        %2630 = vmatmul.bf16.gmra.mxu0 %v1859
        %v2631 = vpop.f32.mrf.mxu0
        %v2632 = vadd.f32 %v2583, %v2631
        %v2633 = vpop.f32.mrf.mxu0
        %v2634 = vadd.f32 %v2585, %v2633
        %2635 = vmatmul.bf16.gmra.mxu0 %v1935
        %v2636 = vpop.f32.mrf.mxu0
        %v2637 = vadd.f32 %v2588, %v2636
        %v2638 = vpop.f32.mrf.mxu0
        %v2639 = vadd.f32 %v2590, %v2638
        %2640 = vdwg.mxu0
        %2641 = vmatpush.bf16.msra.mxu0 %v2381
        %2642 = vmatpush.bf16.msra.mxu0 %v2380
        %2643 = vmatpush.bf16.msra.mxu0 %v2379
        %2644 = vmatpush.bf16.msra.mxu0 %v2378
        %2645 = vmatpush.bf16.msra.mxu0 %v2377
        %2646 = vmatpush.bf16.msra.mxu0 %v2376
        %2647 = vmatpush.bf16.msra.mxu0 %v2375
        %2648 = vmatpush.bf16.msra.mxu0 %v2374
        %2649 = vmatmul.bf16.gmra.mxu0 %v1372
        %v2650 = vpop.f32.mrf.mxu0
        %v2651 = vadd.f32 %v2602, %v2650
        %v2652 = vpop.f32.mrf.mxu0
        %v2653 = vadd.f32 %v2604, %v2652
        %2654 = vmatmul.bf16.gmra.mxu0 %v1488
        %v2655 = vpop.f32.mrf.mxu0
        %v2656 = vadd.f32 %v2607, %v2655
        %v2657 = vpop.f32.mrf.mxu0
        %v2658 = vadd.f32 %v2609, %v2657
        %2659 = vmatmul.bf16.gmra.mxu0 %v1564
        %v2660 = vpop.f32.mrf.mxu0
        %v2661 = vadd.f32 %v2612, %v2660
        %v2662 = vpop.f32.mrf.mxu0
        %v2663 = vadd.f32 %v2614, %v2662
        %2664 = vmatmul.bf16.gmra.mxu0 %v1640
        %v2665 = vpop.f32.mrf.mxu0
        %v2666 = vadd.f32 %v2617, %v2665
        %v2667 = vpop.f32.mrf.mxu0
        %v2668 = vadd.f32 %v2619, %v2667
        %2669 = vmatmul.bf16.gmra.mxu0 %v1716
        %v2670 = vpop.f32.mrf.mxu0
        %v2671 = vadd.f32 %v2622, %v2670
        %v2672 = vpop.f32.mrf.mxu0
        %v2673 = vadd.f32 %v2624, %v2672
        %2674 = vmatmul.bf16.gmra.mxu0 %v1792
        %v2675 = vpop.f32.mrf.mxu0
        %v2676 = vadd.f32 %v2627, %v2675
        %v2677 = vpop.f32.mrf.mxu0
        %v2678 = vadd.f32 %v2629, %v2677
        %2679 = vmatmul.bf16.gmra.mxu0 %v1868
        %v2680 = vpop.f32.mrf.mxu0
        %v2681 = vadd.f32 %v2632, %v2680
        %v2682 = vpop.f32.mrf.mxu0
        %v2683 = vadd.f32 %v2634, %v2682
        %2684 = vmatmul.bf16.gmra.mxu0 %v1944
        %v2685 = vpop.f32.mrf.mxu0
        %v2686 = vadd.f32 %v2637, %v2685
        %v2687 = vpop.f32.mrf.mxu0
        %v2688 = vadd.f32 %v2639, %v2687
        %2689 = vdwg.mxu0
        %2690 = vmatpush.bf16.msra.mxu0 %v2389
        %2691 = vmatpush.bf16.msra.mxu0 %v2388
        %2692 = vmatpush.bf16.msra.mxu0 %v2387
        %2693 = vmatpush.bf16.msra.mxu0 %v2386
        %2694 = vmatpush.bf16.msra.mxu0 %v2385
        %2695 = vmatpush.bf16.msra.mxu0 %v2384
        %2696 = vmatpush.bf16.msra.mxu0 %v2383
        %2697 = vmatpush.bf16.msra.mxu0 %v2382
        %2698 = vmatmul.bf16.gmra.mxu0 %v1389
        %v2699 = vpop.f32.mrf.mxu0
        %v2700 = vadd.f32 %v2651, %v2699
        %v2701 = vpop.f32.mrf.mxu0
        %v2702 = vadd.f32 %v2653, %v2701
        %2703 = vmatmul.bf16.gmra.mxu0 %v1497
        %v2704 = vpop.f32.mrf.mxu0
        %v2705 = vadd.f32 %v2656, %v2704
        %v2706 = vpop.f32.mrf.mxu0
        %v2707 = vadd.f32 %v2658, %v2706
        %2708 = vmatmul.bf16.gmra.mxu0 %v1573
        %v2709 = vpop.f32.mrf.mxu0
        %v2710 = vadd.f32 %v2661, %v2709
        %v2711 = vpop.f32.mrf.mxu0
        %v2712 = vadd.f32 %v2663, %v2711
        %2713 = vmatmul.bf16.gmra.mxu0 %v1649
        %v2714 = vpop.f32.mrf.mxu0
        %v2715 = vadd.f32 %v2666, %v2714
        %v2716 = vpop.f32.mrf.mxu0
        %v2717 = vadd.f32 %v2668, %v2716
        %2718 = vmatmul.bf16.gmra.mxu0 %v1725
        %v2719 = vpop.f32.mrf.mxu0
        %v2720 = vadd.f32 %v2671, %v2719
        %v2721 = vpop.f32.mrf.mxu0
        %v2722 = vadd.f32 %v2673, %v2721
        %2723 = vmatmul.bf16.gmra.mxu0 %v1801
        %v2724 = vpop.f32.mrf.mxu0
        %v2725 = vadd.f32 %v2676, %v2724
        %v2726 = vpop.f32.mrf.mxu0
        %v2727 = vadd.f32 %v2678, %v2726
        %2728 = vmatmul.bf16.gmra.mxu0 %v1877
        %v2729 = vpop.f32.mrf.mxu0
        %v2730 = vadd.f32 %v2681, %v2729
        %v2731 = vpop.f32.mrf.mxu0
        %v2732 = vadd.f32 %v2683, %v2731
        %2733 = vmatmul.bf16.gmra.mxu0 %v1953
        %v2734 = vpop.f32.mrf.mxu0
        %v2735 = vadd.f32 %v2686, %v2734
        %v2736 = vpop.f32.mrf.mxu0
        %v2737 = vadd.f32 %v2688, %v2736
        %2738 = vdwg.mxu0
        %2739 = vmatpush.bf16.msra.mxu0 %v2397
        %2740 = vmatpush.bf16.msra.mxu0 %v2396
        %2741 = vmatpush.bf16.msra.mxu0 %v2395
        %2742 = vmatpush.bf16.msra.mxu0 %v2394
        %2743 = vmatpush.bf16.msra.mxu0 %v2393
        %2744 = vmatpush.bf16.msra.mxu0 %v2392
        %2745 = vmatpush.bf16.msra.mxu0 %v2391
        %2746 = vmatpush.bf16.msra.mxu0 %v2390
        %2747 = vmatmul.bf16.gmra.mxu0 %v1406
        %v2748 = vpop.f32.mrf.mxu0
        %v2749 = vadd.f32 %v2700, %v2748
        %v2750 = vpop.f32.mrf.mxu0
        %v2751 = vadd.f32 %v2702, %v2750
        %2752 = vmatmul.bf16.gmra.mxu0 %v1506
        %v2753 = vpop.f32.mrf.mxu0
        %v2754 = vadd.f32 %v2705, %v2753
        %v2755 = vpop.f32.mrf.mxu0
        %v2756 = vadd.f32 %v2707, %v2755
        %2757 = vmatmul.bf16.gmra.mxu0 %v1582
        %v2758 = vpop.f32.mrf.mxu0
        %v2759 = vadd.f32 %v2710, %v2758
        %v2760 = vpop.f32.mrf.mxu0
        %v2761 = vadd.f32 %v2712, %v2760
        %2762 = vmatmul.bf16.gmra.mxu0 %v1658
        %v2763 = vpop.f32.mrf.mxu0
        %v2764 = vadd.f32 %v2715, %v2763
        %v2765 = vpop.f32.mrf.mxu0
        %v2766 = vadd.f32 %v2717, %v2765
        %2767 = vmatmul.bf16.gmra.mxu0 %v1734
        %v2768 = vpop.f32.mrf.mxu0
        %v2769 = vadd.f32 %v2720, %v2768
        %v2770 = vpop.f32.mrf.mxu0
        %v2771 = vadd.f32 %v2722, %v2770
        %2772 = vmatmul.bf16.gmra.mxu0 %v1810
        %v2773 = vpop.f32.mrf.mxu0
        %v2774 = vadd.f32 %v2725, %v2773
        %v2775 = vpop.f32.mrf.mxu0
        %v2776 = vadd.f32 %v2727, %v2775
        %2777 = vmatmul.bf16.gmra.mxu0 %v1886
        %v2778 = vpop.f32.mrf.mxu0
        %v2779 = vadd.f32 %v2730, %v2778
        %v2780 = vpop.f32.mrf.mxu0
        %v2781 = vadd.f32 %v2732, %v2780
        %2782 = vmatmul.bf16.gmra.mxu0 %v1962
        %v2783 = vpop.f32.mrf.mxu0
        %v2784 = vadd.f32 %v2735, %v2783
        %v2785 = vpop.f32.mrf.mxu0
        %v2786 = vadd.f32 %v2737, %v2785
        %2787 = vdwg.mxu0
        %2788 = vmatpush.bf16.msra.mxu0 %v2405
        %2789 = vmatpush.bf16.msra.mxu0 %v2404
        %2790 = vmatpush.bf16.msra.mxu0 %v2403
        %2791 = vmatpush.bf16.msra.mxu0 %v2402
        %2792 = vmatpush.bf16.msra.mxu0 %v2401
        %2793 = vmatpush.bf16.msra.mxu0 %v2400
        %2794 = vmatpush.bf16.msra.mxu0 %v2399
        %2795 = vmatpush.bf16.msra.mxu0 %v2398
        %2796 = vmatmul.bf16.gmra.mxu0 %v1423
        %v2797 = vpop.f32.mrf.mxu0
        %v2798 = vadd.f32 %v2749, %v2797
        %v2799 = vpop.f32.mrf.mxu0
        %v2800 = vadd.f32 %v2751, %v2799
        %2801 = vmatmul.bf16.gmra.mxu0 %v1515
        %v2802 = vpop.f32.mrf.mxu0
        %v2803 = vadd.f32 %v2754, %v2802
        %v2804 = vpop.f32.mrf.mxu0
        %v2805 = vadd.f32 %v2756, %v2804
        %2806 = vmatmul.bf16.gmra.mxu0 %v1591
        %v2807 = vpop.f32.mrf.mxu0
        %v2808 = vadd.f32 %v2759, %v2807
        %v2809 = vpop.f32.mrf.mxu0
        %v2810 = vadd.f32 %v2761, %v2809
        %2811 = vmatmul.bf16.gmra.mxu0 %v1667
        %v2812 = vpop.f32.mrf.mxu0
        %v2813 = vadd.f32 %v2764, %v2812
        %v2814 = vpop.f32.mrf.mxu0
        %v2815 = vadd.f32 %v2766, %v2814
        %2816 = vmatmul.bf16.gmra.mxu0 %v1743
        %v2817 = vpop.f32.mrf.mxu0
        %v2818 = vadd.f32 %v2769, %v2817
        %v2819 = vpop.f32.mrf.mxu0
        %v2820 = vadd.f32 %v2771, %v2819
        %2821 = vmatmul.bf16.gmra.mxu0 %v1819
        %v2822 = vpop.f32.mrf.mxu0
        %v2823 = vadd.f32 %v2774, %v2822
        %v2824 = vpop.f32.mrf.mxu0
        %v2825 = vadd.f32 %v2776, %v2824
        %2826 = vmatmul.bf16.gmra.mxu0 %v1895
        %v2827 = vpop.f32.mrf.mxu0
        %v2828 = vadd.f32 %v2779, %v2827
        %v2829 = vpop.f32.mrf.mxu0
        %v2830 = vadd.f32 %v2781, %v2829
        %2831 = vmatmul.bf16.gmra.mxu0 %v1971
        %v2832 = vpop.f32.mrf.mxu0
        %v2833 = vadd.f32 %v2784, %v2832
        %v2834 = vpop.f32.mrf.mxu0
        %v2835 = vadd.f32 %v2786, %v2834
        %2836 = vdwg.mxu0
        %2837 = vmatpush.bf16.msra.mxu0 %v2413
        %2838 = vmatpush.bf16.msra.mxu0 %v2412
        %2839 = vmatpush.bf16.msra.mxu0 %v2411
        %2840 = vmatpush.bf16.msra.mxu0 %v2410
        %2841 = vmatpush.bf16.msra.mxu0 %v2409
        %2842 = vmatpush.bf16.msra.mxu0 %v2408
        %2843 = vmatpush.bf16.msra.mxu0 %v2407
        %2844 = vmatpush.bf16.msra.mxu0 %v2406
        %2845 = vmatmul.bf16.gmra.mxu0 %v1440
        %v2846 = vpop.f32.mrf.mxu0
        %v2847 = vadd.f32 %v2798, %v2846
        %v2848 = vpop.f32.mrf.mxu0
        %v2849 = vadd.f32 %v2800, %v2848
        %2850 = vmatmul.bf16.gmra.mxu0 %v1524
        %v2851 = vpop.f32.mrf.mxu0
        %v2852 = vadd.f32 %v2803, %v2851
        %v2853 = vpop.f32.mrf.mxu0
        %v2854 = vadd.f32 %v2805, %v2853
        %2855 = vmatmul.bf16.gmra.mxu0 %v1600
        %v2856 = vpop.f32.mrf.mxu0
        %v2857 = vadd.f32 %v2808, %v2856
        %v2858 = vpop.f32.mrf.mxu0
        %v2859 = vadd.f32 %v2810, %v2858
        %2860 = vmatmul.bf16.gmra.mxu0 %v1676
        %v2861 = vpop.f32.mrf.mxu0
        %v2862 = vadd.f32 %v2813, %v2861
        %v2863 = vpop.f32.mrf.mxu0
        %v2864 = vadd.f32 %v2815, %v2863
        %2865 = vmatmul.bf16.gmra.mxu0 %v1752
        %v2866 = vpop.f32.mrf.mxu0
        %v2867 = vadd.f32 %v2818, %v2866
        %v2868 = vpop.f32.mrf.mxu0
        %v2869 = vadd.f32 %v2820, %v2868
        %2870 = vmatmul.bf16.gmra.mxu0 %v1828
        %v2871 = vpop.f32.mrf.mxu0
        %v2872 = vadd.f32 %v2823, %v2871
        %v2873 = vpop.f32.mrf.mxu0
        %v2874 = vadd.f32 %v2825, %v2873
        %2875 = vmatmul.bf16.gmra.mxu0 %v1904
        %v2876 = vpop.f32.mrf.mxu0
        %v2877 = vadd.f32 %v2828, %v2876
        %v2878 = vpop.f32.mrf.mxu0
        %v2879 = vadd.f32 %v2830, %v2878
        %2880 = vmatmul.bf16.gmra.mxu0 %v1980
        %v2881 = vpop.f32.mrf.mxu0
        %v2882 = vadd.f32 %v2833, %v2881
        %v2883 = vpop.f32.mrf.mxu0
        %v2884 = vadd.f32 %v2835, %v2883
        %2885 = vdwg.mxu0
        %2886 = vmatpush.bf16.msra.mxu0 %v2421
        %2887 = vmatpush.bf16.msra.mxu0 %v2420
        %2888 = vmatpush.bf16.msra.mxu0 %v2419
        %2889 = vmatpush.bf16.msra.mxu0 %v2418
        %2890 = vmatpush.bf16.msra.mxu0 %v2417
        %2891 = vmatpush.bf16.msra.mxu0 %v2416
        %2892 = vmatpush.bf16.msra.mxu0 %v2415
        %2893 = vmatpush.bf16.msra.mxu0 %v2414
        %2894 = vmatmul.bf16.gmra.mxu0 %v1457
        %v2895 = vpop.f32.mrf.mxu0
        %v2896 = vadd.f32 %v2847, %v2895
        %v2897 = vpop.f32.mrf.mxu0
        %v2898 = vadd.f32 %v2849, %v2897
        %2899 = vmatmul.bf16.gmra.mxu0 %v1533
        %v2900 = vpop.f32.mrf.mxu0
        %v2901 = vadd.f32 %v2852, %v2900
        %v2902 = vpop.f32.mrf.mxu0
        %v2903 = vadd.f32 %v2854, %v2902
        %2904 = vmatmul.bf16.gmra.mxu0 %v1609
        %v2905 = vpop.f32.mrf.mxu0
        %v2906 = vadd.f32 %v2857, %v2905
        %v2907 = vpop.f32.mrf.mxu0
        %v2908 = vadd.f32 %v2859, %v2907
        %2909 = vmatmul.bf16.gmra.mxu0 %v1685
        %v2910 = vpop.f32.mrf.mxu0
        %v2911 = vadd.f32 %v2862, %v2910
        %v2912 = vpop.f32.mrf.mxu0
        %v2913 = vadd.f32 %v2864, %v2912
        %2914 = vmatmul.bf16.gmra.mxu0 %v1761
        %v2915 = vpop.f32.mrf.mxu0
        %v2916 = vadd.f32 %v2867, %v2915
        %v2917 = vpop.f32.mrf.mxu0
        %v2918 = vadd.f32 %v2869, %v2917
        %2919 = vmatmul.bf16.gmra.mxu0 %v1837
        %v2920 = vpop.f32.mrf.mxu0
        %v2921 = vadd.f32 %v2872, %v2920
        %v2922 = vpop.f32.mrf.mxu0
        %v2923 = vadd.f32 %v2874, %v2922
        %2924 = vmatmul.bf16.gmra.mxu0 %v1913
        %v2925 = vpop.f32.mrf.mxu0
        %v2926 = vadd.f32 %v2877, %v2925
        %v2927 = vpop.f32.mrf.mxu0
        %v2928 = vadd.f32 %v2879, %v2927
        %2929 = vmatmul.bf16.gmra.mxu0 %v1989
        %v2930 = vpop.f32.mrf.mxu0
        %v2931 = vadd.f32 %v2882, %v2930
        %v2932 = vpop.f32.mrf.mxu0
        %v2933 = vadd.f32 %v2884, %v2932
        %2934 = vdwg.mxu0
        %v2935 = vmax.f32 %v2896, 0.0
        %v2936 = vmax.f32 %v2898, 0.0
        %v2937 = vmax.f32 %v2901, 0.0
        %v2938 = vmax.f32 %v2903, 0.0
        %v2939 = vmax.f32 %v2906, 0.0
        %v2940 = vmax.f32 %v2908, 0.0
        %v2941 = vmax.f32 %v2911, 0.0
        %v2942 = vmax.f32 %v2913, 0.0
        %v2943 = vmax.f32 %v2916, 0.0
        %v2944 = vmax.f32 %v2918, 0.0
        %v2945 = vmax.f32 %v2921, 0.0
        %v2946 = vmax.f32 %v2923, 0.0
        %v2947 = vmax.f32 %v2926, 0.0
        %v2948 = vmax.f32 %v2928, 0.0
        %v2949 = vmax.f32 %v2931, 0.0
        %v2950 = vmax.f32 %v2933, 0.0
        %v2951 = vpack.c.bf16 %v2936, %v2935
        %v2952 = vpack.c.bf16 %v2938, %v2937
        %v2953 = vpack.c.bf16 %v2940, %v2939
        %v2954 = vpack.c.bf16 %v2942, %v2941
        %v2955 = vpack.c.bf16 %v2944, %v2943
        %v2956 = vpack.c.bf16 %v2946, %v2945
        %v2957 = vpack.c.bf16 %v2948, %v2947
        %v2958 = vpack.c.bf16 %v2950, %v2949
        %v2959 = vld [vmem:[#allocation8] sm:$0xf]
        %v2960 = vld [vmem:[#allocation8 + $0x4] sm:$0xf]
        %v2961 = vld [vmem:[#allocation8 + $0x8] sm:$0xf]
        %v2962 = vld [vmem:[#allocation8 + $0xc] sm:$0xf]
        %v2963 = vld [vmem:[#allocation8 + $0x10] sm:$0xf]
        %v2964 = vld [vmem:[#allocation8 + $0x14] sm:$0xf]
        %v2965 = vld [vmem:[#allocation8 + $0x18] sm:$0xf]
        %v2966 = vld [vmem:[#allocation8 + $0x1c] sm:$0xf]
        %v2967 = vld [vmem:[#allocation8 + $0x20] sm:$0xf]
        %v2968 = vld [vmem:[#allocation8 + $0x24] sm:$0xf]
        %v2969 = vld [vmem:[#allocation8 + $0x28] sm:$0xf]
        %v2970 = vld [vmem:[#allocation8 + $0x2c] sm:$0xf]
        %v2971 = vld [vmem:[#allocation8 + $0x30] sm:$0xf]
        %v2972 = vld [vmem:[#allocation8 + $0x34] sm:$0xf]
        %v2973 = vld [vmem:[#allocation8 + $0x38] sm:$0xf]
        %v2974 = vld [vmem:[#allocation8 + $0x3c] sm:$0xf]
        %v2975 = vld [vmem:[#allocation10] sm:$0x1]
        %v2977 = vperm.slane %v2975, 0
        %v2995 = vunpack.c.l.b16 %v2959
        %v2996 = vunpack.c.l.b16 %v2960
        %v2997 = vunpack.c.l.b16 %v2961
        %v2998 = vunpack.c.l.b16 %v2962
        %v2999 = vunpack.c.l.b16 %v2963
        %v3000 = vunpack.c.l.b16 %v2964
        %v3001 = vunpack.c.l.b16 %v2965
        %v3002 = vunpack.c.l.b16 %v2966
        %v3003 = vunpack.c.l.b16 %v2967
        %v3004 = vunpack.c.l.b16 %v2968
        %v3005 = vunpack.c.l.b16 %v2969
        %v3006 = vunpack.c.l.b16 %v2970
        %v3007 = vunpack.c.l.b16 %v2971
        %v3008 = vunpack.c.l.b16 %v2972
        %v3009 = vunpack.c.l.b16 %v2973
        %v3010 = vunpack.c.l.b16 %v2974
        %v3011 = vpack.c.b16 %v2996, %v2995
        %v3012 = vpack.c.b16 %v2998, %v2997
        %v3013 = vpack.c.b16 %v3000, %v2999
        %v3014 = vpack.c.b16 %v3002, %v3001
        %v3015 = vpack.c.b16 %v3004, %v3003
        %v3016 = vpack.c.b16 %v3006, %v3005
        %v3017 = vpack.c.b16 %v3008, %v3007
        %v3018 = vpack.c.b16 %v3010, %v3009
        %3027 = vmatpush.bf16.msra.mxu0 %v3018
        %3028 = vmatpush.bf16.msra.mxu0 %v3017
        %3029 = vmatpush.bf16.msra.mxu0 %v3016
        %3030 = vmatpush.bf16.msra.mxu0 %v3015
        %3031 = vmatpush.bf16.msra.mxu0 %v3014
        %3032 = vmatpush.bf16.msra.mxu0 %v3013
        %3033 = vmatpush.bf16.msra.mxu0 %v3012
        %3034 = vmatpush.bf16.msra.mxu0 %v3011
        %3035 = vmatmul.bf16.gmra.mxu0 %v2951
        %v3036 = vpop.f32.mrf.mxu0
        %v3037 = vadd.f32 %v2977, %v3036
        %v3038 = vpop.f32.mrf.mxu0
        %v3039 = vadd.f32 %v2977, %v3038
        %3040 = vmatmul.bf16.gmra.mxu0 %v2952
        %v3041 = vpop.f32.mrf.mxu0
        %v3042 = vadd.f32 %v2977, %v3041
        %v3043 = vpop.f32.mrf.mxu0
        %v3044 = vadd.f32 %v2977, %v3043
        %3045 = vmatmul.bf16.gmra.mxu0 %v2953
        %v3046 = vpop.f32.mrf.mxu0
        %v3047 = vadd.f32 %v2977, %v3046
        %v3048 = vpop.f32.mrf.mxu0
        %v3049 = vadd.f32 %v2977, %v3048
        %3050 = vmatmul.bf16.gmra.mxu0 %v2954
        %v3051 = vpop.f32.mrf.mxu0
        %v3052 = vadd.f32 %v2977, %v3051
        %v3053 = vpop.f32.mrf.mxu0
        %v3054 = vadd.f32 %v2977, %v3053
        %3055 = vmatmul.bf16.gmra.mxu0 %v2955
        %v3056 = vpop.f32.mrf.mxu0
        %v3057 = vadd.f32 %v2977, %v3056
        %v3058 = vpop.f32.mrf.mxu0
        %v3059 = vadd.f32 %v2977, %v3058
        %3060 = vmatmul.bf16.gmra.mxu0 %v2956
        %v3061 = vpop.f32.mrf.mxu0
        %v3062 = vadd.f32 %v2977, %v3061
        %v3063 = vpop.f32.mrf.mxu0
        %v3064 = vadd.f32 %v2977, %v3063
        %3065 = vmatmul.bf16.gmra.mxu0 %v2957
        %v3066 = vpop.f32.mrf.mxu0
        %v3067 = vadd.f32 %v2977, %v3066
        %v3068 = vpop.f32.mrf.mxu0
        %v3069 = vadd.f32 %v2977, %v3068
        %3070 = vmatmul.bf16.gmra.mxu0 %v2958
        %v3071 = vpop.f32.mrf.mxu0
        %v3072 = vadd.f32 %v2977, %v3071
        %v3073 = vpop.f32.mrf.mxu0
        %v3074 = vadd.f32 %v2977, %v3073
        %3075 = vdwg.mxu0
        %v3076 = vmax.f32 %v3037, 0.0
        %v3077 = vmax.f32 %v3039, 0.0
        %v3078 = vmax.f32 %v3042, 0.0
        %v3079 = vmax.f32 %v3044, 0.0
        %v3080 = vmax.f32 %v3047, 0.0
        %v3081 = vmax.f32 %v3049, 0.0
        %v3082 = vmax.f32 %v3052, 0.0
        %v3083 = vmax.f32 %v3054, 0.0
        %v3084 = vmax.f32 %v3057, 0.0
        %v3085 = vmax.f32 %v3059, 0.0
        %v3086 = vmax.f32 %v3062, 0.0
        %v3087 = vmax.f32 %v3064, 0.0
        %v3088 = vmax.f32 %v3067, 0.0
        %v3089 = vmax.f32 %v3069, 0.0
        %v3090 = vmax.f32 %v3072, 0.0
        %v3091 = vmax.f32 %v3074, 0.0
        %v3092 = vpack.c.bf16 %v3077, %v3076
        %v3093 = vpack.c.bf16 %v3079, %v3078
        %v3094 = vpack.c.bf16 %v3081, %v3080
        %v3095 = vpack.c.bf16 %v3083, %v3082
        %v3096 = vpack.c.bf16 %v3085, %v3084
        %v3097 = vpack.c.bf16 %v3087, %v3086
        %v3098 = vpack.c.bf16 %v3089, %v3088
        %v3099 = vpack.c.bf16 %v3091, %v3090
        %v3100 = vld [vmem:[#allocation11] sm:$0xff]
        %v3101 = vld [vmem:[#allocation11 + $0x8] sm:$0xff]
        %v3102 = vld [vmem:[#allocation11 + $0x10] sm:$0xff]
        %v3103 = vld [vmem:[#allocation11 + $0x18] sm:$0xff]
        %v3104 = vld [vmem:[#allocation11 + $0x20] sm:$0xff]
        %v3105 = vld [vmem:[#allocation11 + $0x28] sm:$0xff]
        %v3106 = vld [vmem:[#allocation11 + $0x30] sm:$0xff]
        %v3107 = vld [vmem:[#allocation11 + $0x38] sm:$0xff]
        %v3108 = vld [vmem:[#allocation11 + $0x40] sm:$0xff]
        %v3109 = vld [vmem:[#allocation11 + $0x48] sm:$0xff]
        %v3110 = vld [vmem:[#allocation11 + $0x50] sm:$0xff]
        %v3111 = vld [vmem:[#allocation11 + $0x58] sm:$0xff]
        %v3112 = vld [vmem:[#allocation11 + $0x60] sm:$0xff]
        %v3113 = vld [vmem:[#allocation11 + $0x68] sm:$0xff]
        %v3114 = vld [vmem:[#allocation11 + $0x70] sm:$0xff]
        %v3115 = vld [vmem:[#allocation11 + $0x78] sm:$0xff]
        %v3116 = vld [vmem:[%s6] sm:$0x3]
        %v3118 = vperm.slane %v3116, 0
        %v3119 = vperm.slane %v3116, 1
        %v3138 = vunpack.c.l.b16 %v3100
        %v3139 = vunpack.c.h.b16 %v3100
        %v3140 = vunpack.c.l.b16 %v3101
        %v3141 = vunpack.c.h.b16 %v3101
        %v3142 = vunpack.c.l.b16 %v3102
        %v3143 = vunpack.c.h.b16 %v3102
        %v3144 = vunpack.c.l.b16 %v3103
        %v3145 = vunpack.c.h.b16 %v3103
        %v3146 = vunpack.c.l.b16 %v3104
        %v3147 = vunpack.c.h.b16 %v3104
        %v3148 = vunpack.c.l.b16 %v3105
        %v3149 = vunpack.c.h.b16 %v3105
        %v3150 = vunpack.c.l.b16 %v3106
        %v3151 = vunpack.c.h.b16 %v3106
        %v3152 = vunpack.c.l.b16 %v3107
        %v3153 = vunpack.c.h.b16 %v3107
        %v3154 = vunpack.c.l.b16 %v3108
        %v3155 = vunpack.c.h.b16 %v3108
        %v3156 = vunpack.c.l.b16 %v3109
        %v3157 = vunpack.c.h.b16 %v3109
        %v3158 = vunpack.c.l.b16 %v3110
        %v3159 = vunpack.c.h.b16 %v3110
        %v3160 = vunpack.c.l.b16 %v3111
        %v3161 = vunpack.c.h.b16 %v3111
        %v3162 = vunpack.c.l.b16 %v3112
        %v3163 = vunpack.c.h.b16 %v3112
        %v3164 = vunpack.c.l.b16 %v3113
        %v3165 = vunpack.c.h.b16 %v3113
        %v3166 = vunpack.c.l.b16 %v3114
        %v3167 = vunpack.c.h.b16 %v3114
        %v3168 = vunpack.c.l.b16 %v3115
        %v3169 = vunpack.c.h.b16 %v3115
        %v3170 = vpack.c.b16 %v3140, %v3138
        %v3171 = vpack.c.b16 %v3141, %v3139
        %v3172 = vpack.c.b16 %v3144, %v3142
        %v3173 = vpack.c.b16 %v3145, %v3143
        %v3174 = vpack.c.b16 %v3148, %v3146
        %v3175 = vpack.c.b16 %v3149, %v3147
        %v3176 = vpack.c.b16 %v3152, %v3150
        %v3177 = vpack.c.b16 %v3153, %v3151
        %v3178 = vpack.c.b16 %v3156, %v3154
        %v3179 = vpack.c.b16 %v3157, %v3155
        %v3180 = vpack.c.b16 %v3160, %v3158
        %v3181 = vpack.c.b16 %v3161, %v3159
        %v3182 = vpack.c.b16 %v3164, %v3162
        %v3183 = vpack.c.b16 %v3165, %v3163
        %v3184 = vpack.c.b16 %v3168, %v3166
        %v3185 = vpack.c.b16 %v3169, %v3167
        %3202 = vmatpush.bf16.msra.mxu0 %v3184
        %3203 = vmatpush.bf16.msra.mxu0 %v3182
        %3204 = vmatpush.bf16.msra.mxu0 %v3180
        %3205 = vmatpush.bf16.msra.mxu0 %v3178
        %3206 = vmatpush.bf16.msra.mxu0 %v3176
        %3207 = vmatpush.bf16.msra.mxu0 %v3174
        %3208 = vmatpush.bf16.msra.mxu0 %v3172
        %3209 = vmatpush.bf16.msra.mxu0 %v3170
        %3210 = vmatmul.bf16.gmra.mxu0 %v3092
        %v3211 = vpop.f32.mrf.mxu0
        %v3212 = vadd.f32 %v3118, %v3211
        %v3213 = vpop.f32.mrf.mxu0
        %v3214 = vadd.f32 %v3118, %v3213
        %3215 = vmatmul.bf16.gmra.mxu0 %v3093
        %v3216 = vpop.f32.mrf.mxu0
        %v3217 = vadd.f32 %v3118, %v3216
        %v3218 = vpop.f32.mrf.mxu0
        %v3219 = vadd.f32 %v3118, %v3218
        %3220 = vmatmul.bf16.gmra.mxu0 %v3094
        %v3221 = vpop.f32.mrf.mxu0
        %v3222 = vadd.f32 %v3118, %v3221
        %v3223 = vpop.f32.mrf.mxu0
        %v3224 = vadd.f32 %v3118, %v3223
        %3225 = vmatmul.bf16.gmra.mxu0 %v3095
        %v3226 = vpop.f32.mrf.mxu0
        %v3227 = vadd.f32 %v3118, %v3226
        %v3228 = vpop.f32.mrf.mxu0
        %v3229 = vadd.f32 %v3118, %v3228
        %3230 = vmatmul.bf16.gmra.mxu0 %v3096
        %v3231 = vpop.f32.mrf.mxu0
        %v3232 = vadd.f32 %v3118, %v3231
        %v3233 = vpop.f32.mrf.mxu0
        %v3234 = vadd.f32 %v3118, %v3233
        %3235 = vmatmul.bf16.gmra.mxu0 %v3097
        %v3236 = vpop.f32.mrf.mxu0
        %v3237 = vadd.f32 %v3118, %v3236
        %v3238 = vpop.f32.mrf.mxu0
        %v3239 = vadd.f32 %v3118, %v3238
        %3240 = vmatmul.bf16.gmra.mxu0 %v3098
        %v3241 = vpop.f32.mrf.mxu0
        %v3242 = vadd.f32 %v3118, %v3241
        %v3243 = vpop.f32.mrf.mxu0
        %v3244 = vadd.f32 %v3118, %v3243
        %3245 = vmatmul.bf16.gmra.mxu0 %v3099
        %v3246 = vpop.f32.mrf.mxu0
        %v3247 = vadd.f32 %v3118, %v3246
        %v3248 = vpop.f32.mrf.mxu0
        %v3249 = vadd.f32 %v3118, %v3248
        %3250 = vdwg.mxu0
        %3251 = vmatpush.bf16.msra.mxu0 %v3185
        %3252 = vmatpush.bf16.msra.mxu0 %v3183
        %3253 = vmatpush.bf16.msra.mxu0 %v3181
        %3254 = vmatpush.bf16.msra.mxu0 %v3179
        %3255 = vmatpush.bf16.msra.mxu0 %v3177
        %3256 = vmatpush.bf16.msra.mxu0 %v3175
        %3257 = vmatpush.bf16.msra.mxu0 %v3173
        %3258 = vmatpush.bf16.msra.mxu0 %v3171
        %3259 = vmatmul.bf16.gmra.mxu0 %v3092
        %v3260 = vpop.f32.mrf.mxu0
        %v3261 = vadd.f32 %v3119, %v3260
        %v3262 = vpop.f32.mrf.mxu0
        %v3263 = vadd.f32 %v3119, %v3262
        %3264 = vmatmul.bf16.gmra.mxu0 %v3093
        %v3265 = vpop.f32.mrf.mxu0
        %v3266 = vadd.f32 %v3119, %v3265
        %v3267 = vpop.f32.mrf.mxu0
        %v3268 = vadd.f32 %v3119, %v3267
        %3269 = vmatmul.bf16.gmra.mxu0 %v3094
        %v3270 = vpop.f32.mrf.mxu0
        %v3271 = vadd.f32 %v3119, %v3270
        %v3272 = vpop.f32.mrf.mxu0
        %v3273 = vadd.f32 %v3119, %v3272
        %3274 = vmatmul.bf16.gmra.mxu0 %v3095
        %v3275 = vpop.f32.mrf.mxu0
        %v3276 = vadd.f32 %v3119, %v3275
        %v3277 = vpop.f32.mrf.mxu0
        %v3278 = vadd.f32 %v3119, %v3277
        %3279 = vmatmul.bf16.gmra.mxu0 %v3096
        %v3280 = vpop.f32.mrf.mxu0
        %v3281 = vadd.f32 %v3119, %v3280
        %v3282 = vpop.f32.mrf.mxu0
        %v3283 = vadd.f32 %v3119, %v3282
        %3284 = vmatmul.bf16.gmra.mxu0 %v3097
        %v3285 = vpop.f32.mrf.mxu0
        %v3286 = vadd.f32 %v3119, %v3285
        %v3287 = vpop.f32.mrf.mxu0
        %v3288 = vadd.f32 %v3119, %v3287
        %3289 = vmatmul.bf16.gmra.mxu0 %v3098
        %v3290 = vpop.f32.mrf.mxu0
        %v3291 = vadd.f32 %v3119, %v3290
        %v3292 = vpop.f32.mrf.mxu0
        %v3293 = vadd.f32 %v3119, %v3292
        %3294 = vmatmul.bf16.gmra.mxu0 %v3099
        %v3295 = vpop.f32.mrf.mxu0
        %v3296 = vadd.f32 %v3119, %v3295
        %v3297 = vpop.f32.mrf.mxu0
        %v3298 = vadd.f32 %v3119, %v3297
        %3299 = vdwg.mxu0
        %v3300 = vmul.f32 %v3212, %v3212
        %v3301 = vmul.f32 %v3261, %v3261
        %v3302 = vmul.f32 %v3214, %v3214
        %v3303 = vmul.f32 %v3263, %v3263
        %v3304 = vmul.f32 %v3217, %v3217
        %v3305 = vmul.f32 %v3266, %v3266
        %v3306 = vmul.f32 %v3219, %v3219
        %v3307 = vmul.f32 %v3268, %v3268
        %v3308 = vmul.f32 %v3222, %v3222
        %v3309 = vmul.f32 %v3271, %v3271
        %v3310 = vmul.f32 %v3224, %v3224
        %v3311 = vmul.f32 %v3273, %v3273
        %v3312 = vmul.f32 %v3227, %v3227
        %v3313 = vmul.f32 %v3276, %v3276
        %v3314 = vmul.f32 %v3229, %v3229
        %v3315 = vmul.f32 %v3278, %v3278
        %v3316 = vmul.f32 %v3232, %v3232
        %v3317 = vmul.f32 %v3281, %v3281
        %v3318 = vmul.f32 %v3234, %v3234
        %v3319 = vmul.f32 %v3283, %v3283
        %v3320 = vmul.f32 %v3237, %v3237
        %v3321 = vmul.f32 %v3286, %v3286
        %v3322 = vmul.f32 %v3239, %v3239
        %v3323 = vmul.f32 %v3288, %v3288
        %v3324 = vmul.f32 %v3242, %v3242
        %v3325 = vmul.f32 %v3291, %v3291
        %v3326 = vmul.f32 %v3244, %v3244
        %v3327 = vmul.f32 %v3293, %v3293
        %v3328 = vmul.f32 %v3247, %v3247
        %v3329 = vmul.f32 %v3296, %v3296
        %v3330 = vmul.f32 %v3249, %v3249
        %v3331 = vmul.f32 %v3298, %v3298
        %v3332 = vadd.f32 %v3300, %v3301
        %3333 = vadd.xlane.f32.xlu0 %v3332
        %v3334 = vpop.xlane.xlu0 %3333
        %v3335 = vadd.f32 %v3302, %v3303
        %3336 = vadd.xlane.f32.xlu0 %v3335
        %v3337 = vpop.xlane.xlu0 %3336
        %v3338 = vadd.f32 %v3304, %v3305
        %3339 = vadd.xlane.f32.xlu0 %v3338
        %v3340 = vpop.xlane.xlu0 %3339
        %v3341 = vadd.f32 %v3306, %v3307
        %3342 = vadd.xlane.f32.xlu0 %v3341
        %v3343 = vpop.xlane.xlu0 %3342
        %v3344 = vadd.f32 %v3308, %v3309
        %3345 = vadd.xlane.f32.xlu0 %v3344
        %v3346 = vpop.xlane.xlu0 %3345
        %v3347 = vadd.f32 %v3310, %v3311
        %3348 = vadd.xlane.f32.xlu0 %v3347
        %v3349 = vpop.xlane.xlu0 %3348
        %v3350 = vadd.f32 %v3312, %v3313
        %3351 = vadd.xlane.f32.xlu0 %v3350
        %v3352 = vpop.xlane.xlu0 %3351
        %v3353 = vadd.f32 %v3314, %v3315
        %3354 = vadd.xlane.f32.xlu0 %v3353
        %v3355 = vpop.xlane.xlu0 %3354
        %v3356 = vadd.f32 %v3316, %v3317
        %3357 = vadd.xlane.f32.xlu0 %v3356
        %v3358 = vpop.xlane.xlu0 %3357
        %v3359 = vadd.f32 %v3318, %v3319
        %3360 = vadd.xlane.f32.xlu0 %v3359
        %v3361 = vpop.xlane.xlu0 %3360
        %v3362 = vadd.f32 %v3320, %v3321
        %3363 = vadd.xlane.f32.xlu0 %v3362
        %v3364 = vpop.xlane.xlu0 %3363
        %v3365 = vadd.f32 %v3322, %v3323
        %3366 = vadd.xlane.f32.xlu0 %v3365
        %v3367 = vpop.xlane.xlu0 %3366
        %v3368 = vadd.f32 %v3324, %v3325
        %3369 = vadd.xlane.f32.xlu0 %v3368
        %v3370 = vpop.xlane.xlu0 %3369
        %v3371 = vadd.f32 %v3326, %v3327
        %3372 = vadd.xlane.f32.xlu0 %v3371
        %v3373 = vpop.xlane.xlu0 %3372
        %v3374 = vadd.f32 %v3328, %v3329
        %3375 = vadd.xlane.f32.xlu0 %v3374
        %v3376 = vpop.xlane.xlu0 %3375
        %v3377 = vadd.f32 %v3330, %v3331
        %3378 = vadd.xlane.f32.xlu0 %v3377
        %v3379 = vpop.xlane.xlu0 %3378
        %v3380 = vmax.f32 %v3334, 1e-24
        %v3381 = vmax.f32 %v3337, 1e-24
        %v3382 = vmax.f32 %v3340, 1e-24
        %v3383 = vmax.f32 %v3343, 1e-24
        %v3384 = vmax.f32 %v3346, 1e-24
        %v3385 = vmax.f32 %v3349, 1e-24
        %v3386 = vmax.f32 %v3352, 1e-24
        %v3387 = vmax.f32 %v3355, 1e-24
        %v3388 = vmax.f32 %v3358, 1e-24
        %v3389 = vmax.f32 %v3361, 1e-24
        %v3390 = vmax.f32 %v3364, 1e-24
        %v3391 = vmax.f32 %v3367, 1e-24
        %v3392 = vmax.f32 %v3370, 1e-24
        %v3393 = vmax.f32 %v3373, 1e-24
        %v3394 = vmax.f32 %v3376, 1e-24
        %v3395 = vmax.f32 %v3379, 1e-24
        %v3396 = vrsqrt.pop %v3380
        %v3397 = vmul.f32 %v3396, %v3380
        %v3398 = vmul.f32 %v3397, %v3396
        %v3399 = vmul.f32 0.5, %v3398
        %v3400 = vsub.f32 1.5, %v3399
        %v3401 = vmul.f32 %v3396, %v3400
        %vm3402 = vweird.f32 %v3380
        %vm3403 = vweird.f32 %v3396
        %vm3404 = vmor %vm3402, %vm3403
        %v3405 = vsel %vm3404, %v3396, %v3401
        %v3406 = vrsqrt.pop %v3381
        %v3407 = vmul.f32 %v3406, %v3381
        %v3408 = vmul.f32 %v3407, %v3406
        %v3409 = vmul.f32 0.5, %v3408
        %v3410 = vsub.f32 1.5, %v3409
        %v3411 = vmul.f32 %v3406, %v3410
        %vm3412 = vweird.f32 %v3381
        %vm3413 = vweird.f32 %v3406
        %vm3414 = vmor %vm3412, %vm3413
        %v3415 = vsel %vm3414, %v3406, %v3411
        %v3416 = vrsqrt.pop %v3382
        %v3417 = vmul.f32 %v3416, %v3382
        %v3418 = vmul.f32 %v3417, %v3416
        %v3419 = vmul.f32 0.5, %v3418
        %v3420 = vsub.f32 1.5, %v3419
        %v3421 = vmul.f32 %v3416, %v3420
        %vm3422 = vweird.f32 %v3382
        %vm3423 = vweird.f32 %v3416
        %vm3424 = vmor %vm3422, %vm3423
        %v3425 = vsel %vm3424, %v3416, %v3421
        %v3426 = vrsqrt.pop %v3383
        %v3427 = vmul.f32 %v3426, %v3383
        %v3428 = vmul.f32 %v3427, %v3426
        %v3429 = vmul.f32 0.5, %v3428
        %v3430 = vsub.f32 1.5, %v3429
        %v3431 = vmul.f32 %v3426, %v3430
        %vm3432 = vweird.f32 %v3383
        %vm3433 = vweird.f32 %v3426
        %vm3434 = vmor %vm3432, %vm3433
        %v3435 = vsel %vm3434, %v3426, %v3431
        %v3436 = vrsqrt.pop %v3384
        %v3437 = vmul.f32 %v3436, %v3384
        %v3438 = vmul.f32 %v3437, %v3436
        %v3439 = vmul.f32 0.5, %v3438
        %v3440 = vsub.f32 1.5, %v3439
        %v3441 = vmul.f32 %v3436, %v3440
        %vm3442 = vweird.f32 %v3384
        %vm3443 = vweird.f32 %v3436
        %vm3444 = vmor %vm3442, %vm3443
        %v3445 = vsel %vm3444, %v3436, %v3441
        %v3446 = vrsqrt.pop %v3385
        %v3447 = vmul.f32 %v3446, %v3385
        %v3448 = vmul.f32 %v3447, %v3446
        %v3449 = vmul.f32 0.5, %v3448
        %v3450 = vsub.f32 1.5, %v3449
        %v3451 = vmul.f32 %v3446, %v3450
        %vm3452 = vweird.f32 %v3385
        %vm3453 = vweird.f32 %v3446
        %vm3454 = vmor %vm3452, %vm3453
        %v3455 = vsel %vm3454, %v3446, %v3451
        %v3456 = vrsqrt.pop %v3386
        %v3457 = vmul.f32 %v3456, %v3386
        %v3458 = vmul.f32 %v3457, %v3456
        %v3459 = vmul.f32 0.5, %v3458
        %v3460 = vsub.f32 1.5, %v3459
        %v3461 = vmul.f32 %v3456, %v3460
        %vm3462 = vweird.f32 %v3386
        %vm3463 = vweird.f32 %v3456
        %vm3464 = vmor %vm3462, %vm3463
        %v3465 = vsel %vm3464, %v3456, %v3461
        %v3466 = vrsqrt.pop %v3387
        %v3467 = vmul.f32 %v3466, %v3387
        %v3468 = vmul.f32 %v3467, %v3466
        %v3469 = vmul.f32 0.5, %v3468
        %v3470 = vsub.f32 1.5, %v3469
        %v3471 = vmul.f32 %v3466, %v3470
        %vm3472 = vweird.f32 %v3387
        %vm3473 = vweird.f32 %v3466
        %vm3474 = vmor %vm3472, %vm3473
        %v3475 = vsel %vm3474, %v3466, %v3471
        %v3476 = vrsqrt.pop %v3388
        %v3477 = vmul.f32 %v3476, %v3388
        %v3478 = vmul.f32 %v3477, %v3476
        %v3479 = vmul.f32 0.5, %v3478
        %v3480 = vsub.f32 1.5, %v3479
        %v3481 = vmul.f32 %v3476, %v3480
        %vm3482 = vweird.f32 %v3388
        %vm3483 = vweird.f32 %v3476
        %vm3484 = vmor %vm3482, %vm3483
        %v3485 = vsel %vm3484, %v3476, %v3481
        %v3486 = vrsqrt.pop %v3389
        %v3487 = vmul.f32 %v3486, %v3389
        %v3488 = vmul.f32 %v3487, %v3486
        %v3489 = vmul.f32 0.5, %v3488
        %v3490 = vsub.f32 1.5, %v3489
        %v3491 = vmul.f32 %v3486, %v3490
        %vm3492 = vweird.f32 %v3389
        %vm3493 = vweird.f32 %v3486
        %vm3494 = vmor %vm3492, %vm3493
        %v3495 = vsel %vm3494, %v3486, %v3491
        %v3496 = vrsqrt.pop %v3390
        %v3497 = vmul.f32 %v3496, %v3390
        %v3498 = vmul.f32 %v3497, %v3496
        %v3499 = vmul.f32 0.5, %v3498
        %v3500 = vsub.f32 1.5, %v3499
        %v3501 = vmul.f32 %v3496, %v3500
        %vm3502 = vweird.f32 %v3390
        %vm3503 = vweird.f32 %v3496
        %vm3504 = vmor %vm3502, %vm3503
        %v3505 = vsel %vm3504, %v3496, %v3501
        %v3506 = vrsqrt.pop %v3391
        %v3507 = vmul.f32 %v3506, %v3391
        %v3508 = vmul.f32 %v3507, %v3506
        %v3509 = vmul.f32 0.5, %v3508
        %v3510 = vsub.f32 1.5, %v3509
        %v3511 = vmul.f32 %v3506, %v3510
        %vm3512 = vweird.f32 %v3391
        %vm3513 = vweird.f32 %v3506
        %vm3514 = vmor %vm3512, %vm3513
        %v3515 = vsel %vm3514, %v3506, %v3511
        %v3516 = vrsqrt.pop %v3392
        %v3517 = vmul.f32 %v3516, %v3392
        %v3518 = vmul.f32 %v3517, %v3516
        %v3519 = vmul.f32 0.5, %v3518
        %v3520 = vsub.f32 1.5, %v3519
        %v3521 = vmul.f32 %v3516, %v3520
        %vm3522 = vweird.f32 %v3392
        %vm3523 = vweird.f32 %v3516
        %vm3524 = vmor %vm3522, %vm3523
        %v3525 = vsel %vm3524, %v3516, %v3521
        %v3526 = vrsqrt.pop %v3393
        %v3527 = vmul.f32 %v3526, %v3393
        %v3528 = vmul.f32 %v3527, %v3526
        %v3529 = vmul.f32 0.5, %v3528
        %v3530 = vsub.f32 1.5, %v3529
        %v3531 = vmul.f32 %v3526, %v3530
        %vm3532 = vweird.f32 %v3393
        %vm3533 = vweird.f32 %v3526
        %vm3534 = vmor %vm3532, %vm3533
        %v3535 = vsel %vm3534, %v3526, %v3531
        %v3536 = vrsqrt.pop %v3394
        %v3537 = vmul.f32 %v3536, %v3394
        %v3538 = vmul.f32 %v3537, %v3536
        %v3539 = vmul.f32 0.5, %v3538
        %v3540 = vsub.f32 1.5, %v3539
        %v3541 = vmul.f32 %v3536, %v3540
        %vm3542 = vweird.f32 %v3394
        %vm3543 = vweird.f32 %v3536
        %vm3544 = vmor %vm3542, %vm3543
        %v3545 = vsel %vm3544, %v3536, %v3541
        %v3546 = vrsqrt.pop %v3395
        %v3547 = vmul.f32 %v3546, %v3395
        %v3548 = vmul.f32 %v3547, %v3546
        %v3549 = vmul.f32 0.5, %v3548
        %v3550 = vsub.f32 1.5, %v3549
        %v3551 = vmul.f32 %v3546, %v3550
        %vm3552 = vweird.f32 %v3395
        %vm3553 = vweird.f32 %v3546
        %vm3554 = vmor %vm3552, %vm3553
        %v3555 = vsel %vm3554, %v3546, %v3551
        %v3556 = vmul.f32 %v3212, %v3405
        %v3557 = vmul.f32 %v3261, %v3405
        %v3558 = vmul.f32 %v3214, %v3415
        %v3559 = vmul.f32 %v3263, %v3415
        %v3560 = vmul.f32 %v3217, %v3425
        %v3561 = vmul.f32 %v3266, %v3425
        %v3562 = vmul.f32 %v3219, %v3435
        %v3563 = vmul.f32 %v3268, %v3435
        %v3564 = vmul.f32 %v3222, %v3445
        %v3565 = vmul.f32 %v3271, %v3445
        %v3566 = vmul.f32 %v3224, %v3455
        %v3567 = vmul.f32 %v3273, %v3455
        %v3568 = vmul.f32 %v3227, %v3465
        %v3569 = vmul.f32 %v3276, %v3465
        %v3570 = vmul.f32 %v3229, %v3475
        %v3571 = vmul.f32 %v3278, %v3475
        %v3572 = vmul.f32 %v3232, %v3485
        %v3573 = vmul.f32 %v3281, %v3485
        %v3574 = vmul.f32 %v3234, %v3495
        %v3575 = vmul.f32 %v3283, %v3495
        %v3576 = vmul.f32 %v3237, %v3505
        %v3577 = vmul.f32 %v3286, %v3505
        %v3578 = vmul.f32 %v3239, %v3515
        %v3579 = vmul.f32 %v3288, %v3515
        %v3580 = vmul.f32 %v3242, %v3525
        %v3581 = vmul.f32 %v3291, %v3525
        %v3582 = vmul.f32 %v3244, %v3535
        %v3583 = vmul.f32 %v3293, %v3535
        %v3584 = vmul.f32 %v3247, %v3545
        %v3585 = vmul.f32 %v3296, %v3545
        %v3586 = vmul.f32 %v3249, %v3555
        %v3587 = vmul.f32 %v3298, %v3555
        %3588 = vst [vmem:[%s698] sm:$0xff] %v3556
        %3589 = vst [vmem:[%s698 + $0x8] sm:$0xff] %v3557
        %3590 = vst [vmem:[%s698 + $0x10] sm:$0xff] %v3558
        %3591 = vst [vmem:[%s698 + $0x18] sm:$0xff] %v3559
        %3592 = vst [vmem:[%s698 + $0x20] sm:$0xff] %v3560
        %3593 = vst [vmem:[%s698 + $0x28] sm:$0xff] %v3561
        %3594 = vst [vmem:[%s698 + $0x30] sm:$0xff] %v3562
        %3595 = vst [vmem:[%s698 + $0x38] sm:$0xff] %v3563
        %3596 = vst [vmem:[%s698 + $0x40] sm:$0xff] %v3564
        %3597 = vst [vmem:[%s698 + $0x48] sm:$0xff] %v3565
        %3598 = vst [vmem:[%s698 + $0x50] sm:$0xff] %v3566
        %3599 = vst [vmem:[%s698 + $0x58] sm:$0xff] %v3567
        %3600 = vst [vmem:[%s698 + $0x60] sm:$0xff] %v3568
        %3601 = vst [vmem:[%s698 + $0x68] sm:$0xff] %v3569
        %3602 = vst [vmem:[%s698 + $0x70] sm:$0xff] %v3570
        %3603 = vst [vmem:[%s698 + $0x78] sm:$0xff] %v3571
        %3604 = vst [vmem:[%s698 + $0x80] sm:$0xff] %v3572
        %3605 = vst [vmem:[%s698 + $0x88] sm:$0xff] %v3573
        %3606 = vst [vmem:[%s698 + $0x90] sm:$0xff] %v3574
        %3607 = vst [vmem:[%s698 + $0x98] sm:$0xff] %v3575
        %3608 = vst [vmem:[%s698 + $0xa0] sm:$0xff] %v3576
        %3609 = vst [vmem:[%s698 + $0xa8] sm:$0xff] %v3577
        %3610 = vst [vmem:[%s698 + $0xb0] sm:$0xff] %v3578
        %3611 = vst [vmem:[%s698 + $0xb8] sm:$0xff] %v3579
        %3612 = vst [vmem:[%s698 + $0xc0] sm:$0xff] %v3580
        %3613 = vst [vmem:[%s698 + $0xc8] sm:$0xff] %v3581
        %3614 = vst [vmem:[%s698 + $0xd0] sm:$0xff] %v3582
        %3615 = vst [vmem:[%s698 + $0xd8] sm:$0xff] %v3583
        %3616 = vst [vmem:[%s698 + $0xe0] sm:$0xff] %v3584
        %3617 = vst [vmem:[%s698 + $0xe8] sm:$0xff] %v3585
        %3618 = vst [vmem:[%s698 + $0xf0] sm:$0xff] %v3586
        %3619 = vst [vmem:[%s698 + $0xf8] sm:$0xff] %v3587
        %v3620 = vld [vmem:[#allocation13] sm:$0xf]
        %v3621 = vld [vmem:[#allocation13 + $0x4] sm:$0xf]
        %v3622 = vld [vmem:[#allocation13 + $0x8] sm:$0xf]
        %v3623 = vld [vmem:[#allocation13 + $0xc] sm:$0xf]
        %v3624 = vld [vmem:[#allocation13 + $0x10] sm:$0xf]
        %v3625 = vld [vmem:[#allocation13 + $0x14] sm:$0xf]
        %v3626 = vld [vmem:[#allocation13 + $0x18] sm:$0xf]
        %v3627 = vld [vmem:[#allocation13 + $0x1c] sm:$0xf]
        %v3628 = vld [vmem:[#allocation13 + $0x20] sm:$0xf]
        %v3629 = vld [vmem:[#allocation13 + $0x24] sm:$0xf]
        %v3630 = vld [vmem:[#allocation13 + $0x28] sm:$0xf]
        %v3631 = vld [vmem:[#allocation13 + $0x2c] sm:$0xf]
        %v3632 = vld [vmem:[#allocation13 + $0x30] sm:$0xf]
        %v3633 = vld [vmem:[#allocation13 + $0x34] sm:$0xf]
        %v3634 = vld [vmem:[#allocation13 + $0x38] sm:$0xf]
        %v3635 = vld [vmem:[#allocation13 + $0x3c] sm:$0xf]
        %v3636 = vld [vmem:[#allocation14] sm:$0x1]
        %v3638 = vperm.slane %v3636, 0
        %v3656 = vunpack.c.l.b16 %v3620
        %v3657 = vunpack.c.l.b16 %v3621
        %v3658 = vunpack.c.l.b16 %v3622
        %v3659 = vunpack.c.l.b16 %v3623
        %v3660 = vunpack.c.l.b16 %v3624
        %v3661 = vunpack.c.l.b16 %v3625
        %v3662 = vunpack.c.l.b16 %v3626
        %v3663 = vunpack.c.l.b16 %v3627
        %v3664 = vunpack.c.l.b16 %v3628
        %v3665 = vunpack.c.l.b16 %v3629
        %v3666 = vunpack.c.l.b16 %v3630
        %v3667 = vunpack.c.l.b16 %v3631
        %v3668 = vunpack.c.l.b16 %v3632
        %v3669 = vunpack.c.l.b16 %v3633
        %v3670 = vunpack.c.l.b16 %v3634
        %v3671 = vunpack.c.l.b16 %v3635
        %v3672 = vpack.c.b16 %v3657, %v3656
        %v3673 = vpack.c.b16 %v3659, %v3658
        %v3674 = vpack.c.b16 %v3661, %v3660
        %v3675 = vpack.c.b16 %v3663, %v3662
        %v3676 = vpack.c.b16 %v3665, %v3664
        %v3677 = vpack.c.b16 %v3667, %v3666
        %v3678 = vpack.c.b16 %v3669, %v3668
        %v3679 = vpack.c.b16 %v3671, %v3670
        %3688 = vmatpush.bf16.msra.mxu0 %v3679
        %3689 = vmatpush.bf16.msra.mxu0 %v3678
        %3690 = vmatpush.bf16.msra.mxu0 %v3677
        %3691 = vmatpush.bf16.msra.mxu0 %v3676
        %3692 = vmatpush.bf16.msra.mxu0 %v3675
        %3693 = vmatpush.bf16.msra.mxu0 %v3674
        %3694 = vmatpush.bf16.msra.mxu0 %v3673
        %3695 = vmatpush.bf16.msra.mxu0 %v3672
        %3696 = vmatmul.bf16.gmra.mxu0 %v1389
        %v3697 = vpop.f32.mrf.mxu0
        %v3698 = vadd.f32 %v3638, %v3697
        %v3699 = vpop.f32.mrf.mxu0
        %v3700 = vadd.f32 %v3638, %v3699
        %3701 = vmatmul.bf16.gmra.mxu0 %v1497
        %v3702 = vpop.f32.mrf.mxu0
        %v3703 = vadd.f32 %v3638, %v3702
        %v3704 = vpop.f32.mrf.mxu0
        %v3705 = vadd.f32 %v3638, %v3704
        %3706 = vmatmul.bf16.gmra.mxu0 %v1573
        %v3707 = vpop.f32.mrf.mxu0
        %v3708 = vadd.f32 %v3638, %v3707
        %v3709 = vpop.f32.mrf.mxu0
        %v3710 = vadd.f32 %v3638, %v3709
        %3711 = vmatmul.bf16.gmra.mxu0 %v1649
        %v3712 = vpop.f32.mrf.mxu0
        %v3713 = vadd.f32 %v3638, %v3712
        %v3714 = vpop.f32.mrf.mxu0
        %v3715 = vadd.f32 %v3638, %v3714
        %3716 = vmatmul.bf16.gmra.mxu0 %v1725
        %v3717 = vpop.f32.mrf.mxu0
        %v3718 = vadd.f32 %v3638, %v3717
        %v3719 = vpop.f32.mrf.mxu0
        %v3720 = vadd.f32 %v3638, %v3719
        %3721 = vmatmul.bf16.gmra.mxu0 %v1801
        %v3722 = vpop.f32.mrf.mxu0
        %v3723 = vadd.f32 %v3638, %v3722
        %v3724 = vpop.f32.mrf.mxu0
        %v3725 = vadd.f32 %v3638, %v3724
        %3726 = vmatmul.bf16.gmra.mxu0 %v1877
        %v3727 = vpop.f32.mrf.mxu0
        %v3728 = vadd.f32 %v3638, %v3727
        %v3729 = vpop.f32.mrf.mxu0
        %v3730 = vadd.f32 %v3638, %v3729
        %3731 = vmatmul.bf16.gmra.mxu0 %v1953
        %v3732 = vpop.f32.mrf.mxu0
        %v3733 = vadd.f32 %v3638, %v3732
        %v3734 = vpop.f32.mrf.mxu0
        %v3735 = vadd.f32 %v3638, %v3734
        %3736 = vdwg.mxu0
        %v3737 = vmax.f32 %v3698, 0.0
        %v3738 = vmax.f32 %v3700, 0.0
        %v3739 = vmax.f32 %v3703, 0.0
        %v3740 = vmax.f32 %v3705, 0.0
        %v3741 = vmax.f32 %v3708, 0.0
        %v3742 = vmax.f32 %v3710, 0.0
        %v3743 = vmax.f32 %v3713, 0.0
        %v3744 = vmax.f32 %v3715, 0.0
        %v3745 = vmax.f32 %v3718, 0.0
        %v3746 = vmax.f32 %v3720, 0.0
        %v3747 = vmax.f32 %v3723, 0.0
        %v3748 = vmax.f32 %v3725, 0.0
        %v3749 = vmax.f32 %v3728, 0.0
        %v3750 = vmax.f32 %v3730, 0.0
        %v3751 = vmax.f32 %v3733, 0.0
        %v3752 = vmax.f32 %v3735, 0.0
        %v3753 = vld [vmem:[%s9] sm:$0x1]
        %v3755 = vperm.slane %v3753, 0
        %v3757 = vmul.f32 %v3737, %v3755
        %v3758 = vmul.f32 %v3738, %v3755
        %v3759 = vmul.f32 %v3739, %v3755
        %v3760 = vmul.f32 %v3740, %v3755
        %v3761 = vmul.f32 %v3741, %v3755
        %v3762 = vmul.f32 %v3742, %v3755
        %v3763 = vmul.f32 %v3743, %v3755
        %v3764 = vmul.f32 %v3744, %v3755
        %v3765 = vmul.f32 %v3745, %v3755
        %v3766 = vmul.f32 %v3746, %v3755
        %v3767 = vmul.f32 %v3747, %v3755
        %v3768 = vmul.f32 %v3748, %v3755
        %v3769 = vmul.f32 %v3749, %v3755
        %v3770 = vmul.f32 %v3750, %v3755
        %v3771 = vmul.f32 %v3751, %v3755
        %v3772 = vmul.f32 %v3752, %v3755
        %3773 = vadd.xlane.f32.xlu0 %v3757
        %v3774 = vpop.xlane.xlu0 %3773
        %3775 = vadd.xlane.f32.xlu0 %v3758
        %v3776 = vpop.xlane.xlu0 %3775
        %3777 = vadd.xlane.f32.xlu0 %v3759
        %v3778 = vpop.xlane.xlu0 %3777
        %3779 = vadd.xlane.f32.xlu0 %v3760
        %v3780 = vpop.xlane.xlu0 %3779
        %3781 = vadd.xlane.f32.xlu0 %v3761
        %v3782 = vpop.xlane.xlu0 %3781
        %3783 = vadd.xlane.f32.xlu0 %v3762
        %v3784 = vpop.xlane.xlu0 %3783
        %3785 = vadd.xlane.f32.xlu0 %v3763
        %v3786 = vpop.xlane.xlu0 %3785
        %3787 = vadd.xlane.f32.xlu0 %v3764
        %v3788 = vpop.xlane.xlu0 %3787
        %3789 = vadd.xlane.f32.xlu0 %v3765
        %v3790 = vpop.xlane.xlu0 %3789
        %3791 = vadd.xlane.f32.xlu0 %v3766
        %v3792 = vpop.xlane.xlu0 %3791
        %3793 = vadd.xlane.f32.xlu0 %v3767
        %v3794 = vpop.xlane.xlu0 %3793
        %3795 = vadd.xlane.f32.xlu0 %v3768
        %v3796 = vpop.xlane.xlu0 %3795
        %3797 = vadd.xlane.f32.xlu0 %v3769
        %v3798 = vpop.xlane.xlu0 %3797
        %3799 = vadd.xlane.f32.xlu0 %v3770
        %v3800 = vpop.xlane.xlu0 %3799
        %3801 = vadd.xlane.f32.xlu0 %v3771
        %v3802 = vpop.xlane.xlu0 %3801
        %3803 = vadd.xlane.f32.xlu0 %v3772
        %v3804 = vpop.xlane.xlu0 %3803
        %s3805 = sld [smem:[#allocation19]]
        %v3806 = vstv %s3805
        %v3807 = vadd.f32 %v3774, %v3806
        %v3808 = vadd.f32 %v3776, %v3806
        %v3809 = vadd.f32 %v3778, %v3806
        %v3810 = vadd.f32 %v3780, %v3806
        %v3811 = vadd.f32 %v3782, %v3806
        %v3812 = vadd.f32 %v3784, %v3806
        %v3813 = vadd.f32 %v3786, %v3806
        %v3814 = vadd.f32 %v3788, %v3806
        %v3815 = vadd.f32 %v3790, %v3806
        %v3816 = vadd.f32 %v3792, %v3806
        %v3817 = vadd.f32 %v3794, %v3806
        %v3818 = vadd.f32 %v3796, %v3806
        %v3819 = vadd.f32 %v3798, %v3806
        %v3820 = vadd.f32 %v3800, %v3806
        %v3821 = vadd.f32 %v3802, %v3806
        %v3822 = vadd.f32 %v3804, %v3806
        %v3823 = vpack.c.bf16 %v3558, %v3556
        %v3824 = vpack.c.bf16 %v3559, %v3557
        %v3825 = vpack.c.bf16 %v3562, %v3560
        %v3826 = vpack.c.bf16 %v3563, %v3561
        %v3827 = vpack.c.bf16 %v3566, %v3564
        %v3828 = vpack.c.bf16 %v3567, %v3565
        %v3829 = vpack.c.bf16 %v3570, %v3568
        %v3830 = vpack.c.bf16 %v3571, %v3569
        %v3831 = vpack.c.bf16 %v3574, %v3572
        %v3832 = vpack.c.bf16 %v3575, %v3573
        %v3833 = vpack.c.bf16 %v3578, %v3576
        %v3834 = vpack.c.bf16 %v3579, %v3577
        %v3835 = vpack.c.bf16 %v3582, %v3580
        %v3836 = vpack.c.bf16 %v3583, %v3581
        %v3837 = vpack.c.bf16 %v3586, %v3584
        %v3838 = vpack.c.bf16 %v3587, %v3585
        %v3839 = vld [vmem:[#allocation16] sm:$0xff]
        %v3840 = vld [vmem:[#allocation16 + $0x8] sm:$0xff]
        %v3841 = vld [vmem:[#allocation16 + $0x10] sm:$0xff]
        %v3842 = vld [vmem:[#allocation16 + $0x18] sm:$0xff]
        %v3843 = vld [vmem:[#allocation16 + $0x20] sm:$0xff]
        %v3844 = vld [vmem:[#allocation16 + $0x28] sm:$0xff]
        %v3845 = vld [vmem:[#allocation16 + $0x30] sm:$0xff]
        %v3846 = vld [vmem:[#allocation16 + $0x38] sm:$0xff]
        %v3847 = vld [vmem:[#allocation16 + $0x40] sm:$0xff]
        %v3848 = vld [vmem:[#allocation16 + $0x48] sm:$0xff]
        %v3849 = vld [vmem:[#allocation16 + $0x50] sm:$0xff]
        %v3850 = vld [vmem:[#allocation16 + $0x58] sm:$0xff]
        %v3851 = vld [vmem:[#allocation16 + $0x60] sm:$0xff]
        %v3852 = vld [vmem:[#allocation16 + $0x68] sm:$0xff]
        %v3853 = vld [vmem:[#allocation16 + $0x70] sm:$0xff]
        %v3854 = vld [vmem:[#allocation16 + $0x78] sm:$0xff]
        %v3855 = vld [vmem:[#allocation16 + $0x80] sm:$0xff]
        %v3856 = vld [vmem:[#allocation16 + $0x88] sm:$0xff]
        %v3857 = vld [vmem:[#allocation16 + $0x90] sm:$0xff]
        %v3858 = vld [vmem:[#allocation16 + $0x98] sm:$0xff]
        %v3859 = vld [vmem:[#allocation16 + $0xa0] sm:$0xff]
        %v3860 = vld [vmem:[#allocation16 + $0xa8] sm:$0xff]
        %v3861 = vld [vmem:[#allocation16 + $0xb0] sm:$0xff]
        %v3862 = vld [vmem:[#allocation16 + $0xb8] sm:$0xff]
        %v3863 = vld [vmem:[#allocation16 + $0xc0] sm:$0xff]
        %v3864 = vld [vmem:[#allocation16 + $0xc8] sm:$0xff]
        %v3865 = vld [vmem:[#allocation16 + $0xd0] sm:$0xff]
        %v3866 = vld [vmem:[#allocation16 + $0xd8] sm:$0xff]
        %v3867 = vld [vmem:[#allocation16 + $0xe0] sm:$0xff]
        %v3868 = vld [vmem:[#allocation16 + $0xe8] sm:$0xff]
        %v3869 = vld [vmem:[#allocation16 + $0xf0] sm:$0xff]
        %v3870 = vld [vmem:[#allocation16 + $0xf8] sm:$0xff]
        %v3871 = vld [vmem:[#allocation16 + $0x100] sm:$0xff]
        %v3872 = vld [vmem:[#allocation16 + $0x108] sm:$0xff]
        %v3873 = vld [vmem:[#allocation16 + $0x110] sm:$0xff]
        %v3874 = vld [vmem:[#allocation16 + $0x118] sm:$0xff]
        %v3875 = vld [vmem:[#allocation16 + $0x120] sm:$0xff]
        %v3876 = vld [vmem:[#allocation16 + $0x128] sm:$0xff]
        %v3877 = vld [vmem:[#allocation16 + $0x130] sm:$0xff]
        %v3878 = vld [vmem:[#allocation16 + $0x138] sm:$0xff]
        %v3879 = vld [vmem:[#allocation16 + $0x140] sm:$0xff]
        %v3880 = vld [vmem:[#allocation16 + $0x148] sm:$0xff]
        %v3881 = vld [vmem:[#allocation16 + $0x150] sm:$0xff]
        %v3882 = vld [vmem:[#allocation16 + $0x158] sm:$0xff]
        %v3883 = vld [vmem:[#allocation16 + $0x160] sm:$0xff]
        %v3884 = vld [vmem:[#allocation16 + $0x168] sm:$0xff]
        %v3885 = vld [vmem:[#allocation16 + $0x170] sm:$0xff]
        %v3886 = vld [vmem:[#allocation16 + $0x178] sm:$0xff]
        %v3887 = vld [vmem:[#allocation16 + $0x180] sm:$0xff]
        %v3888 = vld [vmem:[#allocation16 + $0x188] sm:$0xff]
        %v3889 = vld [vmem:[#allocation16 + $0x190] sm:$0xff]
        %v3890 = vld [vmem:[#allocation16 + $0x198] sm:$0xff]
        %v3891 = vld [vmem:[#allocation16 + $0x1a0] sm:$0xff]
        %v3892 = vld [vmem:[#allocation16 + $0x1a8] sm:$0xff]
        %v3893 = vld [vmem:[#allocation16 + $0x1b0] sm:$0xff]
        %v3894 = vld [vmem:[#allocation16 + $0x1b8] sm:$0xff]
        %v3895 = vld [vmem:[#allocation16 + $0x1c0] sm:$0xff]
        %v3896 = vld [vmem:[#allocation16 + $0x1c8] sm:$0xff]
        %v3897 = vld [vmem:[#allocation16 + $0x1d0] sm:$0xff]
        %v3898 = vld [vmem:[#allocation16 + $0x1d8] sm:$0xff]
        %v3899 = vld [vmem:[#allocation16 + $0x1e0] sm:$0xff]
        %v3900 = vld [vmem:[#allocation16 + $0x1e8] sm:$0xff]
        %v3901 = vld [vmem:[#allocation16 + $0x1f0] sm:$0xff]
        %v3902 = vld [vmem:[#allocation16 + $0x1f8] sm:$0xff]
        %v3903 = vld [vmem:[%s11] sm:$0xf]
        %v3905 = vperm.slane %v3903, 0
        %v3906 = vperm.slane %v3903, 1
        %v3907 = vperm.slane %v3903, 2
        %v3908 = vperm.slane %v3903, 3
        %v3977 = vunpack.c.l.b16 %v3839
        %v3978 = vunpack.c.h.b16 %v3839
        %v3979 = vunpack.c.l.b16 %v3840
        %v3980 = vunpack.c.h.b16 %v3840
        %v3981 = vunpack.c.l.b16 %v3841
        %v3982 = vunpack.c.h.b16 %v3841
        %v3983 = vunpack.c.l.b16 %v3842
        %v3984 = vunpack.c.h.b16 %v3842
        %v3985 = vunpack.c.l.b16 %v3843
        %v3986 = vunpack.c.h.b16 %v3843
        %v3987 = vunpack.c.l.b16 %v3844
        %v3988 = vunpack.c.h.b16 %v3844
        %v3989 = vunpack.c.l.b16 %v3845
        %v3990 = vunpack.c.h.b16 %v3845
        %v3991 = vunpack.c.l.b16 %v3846
        %v3992 = vunpack.c.h.b16 %v3846
        %v3993 = vunpack.c.l.b16 %v3847
        %v3994 = vunpack.c.h.b16 %v3847
        %v3995 = vunpack.c.l.b16 %v3848
        %v3996 = vunpack.c.h.b16 %v3848
        %v3997 = vunpack.c.l.b16 %v3849
        %v3998 = vunpack.c.h.b16 %v3849
        %v3999 = vunpack.c.l.b16 %v3850
        %v4000 = vunpack.c.h.b16 %v3850
        %v4001 = vunpack.c.l.b16 %v3851
        %v4002 = vunpack.c.h.b16 %v3851
        %v4003 = vunpack.c.l.b16 %v3852
        %v4004 = vunpack.c.h.b16 %v3852
        %v4005 = vunpack.c.l.b16 %v3853
        %v4006 = vunpack.c.h.b16 %v3853
        %v4007 = vunpack.c.l.b16 %v3854
        %v4008 = vunpack.c.h.b16 %v3854
        %v4009 = vunpack.c.l.b16 %v3855
        %v4010 = vunpack.c.h.b16 %v3855
        %v4011 = vunpack.c.l.b16 %v3856
        %v4012 = vunpack.c.h.b16 %v3856
        %v4013 = vunpack.c.l.b16 %v3857
        %v4014 = vunpack.c.h.b16 %v3857
        %v4015 = vunpack.c.l.b16 %v3858
        %v4016 = vunpack.c.h.b16 %v3858
        %v4017 = vunpack.c.l.b16 %v3859
        %v4018 = vunpack.c.h.b16 %v3859
        %v4019 = vunpack.c.l.b16 %v3860
        %v4020 = vunpack.c.h.b16 %v3860
        %v4021 = vunpack.c.l.b16 %v3861
        %v4022 = vunpack.c.h.b16 %v3861
        %v4023 = vunpack.c.l.b16 %v3862
        %v4024 = vunpack.c.h.b16 %v3862
        %v4025 = vunpack.c.l.b16 %v3863
        %v4026 = vunpack.c.h.b16 %v3863
        %v4027 = vunpack.c.l.b16 %v3864
        %v4028 = vunpack.c.h.b16 %v3864
        %v4029 = vunpack.c.l.b16 %v3865
        %v4030 = vunpack.c.h.b16 %v3865
        %v4031 = vunpack.c.l.b16 %v3866
        %v4032 = vunpack.c.h.b16 %v3866
        %v4033 = vunpack.c.l.b16 %v3867
        %v4034 = vunpack.c.h.b16 %v3867
        %v4035 = vunpack.c.l.b16 %v3868
        %v4036 = vunpack.c.h.b16 %v3868
        %v4037 = vunpack.c.l.b16 %v3869
        %v4038 = vunpack.c.h.b16 %v3869
        %v4039 = vunpack.c.l.b16 %v3870
        %v4040 = vunpack.c.h.b16 %v3870
        %v4041 = vunpack.c.l.b16 %v3871
        %v4042 = vunpack.c.h.b16 %v3871
        %v4043 = vunpack.c.l.b16 %v3872
        %v4044 = vunpack.c.h.b16 %v3872
        %v4045 = vunpack.c.l.b16 %v3873
        %v4046 = vunpack.c.h.b16 %v3873
        %v4047 = vunpack.c.l.b16 %v3874
        %v4048 = vunpack.c.h.b16 %v3874
        %v4049 = vunpack.c.l.b16 %v3875
        %v4050 = vunpack.c.h.b16 %v3875
        %v4051 = vunpack.c.l.b16 %v3876
        %v4052 = vunpack.c.h.b16 %v3876
        %v4053 = vunpack.c.l.b16 %v3877
        %v4054 = vunpack.c.h.b16 %v3877
        %v4055 = vunpack.c.l.b16 %v3878
        %v4056 = vunpack.c.h.b16 %v3878
        %v4057 = vunpack.c.l.b16 %v3879
        %v4058 = vunpack.c.h.b16 %v3879
        %v4059 = vunpack.c.l.b16 %v3880
        %v4060 = vunpack.c.h.b16 %v3880
        %v4061 = vunpack.c.l.b16 %v3881
        %v4062 = vunpack.c.h.b16 %v3881
        %v4063 = vunpack.c.l.b16 %v3882
        %v4064 = vunpack.c.h.b16 %v3882
        %v4065 = vunpack.c.l.b16 %v3883
        %v4066 = vunpack.c.h.b16 %v3883
        %v4067 = vunpack.c.l.b16 %v3884
        %v4068 = vunpack.c.h.b16 %v3884
        %v4069 = vunpack.c.l.b16 %v3885
        %v4070 = vunpack.c.h.b16 %v3885
        %v4071 = vunpack.c.l.b16 %v3886
        %v4072 = vunpack.c.h.b16 %v3886
        %v4073 = vunpack.c.l.b16 %v3887
        %v4074 = vunpack.c.h.b16 %v3887
        %v4075 = vunpack.c.l.b16 %v3888
        %v4076 = vunpack.c.h.b16 %v3888
        %v4077 = vunpack.c.l.b16 %v3889
        %v4078 = vunpack.c.h.b16 %v3889
        %v4079 = vunpack.c.l.b16 %v3890
        %v4080 = vunpack.c.h.b16 %v3890
        %v4081 = vunpack.c.l.b16 %v3891
        %v4082 = vunpack.c.h.b16 %v3891
        %v4083 = vunpack.c.l.b16 %v3892
        %v4084 = vunpack.c.h.b16 %v3892
        %v4085 = vunpack.c.l.b16 %v3893
        %v4086 = vunpack.c.h.b16 %v3893
        %v4087 = vunpack.c.l.b16 %v3894
        %v4088 = vunpack.c.h.b16 %v3894
        %v4089 = vunpack.c.l.b16 %v3895
        %v4090 = vunpack.c.h.b16 %v3895
        %v4091 = vunpack.c.l.b16 %v3896
        %v4092 = vunpack.c.h.b16 %v3896
        %v4093 = vunpack.c.l.b16 %v3897
        %v4094 = vunpack.c.h.b16 %v3897
        %v4095 = vunpack.c.l.b16 %v3898
        %v4096 = vunpack.c.h.b16 %v3898
        %v4097 = vunpack.c.l.b16 %v3899
        %v4098 = vunpack.c.h.b16 %v3899
        %v4099 = vunpack.c.l.b16 %v3900
        %v4100 = vunpack.c.h.b16 %v3900
        %v4101 = vunpack.c.l.b16 %v3901
        %v4102 = vunpack.c.h.b16 %v3901
        %v4103 = vunpack.c.l.b16 %v3902
        %v4104 = vunpack.c.h.b16 %v3902
        %v4105 = vpack.c.b16 %v3981, %v3977
        %v4106 = vpack.c.b16 %v3982, %v3978
        %v4107 = vpack.c.b16 %v3983, %v3979
        %v4108 = vpack.c.b16 %v3984, %v3980
        %v4109 = vpack.c.b16 %v3989, %v3985
        %v4110 = vpack.c.b16 %v3990, %v3986
        %v4111 = vpack.c.b16 %v3991, %v3987
        %v4112 = vpack.c.b16 %v3992, %v3988
        %v4113 = vpack.c.b16 %v3997, %v3993
        %v4114 = vpack.c.b16 %v3998, %v3994
        %v4115 = vpack.c.b16 %v3999, %v3995
        %v4116 = vpack.c.b16 %v4000, %v3996
        %v4117 = vpack.c.b16 %v4005, %v4001
        %v4118 = vpack.c.b16 %v4006, %v4002
        %v4119 = vpack.c.b16 %v4007, %v4003
        %v4120 = vpack.c.b16 %v4008, %v4004
        %v4121 = vpack.c.b16 %v4013, %v4009
        %v4122 = vpack.c.b16 %v4014, %v4010
        %v4123 = vpack.c.b16 %v4015, %v4011
        %v4124 = vpack.c.b16 %v4016, %v4012
        %v4125 = vpack.c.b16 %v4021, %v4017
        %v4126 = vpack.c.b16 %v4022, %v4018
        %v4127 = vpack.c.b16 %v4023, %v4019
        %v4128 = vpack.c.b16 %v4024, %v4020
        %v4129 = vpack.c.b16 %v4029, %v4025
        %v4130 = vpack.c.b16 %v4030, %v4026
        %v4131 = vpack.c.b16 %v4031, %v4027
        %v4132 = vpack.c.b16 %v4032, %v4028
        %v4133 = vpack.c.b16 %v4037, %v4033
        %v4134 = vpack.c.b16 %v4038, %v4034
        %v4135 = vpack.c.b16 %v4039, %v4035
        %v4136 = vpack.c.b16 %v4040, %v4036
        %v4137 = vpack.c.b16 %v4045, %v4041
        %v4138 = vpack.c.b16 %v4046, %v4042
        %v4139 = vpack.c.b16 %v4047, %v4043
        %v4140 = vpack.c.b16 %v4048, %v4044
        %v4141 = vpack.c.b16 %v4053, %v4049
        %v4142 = vpack.c.b16 %v4054, %v4050
        %v4143 = vpack.c.b16 %v4055, %v4051
        %v4144 = vpack.c.b16 %v4056, %v4052
        %v4145 = vpack.c.b16 %v4061, %v4057
        %v4146 = vpack.c.b16 %v4062, %v4058
        %v4147 = vpack.c.b16 %v4063, %v4059
        %v4148 = vpack.c.b16 %v4064, %v4060
        %v4149 = vpack.c.b16 %v4069, %v4065
        %v4150 = vpack.c.b16 %v4070, %v4066
        %v4151 = vpack.c.b16 %v4071, %v4067
        %v4152 = vpack.c.b16 %v4072, %v4068
        %v4153 = vpack.c.b16 %v4077, %v4073
        %v4154 = vpack.c.b16 %v4078, %v4074
        %v4155 = vpack.c.b16 %v4079, %v4075
        %v4156 = vpack.c.b16 %v4080, %v4076
        %v4157 = vpack.c.b16 %v4085, %v4081
        %v4158 = vpack.c.b16 %v4086, %v4082
        %v4159 = vpack.c.b16 %v4087, %v4083
        %v4160 = vpack.c.b16 %v4088, %v4084
        %v4161 = vpack.c.b16 %v4093, %v4089
        %v4162 = vpack.c.b16 %v4094, %v4090
        %v4163 = vpack.c.b16 %v4095, %v4091
        %v4164 = vpack.c.b16 %v4096, %v4092
        %v4165 = vpack.c.b16 %v4101, %v4097
        %v4166 = vpack.c.b16 %v4102, %v4098
        %v4167 = vpack.c.b16 %v4103, %v4099
        %v4168 = vpack.c.b16 %v4104, %v4100
        %4233 = vmatpush.bf16.msra.mxu0 %v4133
        %4234 = vmatpush.bf16.msra.mxu0 %v4129
        %4235 = vmatpush.bf16.msra.mxu0 %v4125
        %4236 = vmatpush.bf16.msra.mxu0 %v4121
        %4237 = vmatpush.bf16.msra.mxu0 %v4117
        %4238 = vmatpush.bf16.msra.mxu0 %v4113
        %4239 = vmatpush.bf16.msra.mxu0 %v4109
        %4240 = vmatpush.bf16.msra.mxu0 %v4105
        %4241 = vmatmul.bf16.gmra.mxu0 %v3823
        %v4242 = vpop.f32.mrf.mxu0
        %v4243 = vadd.f32 %v3905, %v4242
        %v4244 = vpop.f32.mrf.mxu0
        %v4245 = vadd.f32 %v3905, %v4244
        %4246 = vmatmul.bf16.gmra.mxu0 %v3825
        %v4247 = vpop.f32.mrf.mxu0
        %v4248 = vadd.f32 %v3905, %v4247
        %v4249 = vpop.f32.mrf.mxu0
        %v4250 = vadd.f32 %v3905, %v4249
        %4251 = vmatmul.bf16.gmra.mxu0 %v3827
        %v4252 = vpop.f32.mrf.mxu0
        %v4253 = vadd.f32 %v3905, %v4252
        %v4254 = vpop.f32.mrf.mxu0
        %v4255 = vadd.f32 %v3905, %v4254
        %4256 = vmatmul.bf16.gmra.mxu0 %v3829
        %v4257 = vpop.f32.mrf.mxu0
        %v4258 = vadd.f32 %v3905, %v4257
        %v4259 = vpop.f32.mrf.mxu0
        %v4260 = vadd.f32 %v3905, %v4259
        %4261 = vmatmul.bf16.gmra.mxu0 %v3831
        %v4262 = vpop.f32.mrf.mxu0
        %v4263 = vadd.f32 %v3905, %v4262
        %v4264 = vpop.f32.mrf.mxu0
        %v4265 = vadd.f32 %v3905, %v4264
        %4266 = vmatmul.bf16.gmra.mxu0 %v3833
        %v4267 = vpop.f32.mrf.mxu0
        %v4268 = vadd.f32 %v3905, %v4267
        %v4269 = vpop.f32.mrf.mxu0
        %v4270 = vadd.f32 %v3905, %v4269
        %4271 = vmatmul.bf16.gmra.mxu0 %v3835
        %v4272 = vpop.f32.mrf.mxu0
        %v4273 = vadd.f32 %v3905, %v4272
        %v4274 = vpop.f32.mrf.mxu0
        %v4275 = vadd.f32 %v3905, %v4274
        %4276 = vmatmul.bf16.gmra.mxu0 %v3837
        %v4277 = vpop.f32.mrf.mxu0
        %v4278 = vadd.f32 %v3905, %v4277
        %v4279 = vpop.f32.mrf.mxu0
        %v4280 = vadd.f32 %v3905, %v4279
        %4281 = vdwg.mxu0
        %4282 = vmatpush.bf16.msra.mxu0 %v4165
        %4283 = vmatpush.bf16.msra.mxu0 %v4161
        %4284 = vmatpush.bf16.msra.mxu0 %v4157
        %4285 = vmatpush.bf16.msra.mxu0 %v4153
        %4286 = vmatpush.bf16.msra.mxu0 %v4149
        %4287 = vmatpush.bf16.msra.mxu0 %v4145
        %4288 = vmatpush.bf16.msra.mxu0 %v4141
        %4289 = vmatpush.bf16.msra.mxu0 %v4137
        %4290 = vmatmul.bf16.gmra.mxu0 %v3824
        %v4291 = vpop.f32.mrf.mxu0
        %v4292 = vadd.f32 %v4243, %v4291
        %v4293 = vpop.f32.mrf.mxu0
        %v4294 = vadd.f32 %v4245, %v4293
        %4295 = vmatmul.bf16.gmra.mxu0 %v3826
        %v4296 = vpop.f32.mrf.mxu0
        %v4297 = vadd.f32 %v4248, %v4296
        %v4298 = vpop.f32.mrf.mxu0
        %v4299 = vadd.f32 %v4250, %v4298
        %4300 = vmatmul.bf16.gmra.mxu0 %v3828
        %v4301 = vpop.f32.mrf.mxu0
        %v4302 = vadd.f32 %v4253, %v4301
        %v4303 = vpop.f32.mrf.mxu0
        %v4304 = vadd.f32 %v4255, %v4303
        %4305 = vmatmul.bf16.gmra.mxu0 %v3830
        %v4306 = vpop.f32.mrf.mxu0
        %v4307 = vadd.f32 %v4258, %v4306
        %v4308 = vpop.f32.mrf.mxu0
        %v4309 = vadd.f32 %v4260, %v4308
        %4310 = vmatmul.bf16.gmra.mxu0 %v3832
        %v4311 = vpop.f32.mrf.mxu0
        %v4312 = vadd.f32 %v4263, %v4311
        %v4313 = vpop.f32.mrf.mxu0
        %v4314 = vadd.f32 %v4265, %v4313
        %4315 = vmatmul.bf16.gmra.mxu0 %v3834
        %v4316 = vpop.f32.mrf.mxu0
        %v4317 = vadd.f32 %v4268, %v4316
        %v4318 = vpop.f32.mrf.mxu0
        %v4319 = vadd.f32 %v4270, %v4318
        %4320 = vmatmul.bf16.gmra.mxu0 %v3836
        %v4321 = vpop.f32.mrf.mxu0
        %v4322 = vadd.f32 %v4273, %v4321
        %v4323 = vpop.f32.mrf.mxu0
        %v4324 = vadd.f32 %v4275, %v4323
        %4325 = vmatmul.bf16.gmra.mxu0 %v3838
        %v4326 = vpop.f32.mrf.mxu0
        %v4327 = vadd.f32 %v4278, %v4326
        %v4328 = vpop.f32.mrf.mxu0
        %v4329 = vadd.f32 %v4280, %v4328
        %4330 = vdwg.mxu0
        %4331 = vmatpush.bf16.msra.mxu0 %v4134
        %4332 = vmatpush.bf16.msra.mxu0 %v4130
        %4333 = vmatpush.bf16.msra.mxu0 %v4126
        %4334 = vmatpush.bf16.msra.mxu0 %v4122
        %4335 = vmatpush.bf16.msra.mxu0 %v4118
        %4336 = vmatpush.bf16.msra.mxu0 %v4114
        %4337 = vmatpush.bf16.msra.mxu0 %v4110
        %4338 = vmatpush.bf16.msra.mxu0 %v4106
        %4339 = vmatmul.bf16.gmra.mxu0 %v3823
        %v4340 = vpop.f32.mrf.mxu0
        %v4341 = vadd.f32 %v3906, %v4340
        %v4342 = vpop.f32.mrf.mxu0
        %v4343 = vadd.f32 %v3906, %v4342
        %4344 = vmatmul.bf16.gmra.mxu0 %v3825
        %v4345 = vpop.f32.mrf.mxu0
        %v4346 = vadd.f32 %v3906, %v4345
        %v4347 = vpop.f32.mrf.mxu0
        %v4348 = vadd.f32 %v3906, %v4347
        %4349 = vmatmul.bf16.gmra.mxu0 %v3827
        %v4350 = vpop.f32.mrf.mxu0
        %v4351 = vadd.f32 %v3906, %v4350
        %v4352 = vpop.f32.mrf.mxu0
        %v4353 = vadd.f32 %v3906, %v4352
        %4354 = vmatmul.bf16.gmra.mxu0 %v3829
        %v4355 = vpop.f32.mrf.mxu0
        %v4356 = vadd.f32 %v3906, %v4355
        %v4357 = vpop.f32.mrf.mxu0
        %v4358 = vadd.f32 %v3906, %v4357
        %4359 = vmatmul.bf16.gmra.mxu0 %v3831
        %v4360 = vpop.f32.mrf.mxu0
        %v4361 = vadd.f32 %v3906, %v4360
        %v4362 = vpop.f32.mrf.mxu0
        %v4363 = vadd.f32 %v3906, %v4362
        %4364 = vmatmul.bf16.gmra.mxu0 %v3833
        %v4365 = vpop.f32.mrf.mxu0
        %v4366 = vadd.f32 %v3906, %v4365
        %v4367 = vpop.f32.mrf.mxu0
        %v4368 = vadd.f32 %v3906, %v4367
        %4369 = vmatmul.bf16.gmra.mxu0 %v3835
        %v4370 = vpop.f32.mrf.mxu0
        %v4371 = vadd.f32 %v3906, %v4370
        %v4372 = vpop.f32.mrf.mxu0
        %v4373 = vadd.f32 %v3906, %v4372
        %4374 = vmatmul.bf16.gmra.mxu0 %v3837
        %v4375 = vpop.f32.mrf.mxu0
        %v4376 = vadd.f32 %v3906, %v4375
        %v4377 = vpop.f32.mrf.mxu0
        %v4378 = vadd.f32 %v3906, %v4377
        %4379 = vdwg.mxu0
        %4380 = vmatpush.bf16.msra.mxu0 %v4166
        %4381 = vmatpush.bf16.msra.mxu0 %v4162
        %4382 = vmatpush.bf16.msra.mxu0 %v4158
        %4383 = vmatpush.bf16.msra.mxu0 %v4154
        %4384 = vmatpush.bf16.msra.mxu0 %v4150
        %4385 = vmatpush.bf16.msra.mxu0 %v4146
        %4386 = vmatpush.bf16.msra.mxu0 %v4142
        %4387 = vmatpush.bf16.msra.mxu0 %v4138
        %4388 = vmatmul.bf16.gmra.mxu0 %v3824
        %v4389 = vpop.f32.mrf.mxu0
        %v4390 = vadd.f32 %v4341, %v4389
        %v4391 = vpop.f32.mrf.mxu0
        %v4392 = vadd.f32 %v4343, %v4391
        %4393 = vmatmul.bf16.gmra.mxu0 %v3826
        %v4394 = vpop.f32.mrf.mxu0
        %v4395 = vadd.f32 %v4346, %v4394
        %v4396 = vpop.f32.mrf.mxu0
        %v4397 = vadd.f32 %v4348, %v4396
        %4398 = vmatmul.bf16.gmra.mxu0 %v3828
        %v4399 = vpop.f32.mrf.mxu0
        %v4400 = vadd.f32 %v4351, %v4399
        %v4401 = vpop.f32.mrf.mxu0
        %v4402 = vadd.f32 %v4353, %v4401
        %4403 = vmatmul.bf16.gmra.mxu0 %v3830
        %v4404 = vpop.f32.mrf.mxu0
        %v4405 = vadd.f32 %v4356, %v4404
        %v4406 = vpop.f32.mrf.mxu0
        %v4407 = vadd.f32 %v4358, %v4406
        %4408 = vmatmul.bf16.gmra.mxu0 %v3832
        %v4409 = vpop.f32.mrf.mxu0
        %v4410 = vadd.f32 %v4361, %v4409
        %v4411 = vpop.f32.mrf.mxu0
        %v4412 = vadd.f32 %v4363, %v4411
        %4413 = vmatmul.bf16.gmra.mxu0 %v3834
        %v4414 = vpop.f32.mrf.mxu0
        %v4415 = vadd.f32 %v4366, %v4414
        %v4416 = vpop.f32.mrf.mxu0
        %v4417 = vadd.f32 %v4368, %v4416
        %4418 = vmatmul.bf16.gmra.mxu0 %v3836
        %v4419 = vpop.f32.mrf.mxu0
        %v4420 = vadd.f32 %v4371, %v4419
        %v4421 = vpop.f32.mrf.mxu0
        %v4422 = vadd.f32 %v4373, %v4421
        %4423 = vmatmul.bf16.gmra.mxu0 %v3838
        %v4424 = vpop.f32.mrf.mxu0
        %v4425 = vadd.f32 %v4376, %v4424
        %v4426 = vpop.f32.mrf.mxu0
        %v4427 = vadd.f32 %v4378, %v4426
        %4428 = vdwg.mxu0
        %4429 = vmatpush.bf16.msra.mxu0 %v4135
        %4430 = vmatpush.bf16.msra.mxu0 %v4131
        %4431 = vmatpush.bf16.msra.mxu0 %v4127
        %4432 = vmatpush.bf16.msra.mxu0 %v4123
        %4433 = vmatpush.bf16.msra.mxu0 %v4119
        %4434 = vmatpush.bf16.msra.mxu0 %v4115
        %4435 = vmatpush.bf16.msra.mxu0 %v4111
        %4436 = vmatpush.bf16.msra.mxu0 %v4107
        %4437 = vmatmul.bf16.gmra.mxu0 %v3823
        %v4438 = vpop.f32.mrf.mxu0
        %v4439 = vadd.f32 %v3907, %v4438
        %v4440 = vpop.f32.mrf.mxu0
        %v4441 = vadd.f32 %v3907, %v4440
        %4442 = vmatmul.bf16.gmra.mxu0 %v3825
        %v4443 = vpop.f32.mrf.mxu0
        %v4444 = vadd.f32 %v3907, %v4443
        %v4445 = vpop.f32.mrf.mxu0
        %v4446 = vadd.f32 %v3907, %v4445
        %4447 = vmatmul.bf16.gmra.mxu0 %v3827
        %v4448 = vpop.f32.mrf.mxu0
        %v4449 = vadd.f32 %v3907, %v4448
        %v4450 = vpop.f32.mrf.mxu0
        %v4451 = vadd.f32 %v3907, %v4450
        %4452 = vmatmul.bf16.gmra.mxu0 %v3829
        %v4453 = vpop.f32.mrf.mxu0
        %v4454 = vadd.f32 %v3907, %v4453
        %v4455 = vpop.f32.mrf.mxu0
        %v4456 = vadd.f32 %v3907, %v4455
        %4457 = vmatmul.bf16.gmra.mxu0 %v3831
        %v4458 = vpop.f32.mrf.mxu0
        %v4459 = vadd.f32 %v3907, %v4458
        %v4460 = vpop.f32.mrf.mxu0
        %v4461 = vadd.f32 %v3907, %v4460
        %4462 = vmatmul.bf16.gmra.mxu0 %v3833
        %v4463 = vpop.f32.mrf.mxu0
        %v4464 = vadd.f32 %v3907, %v4463
        %v4465 = vpop.f32.mrf.mxu0
        %v4466 = vadd.f32 %v3907, %v4465
        %4467 = vmatmul.bf16.gmra.mxu0 %v3835
        %v4468 = vpop.f32.mrf.mxu0
        %v4469 = vadd.f32 %v3907, %v4468
        %v4470 = vpop.f32.mrf.mxu0
        %v4471 = vadd.f32 %v3907, %v4470
        %4472 = vmatmul.bf16.gmra.mxu0 %v3837
        %v4473 = vpop.f32.mrf.mxu0
        %v4474 = vadd.f32 %v3907, %v4473
        %v4475 = vpop.f32.mrf.mxu0
        %v4476 = vadd.f32 %v3907, %v4475
        %4477 = vdwg.mxu0
        %4478 = vmatpush.bf16.msra.mxu0 %v4167
        %4479 = vmatpush.bf16.msra.mxu0 %v4163
        %4480 = vmatpush.bf16.msra.mxu0 %v4159
        %4481 = vmatpush.bf16.msra.mxu0 %v4155
        %4482 = vmatpush.bf16.msra.mxu0 %v4151
        %4483 = vmatpush.bf16.msra.mxu0 %v4147
        %4484 = vmatpush.bf16.msra.mxu0 %v4143
        %4485 = vmatpush.bf16.msra.mxu0 %v4139
        %4486 = vmatmul.bf16.gmra.mxu0 %v3824
        %v4487 = vpop.f32.mrf.mxu0
        %v4488 = vadd.f32 %v4439, %v4487
        %v4489 = vpop.f32.mrf.mxu0
        %v4490 = vadd.f32 %v4441, %v4489
        %4491 = vmatmul.bf16.gmra.mxu0 %v3826
        %v4492 = vpop.f32.mrf.mxu0
        %v4493 = vadd.f32 %v4444, %v4492
        %v4494 = vpop.f32.mrf.mxu0
        %v4495 = vadd.f32 %v4446, %v4494
        %4496 = vmatmul.bf16.gmra.mxu0 %v3828
        %v4497 = vpop.f32.mrf.mxu0
        %v4498 = vadd.f32 %v4449, %v4497
        %v4499 = vpop.f32.mrf.mxu0
        %v4500 = vadd.f32 %v4451, %v4499
        %4501 = vmatmul.bf16.gmra.mxu0 %v3830
        %v4502 = vpop.f32.mrf.mxu0
        %v4503 = vadd.f32 %v4454, %v4502
        %v4504 = vpop.f32.mrf.mxu0
        %v4505 = vadd.f32 %v4456, %v4504
        %4506 = vmatmul.bf16.gmra.mxu0 %v3832
        %v4507 = vpop.f32.mrf.mxu0
        %v4508 = vadd.f32 %v4459, %v4507
        %v4509 = vpop.f32.mrf.mxu0
        %v4510 = vadd.f32 %v4461, %v4509
        %4511 = vmatmul.bf16.gmra.mxu0 %v3834
        %v4512 = vpop.f32.mrf.mxu0
        %v4513 = vadd.f32 %v4464, %v4512
        %v4514 = vpop.f32.mrf.mxu0
        %v4515 = vadd.f32 %v4466, %v4514
        %4516 = vmatmul.bf16.gmra.mxu0 %v3836
        %v4517 = vpop.f32.mrf.mxu0
        %v4518 = vadd.f32 %v4469, %v4517
        %v4519 = vpop.f32.mrf.mxu0
        %v4520 = vadd.f32 %v4471, %v4519
        %4521 = vmatmul.bf16.gmra.mxu0 %v3838
        %v4522 = vpop.f32.mrf.mxu0
        %v4523 = vadd.f32 %v4474, %v4522
        %v4524 = vpop.f32.mrf.mxu0
        %v4525 = vadd.f32 %v4476, %v4524
        %4526 = vdwg.mxu0
        %4527 = vmatpush.bf16.msra.mxu0 %v4136
        %4528 = vmatpush.bf16.msra.mxu0 %v4132
        %4529 = vmatpush.bf16.msra.mxu0 %v4128
        %4530 = vmatpush.bf16.msra.mxu0 %v4124
        %4531 = vmatpush.bf16.msra.mxu0 %v4120
        %4532 = vmatpush.bf16.msra.mxu0 %v4116
        %4533 = vmatpush.bf16.msra.mxu0 %v4112
        %4534 = vmatpush.bf16.msra.mxu0 %v4108
        %4535 = vmatmul.bf16.gmra.mxu0 %v3823
        %v4536 = vpop.f32.mrf.mxu0
        %v4537 = vadd.f32 %v3908, %v4536
        %v4538 = vpop.f32.mrf.mxu0
        %v4539 = vadd.f32 %v3908, %v4538
        %4540 = vmatmul.bf16.gmra.mxu0 %v3825
        %v4541 = vpop.f32.mrf.mxu0
        %v4542 = vadd.f32 %v3908, %v4541
        %v4543 = vpop.f32.mrf.mxu0
        %v4544 = vadd.f32 %v3908, %v4543
        %4545 = vmatmul.bf16.gmra.mxu0 %v3827
        %v4546 = vpop.f32.mrf.mxu0
        %v4547 = vadd.f32 %v3908, %v4546
        %v4548 = vpop.f32.mrf.mxu0
        %v4549 = vadd.f32 %v3908, %v4548
        %4550 = vmatmul.bf16.gmra.mxu0 %v3829
        %v4551 = vpop.f32.mrf.mxu0
        %v4552 = vadd.f32 %v3908, %v4551
        %v4553 = vpop.f32.mrf.mxu0
        %v4554 = vadd.f32 %v3908, %v4553
        %4555 = vmatmul.bf16.gmra.mxu0 %v3831
        %v4556 = vpop.f32.mrf.mxu0
        %v4557 = vadd.f32 %v3908, %v4556
        %v4558 = vpop.f32.mrf.mxu0
        %v4559 = vadd.f32 %v3908, %v4558
        %4560 = vmatmul.bf16.gmra.mxu0 %v3833
        %v4561 = vpop.f32.mrf.mxu0
        %v4562 = vadd.f32 %v3908, %v4561
        %v4563 = vpop.f32.mrf.mxu0
        %v4564 = vadd.f32 %v3908, %v4563
        %4565 = vmatmul.bf16.gmra.mxu0 %v3835
        %v4566 = vpop.f32.mrf.mxu0
        %v4567 = vadd.f32 %v3908, %v4566
        %v4568 = vpop.f32.mrf.mxu0
        %v4569 = vadd.f32 %v3908, %v4568
        %4570 = vmatmul.bf16.gmra.mxu0 %v3837
        %v4571 = vpop.f32.mrf.mxu0
        %v4572 = vadd.f32 %v3908, %v4571
        %v4573 = vpop.f32.mrf.mxu0
        %v4574 = vadd.f32 %v3908, %v4573
        %4575 = vdwg.mxu0
        %4576 = vmatpush.bf16.msra.mxu0 %v4168
        %4577 = vmatpush.bf16.msra.mxu0 %v4164
        %4578 = vmatpush.bf16.msra.mxu0 %v4160
        %4579 = vmatpush.bf16.msra.mxu0 %v4156
        %4580 = vmatpush.bf16.msra.mxu0 %v4152
        %4581 = vmatpush.bf16.msra.mxu0 %v4148
        %4582 = vmatpush.bf16.msra.mxu0 %v4144
        %4583 = vmatpush.bf16.msra.mxu0 %v4140
        %4584 = vmatmul.bf16.gmra.mxu0 %v3824
        %v4585 = vpop.f32.mrf.mxu0
        %v4586 = vadd.f32 %v4537, %v4585
        %v4587 = vpop.f32.mrf.mxu0
        %v4588 = vadd.f32 %v4539, %v4587
        %4589 = vmatmul.bf16.gmra.mxu0 %v3826
        %v4590 = vpop.f32.mrf.mxu0
        %v4591 = vadd.f32 %v4542, %v4590
        %v4592 = vpop.f32.mrf.mxu0
        %v4593 = vadd.f32 %v4544, %v4592
        %4594 = vmatmul.bf16.gmra.mxu0 %v3828
        %v4595 = vpop.f32.mrf.mxu0
        %v4596 = vadd.f32 %v4547, %v4595
        %v4597 = vpop.f32.mrf.mxu0
        %v4598 = vadd.f32 %v4549, %v4597
        %4599 = vmatmul.bf16.gmra.mxu0 %v3830
        %v4600 = vpop.f32.mrf.mxu0
        %v4601 = vadd.f32 %v4552, %v4600
        %v4602 = vpop.f32.mrf.mxu0
        %v4603 = vadd.f32 %v4554, %v4602
        %4604 = vmatmul.bf16.gmra.mxu0 %v3832
        %v4605 = vpop.f32.mrf.mxu0
        %v4606 = vadd.f32 %v4557, %v4605
        %v4607 = vpop.f32.mrf.mxu0
        %v4608 = vadd.f32 %v4559, %v4607
        %4609 = vmatmul.bf16.gmra.mxu0 %v3834
        %v4610 = vpop.f32.mrf.mxu0
        %v4611 = vadd.f32 %v4562, %v4610
        %v4612 = vpop.f32.mrf.mxu0
        %v4613 = vadd.f32 %v4564, %v4612
        %4614 = vmatmul.bf16.gmra.mxu0 %v3836
        %v4615 = vpop.f32.mrf.mxu0
        %v4616 = vadd.f32 %v4567, %v4615
        %v4617 = vpop.f32.mrf.mxu0
        %v4618 = vadd.f32 %v4569, %v4617
        %4619 = vmatmul.bf16.gmra.mxu0 %v3838
        %v4620 = vpop.f32.mrf.mxu0
        %v4621 = vadd.f32 %v4572, %v4620
        %v4622 = vpop.f32.mrf.mxu0
        %v4623 = vadd.f32 %v4574, %v4622
        %4624 = vdwg.mxu0
        %4625 = vmax.xlane.f32.xlu0 %v4292
        %v4626 = vpop.xlane.xlu0 %4625
        %4627 = vmax.xlane.f32.xlu0 %v4294
        %v4628 = vpop.xlane.xlu0 %4627
        %4629 = vmax.xlane.f32.xlu0 %v4297
        %v4630 = vpop.xlane.xlu0 %4629
        %4631 = vmax.xlane.f32.xlu0 %v4299
        %v4632 = vpop.xlane.xlu0 %4631
        %4633 = vmax.xlane.f32.xlu0 %v4302
        %v4634 = vpop.xlane.xlu0 %4633
        %4635 = vmax.xlane.f32.xlu0 %v4304
        %v4636 = vpop.xlane.xlu0 %4635
        %4637 = vmax.xlane.f32.xlu0 %v4307
        %v4638 = vpop.xlane.xlu0 %4637
        %4639 = vmax.xlane.f32.xlu0 %v4309
        %v4640 = vpop.xlane.xlu0 %4639
        %4641 = vmax.xlane.f32.xlu0 %v4312
        %v4642 = vpop.xlane.xlu0 %4641
        %4643 = vmax.xlane.f32.xlu0 %v4314
        %v4644 = vpop.xlane.xlu0 %4643
        %4645 = vmax.xlane.f32.xlu0 %v4317
        %v4646 = vpop.xlane.xlu0 %4645
        %4647 = vmax.xlane.f32.xlu0 %v4319
        %v4648 = vpop.xlane.xlu0 %4647
        %4649 = vmax.xlane.f32.xlu0 %v4322
        %v4650 = vpop.xlane.xlu0 %4649
        %4651 = vmax.xlane.f32.xlu0 %v4324
        %v4652 = vpop.xlane.xlu0 %4651
        %4653 = vmax.xlane.f32.xlu0 %v4327
        %v4654 = vpop.xlane.xlu0 %4653
        %4655 = vmax.xlane.f32.xlu0 %v4329
        %v4656 = vpop.xlane.xlu0 %4655
        %v4657 = vsub.f32 %v4292, %v4626
        %v4658 = vsub.f32 %v4294, %v4628
        %v4659 = vsub.f32 %v4297, %v4630
        %v4660 = vsub.f32 %v4299, %v4632
        %v4661 = vsub.f32 %v4302, %v4634
        %v4662 = vsub.f32 %v4304, %v4636
        %v4663 = vsub.f32 %v4307, %v4638
        %v4664 = vsub.f32 %v4309, %v4640
        %v4665 = vsub.f32 %v4312, %v4642
        %v4666 = vsub.f32 %v4314, %v4644
        %v4667 = vsub.f32 %v4317, %v4646
        %v4668 = vsub.f32 %v4319, %v4648
        %v4669 = vsub.f32 %v4322, %v4650
        %v4670 = vsub.f32 %v4324, %v4652
        %v4671 = vsub.f32 %v4327, %v4654
        %v4672 = vsub.f32 %v4329, %v4656
        %v4673 = vpack.c.bf16 %v4657, %v4657
        %v4674 = vpack.c.bf16 %v4658, %v4658
        %v4675 = vpack.c.bf16 %v4659, %v4659
        %v4676 = vpack.c.bf16 %v4660, %v4660
        %v4677 = vpack.c.bf16 %v4661, %v4661
        %v4678 = vpack.c.bf16 %v4662, %v4662
        %v4679 = vpack.c.bf16 %v4663, %v4663
        %v4680 = vpack.c.bf16 %v4664, %v4664
        %v4681 = vpack.c.bf16 %v4665, %v4665
        %v4682 = vpack.c.bf16 %v4666, %v4666
        %v4683 = vpack.c.bf16 %v4667, %v4667
        %v4684 = vpack.c.bf16 %v4668, %v4668
        %v4685 = vpack.c.bf16 %v4669, %v4669
        %v4686 = vpack.c.bf16 %v4670, %v4670
        %v4687 = vpack.c.bf16 %v4671, %v4671
        %v4688 = vpack.c.bf16 %v4672, %v4672
        %v4689 = vunpack.c.l.bf16 %v4673
        %v4690 = vunpack.c.l.bf16 %v4674
        %v4691 = vunpack.c.l.bf16 %v4675
        %v4692 = vunpack.c.l.bf16 %v4676
        %v4693 = vunpack.c.l.bf16 %v4677
        %v4694 = vunpack.c.l.bf16 %v4678
        %v4695 = vunpack.c.l.bf16 %v4679
        %v4696 = vunpack.c.l.bf16 %v4680
        %v4697 = vunpack.c.l.bf16 %v4681
        %v4698 = vunpack.c.l.bf16 %v4682
        %v4699 = vunpack.c.l.bf16 %v4683
        %v4700 = vunpack.c.l.bf16 %v4684
        %v4701 = vunpack.c.l.bf16 %v4685
        %v4702 = vunpack.c.l.bf16 %v4686
        %v4703 = vunpack.c.l.bf16 %v4687
        %v4704 = vunpack.c.l.bf16 %v4688
        %v4705 = vmul.f32 %v4689, 1.442695
        %v4706 = vpow.pop %v4705
        %v4707 = vmul.f32 %v4690, 1.442695
        %v4708 = vpow.pop %v4707
        %v4709 = vmul.f32 %v4691, 1.442695
        %v4710 = vpow.pop %v4709
        %v4711 = vmul.f32 %v4692, 1.442695
        %v4712 = vpow.pop %v4711
        %v4713 = vmul.f32 %v4693, 1.442695
        %v4714 = vpow.pop %v4713
        %v4715 = vmul.f32 %v4694, 1.442695
        %v4716 = vpow.pop %v4715
        %v4717 = vmul.f32 %v4695, 1.442695
        %v4718 = vpow.pop %v4717
        %v4719 = vmul.f32 %v4696, 1.442695
        %v4720 = vpow.pop %v4719
        %v4721 = vmul.f32 %v4697, 1.442695
        %v4722 = vpow.pop %v4721
        %v4723 = vmul.f32 %v4698, 1.442695
        %v4724 = vpow.pop %v4723
        %v4725 = vmul.f32 %v4699, 1.442695
        %v4726 = vpow.pop %v4725
        %v4727 = vmul.f32 %v4700, 1.442695
        %v4728 = vpow.pop %v4727
        %v4729 = vmul.f32 %v4701, 1.442695
        %v4730 = vpow.pop %v4729
        %v4731 = vmul.f32 %v4702, 1.442695
        %v4732 = vpow.pop %v4731
        %v4733 = vmul.f32 %v4703, 1.442695
        %v4734 = vpow.pop %v4733
        %v4735 = vmul.f32 %v4704, 1.442695
        %v4736 = vpow.pop %v4735
        %v4737 = vpack.c.bf16 %v4706, %v4706
        %v4738 = vpack.c.bf16 %v4708, %v4708
        %v4739 = vpack.c.bf16 %v4710, %v4710
        %v4740 = vpack.c.bf16 %v4712, %v4712
        %v4741 = vpack.c.bf16 %v4714, %v4714
        %v4742 = vpack.c.bf16 %v4716, %v4716
        %v4743 = vpack.c.bf16 %v4718, %v4718
        %v4744 = vpack.c.bf16 %v4720, %v4720
        %v4745 = vpack.c.bf16 %v4722, %v4722
        %v4746 = vpack.c.bf16 %v4724, %v4724
        %v4747 = vpack.c.bf16 %v4726, %v4726
        %v4748 = vpack.c.bf16 %v4728, %v4728
        %v4749 = vpack.c.bf16 %v4730, %v4730
        %v4750 = vpack.c.bf16 %v4732, %v4732
        %v4751 = vpack.c.bf16 %v4734, %v4734
        %v4752 = vpack.c.bf16 %v4736, %v4736
        %v4753 = vunpack.c.l.bf16 %v4737
        %v4754 = vunpack.c.l.bf16 %v4738
        %v4755 = vunpack.c.l.bf16 %v4739
        %v4756 = vunpack.c.l.bf16 %v4740
        %v4757 = vunpack.c.l.bf16 %v4741
        %v4758 = vunpack.c.l.bf16 %v4742
        %v4759 = vunpack.c.l.bf16 %v4743
        %v4760 = vunpack.c.l.bf16 %v4744
        %v4761 = vunpack.c.l.bf16 %v4745
        %v4762 = vunpack.c.l.bf16 %v4746
        %v4763 = vunpack.c.l.bf16 %v4747
        %v4764 = vunpack.c.l.bf16 %v4748
        %v4765 = vunpack.c.l.bf16 %v4749
        %v4766 = vunpack.c.l.bf16 %v4750
        %v4767 = vunpack.c.l.bf16 %v4751
        %v4768 = vunpack.c.l.bf16 %v4752
        %4769 = vadd.xlane.f32.xlu0 %v4753
        %v4770 = vpop.xlane.xlu0 %4769
        %4771 = vadd.xlane.f32.xlu0 %v4754
        %v4772 = vpop.xlane.xlu0 %4771
        %4773 = vadd.xlane.f32.xlu0 %v4755
        %v4774 = vpop.xlane.xlu0 %4773
        %4775 = vadd.xlane.f32.xlu0 %v4756
        %v4776 = vpop.xlane.xlu0 %4775
        %4777 = vadd.xlane.f32.xlu0 %v4757
        %v4778 = vpop.xlane.xlu0 %4777
        %4779 = vadd.xlane.f32.xlu0 %v4758
        %v4780 = vpop.xlane.xlu0 %4779
        %4781 = vadd.xlane.f32.xlu0 %v4759
        %v4782 = vpop.xlane.xlu0 %4781
        %4783 = vadd.xlane.f32.xlu0 %v4760
        %v4784 = vpop.xlane.xlu0 %4783
        %4785 = vadd.xlane.f32.xlu0 %v4761
        %v4786 = vpop.xlane.xlu0 %4785
        %4787 = vadd.xlane.f32.xlu0 %v4762
        %v4788 = vpop.xlane.xlu0 %4787
        %4789 = vadd.xlane.f32.xlu0 %v4763
        %v4790 = vpop.xlane.xlu0 %4789
        %4791 = vadd.xlane.f32.xlu0 %v4764
        %v4792 = vpop.xlane.xlu0 %4791
        %4793 = vadd.xlane.f32.xlu0 %v4765
        %v4794 = vpop.xlane.xlu0 %4793
        %4795 = vadd.xlane.f32.xlu0 %v4766
        %v4796 = vpop.xlane.xlu0 %4795
        %4797 = vadd.xlane.f32.xlu0 %v4767
        %v4798 = vpop.xlane.xlu0 %4797
        %4799 = vadd.xlane.f32.xlu0 %v4768
        %v4800 = vpop.xlane.xlu0 %4799
        %v4801 = vrcp.pop %v4770
        %v4802 = vmul.f32 %v4770, %v4801
        %v4803 = vsub.f32 1.0, %v4802
        %v4804 = vmul.f32 %v4801, %v4803
        %v4805 = vadd.f32 %v4801, %v4804
        %vm4806 = vweird.f32 %v4770
        %vm4807 = vweird.f32 %v4801
        %vm4808 = vmor %vm4806, %vm4807
        %v4809 = vsel %vm4808, %v4801, %v4805
        %v4810 = vand.u32 2147483647, %v4770
        %vm4811 = vcmp.eq.f32.partialorder %v4810, 8.507059e+37
        %v4812 = vand.u32 %v4770, 2147483648
        %v4813 = vor.u32 1.1754944e-38, %v4812
        %v4814 = vsel %vm4811, %v4813, %v4809
        %v4815 = vmul.f32 1.0, %v4814
        %v4816 = vrcp.pop %v4772
        %v4817 = vmul.f32 %v4772, %v4816
        %v4818 = vsub.f32 1.0, %v4817
        %v4819 = vmul.f32 %v4816, %v4818
        %v4820 = vadd.f32 %v4816, %v4819
        %vm4821 = vweird.f32 %v4772
        %vm4822 = vweird.f32 %v4816
        %vm4823 = vmor %vm4821, %vm4822
        %v4824 = vsel %vm4823, %v4816, %v4820
        %v4825 = vand.u32 2147483647, %v4772
        %vm4826 = vcmp.eq.f32.partialorder %v4825, 8.507059e+37
        %v4827 = vand.u32 %v4772, 2147483648
        %v4828 = vor.u32 1.1754944e-38, %v4827
        %v4829 = vsel %vm4826, %v4828, %v4824
        %v4830 = vmul.f32 1.0, %v4829
        %v4831 = vrcp.pop %v4774
        %v4832 = vmul.f32 %v4774, %v4831
        %v4833 = vsub.f32 1.0, %v4832
        %v4834 = vmul.f32 %v4831, %v4833
        %v4835 = vadd.f32 %v4831, %v4834
        %vm4836 = vweird.f32 %v4774
        %vm4837 = vweird.f32 %v4831
        %vm4838 = vmor %vm4836, %vm4837
        %v4839 = vsel %vm4838, %v4831, %v4835
        %v4840 = vand.u32 2147483647, %v4774
        %vm4841 = vcmp.eq.f32.partialorder %v4840, 8.507059e+37
        %v4842 = vand.u32 %v4774, 2147483648
        %v4843 = vor.u32 1.1754944e-38, %v4842
        %v4844 = vsel %vm4841, %v4843, %v4839
        %v4845 = vmul.f32 1.0, %v4844
        %v4846 = vrcp.pop %v4776
        %v4847 = vmul.f32 %v4776, %v4846
        %v4848 = vsub.f32 1.0, %v4847
        %v4849 = vmul.f32 %v4846, %v4848
        %v4850 = vadd.f32 %v4846, %v4849
        %vm4851 = vweird.f32 %v4776
        %vm4852 = vweird.f32 %v4846
        %vm4853 = vmor %vm4851, %vm4852
        %v4854 = vsel %vm4853, %v4846, %v4850
        %v4855 = vand.u32 2147483647, %v4776
        %vm4856 = vcmp.eq.f32.partialorder %v4855, 8.507059e+37
        %v4857 = vand.u32 %v4776, 2147483648
        %v4858 = vor.u32 1.1754944e-38, %v4857
        %v4859 = vsel %vm4856, %v4858, %v4854
        %v4860 = vmul.f32 1.0, %v4859
        %v4861 = vrcp.pop %v4778
        %v4862 = vmul.f32 %v4778, %v4861
        %v4863 = vsub.f32 1.0, %v4862
        %v4864 = vmul.f32 %v4861, %v4863
        %v4865 = vadd.f32 %v4861, %v4864
        %vm4866 = vweird.f32 %v4778
        %vm4867 = vweird.f32 %v4861
        %vm4868 = vmor %vm4866, %vm4867
        %v4869 = vsel %vm4868, %v4861, %v4865
        %v4870 = vand.u32 2147483647, %v4778
        %vm4871 = vcmp.eq.f32.partialorder %v4870, 8.507059e+37
        %v4872 = vand.u32 %v4778, 2147483648
        %v4873 = vor.u32 1.1754944e-38, %v4872
        %v4874 = vsel %vm4871, %v4873, %v4869
        %v4875 = vmul.f32 1.0, %v4874
        %v4876 = vrcp.pop %v4780
        %v4877 = vmul.f32 %v4780, %v4876
        %v4878 = vsub.f32 1.0, %v4877
        %v4879 = vmul.f32 %v4876, %v4878
        %v4880 = vadd.f32 %v4876, %v4879
        %vm4881 = vweird.f32 %v4780
        %vm4882 = vweird.f32 %v4876
        %vm4883 = vmor %vm4881, %vm4882
        %v4884 = vsel %vm4883, %v4876, %v4880
        %v4885 = vand.u32 2147483647, %v4780
        %vm4886 = vcmp.eq.f32.partialorder %v4885, 8.507059e+37
        %v4887 = vand.u32 %v4780, 2147483648
        %v4888 = vor.u32 1.1754944e-38, %v4887
        %v4889 = vsel %vm4886, %v4888, %v4884
        %v4890 = vmul.f32 1.0, %v4889
        %v4891 = vrcp.pop %v4782
        %v4892 = vmul.f32 %v4782, %v4891
        %v4893 = vsub.f32 1.0, %v4892
        %v4894 = vmul.f32 %v4891, %v4893
        %v4895 = vadd.f32 %v4891, %v4894
        %vm4896 = vweird.f32 %v4782
        %vm4897 = vweird.f32 %v4891
        %vm4898 = vmor %vm4896, %vm4897
        %v4899 = vsel %vm4898, %v4891, %v4895
        %v4900 = vand.u32 2147483647, %v4782
        %vm4901 = vcmp.eq.f32.partialorder %v4900, 8.507059e+37
        %v4902 = vand.u32 %v4782, 2147483648
        %v4903 = vor.u32 1.1754944e-38, %v4902
        %v4904 = vsel %vm4901, %v4903, %v4899
        %v4905 = vmul.f32 1.0, %v4904
        %v4906 = vrcp.pop %v4784
        %v4907 = vmul.f32 %v4784, %v4906
        %v4908 = vsub.f32 1.0, %v4907
        %v4909 = vmul.f32 %v4906, %v4908
        %v4910 = vadd.f32 %v4906, %v4909
        %vm4911 = vweird.f32 %v4784
        %vm4912 = vweird.f32 %v4906
        %vm4913 = vmor %vm4911, %vm4912
        %v4914 = vsel %vm4913, %v4906, %v4910
        %v4915 = vand.u32 2147483647, %v4784
        %vm4916 = vcmp.eq.f32.partialorder %v4915, 8.507059e+37
        %v4917 = vand.u32 %v4784, 2147483648
        %v4918 = vor.u32 1.1754944e-38, %v4917
        %v4919 = vsel %vm4916, %v4918, %v4914
        %v4920 = vmul.f32 1.0, %v4919
        %v4921 = vrcp.pop %v4786
        %v4922 = vmul.f32 %v4786, %v4921
        %v4923 = vsub.f32 1.0, %v4922
        %v4924 = vmul.f32 %v4921, %v4923
        %v4925 = vadd.f32 %v4921, %v4924
        %vm4926 = vweird.f32 %v4786
        %vm4927 = vweird.f32 %v4921
        %vm4928 = vmor %vm4926, %vm4927
        %v4929 = vsel %vm4928, %v4921, %v4925
        %v4930 = vand.u32 2147483647, %v4786
        %vm4931 = vcmp.eq.f32.partialorder %v4930, 8.507059e+37
        %v4932 = vand.u32 %v4786, 2147483648
        %v4933 = vor.u32 1.1754944e-38, %v4932
        %v4934 = vsel %vm4931, %v4933, %v4929
        %v4935 = vmul.f32 1.0, %v4934
        %v4936 = vrcp.pop %v4788
        %v4937 = vmul.f32 %v4788, %v4936
        %v4938 = vsub.f32 1.0, %v4937
        %v4939 = vmul.f32 %v4936, %v4938
        %v4940 = vadd.f32 %v4936, %v4939
        %vm4941 = vweird.f32 %v4788
        %vm4942 = vweird.f32 %v4936
        %vm4943 = vmor %vm4941, %vm4942
        %v4944 = vsel %vm4943, %v4936, %v4940
        %v4945 = vand.u32 2147483647, %v4788
        %vm4946 = vcmp.eq.f32.partialorder %v4945, 8.507059e+37
        %v4947 = vand.u32 %v4788, 2147483648
        %v4948 = vor.u32 1.1754944e-38, %v4947
        %v4949 = vsel %vm4946, %v4948, %v4944
        %v4950 = vmul.f32 1.0, %v4949
        %v4951 = vrcp.pop %v4790
        %v4952 = vmul.f32 %v4790, %v4951
        %v4953 = vsub.f32 1.0, %v4952
        %v4954 = vmul.f32 %v4951, %v4953
        %v4955 = vadd.f32 %v4951, %v4954
        %vm4956 = vweird.f32 %v4790
        %vm4957 = vweird.f32 %v4951
        %vm4958 = vmor %vm4956, %vm4957
        %v4959 = vsel %vm4958, %v4951, %v4955
        %v4960 = vand.u32 2147483647, %v4790
        %vm4961 = vcmp.eq.f32.partialorder %v4960, 8.507059e+37
        %v4962 = vand.u32 %v4790, 2147483648
        %v4963 = vor.u32 1.1754944e-38, %v4962
        %v4964 = vsel %vm4961, %v4963, %v4959
        %v4965 = vmul.f32 1.0, %v4964
        %v4966 = vrcp.pop %v4792
        %v4967 = vmul.f32 %v4792, %v4966
        %v4968 = vsub.f32 1.0, %v4967
        %v4969 = vmul.f32 %v4966, %v4968
        %v4970 = vadd.f32 %v4966, %v4969
        %vm4971 = vweird.f32 %v4792
        %vm4972 = vweird.f32 %v4966
        %vm4973 = vmor %vm4971, %vm4972
        %v4974 = vsel %vm4973, %v4966, %v4970
        %v4975 = vand.u32 2147483647, %v4792
        %vm4976 = vcmp.eq.f32.partialorder %v4975, 8.507059e+37
        %v4977 = vand.u32 %v4792, 2147483648
        %v4978 = vor.u32 1.1754944e-38, %v4977
        %v4979 = vsel %vm4976, %v4978, %v4974
        %v4980 = vmul.f32 1.0, %v4979
        %v4981 = vrcp.pop %v4794
        %v4982 = vmul.f32 %v4794, %v4981
        %v4983 = vsub.f32 1.0, %v4982
        %v4984 = vmul.f32 %v4981, %v4983
        %v4985 = vadd.f32 %v4981, %v4984
        %vm4986 = vweird.f32 %v4794
        %vm4987 = vweird.f32 %v4981
        %vm4988 = vmor %vm4986, %vm4987
        %v4989 = vsel %vm4988, %v4981, %v4985
        %v4990 = vand.u32 2147483647, %v4794
        %vm4991 = vcmp.eq.f32.partialorder %v4990, 8.507059e+37
        %v4992 = vand.u32 %v4794, 2147483648
        %v4993 = vor.u32 1.1754944e-38, %v4992
        %v4994 = vsel %vm4991, %v4993, %v4989
        %v4995 = vmul.f32 1.0, %v4994
        %v4996 = vrcp.pop %v4796
        %v4997 = vmul.f32 %v4796, %v4996
        %v4998 = vsub.f32 1.0, %v4997
        %v4999 = vmul.f32 %v4996, %v4998
        %v5000 = vadd.f32 %v4996, %v4999
        %vm5001 = vweird.f32 %v4796
        %vm5002 = vweird.f32 %v4996
        %vm5003 = vmor %vm5001, %vm5002
        %v5004 = vsel %vm5003, %v4996, %v5000
        %v5005 = vand.u32 2147483647, %v4796
        %vm5006 = vcmp.eq.f32.partialorder %v5005, 8.507059e+37
        %v5007 = vand.u32 %v4796, 2147483648
        %v5008 = vor.u32 1.1754944e-38, %v5007
        %v5009 = vsel %vm5006, %v5008, %v5004
        %v5010 = vmul.f32 1.0, %v5009
        %v5011 = vrcp.pop %v4798
        %v5012 = vmul.f32 %v4798, %v5011
        %v5013 = vsub.f32 1.0, %v5012
        %v5014 = vmul.f32 %v5011, %v5013
        %v5015 = vadd.f32 %v5011, %v5014
        %vm5016 = vweird.f32 %v4798
        %vm5017 = vweird.f32 %v5011
        %vm5018 = vmor %vm5016, %vm5017
        %v5019 = vsel %vm5018, %v5011, %v5015
        %v5020 = vand.u32 2147483647, %v4798
        %vm5021 = vcmp.eq.f32.partialorder %v5020, 8.507059e+37
        %v5022 = vand.u32 %v4798, 2147483648
        %v5023 = vor.u32 1.1754944e-38, %v5022
        %v5024 = vsel %vm5021, %v5023, %v5019
        %v5025 = vmul.f32 1.0, %v5024
        %v5026 = vrcp.pop %v4800
        %v5027 = vmul.f32 %v4800, %v5026
        %v5028 = vsub.f32 1.0, %v5027
        %v5029 = vmul.f32 %v5026, %v5028
        %v5030 = vadd.f32 %v5026, %v5029
        %vm5031 = vweird.f32 %v4800
        %vm5032 = vweird.f32 %v5026
        %vm5033 = vmor %vm5031, %vm5032
        %v5034 = vsel %vm5033, %v5026, %v5030
        %v5035 = vand.u32 2147483647, %v4800
        %vm5036 = vcmp.eq.f32.partialorder %v5035, 8.507059e+37
        %v5037 = vand.u32 %v4800, 2147483648
        %v5038 = vor.u32 1.1754944e-38, %v5037
        %v5039 = vsel %vm5036, %v5038, %v5034
        %v5040 = vmul.f32 1.0, %v5039
        %v5041 = vmul.f32 %v4753, %v4815
        %v5042 = vmul.f32 %v4754, %v4830
        %v5043 = vmul.f32 %v4755, %v4845
        %v5044 = vmul.f32 %v4756, %v4860
        %v5045 = vmul.f32 %v4757, %v4875
        %v5046 = vmul.f32 %v4758, %v4890
        %v5047 = vmul.f32 %v4759, %v4905
        %v5048 = vmul.f32 %v4760, %v4920
        %v5049 = vmul.f32 %v4761, %v4935
        %v5050 = vmul.f32 %v4762, %v4950
        %v5051 = vmul.f32 %v4763, %v4965
        %v5052 = vmul.f32 %v4764, %v4980
        %v5053 = vmul.f32 %v4765, %v4995
        %v5054 = vmul.f32 %v4766, %v5010
        %v5055 = vmul.f32 %v4767, %v5025
        %v5056 = vmul.f32 %v4768, %v5040
        %v5057 = vadd.f32 %v5041, 0.0
        %v5058 = vadd.f32 %v5042, 0.0
        %v5059 = vadd.f32 %v5043, 0.0
        %v5060 = vadd.f32 %v5044, 0.0
        %v5061 = vadd.f32 %v5045, 0.0
        %v5062 = vadd.f32 %v5046, 0.0
        %v5063 = vadd.f32 %v5047, 0.0
        %v5064 = vadd.f32 %v5048, 0.0
        %v5065 = vadd.f32 %v5049, 0.0
        %v5066 = vadd.f32 %v5050, 0.0
        %v5067 = vadd.f32 %v5051, 0.0
        %v5068 = vadd.f32 %v5052, 0.0
        %v5069 = vadd.f32 %v5053, 0.0
        %v5070 = vadd.f32 %v5054, 0.0
        %v5071 = vadd.f32 %v5055, 0.0
        %v5072 = vadd.f32 %v5056, 0.0
        %5073 = vmax.xlane.f32.xlu0 %v4390
        %v5074 = vpop.xlane.xlu0 %5073
        %5075 = vmax.xlane.f32.xlu0 %v4392
        %v5076 = vpop.xlane.xlu0 %5075
        %5077 = vmax.xlane.f32.xlu0 %v4395
        %v5078 = vpop.xlane.xlu0 %5077
        %5079 = vmax.xlane.f32.xlu0 %v4397
        %v5080 = vpop.xlane.xlu0 %5079
        %5081 = vmax.xlane.f32.xlu0 %v4400
        %v5082 = vpop.xlane.xlu0 %5081
        %5083 = vmax.xlane.f32.xlu0 %v4402
        %v5084 = vpop.xlane.xlu0 %5083
        %5085 = vmax.xlane.f32.xlu0 %v4405
        %v5086 = vpop.xlane.xlu0 %5085
        %5087 = vmax.xlane.f32.xlu0 %v4407
        %v5088 = vpop.xlane.xlu0 %5087
        %5089 = vmax.xlane.f32.xlu0 %v4410
        %v5090 = vpop.xlane.xlu0 %5089
        %5091 = vmax.xlane.f32.xlu0 %v4412
        %v5092 = vpop.xlane.xlu0 %5091
        %5093 = vmax.xlane.f32.xlu0 %v4415
        %v5094 = vpop.xlane.xlu0 %5093
        %5095 = vmax.xlane.f32.xlu0 %v4417
        %v5096 = vpop.xlane.xlu0 %5095
        %5097 = vmax.xlane.f32.xlu0 %v4420
        %v5098 = vpop.xlane.xlu0 %5097
        %5099 = vmax.xlane.f32.xlu0 %v4422
        %v5100 = vpop.xlane.xlu0 %5099
        %5101 = vmax.xlane.f32.xlu0 %v4425
        %v5102 = vpop.xlane.xlu0 %5101
        %5103 = vmax.xlane.f32.xlu0 %v4427
        %v5104 = vpop.xlane.xlu0 %5103
        %v5105 = vsub.f32 %v4390, %v5074
        %v5106 = vsub.f32 %v4392, %v5076
        %v5107 = vsub.f32 %v4395, %v5078
        %v5108 = vsub.f32 %v4397, %v5080
        %v5109 = vsub.f32 %v4400, %v5082
        %v5110 = vsub.f32 %v4402, %v5084
        %v5111 = vsub.f32 %v4405, %v5086
        %v5112 = vsub.f32 %v4407, %v5088
        %v5113 = vsub.f32 %v4410, %v5090
        %v5114 = vsub.f32 %v4412, %v5092
        %v5115 = vsub.f32 %v4415, %v5094
        %v5116 = vsub.f32 %v4417, %v5096
        %v5117 = vsub.f32 %v4420, %v5098
        %v5118 = vsub.f32 %v4422, %v5100
        %v5119 = vsub.f32 %v4425, %v5102
        %v5120 = vsub.f32 %v4427, %v5104
        %v5121 = vpack.c.bf16 %v5105, %v5105
        %v5122 = vpack.c.bf16 %v5106, %v5106
        %v5123 = vpack.c.bf16 %v5107, %v5107
        %v5124 = vpack.c.bf16 %v5108, %v5108
        %v5125 = vpack.c.bf16 %v5109, %v5109
        %v5126 = vpack.c.bf16 %v5110, %v5110
        %v5127 = vpack.c.bf16 %v5111, %v5111
        %v5128 = vpack.c.bf16 %v5112, %v5112
        %v5129 = vpack.c.bf16 %v5113, %v5113
        %v5130 = vpack.c.bf16 %v5114, %v5114
        %v5131 = vpack.c.bf16 %v5115, %v5115
        %v5132 = vpack.c.bf16 %v5116, %v5116
        %v5133 = vpack.c.bf16 %v5117, %v5117
        %v5134 = vpack.c.bf16 %v5118, %v5118
        %v5135 = vpack.c.bf16 %v5119, %v5119
        %v5136 = vpack.c.bf16 %v5120, %v5120
        %v5137 = vunpack.c.l.bf16 %v5121
        %v5138 = vunpack.c.l.bf16 %v5122
        %v5139 = vunpack.c.l.bf16 %v5123
        %v5140 = vunpack.c.l.bf16 %v5124
        %v5141 = vunpack.c.l.bf16 %v5125
        %v5142 = vunpack.c.l.bf16 %v5126
        %v5143 = vunpack.c.l.bf16 %v5127
        %v5144 = vunpack.c.l.bf16 %v5128
        %v5145 = vunpack.c.l.bf16 %v5129
        %v5146 = vunpack.c.l.bf16 %v5130
        %v5147 = vunpack.c.l.bf16 %v5131
        %v5148 = vunpack.c.l.bf16 %v5132
        %v5149 = vunpack.c.l.bf16 %v5133
        %v5150 = vunpack.c.l.bf16 %v5134
        %v5151 = vunpack.c.l.bf16 %v5135
        %v5152 = vunpack.c.l.bf16 %v5136
        %v5153 = vmul.f32 %v5137, 1.442695
        %v5154 = vpow.pop %v5153
        %v5155 = vmul.f32 %v5138, 1.442695
        %v5156 = vpow.pop %v5155
        %v5157 = vmul.f32 %v5139, 1.442695
        %v5158 = vpow.pop %v5157
        %v5159 = vmul.f32 %v5140, 1.442695
        %v5160 = vpow.pop %v5159
        %v5161 = vmul.f32 %v5141, 1.442695
        %v5162 = vpow.pop %v5161
        %v5163 = vmul.f32 %v5142, 1.442695
        %v5164 = vpow.pop %v5163
        %v5165 = vmul.f32 %v5143, 1.442695
        %v5166 = vpow.pop %v5165
        %v5167 = vmul.f32 %v5144, 1.442695
        %v5168 = vpow.pop %v5167
        %v5169 = vmul.f32 %v5145, 1.442695
        %v5170 = vpow.pop %v5169
        %v5171 = vmul.f32 %v5146, 1.442695
        %v5172 = vpow.pop %v5171
        %v5173 = vmul.f32 %v5147, 1.442695
        %v5174 = vpow.pop %v5173
        %v5175 = vmul.f32 %v5148, 1.442695
        %v5176 = vpow.pop %v5175
        %v5177 = vmul.f32 %v5149, 1.442695
        %v5178 = vpow.pop %v5177
        %v5179 = vmul.f32 %v5150, 1.442695
        %v5180 = vpow.pop %v5179
        %v5181 = vmul.f32 %v5151, 1.442695
        %v5182 = vpow.pop %v5181
        %v5183 = vmul.f32 %v5152, 1.442695
        %v5184 = vpow.pop %v5183
        %v5185 = vpack.c.bf16 %v5154, %v5154
        %v5186 = vpack.c.bf16 %v5156, %v5156
        %v5187 = vpack.c.bf16 %v5158, %v5158
        %v5188 = vpack.c.bf16 %v5160, %v5160
        %v5189 = vpack.c.bf16 %v5162, %v5162
        %v5190 = vpack.c.bf16 %v5164, %v5164
        %v5191 = vpack.c.bf16 %v5166, %v5166
        %v5192 = vpack.c.bf16 %v5168, %v5168
        %v5193 = vpack.c.bf16 %v5170, %v5170
        %v5194 = vpack.c.bf16 %v5172, %v5172
        %v5195 = vpack.c.bf16 %v5174, %v5174
        %v5196 = vpack.c.bf16 %v5176, %v5176
        %v5197 = vpack.c.bf16 %v5178, %v5178
        %v5198 = vpack.c.bf16 %v5180, %v5180
        %v5199 = vpack.c.bf16 %v5182, %v5182
        %v5200 = vpack.c.bf16 %v5184, %v5184
        %v5201 = vunpack.c.l.bf16 %v5185
        %v5202 = vunpack.c.l.bf16 %v5186
        %v5203 = vunpack.c.l.bf16 %v5187
        %v5204 = vunpack.c.l.bf16 %v5188
        %v5205 = vunpack.c.l.bf16 %v5189
        %v5206 = vunpack.c.l.bf16 %v5190
        %v5207 = vunpack.c.l.bf16 %v5191
        %v5208 = vunpack.c.l.bf16 %v5192
        %v5209 = vunpack.c.l.bf16 %v5193
        %v5210 = vunpack.c.l.bf16 %v5194
        %v5211 = vunpack.c.l.bf16 %v5195
        %v5212 = vunpack.c.l.bf16 %v5196
        %v5213 = vunpack.c.l.bf16 %v5197
        %v5214 = vunpack.c.l.bf16 %v5198
        %v5215 = vunpack.c.l.bf16 %v5199
        %v5216 = vunpack.c.l.bf16 %v5200
        %5217 = vadd.xlane.f32.xlu0 %v5201
        %v5218 = vpop.xlane.xlu0 %5217
        %5219 = vadd.xlane.f32.xlu0 %v5202
        %v5220 = vpop.xlane.xlu0 %5219
        %5221 = vadd.xlane.f32.xlu0 %v5203
        %v5222 = vpop.xlane.xlu0 %5221
        %5223 = vadd.xlane.f32.xlu0 %v5204
        %v5224 = vpop.xlane.xlu0 %5223
        %5225 = vadd.xlane.f32.xlu0 %v5205
        %v5226 = vpop.xlane.xlu0 %5225
        %5227 = vadd.xlane.f32.xlu0 %v5206
        %v5228 = vpop.xlane.xlu0 %5227
        %5229 = vadd.xlane.f32.xlu0 %v5207
        %v5230 = vpop.xlane.xlu0 %5229
        %5231 = vadd.xlane.f32.xlu0 %v5208
        %v5232 = vpop.xlane.xlu0 %5231
        %5233 = vadd.xlane.f32.xlu0 %v5209
        %v5234 = vpop.xlane.xlu0 %5233
        %5235 = vadd.xlane.f32.xlu0 %v5210
        %v5236 = vpop.xlane.xlu0 %5235
        %5237 = vadd.xlane.f32.xlu0 %v5211
        %v5238 = vpop.xlane.xlu0 %5237
        %5239 = vadd.xlane.f32.xlu0 %v5212
        %v5240 = vpop.xlane.xlu0 %5239
        %5241 = vadd.xlane.f32.xlu0 %v5213
        %v5242 = vpop.xlane.xlu0 %5241
        %5243 = vadd.xlane.f32.xlu0 %v5214
        %v5244 = vpop.xlane.xlu0 %5243
        %5245 = vadd.xlane.f32.xlu0 %v5215
        %v5246 = vpop.xlane.xlu0 %5245
        %5247 = vadd.xlane.f32.xlu0 %v5216
        %v5248 = vpop.xlane.xlu0 %5247
        %v5249 = vrcp.pop %v5218
        %v5250 = vmul.f32 %v5218, %v5249
        %v5251 = vsub.f32 1.0, %v5250
        %v5252 = vmul.f32 %v5249, %v5251
        %v5253 = vadd.f32 %v5249, %v5252
        %vm5254 = vweird.f32 %v5218
        %vm5255 = vweird.f32 %v5249
        %vm5256 = vmor %vm5254, %vm5255
        %v5257 = vsel %vm5256, %v5249, %v5253
        %v5258 = vand.u32 2147483647, %v5218
        %vm5259 = vcmp.eq.f32.partialorder %v5258, 8.507059e+37
        %v5260 = vand.u32 %v5218, 2147483648
        %v5261 = vor.u32 1.1754944e-38, %v5260
        %v5262 = vsel %vm5259, %v5261, %v5257
        %v5263 = vmul.f32 1.0, %v5262
        %v5264 = vrcp.pop %v5220
        %v5265 = vmul.f32 %v5220, %v5264
        %v5266 = vsub.f32 1.0, %v5265
        %v5267 = vmul.f32 %v5264, %v5266
        %v5268 = vadd.f32 %v5264, %v5267
        %vm5269 = vweird.f32 %v5220
        %vm5270 = vweird.f32 %v5264
        %vm5271 = vmor %vm5269, %vm5270
        %v5272 = vsel %vm5271, %v5264, %v5268
        %v5273 = vand.u32 2147483647, %v5220
        %vm5274 = vcmp.eq.f32.partialorder %v5273, 8.507059e+37
        %v5275 = vand.u32 %v5220, 2147483648
        %v5276 = vor.u32 1.1754944e-38, %v5275
        %v5277 = vsel %vm5274, %v5276, %v5272
        %v5278 = vmul.f32 1.0, %v5277
        %v5279 = vrcp.pop %v5222
        %v5280 = vmul.f32 %v5222, %v5279
        %v5281 = vsub.f32 1.0, %v5280
        %v5282 = vmul.f32 %v5279, %v5281
        %v5283 = vadd.f32 %v5279, %v5282
        %vm5284 = vweird.f32 %v5222
        %vm5285 = vweird.f32 %v5279
        %vm5286 = vmor %vm5284, %vm5285
        %v5287 = vsel %vm5286, %v5279, %v5283
        %v5288 = vand.u32 2147483647, %v5222
        %vm5289 = vcmp.eq.f32.partialorder %v5288, 8.507059e+37
        %v5290 = vand.u32 %v5222, 2147483648
        %v5291 = vor.u32 1.1754944e-38, %v5290
        %v5292 = vsel %vm5289, %v5291, %v5287
        %v5293 = vmul.f32 1.0, %v5292
        %v5294 = vrcp.pop %v5224
        %v5295 = vmul.f32 %v5224, %v5294
        %v5296 = vsub.f32 1.0, %v5295
        %v5297 = vmul.f32 %v5294, %v5296
        %v5298 = vadd.f32 %v5294, %v5297
        %vm5299 = vweird.f32 %v5224
        %vm5300 = vweird.f32 %v5294
        %vm5301 = vmor %vm5299, %vm5300
        %v5302 = vsel %vm5301, %v5294, %v5298
        %v5303 = vand.u32 2147483647, %v5224
        %vm5304 = vcmp.eq.f32.partialorder %v5303, 8.507059e+37
        %v5305 = vand.u32 %v5224, 2147483648
        %v5306 = vor.u32 1.1754944e-38, %v5305
        %v5307 = vsel %vm5304, %v5306, %v5302
        %v5308 = vmul.f32 1.0, %v5307
        %v5309 = vrcp.pop %v5226
        %v5310 = vmul.f32 %v5226, %v5309
        %v5311 = vsub.f32 1.0, %v5310
        %v5312 = vmul.f32 %v5309, %v5311
        %v5313 = vadd.f32 %v5309, %v5312
        %vm5314 = vweird.f32 %v5226
        %vm5315 = vweird.f32 %v5309
        %vm5316 = vmor %vm5314, %vm5315
        %v5317 = vsel %vm5316, %v5309, %v5313
        %v5318 = vand.u32 2147483647, %v5226
        %vm5319 = vcmp.eq.f32.partialorder %v5318, 8.507059e+37
        %v5320 = vand.u32 %v5226, 2147483648
        %v5321 = vor.u32 1.1754944e-38, %v5320
        %v5322 = vsel %vm5319, %v5321, %v5317
        %v5323 = vmul.f32 1.0, %v5322
        %v5324 = vrcp.pop %v5228
        %v5325 = vmul.f32 %v5228, %v5324
        %v5326 = vsub.f32 1.0, %v5325
        %v5327 = vmul.f32 %v5324, %v5326
        %v5328 = vadd.f32 %v5324, %v5327
        %vm5329 = vweird.f32 %v5228
        %vm5330 = vweird.f32 %v5324
        %vm5331 = vmor %vm5329, %vm5330
        %v5332 = vsel %vm5331, %v5324, %v5328
        %v5333 = vand.u32 2147483647, %v5228
        %vm5334 = vcmp.eq.f32.partialorder %v5333, 8.507059e+37
        %v5335 = vand.u32 %v5228, 2147483648
        %v5336 = vor.u32 1.1754944e-38, %v5335
        %v5337 = vsel %vm5334, %v5336, %v5332
        %v5338 = vmul.f32 1.0, %v5337
        %v5339 = vrcp.pop %v5230
        %v5340 = vmul.f32 %v5230, %v5339
        %v5341 = vsub.f32 1.0, %v5340
        %v5342 = vmul.f32 %v5339, %v5341
        %v5343 = vadd.f32 %v5339, %v5342
        %vm5344 = vweird.f32 %v5230
        %vm5345 = vweird.f32 %v5339
        %vm5346 = vmor %vm5344, %vm5345
        %v5347 = vsel %vm5346, %v5339, %v5343
        %v5348 = vand.u32 2147483647, %v5230
        %vm5349 = vcmp.eq.f32.partialorder %v5348, 8.507059e+37
        %v5350 = vand.u32 %v5230, 2147483648
        %v5351 = vor.u32 1.1754944e-38, %v5350
        %v5352 = vsel %vm5349, %v5351, %v5347
        %v5353 = vmul.f32 1.0, %v5352
        %v5354 = vrcp.pop %v5232
        %v5355 = vmul.f32 %v5232, %v5354
        %v5356 = vsub.f32 1.0, %v5355
        %v5357 = vmul.f32 %v5354, %v5356
        %v5358 = vadd.f32 %v5354, %v5357
        %vm5359 = vweird.f32 %v5232
        %vm5360 = vweird.f32 %v5354
        %vm5361 = vmor %vm5359, %vm5360
        %v5362 = vsel %vm5361, %v5354, %v5358
        %v5363 = vand.u32 2147483647, %v5232
        %vm5364 = vcmp.eq.f32.partialorder %v5363, 8.507059e+37
        %v5365 = vand.u32 %v5232, 2147483648
        %v5366 = vor.u32 1.1754944e-38, %v5365
        %v5367 = vsel %vm5364, %v5366, %v5362
        %v5368 = vmul.f32 1.0, %v5367
        %v5369 = vrcp.pop %v5234
        %v5370 = vmul.f32 %v5234, %v5369
        %v5371 = vsub.f32 1.0, %v5370
        %v5372 = vmul.f32 %v5369, %v5371
        %v5373 = vadd.f32 %v5369, %v5372
        %vm5374 = vweird.f32 %v5234
        %vm5375 = vweird.f32 %v5369
        %vm5376 = vmor %vm5374, %vm5375
        %v5377 = vsel %vm5376, %v5369, %v5373
        %v5378 = vand.u32 2147483647, %v5234
        %vm5379 = vcmp.eq.f32.partialorder %v5378, 8.507059e+37
        %v5380 = vand.u32 %v5234, 2147483648
        %v5381 = vor.u32 1.1754944e-38, %v5380
        %v5382 = vsel %vm5379, %v5381, %v5377
        %v5383 = vmul.f32 1.0, %v5382
        %v5384 = vrcp.pop %v5236
        %v5385 = vmul.f32 %v5236, %v5384
        %v5386 = vsub.f32 1.0, %v5385
        %v5387 = vmul.f32 %v5384, %v5386
        %v5388 = vadd.f32 %v5384, %v5387
        %vm5389 = vweird.f32 %v5236
        %vm5390 = vweird.f32 %v5384
        %vm5391 = vmor %vm5389, %vm5390
        %v5392 = vsel %vm5391, %v5384, %v5388
        %v5393 = vand.u32 2147483647, %v5236
        %vm5394 = vcmp.eq.f32.partialorder %v5393, 8.507059e+37
        %v5395 = vand.u32 %v5236, 2147483648
        %v5396 = vor.u32 1.1754944e-38, %v5395
        %v5397 = vsel %vm5394, %v5396, %v5392
        %v5398 = vmul.f32 1.0, %v5397
        %v5399 = vrcp.pop %v5238
        %v5400 = vmul.f32 %v5238, %v5399
        %v5401 = vsub.f32 1.0, %v5400
        %v5402 = vmul.f32 %v5399, %v5401
        %v5403 = vadd.f32 %v5399, %v5402
        %vm5404 = vweird.f32 %v5238
        %vm5405 = vweird.f32 %v5399
        %vm5406 = vmor %vm5404, %vm5405
        %v5407 = vsel %vm5406, %v5399, %v5403
        %v5408 = vand.u32 2147483647, %v5238
        %vm5409 = vcmp.eq.f32.partialorder %v5408, 8.507059e+37
        %v5410 = vand.u32 %v5238, 2147483648
        %v5411 = vor.u32 1.1754944e-38, %v5410
        %v5412 = vsel %vm5409, %v5411, %v5407
        %v5413 = vmul.f32 1.0, %v5412
        %v5414 = vrcp.pop %v5240
        %v5415 = vmul.f32 %v5240, %v5414
        %v5416 = vsub.f32 1.0, %v5415
        %v5417 = vmul.f32 %v5414, %v5416
        %v5418 = vadd.f32 %v5414, %v5417
        %vm5419 = vweird.f32 %v5240
        %vm5420 = vweird.f32 %v5414
        %vm5421 = vmor %vm5419, %vm5420
        %v5422 = vsel %vm5421, %v5414, %v5418
        %v5423 = vand.u32 2147483647, %v5240
        %vm5424 = vcmp.eq.f32.partialorder %v5423, 8.507059e+37
        %v5425 = vand.u32 %v5240, 2147483648
        %v5426 = vor.u32 1.1754944e-38, %v5425
        %v5427 = vsel %vm5424, %v5426, %v5422
        %v5428 = vmul.f32 1.0, %v5427
        %v5429 = vrcp.pop %v5242
        %v5430 = vmul.f32 %v5242, %v5429
        %v5431 = vsub.f32 1.0, %v5430
        %v5432 = vmul.f32 %v5429, %v5431
        %v5433 = vadd.f32 %v5429, %v5432
        %vm5434 = vweird.f32 %v5242
        %vm5435 = vweird.f32 %v5429
        %vm5436 = vmor %vm5434, %vm5435
        %v5437 = vsel %vm5436, %v5429, %v5433
        %v5438 = vand.u32 2147483647, %v5242
        %vm5439 = vcmp.eq.f32.partialorder %v5438, 8.507059e+37
        %v5440 = vand.u32 %v5242, 2147483648
        %v5441 = vor.u32 1.1754944e-38, %v5440
        %v5442 = vsel %vm5439, %v5441, %v5437
        %v5443 = vmul.f32 1.0, %v5442
        %v5444 = vrcp.pop %v5244
        %v5445 = vmul.f32 %v5244, %v5444
        %v5446 = vsub.f32 1.0, %v5445
        %v5447 = vmul.f32 %v5444, %v5446
        %v5448 = vadd.f32 %v5444, %v5447
        %vm5449 = vweird.f32 %v5244
        %vm5450 = vweird.f32 %v5444
        %vm5451 = vmor %vm5449, %vm5450
        %v5452 = vsel %vm5451, %v5444, %v5448
        %v5453 = vand.u32 2147483647, %v5244
        %vm5454 = vcmp.eq.f32.partialorder %v5453, 8.507059e+37
        %v5455 = vand.u32 %v5244, 2147483648
        %v5456 = vor.u32 1.1754944e-38, %v5455
        %v5457 = vsel %vm5454, %v5456, %v5452
        %v5458 = vmul.f32 1.0, %v5457
        %v5459 = vrcp.pop %v5246
        %v5460 = vmul.f32 %v5246, %v5459
        %v5461 = vsub.f32 1.0, %v5460
        %v5462 = vmul.f32 %v5459, %v5461
        %v5463 = vadd.f32 %v5459, %v5462
        %vm5464 = vweird.f32 %v5246
        %vm5465 = vweird.f32 %v5459
        %vm5466 = vmor %vm5464, %vm5465
        %v5467 = vsel %vm5466, %v5459, %v5463
        %v5468 = vand.u32 2147483647, %v5246
        %vm5469 = vcmp.eq.f32.partialorder %v5468, 8.507059e+37
        %v5470 = vand.u32 %v5246, 2147483648
        %v5471 = vor.u32 1.1754944e-38, %v5470
        %v5472 = vsel %vm5469, %v5471, %v5467
        %v5473 = vmul.f32 1.0, %v5472
        %v5474 = vrcp.pop %v5248
        %v5475 = vmul.f32 %v5248, %v5474
        %v5476 = vsub.f32 1.0, %v5475
        %v5477 = vmul.f32 %v5474, %v5476
        %v5478 = vadd.f32 %v5474, %v5477
        %vm5479 = vweird.f32 %v5248
        %vm5480 = vweird.f32 %v5474
        %vm5481 = vmor %vm5479, %vm5480
        %v5482 = vsel %vm5481, %v5474, %v5478
        %v5483 = vand.u32 2147483647, %v5248
        %vm5484 = vcmp.eq.f32.partialorder %v5483, 8.507059e+37
        %v5485 = vand.u32 %v5248, 2147483648
        %v5486 = vor.u32 1.1754944e-38, %v5485
        %v5487 = vsel %vm5484, %v5486, %v5482
        %v5488 = vmul.f32 1.0, %v5487
        %v5489 = vmul.f32 %v5201, %v5263
        %v5490 = vmul.f32 %v5202, %v5278
        %v5491 = vmul.f32 %v5203, %v5293
        %v5492 = vmul.f32 %v5204, %v5308
        %v5493 = vmul.f32 %v5205, %v5323
        %v5494 = vmul.f32 %v5206, %v5338
        %v5495 = vmul.f32 %v5207, %v5353
        %v5496 = vmul.f32 %v5208, %v5368
        %v5497 = vmul.f32 %v5209, %v5383
        %v5498 = vmul.f32 %v5210, %v5398
        %v5499 = vmul.f32 %v5211, %v5413
        %v5500 = vmul.f32 %v5212, %v5428
        %v5501 = vmul.f32 %v5213, %v5443
        %v5502 = vmul.f32 %v5214, %v5458
        %v5503 = vmul.f32 %v5215, %v5473
        %v5504 = vmul.f32 %v5216, %v5488
        %v5505 = vadd.f32 %v5057, %v5489
        %v5506 = vadd.f32 %v5058, %v5490
        %v5507 = vadd.f32 %v5059, %v5491
        %v5508 = vadd.f32 %v5060, %v5492
        %v5509 = vadd.f32 %v5061, %v5493
        %v5510 = vadd.f32 %v5062, %v5494
        %v5511 = vadd.f32 %v5063, %v5495
        %v5512 = vadd.f32 %v5064, %v5496
        %v5513 = vadd.f32 %v5065, %v5497
        %v5514 = vadd.f32 %v5066, %v5498
        %v5515 = vadd.f32 %v5067, %v5499
        %v5516 = vadd.f32 %v5068, %v5500
        %v5517 = vadd.f32 %v5069, %v5501
        %v5518 = vadd.f32 %v5070, %v5502
        %v5519 = vadd.f32 %v5071, %v5503
        %v5520 = vadd.f32 %v5072, %v5504
        %5521 = vmax.xlane.f32.xlu0 %v4488
        %v5522 = vpop.xlane.xlu0 %5521
        %5523 = vmax.xlane.f32.xlu0 %v4490
        %v5524 = vpop.xlane.xlu0 %5523
        %5525 = vmax.xlane.f32.xlu0 %v4493
        %v5526 = vpop.xlane.xlu0 %5525
        %5527 = vmax.xlane.f32.xlu0 %v4495
        %v5528 = vpop.xlane.xlu0 %5527
        %5529 = vmax.xlane.f32.xlu0 %v4498
        %v5530 = vpop.xlane.xlu0 %5529
        %5531 = vmax.xlane.f32.xlu0 %v4500
        %v5532 = vpop.xlane.xlu0 %5531
        %5533 = vmax.xlane.f32.xlu0 %v4503
        %v5534 = vpop.xlane.xlu0 %5533
        %5535 = vmax.xlane.f32.xlu0 %v4505
        %v5536 = vpop.xlane.xlu0 %5535
        %5537 = vmax.xlane.f32.xlu0 %v4508
        %v5538 = vpop.xlane.xlu0 %5537
        %5539 = vmax.xlane.f32.xlu0 %v4510
        %v5540 = vpop.xlane.xlu0 %5539
        %5541 = vmax.xlane.f32.xlu0 %v4513
        %v5542 = vpop.xlane.xlu0 %5541
        %5543 = vmax.xlane.f32.xlu0 %v4515
        %v5544 = vpop.xlane.xlu0 %5543
        %5545 = vmax.xlane.f32.xlu0 %v4518
        %v5546 = vpop.xlane.xlu0 %5545
        %5547 = vmax.xlane.f32.xlu0 %v4520
        %v5548 = vpop.xlane.xlu0 %5547
        %5549 = vmax.xlane.f32.xlu0 %v4523
        %v5550 = vpop.xlane.xlu0 %5549
        %5551 = vmax.xlane.f32.xlu0 %v4525
        %v5552 = vpop.xlane.xlu0 %5551
        %v5553 = vsub.f32 %v4488, %v5522
        %v5554 = vsub.f32 %v4490, %v5524
        %v5555 = vsub.f32 %v4493, %v5526
        %v5556 = vsub.f32 %v4495, %v5528
        %v5557 = vsub.f32 %v4498, %v5530
        %v5558 = vsub.f32 %v4500, %v5532
        %v5559 = vsub.f32 %v4503, %v5534
        %v5560 = vsub.f32 %v4505, %v5536
        %v5561 = vsub.f32 %v4508, %v5538
        %v5562 = vsub.f32 %v4510, %v5540
        %v5563 = vsub.f32 %v4513, %v5542
        %v5564 = vsub.f32 %v4515, %v5544
        %v5565 = vsub.f32 %v4518, %v5546
        %v5566 = vsub.f32 %v4520, %v5548
        %v5567 = vsub.f32 %v4523, %v5550
        %v5568 = vsub.f32 %v4525, %v5552
        %v5569 = vpack.c.bf16 %v5553, %v5553
        %v5570 = vpack.c.bf16 %v5554, %v5554
        %v5571 = vpack.c.bf16 %v5555, %v5555
        %v5572 = vpack.c.bf16 %v5556, %v5556
        %v5573 = vpack.c.bf16 %v5557, %v5557
        %v5574 = vpack.c.bf16 %v5558, %v5558
        %v5575 = vpack.c.bf16 %v5559, %v5559
        %v5576 = vpack.c.bf16 %v5560, %v5560
        %v5577 = vpack.c.bf16 %v5561, %v5561
        %v5578 = vpack.c.bf16 %v5562, %v5562
        %v5579 = vpack.c.bf16 %v5563, %v5563
        %v5580 = vpack.c.bf16 %v5564, %v5564
        %v5581 = vpack.c.bf16 %v5565, %v5565
        %v5582 = vpack.c.bf16 %v5566, %v5566
        %v5583 = vpack.c.bf16 %v5567, %v5567
        %v5584 = vpack.c.bf16 %v5568, %v5568
        %v5585 = vunpack.c.l.bf16 %v5569
        %v5586 = vunpack.c.l.bf16 %v5570
        %v5587 = vunpack.c.l.bf16 %v5571
        %v5588 = vunpack.c.l.bf16 %v5572
        %v5589 = vunpack.c.l.bf16 %v5573
        %v5590 = vunpack.c.l.bf16 %v5574
        %v5591 = vunpack.c.l.bf16 %v5575
        %v5592 = vunpack.c.l.bf16 %v5576
        %v5593 = vunpack.c.l.bf16 %v5577
        %v5594 = vunpack.c.l.bf16 %v5578
        %v5595 = vunpack.c.l.bf16 %v5579
        %v5596 = vunpack.c.l.bf16 %v5580
        %v5597 = vunpack.c.l.bf16 %v5581
        %v5598 = vunpack.c.l.bf16 %v5582
        %v5599 = vunpack.c.l.bf16 %v5583
        %v5600 = vunpack.c.l.bf16 %v5584
        %v5601 = vmul.f32 %v5585, 1.442695
        %v5602 = vpow.pop %v5601
        %v5603 = vmul.f32 %v5586, 1.442695
        %v5604 = vpow.pop %v5603
        %v5605 = vmul.f32 %v5587, 1.442695
        %v5606 = vpow.pop %v5605
        %v5607 = vmul.f32 %v5588, 1.442695
        %v5608 = vpow.pop %v5607
        %v5609 = vmul.f32 %v5589, 1.442695
        %v5610 = vpow.pop %v5609
        %v5611 = vmul.f32 %v5590, 1.442695
        %v5612 = vpow.pop %v5611
        %v5613 = vmul.f32 %v5591, 1.442695
        %v5614 = vpow.pop %v5613
        %v5615 = vmul.f32 %v5592, 1.442695
        %v5616 = vpow.pop %v5615
        %v5617 = vmul.f32 %v5593, 1.442695
        %v5618 = vpow.pop %v5617
        %v5619 = vmul.f32 %v5594, 1.442695
        %v5620 = vpow.pop %v5619
        %v5621 = vmul.f32 %v5595, 1.442695
        %v5622 = vpow.pop %v5621
        %v5623 = vmul.f32 %v5596, 1.442695
        %v5624 = vpow.pop %v5623
        %v5625 = vmul.f32 %v5597, 1.442695
        %v5626 = vpow.pop %v5625
        %v5627 = vmul.f32 %v5598, 1.442695
        %v5628 = vpow.pop %v5627
        %v5629 = vmul.f32 %v5599, 1.442695
        %v5630 = vpow.pop %v5629
        %v5631 = vmul.f32 %v5600, 1.442695
        %v5632 = vpow.pop %v5631
        %v5633 = vpack.c.bf16 %v5602, %v5602
        %v5634 = vpack.c.bf16 %v5604, %v5604
        %v5635 = vpack.c.bf16 %v5606, %v5606
        %v5636 = vpack.c.bf16 %v5608, %v5608
        %v5637 = vpack.c.bf16 %v5610, %v5610
        %v5638 = vpack.c.bf16 %v5612, %v5612
        %v5639 = vpack.c.bf16 %v5614, %v5614
        %v5640 = vpack.c.bf16 %v5616, %v5616
        %v5641 = vpack.c.bf16 %v5618, %v5618
        %v5642 = vpack.c.bf16 %v5620, %v5620
        %v5643 = vpack.c.bf16 %v5622, %v5622
        %v5644 = vpack.c.bf16 %v5624, %v5624
        %v5645 = vpack.c.bf16 %v5626, %v5626
        %v5646 = vpack.c.bf16 %v5628, %v5628
        %v5647 = vpack.c.bf16 %v5630, %v5630
        %v5648 = vpack.c.bf16 %v5632, %v5632
        %v5649 = vunpack.c.l.bf16 %v5633
        %v5650 = vunpack.c.l.bf16 %v5634
        %v5651 = vunpack.c.l.bf16 %v5635
        %v5652 = vunpack.c.l.bf16 %v5636
        %v5653 = vunpack.c.l.bf16 %v5637
        %v5654 = vunpack.c.l.bf16 %v5638
        %v5655 = vunpack.c.l.bf16 %v5639
        %v5656 = vunpack.c.l.bf16 %v5640
        %v5657 = vunpack.c.l.bf16 %v5641
        %v5658 = vunpack.c.l.bf16 %v5642
        %v5659 = vunpack.c.l.bf16 %v5643
        %v5660 = vunpack.c.l.bf16 %v5644
        %v5661 = vunpack.c.l.bf16 %v5645
        %v5662 = vunpack.c.l.bf16 %v5646
        %v5663 = vunpack.c.l.bf16 %v5647
        %v5664 = vunpack.c.l.bf16 %v5648
        %5665 = vadd.xlane.f32.xlu0 %v5649
        %v5666 = vpop.xlane.xlu0 %5665
        %5667 = vadd.xlane.f32.xlu0 %v5650
        %v5668 = vpop.xlane.xlu0 %5667
        %5669 = vadd.xlane.f32.xlu0 %v5651
        %v5670 = vpop.xlane.xlu0 %5669
        %5671 = vadd.xlane.f32.xlu0 %v5652
        %v5672 = vpop.xlane.xlu0 %5671
        %5673 = vadd.xlane.f32.xlu0 %v5653
        %v5674 = vpop.xlane.xlu0 %5673
        %5675 = vadd.xlane.f32.xlu0 %v5654
        %v5676 = vpop.xlane.xlu0 %5675
        %5677 = vadd.xlane.f32.xlu0 %v5655
        %v5678 = vpop.xlane.xlu0 %5677
        %5679 = vadd.xlane.f32.xlu0 %v5656
        %v5680 = vpop.xlane.xlu0 %5679
        %5681 = vadd.xlane.f32.xlu0 %v5657
        %v5682 = vpop.xlane.xlu0 %5681
        %5683 = vadd.xlane.f32.xlu0 %v5658
        %v5684 = vpop.xlane.xlu0 %5683
        %5685 = vadd.xlane.f32.xlu0 %v5659
        %v5686 = vpop.xlane.xlu0 %5685
        %5687 = vadd.xlane.f32.xlu0 %v5660
        %v5688 = vpop.xlane.xlu0 %5687
        %5689 = vadd.xlane.f32.xlu0 %v5661
        %v5690 = vpop.xlane.xlu0 %5689
        %5691 = vadd.xlane.f32.xlu0 %v5662
        %v5692 = vpop.xlane.xlu0 %5691
        %5693 = vadd.xlane.f32.xlu0 %v5663
        %v5694 = vpop.xlane.xlu0 %5693
        %5695 = vadd.xlane.f32.xlu0 %v5664
        %v5696 = vpop.xlane.xlu0 %5695
        %v5697 = vrcp.pop %v5666
        %v5698 = vmul.f32 %v5666, %v5697
        %v5699 = vsub.f32 1.0, %v5698
        %v5700 = vmul.f32 %v5697, %v5699
        %v5701 = vadd.f32 %v5697, %v5700
        %vm5702 = vweird.f32 %v5666
        %vm5703 = vweird.f32 %v5697
        %vm5704 = vmor %vm5702, %vm5703
        %v5705 = vsel %vm5704, %v5697, %v5701
        %v5706 = vand.u32 2147483647, %v5666
        %vm5707 = vcmp.eq.f32.partialorder %v5706, 8.507059e+37
        %v5708 = vand.u32 %v5666, 2147483648
        %v5709 = vor.u32 1.1754944e-38, %v5708
        %v5710 = vsel %vm5707, %v5709, %v5705
        %v5711 = vmul.f32 1.0, %v5710
        %v5712 = vrcp.pop %v5668
        %v5713 = vmul.f32 %v5668, %v5712
        %v5714 = vsub.f32 1.0, %v5713
        %v5715 = vmul.f32 %v5712, %v5714
        %v5716 = vadd.f32 %v5712, %v5715
        %vm5717 = vweird.f32 %v5668
        %vm5718 = vweird.f32 %v5712
        %vm5719 = vmor %vm5717, %vm5718
        %v5720 = vsel %vm5719, %v5712, %v5716
        %v5721 = vand.u32 2147483647, %v5668
        %vm5722 = vcmp.eq.f32.partialorder %v5721, 8.507059e+37
        %v5723 = vand.u32 %v5668, 2147483648
        %v5724 = vor.u32 1.1754944e-38, %v5723
        %v5725 = vsel %vm5722, %v5724, %v5720
        %v5726 = vmul.f32 1.0, %v5725
        %v5727 = vrcp.pop %v5670
        %v5728 = vmul.f32 %v5670, %v5727
        %v5729 = vsub.f32 1.0, %v5728
        %v5730 = vmul.f32 %v5727, %v5729
        %v5731 = vadd.f32 %v5727, %v5730
        %vm5732 = vweird.f32 %v5670
        %vm5733 = vweird.f32 %v5727
        %vm5734 = vmor %vm5732, %vm5733
        %v5735 = vsel %vm5734, %v5727, %v5731
        %v5736 = vand.u32 2147483647, %v5670
        %vm5737 = vcmp.eq.f32.partialorder %v5736, 8.507059e+37
        %v5738 = vand.u32 %v5670, 2147483648
        %v5739 = vor.u32 1.1754944e-38, %v5738
        %v5740 = vsel %vm5737, %v5739, %v5735
        %v5741 = vmul.f32 1.0, %v5740
        %v5742 = vrcp.pop %v5672
        %v5743 = vmul.f32 %v5672, %v5742
        %v5744 = vsub.f32 1.0, %v5743
        %v5745 = vmul.f32 %v5742, %v5744
        %v5746 = vadd.f32 %v5742, %v5745
        %vm5747 = vweird.f32 %v5672
        %vm5748 = vweird.f32 %v5742
        %vm5749 = vmor %vm5747, %vm5748
        %v5750 = vsel %vm5749, %v5742, %v5746
        %v5751 = vand.u32 2147483647, %v5672
        %vm5752 = vcmp.eq.f32.partialorder %v5751, 8.507059e+37
        %v5753 = vand.u32 %v5672, 2147483648
        %v5754 = vor.u32 1.1754944e-38, %v5753
        %v5755 = vsel %vm5752, %v5754, %v5750
        %v5756 = vmul.f32 1.0, %v5755
        %v5757 = vrcp.pop %v5674
        %v5758 = vmul.f32 %v5674, %v5757
        %v5759 = vsub.f32 1.0, %v5758
        %v5760 = vmul.f32 %v5757, %v5759
        %v5761 = vadd.f32 %v5757, %v5760
        %vm5762 = vweird.f32 %v5674
        %vm5763 = vweird.f32 %v5757
        %vm5764 = vmor %vm5762, %vm5763
        %v5765 = vsel %vm5764, %v5757, %v5761
        %v5766 = vand.u32 2147483647, %v5674
        %vm5767 = vcmp.eq.f32.partialorder %v5766, 8.507059e+37
        %v5768 = vand.u32 %v5674, 2147483648
        %v5769 = vor.u32 1.1754944e-38, %v5768
        %v5770 = vsel %vm5767, %v5769, %v5765
        %v5771 = vmul.f32 1.0, %v5770
        %v5772 = vrcp.pop %v5676
        %v5773 = vmul.f32 %v5676, %v5772
        %v5774 = vsub.f32 1.0, %v5773
        %v5775 = vmul.f32 %v5772, %v5774
        %v5776 = vadd.f32 %v5772, %v5775
        %vm5777 = vweird.f32 %v5676
        %vm5778 = vweird.f32 %v5772
        %vm5779 = vmor %vm5777, %vm5778
        %v5780 = vsel %vm5779, %v5772, %v5776
        %v5781 = vand.u32 2147483647, %v5676
        %vm5782 = vcmp.eq.f32.partialorder %v5781, 8.507059e+37
        %v5783 = vand.u32 %v5676, 2147483648
        %v5784 = vor.u32 1.1754944e-38, %v5783
        %v5785 = vsel %vm5782, %v5784, %v5780
        %v5786 = vmul.f32 1.0, %v5785
        %v5787 = vrcp.pop %v5678
        %v5788 = vmul.f32 %v5678, %v5787
        %v5789 = vsub.f32 1.0, %v5788
        %v5790 = vmul.f32 %v5787, %v5789
        %v5791 = vadd.f32 %v5787, %v5790
        %vm5792 = vweird.f32 %v5678
        %vm5793 = vweird.f32 %v5787
        %vm5794 = vmor %vm5792, %vm5793
        %v5795 = vsel %vm5794, %v5787, %v5791
        %v5796 = vand.u32 2147483647, %v5678
        %vm5797 = vcmp.eq.f32.partialorder %v5796, 8.507059e+37
        %v5798 = vand.u32 %v5678, 2147483648
        %v5799 = vor.u32 1.1754944e-38, %v5798
        %v5800 = vsel %vm5797, %v5799, %v5795
        %v5801 = vmul.f32 1.0, %v5800
        %v5802 = vrcp.pop %v5680
        %v5803 = vmul.f32 %v5680, %v5802
        %v5804 = vsub.f32 1.0, %v5803
        %v5805 = vmul.f32 %v5802, %v5804
        %v5806 = vadd.f32 %v5802, %v5805
        %vm5807 = vweird.f32 %v5680
        %vm5808 = vweird.f32 %v5802
        %vm5809 = vmor %vm5807, %vm5808
        %v5810 = vsel %vm5809, %v5802, %v5806
        %v5811 = vand.u32 2147483647, %v5680
        %vm5812 = vcmp.eq.f32.partialorder %v5811, 8.507059e+37
        %v5813 = vand.u32 %v5680, 2147483648
        %v5814 = vor.u32 1.1754944e-38, %v5813
        %v5815 = vsel %vm5812, %v5814, %v5810
        %v5816 = vmul.f32 1.0, %v5815
        %v5817 = vrcp.pop %v5682
        %v5818 = vmul.f32 %v5682, %v5817
        %v5819 = vsub.f32 1.0, %v5818
        %v5820 = vmul.f32 %v5817, %v5819
        %v5821 = vadd.f32 %v5817, %v5820
        %vm5822 = vweird.f32 %v5682
        %vm5823 = vweird.f32 %v5817
        %vm5824 = vmor %vm5822, %vm5823
        %v5825 = vsel %vm5824, %v5817, %v5821
        %v5826 = vand.u32 2147483647, %v5682
        %vm5827 = vcmp.eq.f32.partialorder %v5826, 8.507059e+37
        %v5828 = vand.u32 %v5682, 2147483648
        %v5829 = vor.u32 1.1754944e-38, %v5828
        %v5830 = vsel %vm5827, %v5829, %v5825
        %v5831 = vmul.f32 1.0, %v5830
        %v5832 = vrcp.pop %v5684
        %v5833 = vmul.f32 %v5684, %v5832
        %v5834 = vsub.f32 1.0, %v5833
        %v5835 = vmul.f32 %v5832, %v5834
        %v5836 = vadd.f32 %v5832, %v5835
        %vm5837 = vweird.f32 %v5684
        %vm5838 = vweird.f32 %v5832
        %vm5839 = vmor %vm5837, %vm5838
        %v5840 = vsel %vm5839, %v5832, %v5836
        %v5841 = vand.u32 2147483647, %v5684
        %vm5842 = vcmp.eq.f32.partialorder %v5841, 8.507059e+37
        %v5843 = vand.u32 %v5684, 2147483648
        %v5844 = vor.u32 1.1754944e-38, %v5843
        %v5845 = vsel %vm5842, %v5844, %v5840
        %v5846 = vmul.f32 1.0, %v5845
        %v5847 = vrcp.pop %v5686
        %v5848 = vmul.f32 %v5686, %v5847
        %v5849 = vsub.f32 1.0, %v5848
        %v5850 = vmul.f32 %v5847, %v5849
        %v5851 = vadd.f32 %v5847, %v5850
        %vm5852 = vweird.f32 %v5686
        %vm5853 = vweird.f32 %v5847
        %vm5854 = vmor %vm5852, %vm5853
        %v5855 = vsel %vm5854, %v5847, %v5851
        %v5856 = vand.u32 2147483647, %v5686
        %vm5857 = vcmp.eq.f32.partialorder %v5856, 8.507059e+37
        %v5858 = vand.u32 %v5686, 2147483648
        %v5859 = vor.u32 1.1754944e-38, %v5858
        %v5860 = vsel %vm5857, %v5859, %v5855
        %v5861 = vmul.f32 1.0, %v5860
        %v5862 = vrcp.pop %v5688
        %v5863 = vmul.f32 %v5688, %v5862
        %v5864 = vsub.f32 1.0, %v5863
        %v5865 = vmul.f32 %v5862, %v5864
        %v5866 = vadd.f32 %v5862, %v5865
        %vm5867 = vweird.f32 %v5688
        %vm5868 = vweird.f32 %v5862
        %vm5869 = vmor %vm5867, %vm5868
        %v5870 = vsel %vm5869, %v5862, %v5866
        %v5871 = vand.u32 2147483647, %v5688
        %vm5872 = vcmp.eq.f32.partialorder %v5871, 8.507059e+37
        %v5873 = vand.u32 %v5688, 2147483648
        %v5874 = vor.u32 1.1754944e-38, %v5873
        %v5875 = vsel %vm5872, %v5874, %v5870
        %v5876 = vmul.f32 1.0, %v5875
        %v5877 = vrcp.pop %v5690
        %v5878 = vmul.f32 %v5690, %v5877
        %v5879 = vsub.f32 1.0, %v5878
        %v5880 = vmul.f32 %v5877, %v5879
        %v5881 = vadd.f32 %v5877, %v5880
        %vm5882 = vweird.f32 %v5690
        %vm5883 = vweird.f32 %v5877
        %vm5884 = vmor %vm5882, %vm5883
        %v5885 = vsel %vm5884, %v5877, %v5881
        %v5886 = vand.u32 2147483647, %v5690
        %vm5887 = vcmp.eq.f32.partialorder %v5886, 8.507059e+37
        %v5888 = vand.u32 %v5690, 2147483648
        %v5889 = vor.u32 1.1754944e-38, %v5888
        %v5890 = vsel %vm5887, %v5889, %v5885
        %v5891 = vmul.f32 1.0, %v5890
        %v5892 = vrcp.pop %v5692
        %v5893 = vmul.f32 %v5692, %v5892
        %v5894 = vsub.f32 1.0, %v5893
        %v5895 = vmul.f32 %v5892, %v5894
        %v5896 = vadd.f32 %v5892, %v5895
        %vm5897 = vweird.f32 %v5692
        %vm5898 = vweird.f32 %v5892
        %vm5899 = vmor %vm5897, %vm5898
        %v5900 = vsel %vm5899, %v5892, %v5896
        %v5901 = vand.u32 2147483647, %v5692
        %vm5902 = vcmp.eq.f32.partialorder %v5901, 8.507059e+37
        %v5903 = vand.u32 %v5692, 2147483648
        %v5904 = vor.u32 1.1754944e-38, %v5903
        %v5905 = vsel %vm5902, %v5904, %v5900
        %v5906 = vmul.f32 1.0, %v5905
        %v5907 = vrcp.pop %v5694
        %v5908 = vmul.f32 %v5694, %v5907
        %v5909 = vsub.f32 1.0, %v5908
        %v5910 = vmul.f32 %v5907, %v5909
        %v5911 = vadd.f32 %v5907, %v5910
        %vm5912 = vweird.f32 %v5694
        %vm5913 = vweird.f32 %v5907
        %vm5914 = vmor %vm5912, %vm5913
        %v5915 = vsel %vm5914, %v5907, %v5911
        %v5916 = vand.u32 2147483647, %v5694
        %vm5917 = vcmp.eq.f32.partialorder %v5916, 8.507059e+37
        %v5918 = vand.u32 %v5694, 2147483648
        %v5919 = vor.u32 1.1754944e-38, %v5918
        %v5920 = vsel %vm5917, %v5919, %v5915
        %v5921 = vmul.f32 1.0, %v5920
        %v5922 = vrcp.pop %v5696
        %v5923 = vmul.f32 %v5696, %v5922
        %v5924 = vsub.f32 1.0, %v5923
        %v5925 = vmul.f32 %v5922, %v5924
        %v5926 = vadd.f32 %v5922, %v5925
        %vm5927 = vweird.f32 %v5696
        %vm5928 = vweird.f32 %v5922
        %vm5929 = vmor %vm5927, %vm5928
        %v5930 = vsel %vm5929, %v5922, %v5926
        %v5931 = vand.u32 2147483647, %v5696
        %vm5932 = vcmp.eq.f32.partialorder %v5931, 8.507059e+37
        %v5933 = vand.u32 %v5696, 2147483648
        %v5934 = vor.u32 1.1754944e-38, %v5933
        %v5935 = vsel %vm5932, %v5934, %v5930
        %v5936 = vmul.f32 1.0, %v5935
        %v5937 = vmul.f32 %v5649, %v5711
        %v5938 = vmul.f32 %v5650, %v5726
        %v5939 = vmul.f32 %v5651, %v5741
        %v5940 = vmul.f32 %v5652, %v5756
        %v5941 = vmul.f32 %v5653, %v5771
        %v5942 = vmul.f32 %v5654, %v5786
        %v5943 = vmul.f32 %v5655, %v5801
        %v5944 = vmul.f32 %v5656, %v5816
        %v5945 = vmul.f32 %v5657, %v5831
        %v5946 = vmul.f32 %v5658, %v5846
        %v5947 = vmul.f32 %v5659, %v5861
        %v5948 = vmul.f32 %v5660, %v5876
        %v5949 = vmul.f32 %v5661, %v5891
        %v5950 = vmul.f32 %v5662, %v5906
        %v5951 = vmul.f32 %v5663, %v5921
        %v5952 = vmul.f32 %v5664, %v5936
        %v5953 = vadd.f32 %v5505, %v5937
        %v5954 = vadd.f32 %v5506, %v5938
        %v5955 = vadd.f32 %v5507, %v5939
        %v5956 = vadd.f32 %v5508, %v5940
        %v5957 = vadd.f32 %v5509, %v5941
        %v5958 = vadd.f32 %v5510, %v5942
        %v5959 = vadd.f32 %v5511, %v5943
        %v5960 = vadd.f32 %v5512, %v5944
        %v5961 = vadd.f32 %v5513, %v5945
        %v5962 = vadd.f32 %v5514, %v5946
        %v5963 = vadd.f32 %v5515, %v5947
        %v5964 = vadd.f32 %v5516, %v5948
        %v5965 = vadd.f32 %v5517, %v5949
        %v5966 = vadd.f32 %v5518, %v5950
        %v5967 = vadd.f32 %v5519, %v5951
        %v5968 = vadd.f32 %v5520, %v5952
        %5969 = vmax.xlane.f32.xlu0 %v4586
        %v5970 = vpop.xlane.xlu0 %5969
        %5971 = vmax.xlane.f32.xlu0 %v4588
        %v5972 = vpop.xlane.xlu0 %5971
        %5973 = vmax.xlane.f32.xlu0 %v4591
        %v5974 = vpop.xlane.xlu0 %5973
        %5975 = vmax.xlane.f32.xlu0 %v4593
        %v5976 = vpop.xlane.xlu0 %5975
        %5977 = vmax.xlane.f32.xlu0 %v4596
        %v5978 = vpop.xlane.xlu0 %5977
        %5979 = vmax.xlane.f32.xlu0 %v4598
        %v5980 = vpop.xlane.xlu0 %5979
        %5981 = vmax.xlane.f32.xlu0 %v4601
        %v5982 = vpop.xlane.xlu0 %5981
        %5983 = vmax.xlane.f32.xlu0 %v4603
        %v5984 = vpop.xlane.xlu0 %5983
        %5985 = vmax.xlane.f32.xlu0 %v4606
        %v5986 = vpop.xlane.xlu0 %5985
        %5987 = vmax.xlane.f32.xlu0 %v4608
        %v5988 = vpop.xlane.xlu0 %5987
        %5989 = vmax.xlane.f32.xlu0 %v4611
        %v5990 = vpop.xlane.xlu0 %5989
        %5991 = vmax.xlane.f32.xlu0 %v4613
        %v5992 = vpop.xlane.xlu0 %5991
        %5993 = vmax.xlane.f32.xlu0 %v4616
        %v5994 = vpop.xlane.xlu0 %5993
        %5995 = vmax.xlane.f32.xlu0 %v4618
        %v5996 = vpop.xlane.xlu0 %5995
        %5997 = vmax.xlane.f32.xlu0 %v4621
        %v5998 = vpop.xlane.xlu0 %5997
        %5999 = vmax.xlane.f32.xlu0 %v4623
        %v6000 = vpop.xlane.xlu0 %5999
        %v6001 = vsub.f32 %v4586, %v5970
        %v6002 = vsub.f32 %v4588, %v5972
        %v6003 = vsub.f32 %v4591, %v5974
        %v6004 = vsub.f32 %v4593, %v5976
        %v6005 = vsub.f32 %v4596, %v5978
        %v6006 = vsub.f32 %v4598, %v5980
        %v6007 = vsub.f32 %v4601, %v5982
        %v6008 = vsub.f32 %v4603, %v5984
        %v6009 = vsub.f32 %v4606, %v5986
        %v6010 = vsub.f32 %v4608, %v5988
        %v6011 = vsub.f32 %v4611, %v5990
        %v6012 = vsub.f32 %v4613, %v5992
        %v6013 = vsub.f32 %v4616, %v5994
        %v6014 = vsub.f32 %v4618, %v5996
        %v6015 = vsub.f32 %v4621, %v5998
        %v6016 = vsub.f32 %v4623, %v6000
        %v6017 = vpack.c.bf16 %v6001, %v6001
        %v6018 = vpack.c.bf16 %v6002, %v6002
        %v6019 = vpack.c.bf16 %v6003, %v6003
        %v6020 = vpack.c.bf16 %v6004, %v6004
        %v6021 = vpack.c.bf16 %v6005, %v6005
        %v6022 = vpack.c.bf16 %v6006, %v6006
        %v6023 = vpack.c.bf16 %v6007, %v6007
        %v6024 = vpack.c.bf16 %v6008, %v6008
        %v6025 = vpack.c.bf16 %v6009, %v6009
        %v6026 = vpack.c.bf16 %v6010, %v6010
        %v6027 = vpack.c.bf16 %v6011, %v6011
        %v6028 = vpack.c.bf16 %v6012, %v6012
        %v6029 = vpack.c.bf16 %v6013, %v6013
        %v6030 = vpack.c.bf16 %v6014, %v6014
        %v6031 = vpack.c.bf16 %v6015, %v6015
        %v6032 = vpack.c.bf16 %v6016, %v6016
        %v6033 = vunpack.c.l.bf16 %v6017
        %v6034 = vunpack.c.l.bf16 %v6018
        %v6035 = vunpack.c.l.bf16 %v6019
        %v6036 = vunpack.c.l.bf16 %v6020
        %v6037 = vunpack.c.l.bf16 %v6021
        %v6038 = vunpack.c.l.bf16 %v6022
        %v6039 = vunpack.c.l.bf16 %v6023
        %v6040 = vunpack.c.l.bf16 %v6024
        %v6041 = vunpack.c.l.bf16 %v6025
        %v6042 = vunpack.c.l.bf16 %v6026
        %v6043 = vunpack.c.l.bf16 %v6027
        %v6044 = vunpack.c.l.bf16 %v6028
        %v6045 = vunpack.c.l.bf16 %v6029
        %v6046 = vunpack.c.l.bf16 %v6030
        %v6047 = vunpack.c.l.bf16 %v6031
        %v6048 = vunpack.c.l.bf16 %v6032
        %v6049 = vmul.f32 %v6033, 1.442695
        %v6050 = vpow.pop %v6049
        %v6051 = vmul.f32 %v6034, 1.442695
        %v6052 = vpow.pop %v6051
        %v6053 = vmul.f32 %v6035, 1.442695
        %v6054 = vpow.pop %v6053
        %v6055 = vmul.f32 %v6036, 1.442695
        %v6056 = vpow.pop %v6055
        %v6057 = vmul.f32 %v6037, 1.442695
        %v6058 = vpow.pop %v6057
        %v6059 = vmul.f32 %v6038, 1.442695
        %v6060 = vpow.pop %v6059
        %v6061 = vmul.f32 %v6039, 1.442695
        %v6062 = vpow.pop %v6061
        %v6063 = vmul.f32 %v6040, 1.442695
        %v6064 = vpow.pop %v6063
        %v6065 = vmul.f32 %v6041, 1.442695
        %v6066 = vpow.pop %v6065
        %v6067 = vmul.f32 %v6042, 1.442695
        %v6068 = vpow.pop %v6067
        %v6069 = vmul.f32 %v6043, 1.442695
        %v6070 = vpow.pop %v6069
        %v6071 = vmul.f32 %v6044, 1.442695
        %v6072 = vpow.pop %v6071
        %v6073 = vmul.f32 %v6045, 1.442695
        %v6074 = vpow.pop %v6073
        %v6075 = vmul.f32 %v6046, 1.442695
        %v6076 = vpow.pop %v6075
        %v6077 = vmul.f32 %v6047, 1.442695
        %v6078 = vpow.pop %v6077
        %v6079 = vmul.f32 %v6048, 1.442695
        %v6080 = vpow.pop %v6079
        %v6081 = vpack.c.bf16 %v6050, %v6050
        %v6082 = vpack.c.bf16 %v6052, %v6052
        %v6083 = vpack.c.bf16 %v6054, %v6054
        %v6084 = vpack.c.bf16 %v6056, %v6056
        %v6085 = vpack.c.bf16 %v6058, %v6058
        %v6086 = vpack.c.bf16 %v6060, %v6060
        %v6087 = vpack.c.bf16 %v6062, %v6062
        %v6088 = vpack.c.bf16 %v6064, %v6064
        %v6089 = vpack.c.bf16 %v6066, %v6066
        %v6090 = vpack.c.bf16 %v6068, %v6068
        %v6091 = vpack.c.bf16 %v6070, %v6070
        %v6092 = vpack.c.bf16 %v6072, %v6072
        %v6093 = vpack.c.bf16 %v6074, %v6074
        %v6094 = vpack.c.bf16 %v6076, %v6076
        %v6095 = vpack.c.bf16 %v6078, %v6078
        %v6096 = vpack.c.bf16 %v6080, %v6080
        %v6097 = vunpack.c.l.bf16 %v6081
        %v6098 = vunpack.c.l.bf16 %v6082
        %v6099 = vunpack.c.l.bf16 %v6083
        %v6100 = vunpack.c.l.bf16 %v6084
        %v6101 = vunpack.c.l.bf16 %v6085
        %v6102 = vunpack.c.l.bf16 %v6086
        %v6103 = vunpack.c.l.bf16 %v6087
        %v6104 = vunpack.c.l.bf16 %v6088
        %v6105 = vunpack.c.l.bf16 %v6089
        %v6106 = vunpack.c.l.bf16 %v6090
        %v6107 = vunpack.c.l.bf16 %v6091
        %v6108 = vunpack.c.l.bf16 %v6092
        %v6109 = vunpack.c.l.bf16 %v6093
        %v6110 = vunpack.c.l.bf16 %v6094
        %v6111 = vunpack.c.l.bf16 %v6095
        %v6112 = vunpack.c.l.bf16 %v6096
        %6113 = vadd.xlane.f32.xlu0 %v6097
        %v6114 = vpop.xlane.xlu0 %6113
        %6115 = vadd.xlane.f32.xlu0 %v6098
        %v6116 = vpop.xlane.xlu0 %6115
        %6117 = vadd.xlane.f32.xlu0 %v6099
        %v6118 = vpop.xlane.xlu0 %6117
        %6119 = vadd.xlane.f32.xlu0 %v6100
        %v6120 = vpop.xlane.xlu0 %6119
        %6121 = vadd.xlane.f32.xlu0 %v6101
        %v6122 = vpop.xlane.xlu0 %6121
        %6123 = vadd.xlane.f32.xlu0 %v6102
        %v6124 = vpop.xlane.xlu0 %6123
        %6125 = vadd.xlane.f32.xlu0 %v6103
        %v6126 = vpop.xlane.xlu0 %6125
        %6127 = vadd.xlane.f32.xlu0 %v6104
        %v6128 = vpop.xlane.xlu0 %6127
        %6129 = vadd.xlane.f32.xlu0 %v6105
        %v6130 = vpop.xlane.xlu0 %6129
        %6131 = vadd.xlane.f32.xlu0 %v6106
        %v6132 = vpop.xlane.xlu0 %6131
        %6133 = vadd.xlane.f32.xlu0 %v6107
        %v6134 = vpop.xlane.xlu0 %6133
        %6135 = vadd.xlane.f32.xlu0 %v6108
        %v6136 = vpop.xlane.xlu0 %6135
        %6137 = vadd.xlane.f32.xlu0 %v6109
        %v6138 = vpop.xlane.xlu0 %6137
        %6139 = vadd.xlane.f32.xlu0 %v6110
        %v6140 = vpop.xlane.xlu0 %6139
        %6141 = vadd.xlane.f32.xlu0 %v6111
        %v6142 = vpop.xlane.xlu0 %6141
        %6143 = vadd.xlane.f32.xlu0 %v6112
        %v6144 = vpop.xlane.xlu0 %6143
        %v6145 = vrcp.pop %v6114
        %v6146 = vmul.f32 %v6114, %v6145
        %v6147 = vsub.f32 1.0, %v6146
        %v6148 = vmul.f32 %v6145, %v6147
        %v6149 = vadd.f32 %v6145, %v6148
        %vm6150 = vweird.f32 %v6114
        %vm6151 = vweird.f32 %v6145
        %vm6152 = vmor %vm6150, %vm6151
        %v6153 = vsel %vm6152, %v6145, %v6149
        %v6154 = vand.u32 2147483647, %v6114
        %vm6155 = vcmp.eq.f32.partialorder %v6154, 8.507059e+37
        %v6156 = vand.u32 %v6114, 2147483648
        %v6157 = vor.u32 1.1754944e-38, %v6156
        %v6158 = vsel %vm6155, %v6157, %v6153
        %v6159 = vmul.f32 1.0, %v6158
        %v6160 = vrcp.pop %v6116
        %v6161 = vmul.f32 %v6116, %v6160
        %v6162 = vsub.f32 1.0, %v6161
        %v6163 = vmul.f32 %v6160, %v6162
        %v6164 = vadd.f32 %v6160, %v6163
        %vm6165 = vweird.f32 %v6116
        %vm6166 = vweird.f32 %v6160
        %vm6167 = vmor %vm6165, %vm6166
        %v6168 = vsel %vm6167, %v6160, %v6164
        %v6169 = vand.u32 2147483647, %v6116
        %vm6170 = vcmp.eq.f32.partialorder %v6169, 8.507059e+37
        %v6171 = vand.u32 %v6116, 2147483648
        %v6172 = vor.u32 1.1754944e-38, %v6171
        %v6173 = vsel %vm6170, %v6172, %v6168
        %v6174 = vmul.f32 1.0, %v6173
        %v6175 = vrcp.pop %v6118
        %v6176 = vmul.f32 %v6118, %v6175
        %v6177 = vsub.f32 1.0, %v6176
        %v6178 = vmul.f32 %v6175, %v6177
        %v6179 = vadd.f32 %v6175, %v6178
        %vm6180 = vweird.f32 %v6118
        %vm6181 = vweird.f32 %v6175
        %vm6182 = vmor %vm6180, %vm6181
        %v6183 = vsel %vm6182, %v6175, %v6179
        %v6184 = vand.u32 2147483647, %v6118
        %vm6185 = vcmp.eq.f32.partialorder %v6184, 8.507059e+37
        %v6186 = vand.u32 %v6118, 2147483648
        %v6187 = vor.u32 1.1754944e-38, %v6186
        %v6188 = vsel %vm6185, %v6187, %v6183
        %v6189 = vmul.f32 1.0, %v6188
        %v6190 = vrcp.pop %v6120
        %v6191 = vmul.f32 %v6120, %v6190
        %v6192 = vsub.f32 1.0, %v6191
        %v6193 = vmul.f32 %v6190, %v6192
        %v6194 = vadd.f32 %v6190, %v6193
        %vm6195 = vweird.f32 %v6120
        %vm6196 = vweird.f32 %v6190
        %vm6197 = vmor %vm6195, %vm6196
        %v6198 = vsel %vm6197, %v6190, %v6194
        %v6199 = vand.u32 2147483647, %v6120
        %vm6200 = vcmp.eq.f32.partialorder %v6199, 8.507059e+37
        %v6201 = vand.u32 %v6120, 2147483648
        %v6202 = vor.u32 1.1754944e-38, %v6201
        %v6203 = vsel %vm6200, %v6202, %v6198
        %v6204 = vmul.f32 1.0, %v6203
        %v6205 = vrcp.pop %v6122
        %v6206 = vmul.f32 %v6122, %v6205
        %v6207 = vsub.f32 1.0, %v6206
        %v6208 = vmul.f32 %v6205, %v6207
        %v6209 = vadd.f32 %v6205, %v6208
        %vm6210 = vweird.f32 %v6122
        %vm6211 = vweird.f32 %v6205
        %vm6212 = vmor %vm6210, %vm6211
        %v6213 = vsel %vm6212, %v6205, %v6209
        %v6214 = vand.u32 2147483647, %v6122
        %vm6215 = vcmp.eq.f32.partialorder %v6214, 8.507059e+37
        %v6216 = vand.u32 %v6122, 2147483648
        %v6217 = vor.u32 1.1754944e-38, %v6216
        %v6218 = vsel %vm6215, %v6217, %v6213
        %v6219 = vmul.f32 1.0, %v6218
        %v6220 = vrcp.pop %v6124
        %v6221 = vmul.f32 %v6124, %v6220
        %v6222 = vsub.f32 1.0, %v6221
        %v6223 = vmul.f32 %v6220, %v6222
        %v6224 = vadd.f32 %v6220, %v6223
        %vm6225 = vweird.f32 %v6124
        %vm6226 = vweird.f32 %v6220
        %vm6227 = vmor %vm6225, %vm6226
        %v6228 = vsel %vm6227, %v6220, %v6224
        %v6229 = vand.u32 2147483647, %v6124
        %vm6230 = vcmp.eq.f32.partialorder %v6229, 8.507059e+37
        %v6231 = vand.u32 %v6124, 2147483648
        %v6232 = vor.u32 1.1754944e-38, %v6231
        %v6233 = vsel %vm6230, %v6232, %v6228
        %v6234 = vmul.f32 1.0, %v6233
        %v6235 = vrcp.pop %v6126
        %v6236 = vmul.f32 %v6126, %v6235
        %v6237 = vsub.f32 1.0, %v6236
        %v6238 = vmul.f32 %v6235, %v6237
        %v6239 = vadd.f32 %v6235, %v6238
        %vm6240 = vweird.f32 %v6126
        %vm6241 = vweird.f32 %v6235
        %vm6242 = vmor %vm6240, %vm6241
        %v6243 = vsel %vm6242, %v6235, %v6239
        %v6244 = vand.u32 2147483647, %v6126
        %vm6245 = vcmp.eq.f32.partialorder %v6244, 8.507059e+37
        %v6246 = vand.u32 %v6126, 2147483648
        %v6247 = vor.u32 1.1754944e-38, %v6246
        %v6248 = vsel %vm6245, %v6247, %v6243
        %v6249 = vmul.f32 1.0, %v6248
        %v6250 = vrcp.pop %v6128
        %v6251 = vmul.f32 %v6128, %v6250
        %v6252 = vsub.f32 1.0, %v6251
        %v6253 = vmul.f32 %v6250, %v6252
        %v6254 = vadd.f32 %v6250, %v6253
        %vm6255 = vweird.f32 %v6128
        %vm6256 = vweird.f32 %v6250
        %vm6257 = vmor %vm6255, %vm6256
        %v6258 = vsel %vm6257, %v6250, %v6254
        %v6259 = vand.u32 2147483647, %v6128
        %vm6260 = vcmp.eq.f32.partialorder %v6259, 8.507059e+37
        %v6261 = vand.u32 %v6128, 2147483648
        %v6262 = vor.u32 1.1754944e-38, %v6261
        %v6263 = vsel %vm6260, %v6262, %v6258
        %v6264 = vmul.f32 1.0, %v6263
        %v6265 = vrcp.pop %v6130
        %v6266 = vmul.f32 %v6130, %v6265
        %v6267 = vsub.f32 1.0, %v6266
        %v6268 = vmul.f32 %v6265, %v6267
        %v6269 = vadd.f32 %v6265, %v6268
        %vm6270 = vweird.f32 %v6130
        %vm6271 = vweird.f32 %v6265
        %vm6272 = vmor %vm6270, %vm6271
        %v6273 = vsel %vm6272, %v6265, %v6269
        %v6274 = vand.u32 2147483647, %v6130
        %vm6275 = vcmp.eq.f32.partialorder %v6274, 8.507059e+37
        %v6276 = vand.u32 %v6130, 2147483648
        %v6277 = vor.u32 1.1754944e-38, %v6276
        %v6278 = vsel %vm6275, %v6277, %v6273
        %v6279 = vmul.f32 1.0, %v6278
        %v6280 = vrcp.pop %v6132
        %v6281 = vmul.f32 %v6132, %v6280
        %v6282 = vsub.f32 1.0, %v6281
        %v6283 = vmul.f32 %v6280, %v6282
        %v6284 = vadd.f32 %v6280, %v6283
        %vm6285 = vweird.f32 %v6132
        %vm6286 = vweird.f32 %v6280
        %vm6287 = vmor %vm6285, %vm6286
        %v6288 = vsel %vm6287, %v6280, %v6284
        %v6289 = vand.u32 2147483647, %v6132
        %vm6290 = vcmp.eq.f32.partialorder %v6289, 8.507059e+37
        %v6291 = vand.u32 %v6132, 2147483648
        %v6292 = vor.u32 1.1754944e-38, %v6291
        %v6293 = vsel %vm6290, %v6292, %v6288
        %v6294 = vmul.f32 1.0, %v6293
        %v6295 = vrcp.pop %v6134
        %v6296 = vmul.f32 %v6134, %v6295
        %v6297 = vsub.f32 1.0, %v6296
        %v6298 = vmul.f32 %v6295, %v6297
        %v6299 = vadd.f32 %v6295, %v6298
        %vm6300 = vweird.f32 %v6134
        %vm6301 = vweird.f32 %v6295
        %vm6302 = vmor %vm6300, %vm6301
        %v6303 = vsel %vm6302, %v6295, %v6299
        %v6304 = vand.u32 2147483647, %v6134
        %vm6305 = vcmp.eq.f32.partialorder %v6304, 8.507059e+37
        %v6306 = vand.u32 %v6134, 2147483648
        %v6307 = vor.u32 1.1754944e-38, %v6306
        %v6308 = vsel %vm6305, %v6307, %v6303
        %v6309 = vmul.f32 1.0, %v6308
        %v6310 = vrcp.pop %v6136
        %v6311 = vmul.f32 %v6136, %v6310
        %v6312 = vsub.f32 1.0, %v6311
        %v6313 = vmul.f32 %v6310, %v6312
        %v6314 = vadd.f32 %v6310, %v6313
        %vm6315 = vweird.f32 %v6136
        %vm6316 = vweird.f32 %v6310
        %vm6317 = vmor %vm6315, %vm6316
        %v6318 = vsel %vm6317, %v6310, %v6314
        %v6319 = vand.u32 2147483647, %v6136
        %vm6320 = vcmp.eq.f32.partialorder %v6319, 8.507059e+37
        %v6321 = vand.u32 %v6136, 2147483648
        %v6322 = vor.u32 1.1754944e-38, %v6321
        %v6323 = vsel %vm6320, %v6322, %v6318
        %v6324 = vmul.f32 1.0, %v6323
        %v6325 = vrcp.pop %v6138
        %v6326 = vmul.f32 %v6138, %v6325
        %v6327 = vsub.f32 1.0, %v6326
        %v6328 = vmul.f32 %v6325, %v6327
        %v6329 = vadd.f32 %v6325, %v6328
        %vm6330 = vweird.f32 %v6138
        %vm6331 = vweird.f32 %v6325
        %vm6332 = vmor %vm6330, %vm6331
        %v6333 = vsel %vm6332, %v6325, %v6329
        %v6334 = vand.u32 2147483647, %v6138
        %vm6335 = vcmp.eq.f32.partialorder %v6334, 8.507059e+37
        %v6336 = vand.u32 %v6138, 2147483648
        %v6337 = vor.u32 1.1754944e-38, %v6336
        %v6338 = vsel %vm6335, %v6337, %v6333
        %v6339 = vmul.f32 1.0, %v6338
        %v6340 = vrcp.pop %v6140
        %v6341 = vmul.f32 %v6140, %v6340
        %v6342 = vsub.f32 1.0, %v6341
        %v6343 = vmul.f32 %v6340, %v6342
        %v6344 = vadd.f32 %v6340, %v6343
        %vm6345 = vweird.f32 %v6140
        %vm6346 = vweird.f32 %v6340
        %vm6347 = vmor %vm6345, %vm6346
        %v6348 = vsel %vm6347, %v6340, %v6344
        %v6349 = vand.u32 2147483647, %v6140
        %vm6350 = vcmp.eq.f32.partialorder %v6349, 8.507059e+37
        %v6351 = vand.u32 %v6140, 2147483648
        %v6352 = vor.u32 1.1754944e-38, %v6351
        %v6353 = vsel %vm6350, %v6352, %v6348
        %v6354 = vmul.f32 1.0, %v6353
        %v6355 = vrcp.pop %v6142
        %v6356 = vmul.f32 %v6142, %v6355
        %v6357 = vsub.f32 1.0, %v6356
        %v6358 = vmul.f32 %v6355, %v6357
        %v6359 = vadd.f32 %v6355, %v6358
        %vm6360 = vweird.f32 %v6142
        %vm6361 = vweird.f32 %v6355
        %vm6362 = vmor %vm6360, %vm6361
        %v6363 = vsel %vm6362, %v6355, %v6359
        %v6364 = vand.u32 2147483647, %v6142
        %vm6365 = vcmp.eq.f32.partialorder %v6364, 8.507059e+37
        %v6366 = vand.u32 %v6142, 2147483648
        %v6367 = vor.u32 1.1754944e-38, %v6366
        %v6368 = vsel %vm6365, %v6367, %v6363
        %v6369 = vmul.f32 1.0, %v6368
        %v6370 = vrcp.pop %v6144
        %v6371 = vmul.f32 %v6144, %v6370
        %v6372 = vsub.f32 1.0, %v6371
        %v6373 = vmul.f32 %v6370, %v6372
        %v6374 = vadd.f32 %v6370, %v6373
        %vm6375 = vweird.f32 %v6144
        %vm6376 = vweird.f32 %v6370
        %vm6377 = vmor %vm6375, %vm6376
        %v6378 = vsel %vm6377, %v6370, %v6374
        %v6379 = vand.u32 2147483647, %v6144
        %vm6380 = vcmp.eq.f32.partialorder %v6379, 8.507059e+37
        %v6381 = vand.u32 %v6144, 2147483648
        %v6382 = vor.u32 1.1754944e-38, %v6381
        %v6383 = vsel %vm6380, %v6382, %v6378
        %v6384 = vmul.f32 1.0, %v6383
        %v6385 = vmul.f32 %v6097, %v6159
        %v6386 = vmul.f32 %v6098, %v6174
        %v6387 = vmul.f32 %v6099, %v6189
        %v6388 = vmul.f32 %v6100, %v6204
        %v6389 = vmul.f32 %v6101, %v6219
        %v6390 = vmul.f32 %v6102, %v6234
        %v6391 = vmul.f32 %v6103, %v6249
        %v6392 = vmul.f32 %v6104, %v6264
        %v6393 = vmul.f32 %v6105, %v6279
        %v6394 = vmul.f32 %v6106, %v6294
        %v6395 = vmul.f32 %v6107, %v6309
        %v6396 = vmul.f32 %v6108, %v6324
        %v6397 = vmul.f32 %v6109, %v6339
        %v6398 = vmul.f32 %v6110, %v6354
        %v6399 = vmul.f32 %v6111, %v6369
        %v6400 = vmul.f32 %v6112, %v6384
        %v6401 = vadd.f32 %v5953, %v6385
        %v6402 = vadd.f32 %v5954, %v6386
        %v6403 = vadd.f32 %v5955, %v6387
        %v6404 = vadd.f32 %v5956, %v6388
        %v6405 = vadd.f32 %v5957, %v6389
        %v6406 = vadd.f32 %v5958, %v6390
        %v6407 = vadd.f32 %v5959, %v6391
        %v6408 = vadd.f32 %v5960, %v6392
        %v6409 = vadd.f32 %v5961, %v6393
        %v6410 = vadd.f32 %v5962, %v6394
        %v6411 = vadd.f32 %v5963, %v6395
        %v6412 = vadd.f32 %v5964, %v6396
        %v6413 = vadd.f32 %v5965, %v6397
        %v6414 = vadd.f32 %v5966, %v6398
        %v6415 = vadd.f32 %v5967, %v6399
        %v6416 = vadd.f32 %v5968, %v6400
        %v6417 = vpack.c.bf16 %v6402, %v6401
        %v6418 = vpack.c.bf16 %v6404, %v6403
        %v6419 = vpack.c.bf16 %v6406, %v6405
        %v6420 = vpack.c.bf16 %v6408, %v6407
        %v6421 = vpack.c.bf16 %v6410, %v6409
        %v6422 = vpack.c.bf16 %v6412, %v6411
        %v6423 = vpack.c.bf16 %v6414, %v6413
        %v6424 = vpack.c.bf16 %v6416, %v6415
        %v6425 = vld [vmem:[#allocation17] sm:$0xff]
        %v6426 = vld [vmem:[#allocation17 + $0x8] sm:$0xff]
        %v6427 = vld [vmem:[#allocation17 + $0x10] sm:$0xff]
        %v6428 = vld [vmem:[#allocation17 + $0x18] sm:$0xff]
        %v6429 = vld [vmem:[#allocation17 + $0x20] sm:$0xff]
        %v6430 = vld [vmem:[#allocation17 + $0x28] sm:$0xff]
        %v6431 = vld [vmem:[#allocation17 + $0x30] sm:$0xff]
        %v6432 = vld [vmem:[#allocation17 + $0x38] sm:$0xff]
        %v6433 = vld [vmem:[#allocation17 + $0x40] sm:$0xff]
        %v6434 = vld [vmem:[#allocation17 + $0x48] sm:$0xff]
        %v6435 = vld [vmem:[#allocation17 + $0x50] sm:$0xff]
        %v6436 = vld [vmem:[#allocation17 + $0x58] sm:$0xff]
        %v6437 = vld [vmem:[#allocation17 + $0x60] sm:$0xff]
        %v6438 = vld [vmem:[#allocation17 + $0x68] sm:$0xff]
        %v6439 = vld [vmem:[#allocation17 + $0x70] sm:$0xff]
        %v6440 = vld [vmem:[#allocation17 + $0x78] sm:$0xff]
        %v6457 = vunpack.c.l.b16 %v6425
        %v6458 = vunpack.c.h.b16 %v6425
        %v6459 = vunpack.c.l.b16 %v6426
        %v6460 = vunpack.c.h.b16 %v6426
        %v6461 = vunpack.c.l.b16 %v6427
        %v6462 = vunpack.c.h.b16 %v6427
        %v6463 = vunpack.c.l.b16 %v6428
        %v6464 = vunpack.c.h.b16 %v6428
        %v6465 = vunpack.c.l.b16 %v6429
        %v6466 = vunpack.c.h.b16 %v6429
        %v6467 = vunpack.c.l.b16 %v6430
        %v6468 = vunpack.c.h.b16 %v6430
        %v6469 = vunpack.c.l.b16 %v6431
        %v6470 = vunpack.c.h.b16 %v6431
        %v6471 = vunpack.c.l.b16 %v6432
        %v6472 = vunpack.c.h.b16 %v6432
        %v6473 = vunpack.c.l.b16 %v6433
        %v6474 = vunpack.c.h.b16 %v6433
        %v6475 = vunpack.c.l.b16 %v6434
        %v6476 = vunpack.c.h.b16 %v6434
        %v6477 = vunpack.c.l.b16 %v6435
        %v6478 = vunpack.c.h.b16 %v6435
        %v6479 = vunpack.c.l.b16 %v6436
        %v6480 = vunpack.c.h.b16 %v6436
        %v6481 = vunpack.c.l.b16 %v6437
        %v6482 = vunpack.c.h.b16 %v6437
        %v6483 = vunpack.c.l.b16 %v6438
        %v6484 = vunpack.c.h.b16 %v6438
        %v6485 = vunpack.c.l.b16 %v6439
        %v6486 = vunpack.c.h.b16 %v6439
        %v6487 = vunpack.c.l.b16 %v6440
        %v6488 = vunpack.c.h.b16 %v6440
        %v6489 = vpack.c.b16 %v6459, %v6457
        %v6490 = vpack.c.b16 %v6460, %v6458
        %v6491 = vpack.c.b16 %v6463, %v6461
        %v6492 = vpack.c.b16 %v6464, %v6462
        %v6493 = vpack.c.b16 %v6467, %v6465
        %v6494 = vpack.c.b16 %v6468, %v6466
        %v6495 = vpack.c.b16 %v6471, %v6469
        %v6496 = vpack.c.b16 %v6472, %v6470
        %v6497 = vpack.c.b16 %v6475, %v6473
        %v6498 = vpack.c.b16 %v6476, %v6474
        %v6499 = vpack.c.b16 %v6479, %v6477
        %v6500 = vpack.c.b16 %v6480, %v6478
        %v6501 = vpack.c.b16 %v6483, %v6481
        %v6502 = vpack.c.b16 %v6484, %v6482
        %v6503 = vpack.c.b16 %v6487, %v6485
        %v6504 = vpack.c.b16 %v6488, %v6486
        %6521 = vmatpush.bf16.msra.mxu0 %v6503
        %6522 = vmatpush.bf16.msra.mxu0 %v6501
        %6523 = vmatpush.bf16.msra.mxu0 %v6499
        %6524 = vmatpush.bf16.msra.mxu0 %v6497
        %6525 = vmatpush.bf16.msra.mxu0 %v6495
        %6526 = vmatpush.bf16.msra.mxu0 %v6493
        %6527 = vmatpush.bf16.msra.mxu0 %v6491
        %6528 = vmatpush.bf16.msra.mxu0 %v6489
        %6529 = vmatmul.bf16.gmra.mxu0 %v6417
        %v6530 = vpop.f32.mrf.mxu0
        %v6531 = vadd.f32 0.0, %v6530
        %v6532 = vpop.f32.mrf.mxu0
        %v6533 = vadd.f32 0.0, %v6532
        %6534 = vmatmul.bf16.gmra.mxu0 %v6418
        %v6535 = vpop.f32.mrf.mxu0
        %v6536 = vadd.f32 0.0, %v6535
        %v6537 = vpop.f32.mrf.mxu0
        %v6538 = vadd.f32 0.0, %v6537
        %6539 = vmatmul.bf16.gmra.mxu0 %v6419
        %v6540 = vpop.f32.mrf.mxu0
        %v6541 = vadd.f32 0.0, %v6540
        %v6542 = vpop.f32.mrf.mxu0
        %v6543 = vadd.f32 0.0, %v6542
        %6544 = vmatmul.bf16.gmra.mxu0 %v6420
        %v6545 = vpop.f32.mrf.mxu0
        %v6546 = vadd.f32 0.0, %v6545
        %v6547 = vpop.f32.mrf.mxu0
        %v6548 = vadd.f32 0.0, %v6547
        %6549 = vmatmul.bf16.gmra.mxu0 %v6421
        %v6550 = vpop.f32.mrf.mxu0
        %v6551 = vadd.f32 0.0, %v6550
        %v6552 = vpop.f32.mrf.mxu0
        %v6553 = vadd.f32 0.0, %v6552
        %6554 = vmatmul.bf16.gmra.mxu0 %v6422
        %v6555 = vpop.f32.mrf.mxu0
        %v6556 = vadd.f32 0.0, %v6555
        %v6557 = vpop.f32.mrf.mxu0
        %v6558 = vadd.f32 0.0, %v6557
        %6559 = vmatmul.bf16.gmra.mxu0 %v6423
        %v6560 = vpop.f32.mrf.mxu0
        %v6561 = vadd.f32 0.0, %v6560
        %v6562 = vpop.f32.mrf.mxu0
        %v6563 = vadd.f32 0.0, %v6562
        %6564 = vmatmul.bf16.gmra.mxu0 %v6424
        %v6565 = vpop.f32.mrf.mxu0
        %v6566 = vadd.f32 0.0, %v6565
        %v6567 = vpop.f32.mrf.mxu0
        %v6568 = vadd.f32 0.0, %v6567
        %6569 = vdwg.mxu0
        %6570 = vmatpush.bf16.msra.mxu0 %v6504
        %6571 = vmatpush.bf16.msra.mxu0 %v6502
        %6572 = vmatpush.bf16.msra.mxu0 %v6500
        %6573 = vmatpush.bf16.msra.mxu0 %v6498
        %6574 = vmatpush.bf16.msra.mxu0 %v6496
        %6575 = vmatpush.bf16.msra.mxu0 %v6494
        %6576 = vmatpush.bf16.msra.mxu0 %v6492
        %6577 = vmatpush.bf16.msra.mxu0 %v6490
        %6578 = vmatmul.bf16.gmra.mxu0 %v6417
        %v6579 = vpop.f32.mrf.mxu0
        %v6580 = vadd.f32 0.0, %v6579
        %v6581 = vpop.f32.mrf.mxu0
        %v6582 = vadd.f32 0.0, %v6581
        %6583 = vmatmul.bf16.gmra.mxu0 %v6418
        %v6584 = vpop.f32.mrf.mxu0
        %v6585 = vadd.f32 0.0, %v6584
        %v6586 = vpop.f32.mrf.mxu0
        %v6587 = vadd.f32 0.0, %v6586
        %6588 = vmatmul.bf16.gmra.mxu0 %v6419
        %v6589 = vpop.f32.mrf.mxu0
        %v6590 = vadd.f32 0.0, %v6589
        %v6591 = vpop.f32.mrf.mxu0
        %v6592 = vadd.f32 0.0, %v6591
        %6593 = vmatmul.bf16.gmra.mxu0 %v6420
        %v6594 = vpop.f32.mrf.mxu0
        %v6595 = vadd.f32 0.0, %v6594
        %v6596 = vpop.f32.mrf.mxu0
        %v6597 = vadd.f32 0.0, %v6596
        %6598 = vmatmul.bf16.gmra.mxu0 %v6421
        %v6599 = vpop.f32.mrf.mxu0
        %v6600 = vadd.f32 0.0, %v6599
        %v6601 = vpop.f32.mrf.mxu0
        %v6602 = vadd.f32 0.0, %v6601
        %6603 = vmatmul.bf16.gmra.mxu0 %v6422
        %v6604 = vpop.f32.mrf.mxu0
        %v6605 = vadd.f32 0.0, %v6604
        %v6606 = vpop.f32.mrf.mxu0
        %v6607 = vadd.f32 0.0, %v6606
        %6608 = vmatmul.bf16.gmra.mxu0 %v6423
        %v6609 = vpop.f32.mrf.mxu0
        %v6610 = vadd.f32 0.0, %v6609
        %v6611 = vpop.f32.mrf.mxu0
        %v6612 = vadd.f32 0.0, %v6611
        %6613 = vmatmul.bf16.gmra.mxu0 %v6424
        %v6614 = vpop.f32.mrf.mxu0
        %v6615 = vadd.f32 0.0, %v6614
        %v6616 = vpop.f32.mrf.mxu0
        %v6617 = vadd.f32 0.0, %v6616
        %6618 = vdwg.mxu0
        %v6619 = vmul.f32 %v3556, %v6531
        %v6620 = vmul.f32 %v3557, %v6580
        %v6621 = vmul.f32 %v3558, %v6533
        %v6622 = vmul.f32 %v3559, %v6582
        %v6623 = vmul.f32 %v3560, %v6536
        %v6624 = vmul.f32 %v3561, %v6585
        %v6625 = vmul.f32 %v3562, %v6538
        %v6626 = vmul.f32 %v3563, %v6587
        %v6627 = vmul.f32 %v3564, %v6541
        %v6628 = vmul.f32 %v3565, %v6590
        %v6629 = vmul.f32 %v3566, %v6543
        %v6630 = vmul.f32 %v3567, %v6592
        %v6631 = vmul.f32 %v3568, %v6546
        %v6632 = vmul.f32 %v3569, %v6595
        %v6633 = vmul.f32 %v3570, %v6548
        %v6634 = vmul.f32 %v3571, %v6597
        %v6635 = vmul.f32 %v3572, %v6551
        %v6636 = vmul.f32 %v3573, %v6600
        %v6637 = vmul.f32 %v3574, %v6553
        %v6638 = vmul.f32 %v3575, %v6602
        %v6639 = vmul.f32 %v3576, %v6556
        %v6640 = vmul.f32 %v3577, %v6605
        %v6641 = vmul.f32 %v3578, %v6558
        %v6642 = vmul.f32 %v3579, %v6607
        %v6643 = vmul.f32 %v3580, %v6561
        %v6644 = vmul.f32 %v3581, %v6610
        %v6645 = vmul.f32 %v3582, %v6563
        %v6646 = vmul.f32 %v3583, %v6612
        %v6647 = vmul.f32 %v3584, %v6566
        %v6648 = vmul.f32 %v3585, %v6615
        %v6649 = vmul.f32 %v3586, %v6568
        %v6650 = vmul.f32 %v3587, %v6617
        %v6651 = vadd.f32 %v6619, %v6620
        %6652 = vadd.xlane.f32.xlu0 %v6651
        %v6653 = vpop.xlane.xlu0 %6652
        %v6654 = vadd.f32 %v6621, %v6622
        %6655 = vadd.xlane.f32.xlu0 %v6654
        %v6656 = vpop.xlane.xlu0 %6655
        %v6657 = vadd.f32 %v6623, %v6624
        %6658 = vadd.xlane.f32.xlu0 %v6657
        %v6659 = vpop.xlane.xlu0 %6658
        %v6660 = vadd.f32 %v6625, %v6626
        %6661 = vadd.xlane.f32.xlu0 %v6660
        %v6662 = vpop.xlane.xlu0 %6661
        %v6663 = vadd.f32 %v6627, %v6628
        %6664 = vadd.xlane.f32.xlu0 %v6663
        %v6665 = vpop.xlane.xlu0 %6664
        %v6666 = vadd.f32 %v6629, %v6630
        %6667 = vadd.xlane.f32.xlu0 %v6666
        %v6668 = vpop.xlane.xlu0 %6667
        %v6669 = vadd.f32 %v6631, %v6632
        %6670 = vadd.xlane.f32.xlu0 %v6669
        %v6671 = vpop.xlane.xlu0 %6670
        %v6672 = vadd.f32 %v6633, %v6634
        %6673 = vadd.xlane.f32.xlu0 %v6672
        %v6674 = vpop.xlane.xlu0 %6673
        %v6675 = vadd.f32 %v6635, %v6636
        %6676 = vadd.xlane.f32.xlu0 %v6675
        %v6677 = vpop.xlane.xlu0 %6676
        %v6678 = vadd.f32 %v6637, %v6638
        %6679 = vadd.xlane.f32.xlu0 %v6678
        %v6680 = vpop.xlane.xlu0 %6679
        %v6681 = vadd.f32 %v6639, %v6640
        %6682 = vadd.xlane.f32.xlu0 %v6681
        %v6683 = vpop.xlane.xlu0 %6682
        %v6684 = vadd.f32 %v6641, %v6642
        %6685 = vadd.xlane.f32.xlu0 %v6684
        %v6686 = vpop.xlane.xlu0 %6685
        %v6687 = vadd.f32 %v6643, %v6644
        %6688 = vadd.xlane.f32.xlu0 %v6687
        %v6689 = vpop.xlane.xlu0 %6688
        %v6690 = vadd.f32 %v6645, %v6646
        %6691 = vadd.xlane.f32.xlu0 %v6690
        %v6692 = vpop.xlane.xlu0 %6691
        %v6693 = vadd.f32 %v6647, %v6648
        %6694 = vadd.xlane.f32.xlu0 %v6693
        %v6695 = vpop.xlane.xlu0 %6694
        %v6696 = vadd.f32 %v6649, %v6650
        %6697 = vadd.xlane.f32.xlu0 %v6696
        %v6698 = vpop.xlane.xlu0 %6697
        %v6699 = vsub.f32 1.0, %v6653
        %v6700 = vsub.f32 1.0, %v6656
        %v6701 = vsub.f32 1.0, %v6659
        %v6702 = vsub.f32 1.0, %v6662
        %v6703 = vsub.f32 1.0, %v6665
        %v6704 = vsub.f32 1.0, %v6668
        %v6705 = vsub.f32 1.0, %v6671
        %v6706 = vsub.f32 1.0, %v6674
        %v6707 = vsub.f32 1.0, %v6677
        %v6708 = vsub.f32 1.0, %v6680
        %v6709 = vsub.f32 1.0, %v6683
        %v6710 = vsub.f32 1.0, %v6686
        %v6711 = vsub.f32 1.0, %v6689
        %v6712 = vsub.f32 1.0, %v6692
        %v6713 = vsub.f32 1.0, %v6695
        %v6714 = vsub.f32 1.0, %v6698
        %v6715 = vld [vmem:[%s13] sm:$0x1]
        %v6717 = vperm.slane %v6715, 0
        %v6719 = vmul.f32 %v3807, %v6717
        %v6720 = vmul.f32 %v3808, %v6717
        %v6721 = vmul.f32 %v3809, %v6717
        %v6722 = vmul.f32 %v3810, %v6717
        %v6723 = vmul.f32 %v3811, %v6717
        %v6724 = vmul.f32 %v3812, %v6717
        %v6725 = vmul.f32 %v3813, %v6717
        %v6726 = vmul.f32 %v3814, %v6717
        %v6727 = vmul.f32 %v3815, %v6717
        %v6728 = vmul.f32 %v3816, %v6717
        %v6729 = vmul.f32 %v3817, %v6717
        %v6730 = vmul.f32 %v3818, %v6717
        %v6731 = vmul.f32 %v3819, %v6717
        %v6732 = vmul.f32 %v3820, %v6717
        %v6733 = vmul.f32 %v3821, %v6717
        %v6734 = vmul.f32 %v3822, %v6717
        %v6735 = vld [vmem:[%s14] sm:$0x1]
        %v6737 = vperm.slane %v6735, 0
        %v6739 = vmul.f32 %v6699, %v6737
        %v6740 = vmul.f32 %v6700, %v6737
        %v6741 = vmul.f32 %v6701, %v6737
        %v6742 = vmul.f32 %v6702, %v6737
        %v6743 = vmul.f32 %v6703, %v6737
        %v6744 = vmul.f32 %v6704, %v6737
        %v6745 = vmul.f32 %v6705, %v6737
        %v6746 = vmul.f32 %v6706, %v6737
        %v6747 = vmul.f32 %v6707, %v6737
        %v6748 = vmul.f32 %v6708, %v6737
        %v6749 = vmul.f32 %v6709, %v6737
        %v6750 = vmul.f32 %v6710, %v6737
        %v6751 = vmul.f32 %v6711, %v6737
        %v6752 = vmul.f32 %v6712, %v6737
        %v6753 = vmul.f32 %v6713, %v6737
        %v6754 = vmul.f32 %v6714, %v6737
        %v6755 = vadd.f32 %v6719, %v6739
        %v6756 = vadd.f32 %v6720, %v6740
        %v6757 = vadd.f32 %v6721, %v6741
        %v6758 = vadd.f32 %v6722, %v6742
        %v6759 = vadd.f32 %v6723, %v6743
        %v6760 = vadd.f32 %v6724, %v6744
        %v6761 = vadd.f32 %v6725, %v6745
        %v6762 = vadd.f32 %v6726, %v6746
        %v6763 = vadd.f32 %v6727, %v6747
        %v6764 = vadd.f32 %v6728, %v6748
        %v6765 = vadd.f32 %v6729, %v6749
        %v6766 = vadd.f32 %v6730, %v6750
        %v6767 = vadd.f32 %v6731, %v6751
        %v6768 = vadd.f32 %v6732, %v6752
        %v6769 = vadd.f32 %v6733, %v6753
        %v6770 = vadd.f32 %v6734, %v6754
        %v6771 = vld [vmem:[%s15] sm:$0x1]
        %v6773 = vperm.slane %v6771, 0
        %v6775 = vadd.f32 %v6755, %v6773
        %v6776 = vadd.f32 %v6756, %v6773
        %v6777 = vadd.f32 %v6757, %v6773
        %v6778 = vadd.f32 %v6758, %v6773
        %v6779 = vadd.f32 %v6759, %v6773
        %v6780 = vadd.f32 %v6760, %v6773
        %v6781 = vadd.f32 %v6761, %v6773
        %v6782 = vadd.f32 %v6762, %v6773
        %v6783 = vadd.f32 %v6763, %v6773
        %v6784 = vadd.f32 %v6764, %v6773
        %v6785 = vadd.f32 %v6765, %v6773
        %v6786 = vadd.f32 %v6766, %v6773
        %v6787 = vadd.f32 %v6767, %v6773
        %v6788 = vadd.f32 %v6768, %v6773
        %v6789 = vadd.f32 %v6769, %v6773
        %v6790 = vadd.f32 %v6770, %v6773
        %v6791 = vmax.f32 %v6775, 0.0
        %v6792 = vmax.f32 %v6776, 0.0
        %v6793 = vmax.f32 %v6777, 0.0
        %v6794 = vmax.f32 %v6778, 0.0
        %v6795 = vmax.f32 %v6779, 0.0
        %v6796 = vmax.f32 %v6780, 0.0
        %v6797 = vmax.f32 %v6781, 0.0
        %v6798 = vmax.f32 %v6782, 0.0
        %v6799 = vmax.f32 %v6783, 0.0
        %v6800 = vmax.f32 %v6784, 0.0
        %v6801 = vmax.f32 %v6785, 0.0
        %v6802 = vmax.f32 %v6786, 0.0
        %v6803 = vmax.f32 %v6787, 0.0
        %v6804 = vmax.f32 %v6788, 0.0
        %v6805 = vmax.f32 %v6789, 0.0
        %v6806 = vmax.f32 %v6790, 0.0
        %v6807 = vld [vmem:[%s16] sm:$0x1]
        %v6809 = vperm.slane %v6807, 0
        %v6811 = vmul.f32 %v6791, %v6809
        %v6812 = vmul.f32 %v6792, %v6809
        %v6813 = vmul.f32 %v6793, %v6809
        %v6814 = vmul.f32 %v6794, %v6809
        %v6815 = vmul.f32 %v6795, %v6809
        %v6816 = vmul.f32 %v6796, %v6809
        %v6817 = vmul.f32 %v6797, %v6809
        %v6818 = vmul.f32 %v6798, %v6809
        %v6819 = vmul.f32 %v6799, %v6809
        %v6820 = vmul.f32 %v6800, %v6809
        %v6821 = vmul.f32 %v6801, %v6809
        %v6822 = vmul.f32 %v6802, %v6809
        %v6823 = vmul.f32 %v6803, %v6809
        %v6824 = vmul.f32 %v6804, %v6809
        %v6825 = vmul.f32 %v6805, %v6809
        %v6826 = vmul.f32 %v6806, %v6809
        %vm6827 = vcmask 64512
        %v6828 = vsel %vm6827, %v6811, 0.0
        %6829 = vadd.xlane.f32.xlu0 %v6828
        %v6830 = vpop.xlane.xlu0 %6829
        %v6831 = vsel %vm6827, %v6812, 0.0
        %6832 = vadd.xlane.f32.xlu0 %v6831
        %v6833 = vpop.xlane.xlu0 %6832
        %v6834 = vsel %vm6827, %v6813, 0.0
        %6835 = vadd.xlane.f32.xlu0 %v6834
        %v6836 = vpop.xlane.xlu0 %6835
        %v6837 = vsel %vm6827, %v6814, 0.0
        %6838 = vadd.xlane.f32.xlu0 %v6837
        %v6839 = vpop.xlane.xlu0 %6838
        %v6840 = vsel %vm6827, %v6815, 0.0
        %6841 = vadd.xlane.f32.xlu0 %v6840
        %v6842 = vpop.xlane.xlu0 %6841
        %v6843 = vsel %vm6827, %v6816, 0.0
        %6844 = vadd.xlane.f32.xlu0 %v6843
        %v6845 = vpop.xlane.xlu0 %6844
        %v6846 = vsel %vm6827, %v6817, 0.0
        %6847 = vadd.xlane.f32.xlu0 %v6846
        %v6848 = vpop.xlane.xlu0 %6847
        %v6849 = vsel %vm6827, %v6818, 0.0
        %6850 = vadd.xlane.f32.xlu0 %v6849
        %v6851 = vpop.xlane.xlu0 %6850
        %v6852 = vsel %vm6827, %v6819, 0.0
        %6853 = vadd.xlane.f32.xlu0 %v6852
        %v6854 = vpop.xlane.xlu0 %6853
        %v6855 = vsel %vm6827, %v6820, 0.0
        %6856 = vadd.xlane.f32.xlu0 %v6855
        %v6857 = vpop.xlane.xlu0 %6856
        %v6858 = vsel %vm6827, %v6821, 0.0
        %6859 = vadd.xlane.f32.xlu0 %v6858
        %v6860 = vpop.xlane.xlu0 %6859
        %v6861 = vsel %vm6827, %v6822, 0.0
        %6862 = vadd.xlane.f32.xlu0 %v6861
        %v6863 = vpop.xlane.xlu0 %6862
        %v6864 = vsel %vm6827, %v6823, 0.0
        %6865 = vadd.xlane.f32.xlu0 %v6864
        %v6866 = vpop.xlane.xlu0 %6865
        %v6867 = vsel %vm6827, %v6824, 0.0
        %6868 = vadd.xlane.f32.xlu0 %v6867
        %v6869 = vpop.xlane.xlu0 %6868
        %v6870 = vsel %vm6827, %v6825, 0.0
        %6871 = vadd.xlane.f32.xlu0 %v6870
        %v6872 = vpop.xlane.xlu0 %6871
        %v6873 = vsel %vm6827, %v6826, 0.0
        %6874 = vadd.xlane.f32.xlu0 %v6873
        %v6875 = vpop.xlane.xlu0 %6874
        %s6876 = sld [smem:[#allocation19 + $0x1]]
        %v6877 = vstv %s6876
        %v6878 = vadd.f32 %v6830, %v6877
        %v6879 = vadd.f32 %v6833, %v6877
        %v6880 = vadd.f32 %v6836, %v6877
        %v6881 = vadd.f32 %v6839, %v6877
        %v6882 = vadd.f32 %v6842, %v6877
        %v6883 = vadd.f32 %v6845, %v6877
        %v6884 = vadd.f32 %v6848, %v6877
        %v6885 = vadd.f32 %v6851, %v6877
        %v6886 = vadd.f32 %v6854, %v6877
        %v6887 = vadd.f32 %v6857, %v6877
        %v6888 = vadd.f32 %v6860, %v6877
        %v6889 = vadd.f32 %v6863, %v6877
        %v6890 = vadd.f32 %v6866, %v6877
        %v6891 = vadd.f32 %v6869, %v6877
        %v6892 = vadd.f32 %v6872, %v6877
        %v6893 = vadd.f32 %v6875, %v6877
        %vm6894 = vcmask 7168
        %v6895 = vsel %vm6894, %v6878, %v6699
        %v6896 = vsel %vm6894, %v6879, %v6700
        %v6897 = vsel %vm6894, %v6880, %v6701
        %v6898 = vsel %vm6894, %v6881, %v6702
        %v6899 = vsel %vm6894, %v6882, %v6703
        %v6900 = vsel %vm6894, %v6883, %v6704
        %v6901 = vsel %vm6894, %v6884, %v6705
        %v6902 = vsel %vm6894, %v6885, %v6706
        %v6903 = vsel %vm6894, %v6886, %v6707
        %v6904 = vsel %vm6894, %v6887, %v6708
        %v6905 = vsel %vm6894, %v6888, %v6709
        %v6906 = vsel %vm6894, %v6889, %v6710
        %v6907 = vsel %vm6894, %v6890, %v6711
        %v6908 = vsel %vm6894, %v6891, %v6712
        %v6909 = vsel %vm6894, %v6892, %v6713
        %v6910 = vsel %vm6894, %v6893, %v6714
        %vm6911 = vcmask 15360
        %6912 = vst.msk [vmem:[%s711] sm:$0xff] %vm6911, %v6895
        %6913 = vst.msk [vmem:[%s711 + $0x8] sm:$0xff] %vm6911, %v6896
        %6914 = vst.msk [vmem:[%s711 + $0x10] sm:$0xff] %vm6911, %v6897
        %6915 = vst.msk [vmem:[%s711 + $0x18] sm:$0xff] %vm6911, %v6898
        %6916 = vst.msk [vmem:[%s711 + $0x20] sm:$0xff] %vm6911, %v6899
        %6917 = vst.msk [vmem:[%s711 + $0x28] sm:$0xff] %vm6911, %v6900
        %6918 = vst.msk [vmem:[%s711 + $0x30] sm:$0xff] %vm6911, %v6901
        %6919 = vst.msk [vmem:[%s711 + $0x38] sm:$0xff] %vm6911, %v6902
        %6920 = vst.msk [vmem:[%s711 + $0x40] sm:$0xff] %vm6911, %v6903
        %6921 = vst.msk [vmem:[%s711 + $0x48] sm:$0xff] %vm6911, %v6904
        %6922 = vst.msk [vmem:[%s711 + $0x50] sm:$0xff] %vm6911, %v6905
        %6923 = vst.msk [vmem:[%s711 + $0x58] sm:$0xff] %vm6911, %v6906
        %6924 = vst.msk [vmem:[%s711 + $0x60] sm:$0xff] %vm6911, %v6907
        %6925 = vst.msk [vmem:[%s711 + $0x68] sm:$0xff] %vm6911, %v6908
        %6926 = vst.msk [vmem:[%s711 + $0x70] sm:$0xff] %vm6911, %v6909
        %6927 = vst.msk [vmem:[%s711 + $0x78] sm:$0xff] %vm6911, %v6910
        %s6928 = sand.u32 %s405, 1
        %s6929 = scalar_lea.sflag [#allocation6], %s6928
        %s6930 = sand.u32 %s405, 1
        %s6931 = smul.addr %s6930, 256
        %s6932 = scalar_lea.vmem [#allocation20], %s6931
        %s6933 = smul.u32 16, %s40
        %p6934 = scmp.lt.s32.totalorder %s6933, 31
        %s6935 = scalar_select %p6934, %s6933, 31
        %s6936 = smul.addr %s6935, 8
        %s6937 = scalar_lea.vmem %s19, %s6936
        // Predicated region
        $region141: #{tpu_custom_call.1} parent=87 // pred_check
          %p6938 = pneg %p415
        $region142: #{tpu_custom_call.1} parent=87 // pred_check_branch
          %6940 = sbr.rel (%p6938) target = $region144
        $region143: #{tpu_custom_call.1} parent=87 // pred_region
          %s6941 = smul.u32 16, %s40
          %6943 = vsyncadd %s6929, 0
          %s6944 = smul.addr %s6941, 2
          %s6945 = smul.addr %s6944, 8
          %s6946 = scalar_lea.hbm %s18, %s6945
          %s6947 = sshll.u32 %s6932, 4
          %s6948 = int_to_ptr.vmem [resolvable:$true] %s6947
          %s6949 = sshll.u32 %s6946, 4
          %s6950 = int_to_ptr.hbm [resolvable:$true] %s6949
          %6955 = dma.vmem_to_hbm [thread:$0]  %s6948, 4096, %s6950, %s6929, 256, 256, 16
        $region144: #{tpu_custom_call.1} parent=87 // pred_fallthru
          _
        // Predicated region
        $region145: #{tpu_custom_call.1} parent=87 // pred_check
          %p6956 = pneg %p441
        $region146: #{tpu_custom_call.1} parent=87 // pred_check_branch
          %6958 = sbr.rel (%p6956) target = $region148
        $region147: #{tpu_custom_call.1} parent=87 // pred_region
          %s6959 = smul.u32 16, %s40
        $region148: #{tpu_custom_call.1} parent=87 // pred_fallthru
          _
      $region88: #{tpu_custom_call.1} parent=5 // pred_fallthru
        _
      %p6960 = scmp.le.s32.totalorder 2, %s35
      // Predicated region
      $region149: #{tpu_custom_call.1} parent=5 // pred_check
        %p6961 = pneg %p6960
      $region150: #{tpu_custom_call.1} parent=5 // pred_check_branch
        %6963 = sbr.rel (%p6961) target = $region152
      $region151: #{tpu_custom_call.1} parent=5 // pred_region
        %s6964 = ssub.s32 %s35, 2
        // Predicated region
        $region153: #{tpu_custom_call.1} parent=151 // pred_check
          %p6965 = pneg %p421
        $region154: #{tpu_custom_call.1} parent=151 // pred_check_branch
          %6967 = sbr.rel (%p6965) target = $region156
        $region155: #{tpu_custom_call.1} parent=151 // pred_region
          %s6968 = sand.u32 %s406, 1
          %s6969 = scalar_lea.sflag [#allocation6], %s6968
          %s6970 = sand.u32 %s406, 1
          %s6971 = smul.addr %s6970, 256
          %s6972 = scalar_lea.vmem [#allocation20], %s6971
          %6974 = dma.done %s6969, 4096
        $region156: #{tpu_custom_call.1} parent=151 // pred_fallthru
          _
        // Predicated region
        $region157: #{tpu_custom_call.1} parent=151 // pred_check
          %p6975 = pneg %p447
        $region158: #{tpu_custom_call.1} parent=151 // pred_check_branch
          %6977 = sbr.rel (%p6975) target = $region160
        $region159: #{tpu_custom_call.1} parent=151 // pred_region
          %s6978 = smul.u32 16, %s41
          %p6979 = scmp.lt.s32.totalorder %s6978, 31
          %s6980 = scalar_select %p6979, %s6978, 31
          %s6981 = smul.addr %s6980, 8
          %s6982 = scalar_lea.vmem %s19, %s6981
        $region160: #{tpu_custom_call.1} parent=151 // pred_fallthru
          _
      $region152: #{tpu_custom_call.1} parent=5 // pred_fallthru
        _
    $region6: #{tpu_custom_call.1} parent=1 // loop_footer
      %s39 = sadd.s32 1, %s35
    $region7: #{tpu_custom_call.1} parent=1 // loop_footer_branch
      %34 = sbr.rel target = $region3
    $region8: #{tpu_custom_call.1} parent=1 // loop_exit
      _
    %6983 = vsyncpa [#allocation5], 1
    %s6984 = scalar_lea.sflag [#allocation5], 1
    %6985 = vsyncpa %s6984, 1
    %6986 = vsyncpa [#allocation9], 1
    %6987 = vsyncpa [#allocation12], 1
    %6988 = vsyncpa [#allocation15], 1
    %6989 = vsyncpa [#allocation18], 1
    %6990 = vsyncpa [#allocation6], 1
    %s6991 = scalar_lea.sflag [#allocation6], 1
    %6992 = vsyncpa %s6991, 1
    %6993 = vsyncpa [#allocation7], 1
    %s6994 = scalar_lea.sflag [#allocation7], 1
    %6995 = vsyncpa %s6994, 1
  %6996 = vsyncmov [#allocation3]
  %s6997 = vpop.sfrf %6996
  %p6998 = scmp.eq.s32.totalorder %s6997, 0
  %p6999 = pneg %p6998
  %7001 = shalt.err (%p6999)
  %s7002 = scalar_lea.sflag [#allocation3], 1
  %7003 = vsyncmov %s7002
  %s7004 = vpop.sfrf %7003
  %p7005 = scmp.eq.s32.totalorder %s7004, 0
  %p7006 = pneg %p7005
  %7008 = shalt.err (%p7006)

</llo_original>
